<compile_context>
chip_gen: v7x
topology: tpu7x:2x2x1
jax: 0.10.0
libtpu: 0.0.40
codegen_flags: <defaults>
</compile_context>

<pallas_src>
import functools
import math

import jax
import jax.numpy as jnp
import numpy as np
from jax import lax
from jax.experimental import pallas as pl
from jax.experimental.pallas import tpu as pltpu


_NT_DIMS = (((1,), (1,)), ((), ()))   # A @ B.T for 2-D operands


def _layer_norm(z, gamma, beta, eps=1e-5):
    mu = jnp.mean(z, axis=-1, keepdims=True)
    var = jnp.mean(jnp.square(z - mu), axis=-1, keepdims=True)
    return (z - mu) * lax.rsqrt(var + eps) * gamma + beta


def _attention_branch(x_q, x_k, x_v, bias, H, d_k, d_v, cd, approx,
                      wq_ref, bq_ref, wk_ref, bk_ref, wv_ref, bv_ref, wl_ref):
    """One multi-head attention branch for a single (batch, query-tile) block.

    x_q: (TQ, D) f32, x_k/x_v: (Sk, D) f32, bias: (TQ, Sk) additive mask bias
    (0 = visible, -1e9 = masked).  Projection weights are lane-dense
    (D, H*d_h) in the matmul dtype `cd`; biases are (1, H*d_h) f32 (Q weight
    and bias already include the 1/sqrt(d_k) folding).  wl is this branch's
    (H*d_v, D) slice of the shared output linear.

    Returns (partial output (TQ, D) f32, attention weights (H, TQ, Sk) f32).
    """
    f32 = jnp.float32

    def proj(x, w_ref, b_ref):
        # Fused, lane-dense projection: one (S, D) @ (D, H*d_h) MXU matmul
        # with f32 accumulation + bias, then a single cast to the compute
        # dtype (no f32 copy kept around).
        y = jnp.dot(x.astype(cd), w_ref[...], preferred_element_type=f32)
        return (y + b_ref[...]).astype(cd)

    qf = proj(x_q, wq_ref, bq_ref)          # (TQ, H*d_k), already * 1/sqrt(dk)
    kf = proj(x_k, wk_ref, bk_ref)          # (Sk, H*d_k)
    vf = proj(x_v, wv_ref, bv_ref)          # (Sk, H*d_v)

    # Per-head scores: H statically unrolled 2-D NT matmuls on static lane
    # slices of the fused projections, stacked head-major so the mask add and
    # softmax are one vectorized pass over all heads.
    scores = jnp.stack(
        [lax.dot_general(qf[:, h * d_k:(h + 1) * d_k],
                         kf[:, h * d_k:(h + 1) * d_k],
                         _NT_DIMS, preferred_element_type=f32)
         for h in range(H)], axis=0)                          # (H, TQ, Sk) f32
    scores = scores + bias.astype(f32)[None]

    # Softmax over keys in f32; divide replaced by an EUP reciprocal.
    m = jnp.max(scores, axis=-1, keepdims=True)
    e = jnp.exp(scores - m)
    attn = e * pl.reciprocal(jnp.sum(e, axis=-1, keepdims=True), approx=approx)

    # Per-head context, concatenated along lanes so the branch's slice of the
    # shared output linear is ONE lane-dense matmul with K = H*d_v
    # (mathematically identical to concat_h(ctx_h) @ Wl_branch).
    attn_cd = attn.astype(cd)
    ctx = jnp.concatenate(
        [jnp.dot(attn_cd[h], vf[:, h * d_v:(h + 1) * d_v],
                 preferred_element_type=f32).astype(cd)
         for h in range(H)], axis=-1)                         # (TQ, H*d_v) cd
    y = jnp.dot(ctx, wl_ref[...], preferred_element_type=f32)  # (TQ, D) f32
    return y, attn


def _multi_encoder_attention_kernel(
        n_heads_op, d_k_op, d_v_op, n_heads_tp, d_k_tp, d_v_tp,
        compute_dtype, approx_recip,
        # data blocks
        q_op_ref, k_op_ref, v_op_ref, bias_op_ref,
        q_tp_ref, k_tp_ref, v_tp_ref, bias_tp_ref,
        # OP projection weights (lane-dense; Q pre-scaled by 1/sqrt(d_k))
        wq_op_ref, bq_op_ref, wk_op_ref, bk_op_ref, wv_op_ref, bv_op_ref,
        # TP projection weights
        wq_tp_ref, bq_tp_ref, wk_tp_ref, bk_tp_ref, wv_tp_ref, bv_tp_ref,
        # shared output linear (split per branch) + LayerNorm params
        wl_op_ref, wl_tp_ref, bl_ref, gamma_ref, beta_ref,
        # outputs
        out_ref, attn_op_ref, attn_tp_ref):
    x_q_op = q_op_ref[0]                                      # (TQ, D) f32

    y_op, attn_op = _attention_branch(
        x_q_op, k_op_ref[0], v_op_ref[0], bias_op_ref[0],
        n_heads_op, d_k_op, d_v_op, compute_dtype, approx_recip,
        wq_op_ref, bq_op_ref, wk_op_ref, bk_op_ref, wv_op_ref, bv_op_ref,
        wl_op_ref)
    y_tp, attn_tp = _attention_branch(
        q_tp_ref[0], k_tp_ref[0], v_tp_ref[0], bias_tp_ref[0],
        n_heads_tp, d_k_tp, d_v_tp, compute_dtype, approx_recip,
        wq_tp_ref, bq_tp_ref, wk_tp_ref, bk_tp_ref, wv_tp_ref, bv_tp_ref,
        wl_tp_ref)

    # Single slab store per branch (not one narrow store per head).
    attn_op_ref[0] = attn_op.astype(attn_op_ref.dtype)
    attn_tp_ref[0] = attn_tp.astype(attn_tp_ref.dtype)

    # Shared linear bias + residual with Q_OP + LayerNorm, all in f32.
    z = y_op + y_tp + bl_ref[...] + x_q_op
    out_ref[0] = _layer_norm(z, gamma_ref[...], beta_ref[...]).astype(out_ref.dtype)


def _tpu_vmem_capacity_bytes(default=64 << 20):
    try:
        info = pltpu.get_tpu_info()
        cap = getattr(info, "vmem_capacity_bytes", None)
        if cap:
            return int(cap)
    except Exception:
        pass
    return default


def _query_tile_candidates(sq):
    # Full sequence first (fewest grid steps, no K/V-projection recompute),
    # then progressively smaller divisors that are multiples of 16 (keeps
    # every tiled block legal for f32/bf16 sublane packing).
    yield sq
    t = (sq // 16) * 16
    while t >= 16:
        if t != sq and sq % t == 0:
            yield t
        t -= 16


def multi_encoder_attention(q_op, k_op, v_op, mask_op, q_tp, k_tp, v_tp, mask_tp,
                            params, *, n_heads_op, d_k_op, d_v_op,
                            n_heads_tp, d_k_tp, d_v_tp,
                            compute_dtype=jnp.bfloat16,
                            attn_dtype=jnp.float32,
                            query_tile=None):
    """Pallas implementation of MultiEncoderAttention.forward.

    params use math convention: W* are (in_features, out_features), b* are
    (out_features,); "Wl"/"bl" are the shared output linear; "gamma"/"beta"
    the LayerNorm affine parameters.  Masks: nonzero == masked.
    """
    B, Sq, D = q_op.shape
    Sk_op = k_op.shape[1]
    Sk_tp = k_tp.shape[1]
    f32 = jnp.float32
    cd = compute_dtype
    approx_recip = np.dtype(cd) != np.dtype(np.float32)
    nbytes = lambda dt: np.dtype(dt).itemsize

    # --- additive mask bias, pre-baked (0 / -1e9) ----------------------------
    bias_dtype = cd
    neg = jnp.asarray(-1e9, f32)
    bias_op = jnp.where(mask_op != 0, neg, jnp.asarray(0.0, f32)).astype(bias_dtype)
    bias_tp = jnp.where(mask_tp != 0, neg, jnp.asarray(0.0, f32)).astype(bias_dtype)

    # --- lane-dense weights; 1/sqrt(d_k) folded into WQ/bQ -------------------
    def as_w(w):
        return jnp.asarray(w, f32).astype(cd)

    def as_b(b):
        return jnp.asarray(b, f32).reshape(1, -1)

    s_op = np.float32(1.0 / np.sqrt(d_k_op))
    s_tp = np.float32(1.0 / np.sqrt(d_k_tp))
    c_op = n_heads_op * d_v_op
    wl = jnp.asarray(params["Wl"], f32)

    weights = [
        as_w(jnp.asarray(params["WQ_OP"], f32) * s_op),
        as_b(jnp.asarray(params["bQ_OP"], f32) * s_op),
        as_w(params["WK_OP"]), as_b(params["bK_OP"]),
        as_w(params["WV_OP"]), as_b(params["bV_OP"]),
        as_w(jnp.asarray(params["WQ_TP"], f32) * s_tp),
        as_b(jnp.asarray(params["bQ_TP"], f32) * s_tp),
        as_w(params["WK_TP"]), as_b(params["bK_TP"]),
        as_w(params["WV_TP"]), as_b(params["bV_TP"]),
        as_w(wl[:c_op]),          # (H_op*d_v_op, D)
        as_w(wl[c_op:]),          # (H_tp*d_v_tp, D)
        as_b(params["bl"]), as_b(params["gamma"]), as_b(params["beta"]),
    ]
    weight_bytes = sum(int(w.size) * w.dtype.itemsize for w in weights)

    # --- query-tile selection + VMEM sizing (per-generation) -----------------
    vmem_cap = _tpu_vmem_capacity_bytes()

    def per_step_bytes(tq):
        act = 4 * (3 * tq * D + 2 * Sk_op * D + 2 * Sk_tp * D) \
            + nbytes(bias_dtype) * tq * (Sk_op + Sk_tp) \
            + nbytes(attn_dtype) * tq * (n_heads_op * Sk_op + n_heads_tp * Sk_tp)
        # rough upper bound on in-kernel temporaries (f32 scores/exp/attn,
        # cast projections, relayout copies)
        tmp = 16 * tq * (n_heads_op * Sk_op + n_heads_tp * Sk_tp) \
            + 4 * (tq + 2 * Sk_op) * n_heads_op * (d_k_op + d_v_op) \
            + 4 * (tq + 2 * Sk_tp) * n_heads_tp * (d_k_tp + d_v_tp)
        return 2 * act + 2 * weight_bytes + tmp

    if query_tile is None:
        budget = int(0.85 * max(vmem_cap - (8 << 20), 16 << 20))
        TQ = Sq
        for cand in _query_tile_candidates(Sq):
            TQ = cand
            if per_step_bytes(cand) <= budget:
                break
    else:
        TQ = int(query_tile)
    if Sq % TQ != 0:
        raise ValueError("query_tile must divide the query sequence length")
    n_tq = Sq // TQ

    vmem_limit = int(max(32 << 20,
                         min(per_step_bytes(TQ) + (8 << 20), vmem_cap - (4 << 20))))

    # --- specs ---------------------------------------------------------------
    q_spec = pl.BlockSpec((1, TQ, D), lambda b, t: (b, t, 0))

    def kv_spec(sk):
        return pl.BlockSpec((1, sk, D), lambda b, t: (b, 0, 0))

    def bias_spec(sk):
        return pl.BlockSpec((1, TQ, sk), lambda b, t: (b, t, 0))

    data_specs = [q_spec, kv_spec(Sk_op), kv_spec(Sk_op), bias_spec(Sk_op),
                  q_spec, kv_spec(Sk_tp), kv_spec(Sk_tp), bias_spec(Sk_tp)]

    def weight_spec(arr, single_buffer):
        idx = lambda b, t: (0, 0)
        if single_buffer:
            # Grid-invariant input: single-buffer to halve its VMEM footprint.
            return pl.BlockSpec(arr.shape, idx, pipeline_mode=pl.Buffered(1))
        return pl.BlockSpec(arr.shape, idx)

    out_specs = (
        pl.BlockSpec((1, TQ, D), lambda b, t: (b, t, 0)),
        pl.BlockSpec((1, n_heads_op, TQ, Sk_op), lambda b, t: (b, 0, t, 0)),
        pl.BlockSpec((1, n_heads_tp, TQ, Sk_tp), lambda b, t: (b, 0, t, 0)),
    )
    out_shape = (
        jax.ShapeDtypeStruct((B, Sq, D), f32),
        jax.ShapeDtypeStruct((B, n_heads_op, Sq, Sk_op), attn_dtype),
        jax.ShapeDtypeStruct((B, n_heads_tp, Sq, Sk_tp), attn_dtype),
    )

    # --- advisory cost estimate ----------------------------------------------
    def branch_flops(H, dk, dv, sk):
        return (2 * Sq * D * H * dk
                + n_tq * 2 * sk * D * H * (dk + dv)   # K/V proj per query tile
                + 2 * H * Sq * sk * (dk + dv)
                + 2 * Sq * H * dv * D)
    flops = B * (branch_flops(n_heads_op, d_k_op, d_v_op, Sk_op)
                 + branch_flops(n_heads_tp, d_k_tp, d_v_tp, Sk_tp))
    transcendentals = B * Sq * (n_heads_op * Sk_op + n_heads_tp * Sk_tp) + 2 * B * Sq
    data_args = (q_op, k_op, v_op, bias_op, q_tp, k_tp, v_tp, bias_tp)
    bytes_accessed = int(
        sum(int(a.size) * a.dtype.itemsize for a in data_args)
        + weight_bytes
        + sum(int(np.prod(s.shape)) * np.dtype(s.dtype).itemsize for s in out_shape))

    kernel = functools.partial(
        _multi_encoder_attention_kernel,
        n_heads_op, d_k_op, d_v_op, n_heads_tp, d_k_tp, d_v_tp,
        cd, bool(approx_recip))

    args = (q_op, k_op, v_op, bias_op, q_tp, k_tp, v_tp, bias_tp, *weights)

    def call(single_buffer_weights):
        in_specs = data_specs + [weight_spec(w, single_buffer_weights)
                                 for w in weights]
        return pl.pallas_call(
            kernel,
            grid=(B, n_tq),
            in_specs=in_specs,
            out_specs=out_specs,
            out_shape=out_shape,
            compiler_params=pltpu.CompilerParams(
                dimension_semantics=("parallel", "parallel"),
                vmem_limit_bytes=vmem_limit),
            cost_estimate=pl.CostEstimate(flops=int(flops),
                                          transcendentals=int(transcendentals),
                                          bytes_accessed=int(bytes_accessed)),
        )(*args)

    try:
        return call(True)
    except Exception:
        # Single-buffering the grid-invariant weights (pl.Buffered(1)) is a
        # pure VMEM optimization; retry with default double-buffering if the
        # running JAX/Mosaic build rejects it (any genuine error re-raises).
        return call(False)


def _reference(q_op, k_op, v_op, mask_op, q_tp, k_tp, v_tp, mask_tp, params, *,
               n_heads_op, d_k_op, d_v_op, n_heads_tp, d_k_tp, d_v_tp,
               compute_dtype=jnp.float32):
    """Pure-JAX mirror of the PyTorch forward (optionally with bf16 matmul
    operands, f32 accumulation — matching the kernel's casting points)."""
    cd = compute_dtype

    def linear(x, w, b):
        return jnp.dot(x.astype(cd), w.astype(cd),
                       preferred_element_type=jnp.float32) + b

    def branch(xq, xk, xv, mask, WQ, bQ, WK, bK, WV, bV, H, dk, dv):
        B, Sq, D = xq.shape
        Sk = xk.shape[1]
        q = linear(xq, WQ, bQ).reshape(B, Sq, H, dk).transpose(0, 2, 1, 3)
        k = linear(xk, WK, bK).reshape(B, Sk, H, dk).transpose(0, 2, 1, 3)
        v = linear(xv, WV, bV).reshape(B, Sk, H, dv).transpose(0, 2, 1, 3)
        scores = jnp.einsum("bhqd,bhkd->bhqk", q.astype(cd), k.astype(cd),
                            preferred_element_type=jnp.float32)
        scores = scores * jnp.float32(1.0 / np.sqrt(dk))
        scores = jnp.where(mask[:, None, :, :] != 0, jnp.float32(-1e9), scores)
        m = jnp.max(scores, axis=-1, keepdims=True)
        e = jnp.exp(scores - m)
        attn = e / jnp.sum(e, axis=-1, keepdims=True)
        ctx = jnp.einsum("bhqk,bhkd->bhqd", attn.astype(cd), v.astype(cd),
                         preferred_element_type=jnp.float32)
        ctx = ctx.transpose(0, 2, 1, 3).reshape(B, Sq, H * dv)
        return ctx, attn

    ctx_op, attn_op = branch(q_op, k_op, v_op, mask_op,
                             params["WQ_OP"], params["bQ_OP"], params["WK_OP"],
                             params["bK_OP"], params["WV_OP"], params["bV_OP"],
                             n_heads_op, d_k_op, d_v_op)
    ctx_tp, attn_tp = branch(q_tp, k_tp, v_tp, mask_tp,
                             params["WQ_TP"], params["bQ_TP"], params["WK_TP"],
                             params["bK_TP"], params["WV_TP"], params["bV_TP"],
                             n_heads_tp, d_k_tp, d_v_tp)
    ctx = jnp.concatenate([ctx_op, ctx_tp], axis=-1)
    out = jnp.dot(ctx.astype(cd), params["Wl"].astype(cd),
                  preferred_element_type=jnp.float32) + params["bl"]
    y = _layer_norm(out + q_op, params["gamma"], params["beta"])
    return y, attn_op, attn_tp


if __name__ == "__main__":
    B, S = 2, 8
    d_model = 32
    d_k_op, d_v_op, n_heads_op = 8, 8, 4
    d_k_tp, d_v_tp, n_heads_tp = 8, 8, 2

    key = jax.random.PRNGKey(0)
    keys = jax.random.split(key, 24)

    def init_linear(kw, kb, in_f, out_f):
        bound = 1.0 / math.sqrt(in_f)
        w = jax.random.uniform(kw, (in_f, out_f), jnp.float32, -bound, bound)
        b = jax.random.uniform(kb, (out_f,), jnp.float32, -bound, bound)
        return w, b

    WQ_OP, bQ_OP = init_linear(keys[0], keys[1], d_model, d_k_op * n_heads_op)
    WK_OP, bK_OP = init_linear(keys[2], keys[3], d_model, d_k_op * n_heads_op)
    WV_OP, bV_OP = init_linear(keys[4], keys[5], d_model, d_v_op * n_heads_op)
    WQ_TP, bQ_TP = init_linear(keys[6], keys[7], d_model, d_k_tp * n_heads_tp)
    WK_TP, bK_TP = init_linear(keys[8], keys[9], d_model, d_k_tp * n_heads_tp)
    WV_TP, bV_TP = init_linear(keys[10], keys[11], d_model, d_v_tp * n_heads_tp)
    c_total = d_v_op * n_heads_op + d_v_tp * n_heads_tp
    Wl, bl = init_linear(keys[12], keys[13], c_total, d_model)

    params = {
        "WQ_OP": WQ_OP, "bQ_OP": bQ_OP, "WK_OP": WK_OP, "bK_OP": bK_OP,
        "WV_OP": WV_OP, "bV_OP": bV_OP,
        "WQ_TP": WQ_TP, "bQ_TP": bQ_TP, "WK_TP": WK_TP, "bK_TP": bK_TP,
        "WV_TP": WV_TP, "bV_TP": bV_TP,
        "Wl": Wl, "bl": bl,
        "gamma": jnp.ones((d_model,), jnp.float32),
        "beta": jnp.zeros((d_model,), jnp.float32),
    }

    q_op = jax.random.normal(keys[14], (B, S, d_model), jnp.float32)
    k_op = jax.random.normal(keys[15], (B, S, d_model), jnp.float32)
    v_op = jax.random.normal(keys[16], (B, S, d_model), jnp.float32)
    q_tp = jax.random.normal(keys[17], (B, S, d_model), jnp.float32)
    k_tp = jax.random.normal(keys[18], (B, S, d_model), jnp.float32)
    v_tp = jax.random.normal(keys[19], (B, S, d_model), jnp.float32)

    # OP branch: causal (subsequent-position) mask; TP branch: mask the last
    # two key positions.  Nonzero == masked, like the PyTorch module.
    mask_op = jnp.broadcast_to(jnp.triu(jnp.ones((S, S), jnp.float32), k=1), (B, S, S))
    mask_tp = jnp.zeros((B, S, S), jnp.float32).at[:, :, -2:].set(1.0)

    hp = dict(n_heads_op=n_heads_op, d_k_op=d_k_op, d_v_op=d_v_op,
              n_heads_tp=n_heads_tp, d_k_tp=d_k_tp, d_v_tp=d_v_tp)
    data = (q_op, k_op, v_op, mask_op, q_tp, k_tp, v_tp, mask_tp)

    # f32 path: tight check of the forward semantics against the reference.
    out32, a_op32, a_tp32 = multi_encoder_attention(
        *data, params, compute_dtype=jnp.float32, **hp)
    jax.block_until_ready(out32)
    r_out32, r_aop32, r_atp32 = _reference(*data, params,
                                           compute_dtype=jnp.float32, **hp)
    np.testing.assert_allclose(np.asarray(out32), np.asarray(r_out32), rtol=1e-4, atol=1e-4)
    np.testing.assert_allclose(np.asarray(a_op32), np.asarray(r_aop32), rtol=1e-4, atol=1e-4)
    np.testing.assert_allclose(np.asarray(a_tp32), np.asarray(r_atp32), rtol=1e-4, atol=1e-4)

    # Default bf16 matmul path (MXU-native operands, f32 accumulation): checked
    # against the reference with matching bf16 operand rounding, looser tol.
    out_bf, a_op_bf, a_tp_bf = multi_encoder_attention(*data, params, **hp)
    jax.block_until_ready(out_bf)
    r_out_bf, r_aop_bf, r_atp_bf = _reference(*data, params,
                                              compute_dtype=jnp.bfloat16, **hp)
    np.testing.assert_allclose(np.asarray(out_bf), np.asarray(r_out_bf), rtol=3e-2, atol=3e-2)
    np.testing.assert_allclose(np.asarray(a_op_bf), np.asarray(r_aop_bf), rtol=3e-2, atol=3e-2)
    np.testing.assert_allclose(np.asarray(a_tp_bf), np.asarray(r_atp_bf), rtol=3e-2, atol=3e-2)

    print("KERNEL_OK")
</pallas_src>

<mosaic_0001>
module attributes {stable_mosaic.version = 11 : i64} {
  func.func @_multi_encoder_attention_kernel(%arg0: i32, %arg1: i32, %arg2: memref<1x8x32xf32, #tpu.memory_space<vmem>>, %arg3: memref<1x8x32xf32, #tpu.memory_space<vmem>>, %arg4: memref<1x8x32xf32, #tpu.memory_space<vmem>>, %arg5: memref<1x8x8xf32, #tpu.memory_space<vmem>>, %arg6: memref<1x8x32xf32, #tpu.memory_space<vmem>>, %arg7: memref<1x8x32xf32, #tpu.memory_space<vmem>>, %arg8: memref<1x8x32xf32, #tpu.memory_space<vmem>>, %arg9: memref<1x8x8xf32, #tpu.memory_space<vmem>>, %arg10: memref<32x32xf32, #tpu.memory_space<vmem>>, %arg11: memref<1x32xf32, #tpu.memory_space<vmem>>, %arg12: memref<32x32xf32, #tpu.memory_space<vmem>>, %arg13: memref<1x32xf32, #tpu.memory_space<vmem>>, %arg14: memref<32x32xf32, #tpu.memory_space<vmem>>, %arg15: memref<1x32xf32, #tpu.memory_space<vmem>>, %arg16: memref<32x16xf32, #tpu.memory_space<vmem>>, %arg17: memref<1x16xf32, #tpu.memory_space<vmem>>, %arg18: memref<32x16xf32, #tpu.memory_space<vmem>>, %arg19: memref<1x16xf32, #tpu.memory_space<vmem>>, %arg20: memref<32x16xf32, #tpu.memory_space<vmem>>, %arg21: memref<1x16xf32, #tpu.memory_space<vmem>>, %arg22: memref<32x32xf32, #tpu.memory_space<vmem>>, %arg23: memref<16x32xf32, #tpu.memory_space<vmem>>, %arg24: memref<1x32xf32, #tpu.memory_space<vmem>>, %arg25: memref<1x32xf32, #tpu.memory_space<vmem>>, %arg26: memref<1x32xf32, #tpu.memory_space<vmem>>, %arg27: memref<1x8x32xf32, #tpu.memory_space<vmem>>, %arg28: memref<1x4x8x8xf32, #tpu.memory_space<vmem>>, %arg29: memref<1x2x8x8xf32, #tpu.memory_space<vmem>>) attributes {dimension_semantics = [#tpu.dimension_semantics<parallel>, #tpu.dimension_semantics<parallel>], iteration_bounds = array<i64: 2, 1>, scalar_prefetch = 0 : i64, scratch_operands = 0 : i64, tpu.core_type = #tpu.core_type<tc>, window_params = [{transform_indices = @transform_0, window_bounds = array<i64: 1, 8, 32>}, {transform_indices = @transform_1, window_bounds = array<i64: 1, 8, 32>}, {transform_indices = @transform_2, window_bounds = array<i64: 1, 8, 32>}, {transform_indices = @transform_3, window_bounds = array<i64: 1, 8, 8>}, {transform_indices = @transform_4, window_bounds = array<i64: 1, 8, 32>}, {transform_indices = @transform_5, window_bounds = array<i64: 1, 8, 32>}, {transform_indices = @transform_6, window_bounds = array<i64: 1, 8, 32>}, {transform_indices = @transform_7, window_bounds = array<i64: 1, 8, 8>}, {pipeline_mode = #tpu.pipeline_mode<synchronous>, transform_indices = @transform_8, window_bounds = array<i64: 32, 32>}, {pipeline_mode = #tpu.pipeline_mode<synchronous>, transform_indices = @transform_9, window_bounds = array<i64: 1, 32>}, {pipeline_mode = #tpu.pipeline_mode<synchronous>, transform_indices = @transform_10, window_bounds = array<i64: 32, 32>}, {pipeline_mode = #tpu.pipeline_mode<synchronous>, transform_indices = @transform_11, window_bounds = array<i64: 1, 32>}, {pipeline_mode = #tpu.pipeline_mode<synchronous>, transform_indices = @transform_12, window_bounds = array<i64: 32, 32>}, {pipeline_mode = #tpu.pipeline_mode<synchronous>, transform_indices = @transform_13, window_bounds = array<i64: 1, 32>}, {pipeline_mode = #tpu.pipeline_mode<synchronous>, transform_indices = @transform_14, window_bounds = array<i64: 32, 16>}, {pipeline_mode = #tpu.pipeline_mode<synchronous>, transform_indices = @transform_15, window_bounds = array<i64: 1, 16>}, {pipeline_mode = #tpu.pipeline_mode<synchronous>, transform_indices = @transform_16, window_bounds = array<i64: 32, 16>}, {pipeline_mode = #tpu.pipeline_mode<synchronous>, transform_indices = @transform_17, window_bounds = array<i64: 1, 16>}, {pipeline_mode = #tpu.pipeline_mode<synchronous>, transform_indices = @transform_18, window_bounds = array<i64: 32, 16>}, {pipeline_mode = #tpu.pipeline_mode<synchronous>, transform_indices = @transform_19, window_bounds = array<i64: 1, 16>}, {pipeline_mode = #tpu.pipeline_mode<synchronous>, transform_indices = @transform_20, window_bounds = array<i64: 32, 32>}, {pipeline_mode = #tpu.pipeline_mode<synchronous>, transform_indices = @transform_21, window_bounds = array<i64: 16, 32>}, {pipeline_mode = #tpu.pipeline_mode<synchronous>, transform_indices = @transform_22, window_bounds = array<i64: 1, 32>}, {pipeline_mode = #tpu.pipeline_mode<synchronous>, transform_indices = @transform_23, window_bounds = array<i64: 1, 32>}, {pipeline_mode = #tpu.pipeline_mode<synchronous>, transform_indices = @transform_24, window_bounds = array<i64: 1, 32>}, {transform_indices = @transform_25, window_bounds = array<i64: 1, 8, 32>}, {transform_indices = @transform_26, window_bounds = array<i64: 1, 4, 8, 8>}, {transform_indices = @transform_27, window_bounds = array<i64: 1, 2, 8, 8>}]} {
    %c0 = arith.constant 0 : index
    %c0_0 = arith.constant 0 : index
    %c0_1 = arith.constant 0 : index
    %0 = vector.load %arg2[%c0, %c0_0, %c0_1] : memref<1x8x32xf32, #tpu.memory_space<vmem>>, vector<1x8x32xf32>
    %1 = vector.shape_cast %0 : vector<1x8x32xf32> to vector<8x32xf32>
    %c0_2 = arith.constant 0 : index
    %c0_3 = arith.constant 0 : index
    %c0_4 = arith.constant 0 : index
    %2 = vector.load %arg3[%c0_2, %c0_3, %c0_4] : memref<1x8x32xf32, #tpu.memory_space<vmem>>, vector<1x8x32xf32>
    %3 = vector.shape_cast %2 : vector<1x8x32xf32> to vector<8x32xf32>
    %c0_5 = arith.constant 0 : index
    %c0_6 = arith.constant 0 : index
    %c0_7 = arith.constant 0 : index
    %4 = vector.load %arg4[%c0_5, %c0_6, %c0_7] : memref<1x8x32xf32, #tpu.memory_space<vmem>>, vector<1x8x32xf32>
    %5 = vector.shape_cast %4 : vector<1x8x32xf32> to vector<8x32xf32>
    %c0_8 = arith.constant 0 : index
    %c0_9 = arith.constant 0 : index
    %c0_10 = arith.constant 0 : index
    %6 = vector.load %arg5[%c0_8, %c0_9, %c0_10] : memref<1x8x8xf32, #tpu.memory_space<vmem>>, vector<1x8x8xf32>
    %7 = vector.shape_cast %6 : vector<1x8x8xf32> to vector<8x8xf32>
    %c0_11 = arith.constant 0 : index
    %c0_12 = arith.constant 0 : index
    %8 = vector.load %arg10[%c0_11, %c0_12] : memref<32x32xf32, #tpu.memory_space<vmem>>, vector<32x32xf32>
    %cst = arith.constant dense<0.000000e+00> : vector<8x32xf32>
    %9 = tpu.matmul %1, %8, %cst {dimension_numbers = #tpu.dot_dimension_numbers<[1], [0], [0], [1], [0, 0, 1, 1], [], []>} : vector<8x32xf32>, vector<32x32xf32>, vector<8x32xf32> -> vector<8x32xf32>
    %c0_13 = arith.constant 0 : index
    %c0_14 = arith.constant 0 : index
    %10 = vector.load %arg11[%c0_13, %c0_14] : memref<1x32xf32, #tpu.memory_space<vmem>>, vector<1x32xf32>
    %11 = vector.broadcast %10 : vector<1x32xf32> to vector<8x32xf32>
    %12 = arith.addf %9, %11 : vector<8x32xf32>
    %c0_15 = arith.constant 0 : index
    %c0_16 = arith.constant 0 : index
    %13 = vector.load %arg12[%c0_15, %c0_16] : memref<32x32xf32, #tpu.memory_space<vmem>>, vector<32x32xf32>
    %cst_17 = arith.constant dense<0.000000e+00> : vector<8x32xf32>
    %14 = tpu.matmul %3, %13, %cst_17 {dimension_numbers = #tpu.dot_dimension_numbers<[1], [0], [0], [1], [0, 0, 1, 1], [], []>} : vector<8x32xf32>, vector<32x32xf32>, vector<8x32xf32> -> vector<8x32xf32>
    %c0_18 = arith.constant 0 : index
    %c0_19 = arith.constant 0 : index
    %15 = vector.load %arg13[%c0_18, %c0_19] : memref<1x32xf32, #tpu.memory_space<vmem>>, vector<1x32xf32>
    %16 = vector.broadcast %15 : vector<1x32xf32> to vector<8x32xf32>
    %17 = arith.addf %14, %16 : vector<8x32xf32>
    %c0_20 = arith.constant 0 : index
    %c0_21 = arith.constant 0 : index
    %18 = vector.load %arg14[%c0_20, %c0_21] : memref<32x32xf32, #tpu.memory_space<vmem>>, vector<32x32xf32>
    %cst_22 = arith.constant dense<0.000000e+00> : vector<8x32xf32>
    %19 = tpu.matmul %5, %18, %cst_22 {dimension_numbers = #tpu.dot_dimension_numbers<[1], [0], [0], [1], [0, 0, 1, 1], [], []>} : vector<8x32xf32>, vector<32x32xf32>, vector<8x32xf32> -> vector<8x32xf32>
    %c0_23 = arith.constant 0 : index
    %c0_24 = arith.constant 0 : index
    %20 = vector.load %arg15[%c0_23, %c0_24] : memref<1x32xf32, #tpu.memory_space<vmem>>, vector<1x32xf32>
    %21 = vector.broadcast %20 : vector<1x32xf32> to vector<8x32xf32>
    %22 = arith.addf %19, %21 : vector<8x32xf32>
    %23 = vector.extract_strided_slice %12 {offsets = [0, 0], sizes = [8, 8], strides = [1, 1]} : vector<8x32xf32> to vector<8x8xf32>
    %24 = vector.extract_strided_slice %17 {offsets = [0, 0], sizes = [8, 8], strides = [1, 1]} : vector<8x32xf32> to vector<8x8xf32>
    %cst_25 = arith.constant dense<0.000000e+00> : vector<8x8xf32>
    %25 = tpu.matmul %23, %24, %cst_25 {dimension_numbers = #tpu.dot_dimension_numbers<[1], [1], [0], [0], [0, 0, 1, 0], [], []>} : vector<8x8xf32>, vector<8x8xf32>, vector<8x8xf32> -> vector<8x8xf32>
    %26 = vector.extract_strided_slice %12 {offsets = [0, 8], sizes = [8, 8], strides = [1, 1]} : vector<8x32xf32> to vector<8x8xf32>
    %27 = vector.extract_strided_slice %17 {offsets = [0, 8], sizes = [8, 8], strides = [1, 1]} : vector<8x32xf32> to vector<8x8xf32>
    %cst_26 = arith.constant dense<0.000000e+00> : vector<8x8xf32>
    %28 = tpu.matmul %26, %27, %cst_26 {dimension_numbers = #tpu.dot_dimension_numbers<[1], [1], [0], [0], [0, 0, 1, 0], [], []>} : vector<8x8xf32>, vector<8x8xf32>, vector<8x8xf32> -> vector<8x8xf32>
    %29 = vector.extract_strided_slice %12 {offsets = [0, 16], sizes = [8, 8], strides = [1, 1]} : vector<8x32xf32> to vector<8x8xf32>
    %30 = vector.extract_strided_slice %17 {offsets = [0, 16], sizes = [8, 8], strides = [1, 1]} : vector<8x32xf32> to vector<8x8xf32>
    %cst_27 = arith.constant dense<0.000000e+00> : vector<8x8xf32>
    %31 = tpu.matmul %29, %30, %cst_27 {dimension_numbers = #tpu.dot_dimension_numbers<[1], [1], [0], [0], [0, 0, 1, 0], [], []>} : vector<8x8xf32>, vector<8x8xf32>, vector<8x8xf32> -> vector<8x8xf32>
    %32 = vector.extract_strided_slice %12 {offsets = [0, 24], sizes = [8, 8], strides = [1, 1]} : vector<8x32xf32> to vector<8x8xf32>
    %33 = vector.extract_strided_slice %17 {offsets = [0, 24], sizes = [8, 8], strides = [1, 1]} : vector<8x32xf32> to vector<8x8xf32>
    %cst_28 = arith.constant dense<0.000000e+00> : vector<8x8xf32>
    %34 = tpu.matmul %32, %33, %cst_28 {dimension_numbers = #tpu.dot_dimension_numbers<[1], [1], [0], [0], [0, 0, 1, 0], [], []>} : vector<8x8xf32>, vector<8x8xf32>, vector<8x8xf32> -> vector<8x8xf32>
    %35 = vector.shape_cast %25 : vector<8x8xf32> to vector<1x8x8xf32>
    %36 = vector.shape_cast %28 : vector<8x8xf32> to vector<1x8x8xf32>
    %37 = vector.shape_cast %31 : vector<8x8xf32> to vector<1x8x8xf32>
    %38 = vector.shape_cast %34 : vector<8x8xf32> to vector<1x8x8xf32>
    %39 = tpu.concatenate %35, %36, %37, %38 in 0 : vector<1x8x8xf32>, vector<1x8x8xf32>, vector<1x8x8xf32>, vector<1x8x8xf32> -> vector<4x8x8xf32>
    %40 = vector.shape_cast %7 : vector<8x8xf32> to vector<1x8x8xf32>
    %41 = vector.broadcast %40 : vector<1x8x8xf32> to vector<4x8x8xf32>
    %42 = arith.addf %39, %41 : vector<4x8x8xf32>
    %cst_29 = arith.constant dense<0xFF800000> : vector<4x8xf32>
    %43 = vector.multi_reduction <maximumf>, %42, %cst_29 [2] : vector<4x8x8xf32> to vector<4x8xf32>
    %44 = vector.shape_cast %43 : vector<4x8xf32> to vector<4x8x1xf32>
    %45 = vector.broadcast %44 : vector<4x8x1xf32> to vector<4x8x8xf32>
    %46 = arith.subf %42, %45 : vector<4x8x8xf32>
    %47 = math.exp %46 : vector<4x8x8xf32>
    %cst_30 = arith.constant dense<0.000000e+00> : vector<4x8xf32>
    %48 = vector.multi_reduction <add>, %47, %cst_30 [2] : vector<4x8x8xf32> to vector<4x8xf32>
    %49 = vector.shape_cast %48 : vector<4x8xf32> to vector<4x8x1xf32>
    %50 = tpu.reciprocal %49 : vector<4x8x1xf32> -> vector<4x8x1xf32>
    %51 = vector.broadcast %50 : vector<4x8x1xf32> to vector<4x8x8xf32>
    %52 = arith.mulf %47, %51 : vector<4x8x8xf32>
    %53 = vector.extract_strided_slice %52 {offsets = [0, 0, 0], sizes = [1, 8, 8], strides = [1, 1, 1]} : vector<4x8x8xf32> to vector<1x8x8xf32>
    %54 = vector.shape_cast %53 : vector<1x8x8xf32> to vector<8x8xf32>
    %55 = vector.extract_strided_slice %22 {offsets = [0, 0], sizes = [8, 8], strides = [1, 1]} : vector<8x32xf32> to vector<8x8xf32>
    %cst_31 = arith.constant dense<0.000000e+00> : vector<8x8xf32>
    %56 = tpu.matmul %54, %55, %cst_31 {dimension_numbers = #tpu.dot_dimension_numbers<[1], [0], [0], [1], [0, 0, 1, 1], [], []>} : vector<8x8xf32>, vector<8x8xf32>, vector<8x8xf32> -> vector<8x8xf32>
    %57 = vector.extract_strided_slice %52 {offsets = [1, 0, 0], sizes = [1, 8, 8], strides = [1, 1, 1]} : vector<4x8x8xf32> to vector<1x8x8xf32>
    %58 = vector.shape_cast %57 : vector<1x8x8xf32> to vector<8x8xf32>
    %59 = vector.extract_strided_slice %22 {offsets = [0, 8], sizes = [8, 8], strides = [1, 1]} : vector<8x32xf32> to vector<8x8xf32>
    %cst_32 = arith.constant dense<0.000000e+00> : vector<8x8xf32>
    %60 = tpu.matmul %58, %59, %cst_32 {dimension_numbers = #tpu.dot_dimension_numbers<[1], [0], [0], [1], [0, 0, 1, 1], [], []>} : vector<8x8xf32>, vector<8x8xf32>, vector<8x8xf32> -> vector<8x8xf32>
    %61 = vector.extract_strided_slice %52 {offsets = [2, 0, 0], sizes = [1, 8, 8], strides = [1, 1, 1]} : vector<4x8x8xf32> to vector<1x8x8xf32>
    %62 = vector.shape_cast %61 : vector<1x8x8xf32> to vector<8x8xf32>
    %63 = vector.extract_strided_slice %22 {offsets = [0, 16], sizes = [8, 8], strides = [1, 1]} : vector<8x32xf32> to vector<8x8xf32>
    %cst_33 = arith.constant dense<0.000000e+00> : vector<8x8xf32>
    %64 = tpu.matmul %62, %63, %cst_33 {dimension_numbers = #tpu.dot_dimension_numbers<[1], [0], [0], [1], [0, 0, 1, 1], [], []>} : vector<8x8xf32>, vector<8x8xf32>, vector<8x8xf32> -> vector<8x8xf32>
    %65 = vector.extract_strided_slice %52 {offsets = [3, 0, 0], sizes = [1, 8, 8], strides = [1, 1, 1]} : vector<4x8x8xf32> to vector<1x8x8xf32>
    %66 = vector.shape_cast %65 : vector<1x8x8xf32> to vector<8x8xf32>
    %67 = vector.extract_strided_slice %22 {offsets = [0, 24], sizes = [8, 8], strides = [1, 1]} : vector<8x32xf32> to vector<8x8xf32>
    %cst_34 = arith.constant dense<0.000000e+00> : vector<8x8xf32>
    %68 = tpu.matmul %66, %67, %cst_34 {dimension_numbers = #tpu.dot_dimension_numbers<[1], [0], [0], [1], [0, 0, 1, 1], [], []>} : vector<8x8xf32>, vector<8x8xf32>, vector<8x8xf32> -> vector<8x8xf32>
    %69 = tpu.concatenate %56, %60, %64, %68 in 1 : vector<8x8xf32>, vector<8x8xf32>, vector<8x8xf32>, vector<8x8xf32> -> vector<8x32xf32>
    %c0_35 = arith.constant 0 : index
    %c0_36 = arith.constant 0 : index
    %70 = vector.load %arg22[%c0_35, %c0_36] : memref<32x32xf32, #tpu.memory_space<vmem>>, vector<32x32xf32>
    %cst_37 = arith.constant dense<0.000000e+00> : vector<8x32xf32>
    %71 = tpu.matmul %69, %70, %cst_37 {dimension_numbers = #tpu.dot_dimension_numbers<[1], [0], [0], [1], [0, 0, 1, 1], [], []>} : vector<8x32xf32>, vector<32x32xf32>, vector<8x32xf32> -> vector<8x32xf32>
    %c0_38 = arith.constant 0 : index
    %c0_39 = arith.constant 0 : index
    %c0_40 = arith.constant 0 : index
    %72 = vector.load %arg6[%c0_38, %c0_39, %c0_40] : memref<1x8x32xf32, #tpu.memory_space<vmem>>, vector<1x8x32xf32>
    %73 = vector.shape_cast %72 : vector<1x8x32xf32> to vector<8x32xf32>
    %c0_41 = arith.constant 0 : index
    %c0_42 = arith.constant 0 : index
    %c0_43 = arith.constant 0 : index
    %74 = vector.load %arg7[%c0_41, %c0_42, %c0_43] : memref<1x8x32xf32, #tpu.memory_space<vmem>>, vector<1x8x32xf32>
    %75 = vector.shape_cast %74 : vector<1x8x32xf32> to vector<8x32xf32>
    %c0_44 = arith.constant 0 : index
    %c0_45 = arith.constant 0 : index
    %c0_46 = arith.constant 0 : index
    %76 = vector.load %arg8[%c0_44, %c0_45, %c0_46] : memref<1x8x32xf32, #tpu.memory_space<vmem>>, vector<1x8x32xf32>
    %77 = vector.shape_cast %76 : vector<1x8x32xf32> to vector<8x32xf32>
    %c0_47 = arith.constant 0 : index
    %c0_48 = arith.constant 0 : index
    %c0_49 = arith.constant 0 : index
    %78 = vector.load %arg9[%c0_47, %c0_48, %c0_49] : memref<1x8x8xf32, #tpu.memory_space<vmem>>, vector<1x8x8xf32>
    %79 = vector.shape_cast %78 : vector<1x8x8xf32> to vector<8x8xf32>
    %c0_50 = arith.constant 0 : index
    %c0_51 = arith.constant 0 : index
    %80 = vector.load %arg16[%c0_50, %c0_51] : memref<32x16xf32, #tpu.memory_space<vmem>>, vector<32x16xf32>
    %cst_52 = arith.constant dense<0.000000e+00> : vector<8x16xf32>
    %81 = tpu.matmul %73, %80, %cst_52 {dimension_numbers = #tpu.dot_dimension_numbers<[1], [0], [0], [1], [0, 0, 1, 1], [], []>} : vector<8x32xf32>, vector<32x16xf32>, vector<8x16xf32> -> vector<8x16xf32>
    %c0_53 = arith.constant 0 : index
    %c0_54 = arith.constant 0 : index
    %82 = vector.load %arg17[%c0_53, %c0_54] : memref<1x16xf32, #tpu.memory_space<vmem>>, vector<1x16xf32>
    %83 = vector.broadcast %82 : vector<1x16xf32> to vector<8x16xf32>
    %84 = arith.addf %81, %83 : vector<8x16xf32>
    %c0_55 = arith.constant 0 : index
    %c0_56 = arith.constant 0 : index
    %85 = vector.load %arg18[%c0_55, %c0_56] : memref<32x16xf32, #tpu.memory_space<vmem>>, vector<32x16xf32>
    %cst_57 = arith.constant dense<0.000000e+00> : vector<8x16xf32>
    %86 = tpu.matmul %75, %85, %cst_57 {dimension_numbers = #tpu.dot_dimension_numbers<[1], [0], [0], [1], [0, 0, 1, 1], [], []>} : vector<8x32xf32>, vector<32x16xf32>, vector<8x16xf32> -> vector<8x16xf32>
    %c0_58 = arith.constant 0 : index
    %c0_59 = arith.constant 0 : index
    %87 = vector.load %arg19[%c0_58, %c0_59] : memref<1x16xf32, #tpu.memory_space<vmem>>, vector<1x16xf32>
    %88 = vector.broadcast %87 : vector<1x16xf32> to vector<8x16xf32>
    %89 = arith.addf %86, %88 : vector<8x16xf32>
    %c0_60 = arith.constant 0 : index
    %c0_61 = arith.constant 0 : index
    %90 = vector.load %arg20[%c0_60, %c0_61] : memref<32x16xf32, #tpu.memory_space<vmem>>, vector<32x16xf32>
    %cst_62 = arith.constant dense<0.000000e+00> : vector<8x16xf32>
    %91 = tpu.matmul %77, %90, %cst_62 {dimension_numbers = #tpu.dot_dimension_numbers<[1], [0], [0], [1], [0, 0, 1, 1], [], []>} : vector<8x32xf32>, vector<32x16xf32>, vector<8x16xf32> -> vector<8x16xf32>
    %c0_63 = arith.constant 0 : index
    %c0_64 = arith.constant 0 : index
    %92 = vector.load %arg21[%c0_63, %c0_64] : memref<1x16xf32, #tpu.memory_space<vmem>>, vector<1x16xf32>
    %93 = vector.broadcast %92 : vector<1x16xf32> to vector<8x16xf32>
    %94 = arith.addf %91, %93 : vector<8x16xf32>
    %95 = vector.extract_strided_slice %84 {offsets = [0, 0], sizes = [8, 8], strides = [1, 1]} : vector<8x16xf32> to vector<8x8xf32>
    %96 = vector.extract_strided_slice %89 {offsets = [0, 0], sizes = [8, 8], strides = [1, 1]} : vector<8x16xf32> to vector<8x8xf32>
    %cst_65 = arith.constant dense<0.000000e+00> : vector<8x8xf32>
    %97 = tpu.matmul %95, %96, %cst_65 {dimension_numbers = #tpu.dot_dimension_numbers<[1], [1], [0], [0], [0, 0, 1, 0], [], []>} : vector<8x8xf32>, vector<8x8xf32>, vector<8x8xf32> -> vector<8x8xf32>
    %98 = vector.extract_strided_slice %84 {offsets = [0, 8], sizes = [8, 8], strides = [1, 1]} : vector<8x16xf32> to vector<8x8xf32>
    %99 = vector.extract_strided_slice %89 {offsets = [0, 8], sizes = [8, 8], strides = [1, 1]} : vector<8x16xf32> to vector<8x8xf32>
    %cst_66 = arith.constant dense<0.000000e+00> : vector<8x8xf32>
    %100 = tpu.matmul %98, %99, %cst_66 {dimension_numbers = #tpu.dot_dimension_numbers<[1], [1], [0], [0], [0, 0, 1, 0], [], []>} : vector<8x8xf32>, vector<8x8xf32>, vector<8x8xf32> -> vector<8x8xf32>
    %101 = vector.shape_cast %97 : vector<8x8xf32> to vector<1x8x8xf32>
    %102 = vector.shape_cast %100 : vector<8x8xf32> to vector<1x8x8xf32>
    %103 = tpu.concatenate %101, %102 in 0 : vector<1x8x8xf32>, vector<1x8x8xf32> -> vector<2x8x8xf32>
    %104 = vector.shape_cast %79 : vector<8x8xf32> to vector<1x8x8xf32>
    %105 = vector.broadcast %104 : vector<1x8x8xf32> to vector<2x8x8xf32>
    %106 = arith.addf %103, %105 : vector<2x8x8xf32>
    %cst_67 = arith.constant dense<0xFF800000> : vector<2x8xf32>
    %107 = vector.multi_reduction <maximumf>, %106, %cst_67 [2] : vector<2x8x8xf32> to vector<2x8xf32>
    %108 = vector.shape_cast %107 : vector<2x8xf32> to vector<2x8x1xf32>
    %109 = vector.broadcast %108 : vector<2x8x1xf32> to vector<2x8x8xf32>
    %110 = arith.subf %106, %109 : vector<2x8x8xf32>
    %111 = math.exp %110 : vector<2x8x8xf32>
    %cst_68 = arith.constant dense<0.000000e+00> : vector<2x8xf32>
    %112 = vector.multi_reduction <add>, %111, %cst_68 [2] : vector<2x8x8xf32> to vector<2x8xf32>
    %113 = vector.shape_cast %112 : vector<2x8xf32> to vector<2x8x1xf32>
    %114 = tpu.reciprocal %113 : vector<2x8x1xf32> -> vector<2x8x1xf32>
    %115 = vector.broadcast %114 : vector<2x8x1xf32> to vector<2x8x8xf32>
    %116 = arith.mulf %111, %115 : vector<2x8x8xf32>
    %117 = vector.extract_strided_slice %116 {offsets = [0, 0, 0], sizes = [1, 8, 8], strides = [1, 1, 1]} : vector<2x8x8xf32> to vector<1x8x8xf32>
    %118 = vector.shape_cast %117 : vector<1x8x8xf32> to vector<8x8xf32>
    %119 = vector.extract_strided_slice %94 {offsets = [0, 0], sizes = [8, 8], strides = [1, 1]} : vector<8x16xf32> to vector<8x8xf32>
    %cst_69 = arith.constant dense<0.000000e+00> : vector<8x8xf32>
    %120 = tpu.matmul %118, %119, %cst_69 {dimension_numbers = #tpu.dot_dimension_numbers<[1], [0], [0], [1], [0, 0, 1, 1], [], []>} : vector<8x8xf32>, vector<8x8xf32>, vector<8x8xf32> -> vector<8x8xf32>
    %121 = vector.extract_strided_slice %116 {offsets = [1, 0, 0], sizes = [1, 8, 8], strides = [1, 1, 1]} : vector<2x8x8xf32> to vector<1x8x8xf32>
    %122 = vector.shape_cast %121 : vector<1x8x8xf32> to vector<8x8xf32>
    %123 = vector.extract_strided_slice %94 {offsets = [0, 8], sizes = [8, 8], strides = [1, 1]} : vector<8x16xf32> to vector<8x8xf32>
    %cst_70 = arith.constant dense<0.000000e+00> : vector<8x8xf32>
    %124 = tpu.matmul %122, %123, %cst_70 {dimension_numbers = #tpu.dot_dimension_numbers<[1], [0], [0], [1], [0, 0, 1, 1], [], []>} : vector<8x8xf32>, vector<8x8xf32>, vector<8x8xf32> -> vector<8x8xf32>
    %125 = tpu.concatenate %120, %124 in 1 : vector<8x8xf32>, vector<8x8xf32> -> vector<8x16xf32>
    %c0_71 = arith.constant 0 : index
    %c0_72 = arith.constant 0 : index
    %126 = vector.load %arg23[%c0_71, %c0_72] : memref<16x32xf32, #tpu.memory_space<vmem>>, vector<16x32xf32>
    %cst_73 = arith.constant dense<0.000000e+00> : vector<8x32xf32>
    %127 = tpu.matmul %125, %126, %cst_73 {dimension_numbers = #tpu.dot_dimension_numbers<[1], [0], [0], [1], [0, 0, 1, 1], [], []>} : vector<8x16xf32>, vector<16x32xf32>, vector<8x32xf32> -> vector<8x32xf32>
    %c0_74 = arith.constant 0 : index
    %c0_75 = arith.constant 0 : index
    %c0_76 = arith.constant 0 : index
    %c0_77 = arith.constant 0 : index
    %128 = vector.load %arg28[%c0_74, %c0_75, %c0_76, %c0_77] : memref<1x4x8x8xf32, #tpu.memory_space<vmem>>, vector<1x4x8x8xf32>
    %129 = vector.shape_cast %128 : vector<1x4x8x8xf32> to vector<4x8x8xf32>
    %130 = vector.shape_cast %52 : vector<4x8x8xf32> to vector<1x4x8x8xf32>
    tpu.vector_store %arg28[%c0_74, %c0_75, %c0_76, %c0_77], %130 {strides = array<i32>} : memref<1x4x8x8xf32, #tpu.memory_space<vmem>>, vector<1x4x8x8xf32>,
    %c0_78 = arith.constant 0 : index
    %c0_79 = arith.constant 0 : index
    %c0_80 = arith.constant 0 : index
    %c0_81 = arith.constant 0 : index
    %131 = vector.load %arg29[%c0_78, %c0_79, %c0_80, %c0_81] : memref<1x2x8x8xf32, #tpu.memory_space<vmem>>, vector<1x2x8x8xf32>
    %132 = vector.shape_cast %131 : vector<1x2x8x8xf32> to vector<2x8x8xf32>
    %133 = vector.shape_cast %116 : vector<2x8x8xf32> to vector<1x2x8x8xf32>
    tpu.vector_store %arg29[%c0_78, %c0_79, %c0_80, %c0_81], %133 {strides = array<i32>} : memref<1x2x8x8xf32, #tpu.memory_space<vmem>>, vector<1x2x8x8xf32>,
    %134 = arith.addf %71, %127 : vector<8x32xf32>
    %c0_82 = arith.constant 0 : index
    %c0_83 = arith.constant 0 : index
    %135 = vector.load %arg24[%c0_82, %c0_83] : memref<1x32xf32, #tpu.memory_space<vmem>>, vector<1x32xf32>
    %136 = vector.broadcast %135 : vector<1x32xf32> to vector<8x32xf32>
    %137 = arith.addf %134, %136 : vector<8x32xf32>
    %138 = arith.addf %137, %1 : vector<8x32xf32>
    %c0_84 = arith.constant 0 : index
    %c0_85 = arith.constant 0 : index
    %139 = vector.load %arg25[%c0_84, %c0_85] : memref<1x32xf32, #tpu.memory_space<vmem>>, vector<1x32xf32>
    %c0_86 = arith.constant 0 : index
    %c0_87 = arith.constant 0 : index
    %140 = vector.load %arg26[%c0_86, %c0_87] : memref<1x32xf32, #tpu.memory_space<vmem>>, vector<1x32xf32>
    %cst_88 = arith.constant dense<0.000000e+00> : vector<8xf32>
    %141 = vector.multi_reduction <add>, %138, %cst_88 [1] : vector<8x32xf32> to vector<8xf32>
    %142 = vector.shape_cast %141 : vector<8xf32> to vector<8x1xf32>
    %cst_89 = arith.constant 3.200000e+01 : f32
    %143 = vector.broadcast %cst_89 : f32 to vector<8x1xf32>
    %144 = arith.divf %142, %143 : vector<8x1xf32>
    %145 = vector.broadcast %144 : vector<8x1xf32> to vector<8x32xf32>
    %146 = arith.subf %138, %145 : vector<8x32xf32>
    %147 = arith.mulf %146, %146 : vector<8x32xf32>
    %cst_90 = arith.constant dense<0.000000e+00> : vector<8xf32>
    %148 = vector.multi_reduction <add>, %147, %cst_90 [1] : vector<8x32xf32> to vector<8xf32>
    %149 = vector.shape_cast %148 : vector<8xf32> to vector<8x1xf32>
    %cst_91 = arith.constant 3.200000e+01 : f32
    %150 = vector.broadcast %cst_91 : f32 to vector<8x1xf32>
    %151 = arith.divf %149, %150 : vector<8x1xf32>
    %152 = vector.broadcast %144 : vector<8x1xf32> to vector<8x32xf32>
    %153 = arith.subf %138, %152 : vector<8x32xf32>
    %cst_92 = arith.constant 9.99999974E-6 : f32
    %154 = vector.broadcast %cst_92 : f32 to vector<8x1xf32>
    %155 = arith.addf %151, %154 : vector<8x1xf32>
    %156 = math.rsqrt %155 : vector<8x1xf32>
    %157 = vector.broadcast %156 : vector<8x1xf32> to vector<8x32xf32>
    %158 = arith.mulf %153, %157 : vector<8x32xf32>
    %159 = vector.broadcast %139 : vector<1x32xf32> to vector<8x32xf32>
    %160 = arith.mulf %158, %159 : vector<8x32xf32>
    %161 = vector.broadcast %140 : vector<1x32xf32> to vector<8x32xf32>
    %162 = arith.addf %160, %161 : vector<8x32xf32>
    %c0_93 = arith.constant 0 : index
    %c0_94 = arith.constant 0 : index
    %c0_95 = arith.constant 0 : index
    %163 = vector.load %arg27[%c0_93, %c0_94, %c0_95] : memref<1x8x32xf32, #tpu.memory_space<vmem>>, vector<1x8x32xf32>
    %164 = vector.shape_cast %163 : vector<1x8x32xf32> to vector<8x32xf32>
    %165 = vector.shape_cast %162 : vector<8x32xf32> to vector<1x8x32xf32>
    tpu.vector_store %arg27[%c0_93, %c0_94, %c0_95], %165 {strides = array<i32>} : memref<1x8x32xf32, #tpu.memory_space<vmem>>, vector<1x8x32xf32>,
    return
  }
  func.func @transform_0(%arg0: i32, %arg1: i32) -> (i32, i32, i32) {
    %c0_i32 = arith.constant 0 : i32
    %c0_i32_0 = arith.constant 0 : i32
    return %arg0, %arg1, %c0_i32 : i32, i32, i32
  }
  func.func @transform_1(%arg0: i32, %arg1: i32) -> (i32, i32, i32) {
    %c0_i32 = arith.constant 0 : i32
    %c0_i32_0 = arith.constant 0 : i32
    %c0_i32_1 = arith.constant 0 : i32
    return %arg0, %c0_i32, %c0_i32_0 : i32, i32, i32
  }
  func.func @transform_2(%arg0: i32, %arg1: i32) -> (i32, i32, i32) {
    %c0_i32 = arith.constant 0 : i32
    %c0_i32_0 = arith.constant 0 : i32
    %c0_i32_1 = arith.constant 0 : i32
    return %arg0, %c0_i32, %c0_i32_0 : i32, i32, i32
  }
  func.func @transform_3(%arg0: i32, %arg1: i32) -> (i32, i32, i32) {
    %c0_i32 = arith.constant 0 : i32
    %c0_i32_0 = arith.constant 0 : i32
    return %arg0, %arg1, %c0_i32 : i32, i32, i32
  }
  func.func @transform_4(%arg0: i32, %arg1: i32) -> (i32, i32, i32) {
    %c0_i32 = arith.constant 0 : i32
    %c0_i32_0 = arith.constant 0 : i32
    return %arg0, %arg1, %c0_i32 : i32, i32, i32
  }
  func.func @transform_5(%arg0: i32, %arg1: i32) -> (i32, i32, i32) {
    %c0_i32 = arith.constant 0 : i32
    %c0_i32_0 = arith.constant 0 : i32
    %c0_i32_1 = arith.constant 0 : i32
    return %arg0, %c0_i32, %c0_i32_0 : i32, i32, i32
  }
  func.func @transform_6(%arg0: i32, %arg1: i32) -> (i32, i32, i32) {
    %c0_i32 = arith.constant 0 : i32
    %c0_i32_0 = arith.constant 0 : i32
    %c0_i32_1 = arith.constant 0 : i32
    return %arg0, %c0_i32, %c0_i32_0 : i32, i32, i32
  }
  func.func @transform_7(%arg0: i32, %arg1: i32) -> (i32, i32, i32) {
    %c0_i32 = arith.constant 0 : i32
    %c0_i32_0 = arith.constant 0 : i32
    return %arg0, %arg1, %c0_i32 : i32, i32, i32
  }
  func.func @transform_8(%arg0: i32, %arg1: i32) -> (i32, i32) {
    %c0_i32 = arith.constant 0 : i32
    %c0_i32_0 = arith.constant 0 : i32
    %c0_i32_1 = arith.constant 0 : i32
    return %c0_i32, %c0_i32_0 : i32, i32
  }
  func.func @transform_9(%arg0: i32, %arg1: i32) -> (i32, i32) {
    %c0_i32 = arith.constant 0 : i32
    %c0_i32_0 = arith.constant 0 : i32
    %c0_i32_1 = arith.constant 0 : i32
    return %c0_i32, %c0_i32_0 : i32, i32
  }
  func.func @transform_10(%arg0: i32, %arg1: i32) -> (i32, i32) {
    %c0_i32 = arith.constant 0 : i32
    %c0_i32_0 = arith.constant 0 : i32
    %c0_i32_1 = arith.constant 0 : i32
    return %c0_i32, %c0_i32_0 : i32, i32
  }
  func.func @transform_11(%arg0: i32, %arg1: i32) -> (i32, i32) {
    %c0_i32 = arith.constant 0 : i32
    %c0_i32_0 = arith.constant 0 : i32
    %c0_i32_1 = arith.constant 0 : i32
    return %c0_i32, %c0_i32_0 : i32, i32
  }
  func.func @transform_12(%arg0: i32, %arg1: i32) -> (i32, i32) {
    %c0_i32 = arith.constant 0 : i32
    %c0_i32_0 = arith.constant 0 : i32
    %c0_i32_1 = arith.constant 0 : i32
    return %c0_i32, %c0_i32_0 : i32, i32
  }
  func.func @transform_13(%arg0: i32, %arg1: i32) -> (i32, i32) {
    %c0_i32 = arith.constant 0 : i32
    %c0_i32_0 = arith.constant 0 : i32
    %c0_i32_1 = arith.constant 0 : i32
    return %c0_i32, %c0_i32_0 : i32, i32
  }
  func.func @transform_14(%arg0: i32, %arg1: i32) -> (i32, i32) {
    %c0_i32 = arith.constant 0 : i32
    %c0_i32_0 = arith.constant 0 : i32
    %c0_i32_1 = arith.constant 0 : i32
    return %c0_i32, %c0_i32_0 : i32, i32
  }
  func.func @transform_15(%arg0: i32, %arg1: i32) -> (i32, i32) {
    %c0_i32 = arith.constant 0 : i32
    %c0_i32_0 = arith.constant 0 : i32
    %c0_i32_1 = arith.constant 0 : i32
    return %c0_i32, %c0_i32_0 : i32, i32
  }
  func.func @transform_16(%arg0: i32, %arg1: i32) -> (i32, i32) {
    %c0_i32 = arith.constant 0 : i32
    %c0_i32_0 = arith.constant 0 : i32
    %c0_i32_1 = arith.constant 0 : i32
    return %c0_i32, %c0_i32_0 : i32, i32
  }
  func.func @transform_17(%arg0: i32, %arg1: i32) -> (i32, i32) {
    %c0_i32 = arith.constant 0 : i32
    %c0_i32_0 = arith.constant 0 : i32
    %c0_i32_1 = arith.constant 0 : i32
    return %c0_i32, %c0_i32_0 : i32, i32
  }
  func.func @transform_18(%arg0: i32, %arg1: i32) -> (i32, i32) {
    %c0_i32 = arith.constant 0 : i32
    %c0_i32_0 = arith.constant 0 : i32
    %c0_i32_1 = arith.constant 0 : i32
    return %c0_i32, %c0_i32_0 : i32, i32
  }
  func.func @transform_19(%arg0: i32, %arg1: i32) -> (i32, i32) {
    %c0_i32 = arith.constant 0 : i32
    %c0_i32_0 = arith.constant 0 : i32
    %c0_i32_1 = arith.constant 0 : i32
    return %c0_i32, %c0_i32_0 : i32, i32
  }
  func.func @transform_20(%arg0: i32, %arg1: i32) -> (i32, i32) {
    %c0_i32 = arith.constant 0 : i32
    %c0_i32_0 = arith.constant 0 : i32
    %c0_i32_1 = arith.constant 0 : i32
    return %c0_i32, %c0_i32_0 : i32, i32
  }
  func.func @transform_21(%arg0: i32, %arg1: i32) -> (i32, i32) {
    %c0_i32 = arith.constant 0 : i32
    %c0_i32_0 = arith.constant 0 : i32
    %c0_i32_1 = arith.constant 0 : i32
    return %c0_i32, %c0_i32_0 : i32, i32
  }
  func.func @transform_22(%arg0: i32, %arg1: i32) -> (i32, i32) {
    %c0_i32 = arith.constant 0 : i32
    %c0_i32_0 = arith.constant 0 : i32
    %c0_i32_1 = arith.constant 0 : i32
    return %c0_i32, %c0_i32_0 : i32, i32
  }
  func.func @transform_23(%arg0: i32, %arg1: i32) -> (i32, i32) {
    %c0_i32 = arith.constant 0 : i32
    %c0_i32_0 = arith.constant 0 : i32
    %c0_i32_1 = arith.constant 0 : i32
    return %c0_i32, %c0_i32_0 : i32, i32
  }
  func.func @transform_24(%arg0: i32, %arg1: i32) -> (i32, i32) {
    %c0_i32 = arith.constant 0 : i32
    %c0_i32_0 = arith.constant 0 : i32
    %c0_i32_1 = arith.constant 0 : i32
    return %c0_i32, %c0_i32_0 : i32, i32
  }
  func.func @transform_25(%arg0: i32, %arg1: i32) -> (i32, i32, i32) {
    %c0_i32 = arith.constant 0 : i32
    %c0_i32_0 = arith.constant 0 : i32
    return %arg0, %arg1, %c0_i32 : i32, i32, i32
  }
  func.func @transform_26(%arg0: i32, %arg1: i32) -> (i32, i32, i32, i32) {
    %c0_i32 = arith.constant 0 : i32
    %c0_i32_0 = arith.constant 0 : i32
    %c0_i32_1 = arith.constant 0 : i32
    return %arg0, %c0_i32, %arg1, %c0_i32_0 : i32, i32, i32, i32
  }
  func.func @transform_27(%arg0: i32, %arg1: i32) -> (i32, i32, i32, i32) {
    %c0_i32 = arith.constant 0 : i32
    %c0_i32_0 = arith.constant 0 : i32
    %c0_i32_1 = arith.constant 0 : i32
    return %arg0, %c0_i32, %arg1, %c0_i32_0 : i32, i32, i32, i32
  }
}

module attributes {stable_mosaic.version = 11 : i64} {
  func.func @_multi_encoder_attention_kernel(%arg0: i32, %arg1: i32, %arg2: memref<1x8x32xf32, #tpu.memory_space<vmem>>, %arg3: memref<1x8x32xf32, #tpu.memory_space<vmem>>, %arg4: memref<1x8x32xf32, #tpu.memory_space<vmem>>, %arg5: memref<1x8x8xf32, #tpu.memory_space<vmem>>, %arg6: memref<1x8x32xf32, #tpu.memory_space<vmem>>, %arg7: memref<1x8x32xf32, #tpu.memory_space<vmem>>, %arg8: memref<1x8x32xf32, #tpu.memory_space<vmem>>, %arg9: memref<1x8x8xf32, #tpu.memory_space<vmem>>, %arg10: memref<32x32xf32, #tpu.memory_space<vmem>>, %arg11: memref<1x32xf32, #tpu.memory_space<vmem>>, %arg12: memref<32x32xf32, #tpu.memory_space<vmem>>, %arg13: memref<1x32xf32, #tpu.memory_space<vmem>>, %arg14: memref<32x32xf32, #tpu.memory_space<vmem>>, %arg15: memref<1x32xf32, #tpu.memory_space<vmem>>, %arg16: memref<32x16xf32, #tpu.memory_space<vmem>>, %arg17: memref<1x16xf32, #tpu.memory_space<vmem>>, %arg18: memref<32x16xf32, #tpu.memory_space<vmem>>, %arg19: memref<1x16xf32, #tpu.memory_space<vmem>>, %arg20: memref<32x16xf32, #tpu.memory_space<vmem>>, %arg21: memref<1x16xf32, #tpu.memory_space<vmem>>, %arg22: memref<32x32xf32, #tpu.memory_space<vmem>>, %arg23: memref<16x32xf32, #tpu.memory_space<vmem>>, %arg24: memref<1x32xf32, #tpu.memory_space<vmem>>, %arg25: memref<1x32xf32, #tpu.memory_space<vmem>>, %arg26: memref<1x32xf32, #tpu.memory_space<vmem>>, %arg27: memref<1x8x32xf32, #tpu.memory_space<vmem>>, %arg28: memref<1x4x8x8xf32, #tpu.memory_space<vmem>>, %arg29: memref<1x2x8x8xf32, #tpu.memory_space<vmem>>) attributes {dimension_semantics = [#tpu.dimension_semantics<parallel>, #tpu.dimension_semantics<parallel>], iteration_bounds = array<i64: 2, 1>, scalar_prefetch = 0 : i64, scratch_operands = 0 : i64, tpu.core_type = #tpu.core_type<tc>, window_params = [{transform_indices = @transform_0, window_bounds = array<i64: 1, 8, 32>}, {transform_indices = @transform_1, window_bounds = array<i64: 1, 8, 32>}, {transform_indices = @transform_2, window_bounds = array<i64: 1, 8, 32>}, {transform_indices = @transform_3, window_bounds = array<i64: 1, 8, 8>}, {transform_indices = @transform_4, window_bounds = array<i64: 1, 8, 32>}, {transform_indices = @transform_5, window_bounds = array<i64: 1, 8, 32>}, {transform_indices = @transform_6, window_bounds = array<i64: 1, 8, 32>}, {transform_indices = @transform_7, window_bounds = array<i64: 1, 8, 8>}, {pipeline_mode = #tpu.pipeline_mode<synchronous>, transform_indices = @transform_8, window_bounds = array<i64: 32, 32>}, {pipeline_mode = #tpu.pipeline_mode<synchronous>, transform_indices = @transform_9, window_bounds = array<i64: 1, 32>}, {pipeline_mode = #tpu.pipeline_mode<synchronous>, transform_indices = @transform_10, window_bounds = array<i64: 32, 32>}, {pipeline_mode = #tpu.pipeline_mode<synchronous>, transform_indices = @transform_11, window_bounds = array<i64: 1, 32>}, {pipeline_mode = #tpu.pipeline_mode<synchronous>, transform_indices = @transform_12, window_bounds = array<i64: 32, 32>}, {pipeline_mode = #tpu.pipeline_mode<synchronous>, transform_indices = @transform_13, window_bounds = array<i64: 1, 32>}, {pipeline_mode = #tpu.pipeline_mode<synchronous>, transform_indices = @transform_14, window_bounds = array<i64: 32, 16>}, {pipeline_mode = #tpu.pipeline_mode<synchronous>, transform_indices = @transform_15, window_bounds = array<i64: 1, 16>}, {pipeline_mode = #tpu.pipeline_mode<synchronous>, transform_indices = @transform_16, window_bounds = array<i64: 32, 16>}, {pipeline_mode = #tpu.pipeline_mode<synchronous>, transform_indices = @transform_17, window_bounds = array<i64: 1, 16>}, {pipeline_mode = #tpu.pipeline_mode<synchronous>, transform_indices = @transform_18, window_bounds = array<i64: 32, 16>}, {pipeline_mode = #tpu.pipeline_mode<synchronous>, transform_indices = @transform_19, window_bounds = array<i64: 1, 16>}, {pipeline_mode = #tpu.pipeline_mode<synchronous>, transform_indices = @transform_20, window_bounds = array<i64: 32, 32>}, {pipeline_mode = #tpu.pipeline_mode<synchronous>, transform_indices = @transform_21, window_bounds = array<i64: 16, 32>}, {pipeline_mode = #tpu.pipeline_mode<synchronous>, transform_indices = @transform_22, window_bounds = array<i64: 1, 32>}, {pipeline_mode = #tpu.pipeline_mode<synchronous>, transform_indices = @transform_23, window_bounds = array<i64: 1, 32>}, {pipeline_mode = #tpu.pipeline_mode<synchronous>, transform_indices = @transform_24, window_bounds = array<i64: 1, 32>}, {transform_indices = @transform_25, window_bounds = array<i64: 1, 8, 32>}, {transform_indices = @transform_26, window_bounds = array<i64: 1, 4, 8, 8>}, {transform_indices = @transform_27, window_bounds = array<i64: 1, 2, 8, 8>}]} {
    %c0 = arith.constant 0 : index
    %c0_0 = arith.constant 0 : index
    %c0_1 = arith.constant 0 : index
    %0 = vector.load %arg2[%c0, %c0_0, %c0_1] : memref<1x8x32xf32, #tpu.memory_space<vmem>>, vector<1x8x32xf32>
    %1 = vector.shape_cast %0 : vector<1x8x32xf32> to vector<8x32xf32>
    %c0_2 = arith.constant 0 : index
    %c0_3 = arith.constant 0 : index
    %c0_4 = arith.constant 0 : index
    %2 = vector.load %arg3[%c0_2, %c0_3, %c0_4] : memref<1x8x32xf32, #tpu.memory_space<vmem>>, vector<1x8x32xf32>
    %3 = vector.shape_cast %2 : vector<1x8x32xf32> to vector<8x32xf32>
    %c0_5 = arith.constant 0 : index
    %c0_6 = arith.constant 0 : index
    %c0_7 = arith.constant 0 : index
    %4 = vector.load %arg4[%c0_5, %c0_6, %c0_7] : memref<1x8x32xf32, #tpu.memory_space<vmem>>, vector<1x8x32xf32>
    %5 = vector.shape_cast %4 : vector<1x8x32xf32> to vector<8x32xf32>
    %c0_8 = arith.constant 0 : index
    %c0_9 = arith.constant 0 : index
    %c0_10 = arith.constant 0 : index
    %6 = vector.load %arg5[%c0_8, %c0_9, %c0_10] : memref<1x8x8xf32, #tpu.memory_space<vmem>>, vector<1x8x8xf32>
    %7 = vector.shape_cast %6 : vector<1x8x8xf32> to vector<8x8xf32>
    %c0_11 = arith.constant 0 : index
    %c0_12 = arith.constant 0 : index
    %8 = vector.load %arg10[%c0_11, %c0_12] : memref<32x32xf32, #tpu.memory_space<vmem>>, vector<32x32xf32>
    %cst = arith.constant dense<0.000000e+00> : vector<8x32xf32>
    %9 = tpu.matmul %1, %8, %cst {dimension_numbers = #tpu.dot_dimension_numbers<[1], [0], [0], [1], [0, 0, 1, 1], [], []>} : vector<8x32xf32>, vector<32x32xf32>, vector<8x32xf32> -> vector<8x32xf32>
    %c0_13 = arith.constant 0 : index
    %c0_14 = arith.constant 0 : index
    %10 = vector.load %arg11[%c0_13, %c0_14] : memref<1x32xf32, #tpu.memory_space<vmem>>, vector<1x32xf32>
    %11 = vector.broadcast %10 : vector<1x32xf32> to vector<8x32xf32>
    %12 = arith.addf %9, %11 : vector<8x32xf32>
    %c0_15 = arith.constant 0 : index
    %c0_16 = arith.constant 0 : index
    %13 = vector.load %arg12[%c0_15, %c0_16] : memref<32x32xf32, #tpu.memory_space<vmem>>, vector<32x32xf32>
    %cst_17 = arith.constant dense<0.000000e+00> : vector<8x32xf32>
    %14 = tpu.matmul %3, %13, %cst_17 {dimension_numbers = #tpu.dot_dimension_numbers<[1], [0], [0], [1], [0, 0, 1, 1], [], []>} : vector<8x32xf32>, vector<32x32xf32>, vector<8x32xf32> -> vector<8x32xf32>
    %c0_18 = arith.constant 0 : index
    %c0_19 = arith.constant 0 : index
    %15 = vector.load %arg13[%c0_18, %c0_19] : memref<1x32xf32, #tpu.memory_space<vmem>>, vector<1x32xf32>
    %16 = vector.broadcast %15 : vector<1x32xf32> to vector<8x32xf32>
    %17 = arith.addf %14, %16 : vector<8x32xf32>
    %c0_20 = arith.constant 0 : index
    %c0_21 = arith.constant 0 : index
    %18 = vector.load %arg14[%c0_20, %c0_21] : memref<32x32xf32, #tpu.memory_space<vmem>>, vector<32x32xf32>
    %cst_22 = arith.constant dense<0.000000e+00> : vector<8x32xf32>
    %19 = tpu.matmul %5, %18, %cst_22 {dimension_numbers = #tpu.dot_dimension_numbers<[1], [0], [0], [1], [0, 0, 1, 1], [], []>} : vector<8x32xf32>, vector<32x32xf32>, vector<8x32xf32> -> vector<8x32xf32>
    %c0_23 = arith.constant 0 : index
    %c0_24 = arith.constant 0 : index
    %20 = vector.load %arg15[%c0_23, %c0_24] : memref<1x32xf32, #tpu.memory_space<vmem>>, vector<1x32xf32>
    %21 = vector.broadcast %20 : vector<1x32xf32> to vector<8x32xf32>
    %22 = arith.addf %19, %21 : vector<8x32xf32>
    %23 = vector.extract_strided_slice %12 {offsets = [0, 0], sizes = [8, 8], strides = [1, 1]} : vector<8x32xf32> to vector<8x8xf32>
    %24 = vector.extract_strided_slice %17 {offsets = [0, 0], sizes = [8, 8], strides = [1, 1]} : vector<8x32xf32> to vector<8x8xf32>
    %cst_25 = arith.constant dense<0.000000e+00> : vector<8x8xf32>
    %25 = tpu.matmul %23, %24, %cst_25 {dimension_numbers = #tpu.dot_dimension_numbers<[1], [1], [0], [0], [0, 0, 1, 0], [], []>} : vector<8x8xf32>, vector<8x8xf32>, vector<8x8xf32> -> vector<8x8xf32>
    %26 = vector.extract_strided_slice %12 {offsets = [0, 8], sizes = [8, 8], strides = [1, 1]} : vector<8x32xf32> to vector<8x8xf32>
    %27 = vector.extract_strided_slice %17 {offsets = [0, 8], sizes = [8, 8], strides = [1, 1]} : vector<8x32xf32> to vector<8x8xf32>
    %cst_26 = arith.constant dense<0.000000e+00> : vector<8x8xf32>
    %28 = tpu.matmul %26, %27, %cst_26 {dimension_numbers = #tpu.dot_dimension_numbers<[1], [1], [0], [0], [0, 0, 1, 0], [], []>} : vector<8x8xf32>, vector<8x8xf32>, vector<8x8xf32> -> vector<8x8xf32>
    %29 = vector.extract_strided_slice %12 {offsets = [0, 16], sizes = [8, 8], strides = [1, 1]} : vector<8x32xf32> to vector<8x8xf32>
    %30 = vector.extract_strided_slice %17 {offsets = [0, 16], sizes = [8, 8], strides = [1, 1]} : vector<8x32xf32> to vector<8x8xf32>
    %cst_27 = arith.constant dense<0.000000e+00> : vector<8x8xf32>
    %31 = tpu.matmul %29, %30, %cst_27 {dimension_numbers = #tpu.dot_dimension_numbers<[1], [1], [0], [0], [0, 0, 1, 0], [], []>} : vector<8x8xf32>, vector<8x8xf32>, vector<8x8xf32> -> vector<8x8xf32>
    %32 = vector.extract_strided_slice %12 {offsets = [0, 24], sizes = [8, 8], strides = [1, 1]} : vector<8x32xf32> to vector<8x8xf32>
    %33 = vector.extract_strided_slice %17 {offsets = [0, 24], sizes = [8, 8], strides = [1, 1]} : vector<8x32xf32> to vector<8x8xf32>
    %cst_28 = arith.constant dense<0.000000e+00> : vector<8x8xf32>
    %34 = tpu.matmul %32, %33, %cst_28 {dimension_numbers = #tpu.dot_dimension_numbers<[1], [1], [0], [0], [0, 0, 1, 0], [], []>} : vector<8x8xf32>, vector<8x8xf32>, vector<8x8xf32> -> vector<8x8xf32>
    %35 = vector.shape_cast %25 : vector<8x8xf32> to vector<1x8x8xf32>
    %36 = vector.shape_cast %28 : vector<8x8xf32> to vector<1x8x8xf32>
    %37 = vector.shape_cast %31 : vector<8x8xf32> to vector<1x8x8xf32>
    %38 = vector.shape_cast %34 : vector<8x8xf32> to vector<1x8x8xf32>
    %39 = tpu.concatenate %35, %36, %37, %38 in 0 : vector<1x8x8xf32>, vector<1x8x8xf32>, vector<1x8x8xf32>, vector<1x8x8xf32> -> vector<4x8x8xf32>
    %40 = vector.shape_cast %7 : vector<8x8xf32> to vector<1x8x8xf32>
    %41 = vector.broadcast %40 : vector<1x8x8xf32> to vector<4x8x8xf32>
    %42 = arith.addf %39, %41 : vector<4x8x8xf32>
    %cst_29 = arith.constant dense<0xFF800000> : vector<4x8xf32>
    %43 = vector.multi_reduction <maximumf>, %42, %cst_29 [2] : vector<4x8x8xf32> to vector<4x8xf32>
    %44 = vector.shape_cast %43 : vector<4x8xf32> to vector<4x8x1xf32>
    %45 = vector.broadcast %44 : vector<4x8x1xf32> to vector<4x8x8xf32>
    %46 = arith.subf %42, %45 : vector<4x8x8xf32>
    %47 = math.exp %46 : vector<4x8x8xf32>
    %cst_30 = arith.constant dense<0.000000e+00> : vector<4x8xf32>
    %48 = vector.multi_reduction <add>, %47, %cst_30 [2] : vector<4x8x8xf32> to vector<4x8xf32>
    %49 = vector.shape_cast %48 : vector<4x8xf32> to vector<4x8x1xf32>
    %50 = tpu.reciprocal %49 : vector<4x8x1xf32> -> vector<4x8x1xf32>
    %51 = vector.broadcast %50 : vector<4x8x1xf32> to vector<4x8x8xf32>
    %52 = arith.mulf %47, %51 : vector<4x8x8xf32>
    %53 = vector.extract_strided_slice %52 {offsets = [0, 0, 0], sizes = [1, 8, 8], strides = [1, 1, 1]} : vector<4x8x8xf32> to vector<1x8x8xf32>
    %54 = vector.shape_cast %53 : vector<1x8x8xf32> to vector<8x8xf32>
    %55 = vector.extract_strided_slice %22 {offsets = [0, 0], sizes = [8, 8], strides = [1, 1]} : vector<8x32xf32> to vector<8x8xf32>
    %cst_31 = arith.constant dense<0.000000e+00> : vector<8x8xf32>
    %56 = tpu.matmul %54, %55, %cst_31 {dimension_numbers = #tpu.dot_dimension_numbers<[1], [0], [0], [1], [0, 0, 1, 1], [], []>} : vector<8x8xf32>, vector<8x8xf32>, vector<8x8xf32> -> vector<8x8xf32>
    %57 = vector.extract_strided_slice %52 {offsets = [1, 0, 0], sizes = [1, 8, 8], strides = [1, 1, 1]} : vector<4x8x8xf32> to vector<1x8x8xf32>
    %58 = vector.shape_cast %57 : vector<1x8x8xf32> to vector<8x8xf32>
    %59 = vector.extract_strided_slice %22 {offsets = [0, 8], sizes = [8, 8], strides = [1, 1]} : vector<8x32xf32> to vector<8x8xf32>
    %cst_32 = arith.constant dense<0.000000e+00> : vector<8x8xf32>
    %60 = tpu.matmul %58, %59, %cst_32 {dimension_numbers = #tpu.dot_dimension_numbers<[1], [0], [0], [1], [0, 0, 1, 1], [], []>} : vector<8x8xf32>, vector<8x8xf32>, vector<8x8xf32> -> vector<8x8xf32>
    %61 = vector.extract_strided_slice %52 {offsets = [2, 0, 0], sizes = [1, 8, 8], strides = [1, 1, 1]} : vector<4x8x8xf32> to vector<1x8x8xf32>
    %62 = vector.shape_cast %61 : vector<1x8x8xf32> to vector<8x8xf32>
    %63 = vector.extract_strided_slice %22 {offsets = [0, 16], sizes = [8, 8], strides = [1, 1]} : vector<8x32xf32> to vector<8x8xf32>
    %cst_33 = arith.constant dense<0.000000e+00> : vector<8x8xf32>
    %64 = tpu.matmul %62, %63, %cst_33 {dimension_numbers = #tpu.dot_dimension_numbers<[1], [0], [0], [1], [0, 0, 1, 1], [], []>} : vector<8x8xf32>, vector<8x8xf32>, vector<8x8xf32> -> vector<8x8xf32>
    %65 = vector.extract_strided_slice %52 {offsets = [3, 0, 0], sizes = [1, 8, 8], strides = [1, 1, 1]} : vector<4x8x8xf32> to vector<1x8x8xf32>
    %66 = vector.shape_cast %65 : vector<1x8x8xf32> to vector<8x8xf32>
    %67 = vector.extract_strided_slice %22 {offsets = [0, 24], sizes = [8, 8], strides = [1, 1]} : vector<8x32xf32> to vector<8x8xf32>
    %cst_34 = arith.constant dense<0.000000e+00> : vector<8x8xf32>
    %68 = tpu.matmul %66, %67, %cst_34 {dimension_numbers = #tpu.dot_dimension_numbers<[1], [0], [0], [1], [0, 0, 1, 1], [], []>} : vector<8x8xf32>, vector<8x8xf32>, vector<8x8xf32> -> vector<8x8xf32>
    %69 = tpu.concatenate %56, %60, %64, %68 in 1 : vector<8x8xf32>, vector<8x8xf32>, vector<8x8xf32>, vector<8x8xf32> -> vector<8x32xf32>
    %c0_35 = arith.constant 0 : index
    %c0_36 = arith.constant 0 : index
    %70 = vector.load %arg22[%c0_35, %c0_36] : memref<32x32xf32, #tpu.memory_space<vmem>>, vector<32x32xf32>
    %cst_37 = arith.constant dense<0.000000e+00> : vector<8x32xf32>
    %71 = tpu.matmul %69, %70, %cst_37 {dimension_numbers = #tpu.dot_dimension_numbers<[1], [0], [0], [1], [0, 0, 1, 1], [], []>} : vector<8x32xf32>, vector<32x32xf32>, vector<8x32xf32> -> vector<8x32xf32>
    %c0_38 = arith.constant 0 : index
    %c0_39 = arith.constant 0 : index
    %c0_40 = arith.constant 0 : index
    %72 = vector.load %arg6[%c0_38, %c0_39, %c0_40] : memref<1x8x32xf32, #tpu.memory_space<vmem>>, vector<1x8x32xf32>
    %73 = vector.shape_cast %72 : vector<1x8x32xf32> to vector<8x32xf32>
    %c0_41 = arith.constant 0 : index
    %c0_42 = arith.constant 0 : index
    %c0_43 = arith.constant 0 : index
    %74 = vector.load %arg7[%c0_41, %c0_42, %c0_43] : memref<1x8x32xf32, #tpu.memory_space<vmem>>, vector<1x8x32xf32>
    %75 = vector.shape_cast %74 : vector<1x8x32xf32> to vector<8x32xf32>
    %c0_44 = arith.constant 0 : index
    %c0_45 = arith.constant 0 : index
    %c0_46 = arith.constant 0 : index
    %76 = vector.load %arg8[%c0_44, %c0_45, %c0_46] : memref<1x8x32xf32, #tpu.memory_space<vmem>>, vector<1x8x32xf32>
    %77 = vector.shape_cast %76 : vector<1x8x32xf32> to vector<8x32xf32>
    %c0_47 = arith.constant 0 : index
    %c0_48 = arith.constant 0 : index
    %c0_49 = arith.constant 0 : index
    %78 = vector.load %arg9[%c0_47, %c0_48, %c0_49] : memref<1x8x8xf32, #tpu.memory_space<vmem>>, vector<1x8x8xf32>
    %79 = vector.shape_cast %78 : vector<1x8x8xf32> to vector<8x8xf32>
    %c0_50 = arith.constant 0 : index
    %c0_51 = arith.constant 0 : index
    %80 = vector.load %arg16[%c0_50, %c0_51] : memref<32x16xf32, #tpu.memory_space<vmem>>, vector<32x16xf32>
    %cst_52 = arith.constant dense<0.000000e+00> : vector<8x16xf32>
    %81 = tpu.matmul %73, %80, %cst_52 {dimension_numbers = #tpu.dot_dimension_numbers<[1], [0], [0], [1], [0, 0, 1, 1], [], []>} : vector<8x32xf32>, vector<32x16xf32>, vector<8x16xf32> -> vector<8x16xf32>
    %c0_53 = arith.constant 0 : index
    %c0_54 = arith.constant 0 : index
    %82 = vector.load %arg17[%c0_53, %c0_54] : memref<1x16xf32, #tpu.memory_space<vmem>>, vector<1x16xf32>
    %83 = vector.broadcast %82 : vector<1x16xf32> to vector<8x16xf32>
    %84 = arith.addf %81, %83 : vector<8x16xf32>
    %c0_55 = arith.constant 0 : index
    %c0_56 = arith.constant 0 : index
    %85 = vector.load %arg18[%c0_55, %c0_56] : memref<32x16xf32, #tpu.memory_space<vmem>>, vector<32x16xf32>
    %cst_57 = arith.constant dense<0.000000e+00> : vector<8x16xf32>
    %86 = tpu.matmul %75, %85, %cst_57 {dimension_numbers = #tpu.dot_dimension_numbers<[1], [0], [0], [1], [0, 0, 1, 1], [], []>} : vector<8x32xf32>, vector<32x16xf32>, vector<8x16xf32> -> vector<8x16xf32>
    %c0_58 = arith.constant 0 : index
    %c0_59 = arith.constant 0 : index
    %87 = vector.load %arg19[%c0_58, %c0_59] : memref<1x16xf32, #tpu.memory_space<vmem>>, vector<1x16xf32>
    %88 = vector.broadcast %87 : vector<1x16xf32> to vector<8x16xf32>
    %89 = arith.addf %86, %88 : vector<8x16xf32>
    %c0_60 = arith.constant 0 : index
    %c0_61 = arith.constant 0 : index
    %90 = vector.load %arg20[%c0_60, %c0_61] : memref<32x16xf32, #tpu.memory_space<vmem>>, vector<32x16xf32>
    %cst_62 = arith.constant dense<0.000000e+00> : vector<8x16xf32>
    %91 = tpu.matmul %77, %90, %cst_62 {dimension_numbers = #tpu.dot_dimension_numbers<[1], [0], [0], [1], [0, 0, 1, 1], [], []>} : vector<8x32xf32>, vector<32x16xf32>, vector<8x16xf32> -> vector<8x16xf32>
    %c0_63 = arith.constant 0 : index
    %c0_64 = arith.constant 0 : index
    %92 = vector.load %arg21[%c0_63, %c0_64] : memref<1x16xf32, #tpu.memory_space<vmem>>, vector<1x16xf32>
    %93 = vector.broadcast %92 : vector<1x16xf32> to vector<8x16xf32>
    %94 = arith.addf %91, %93 : vector<8x16xf32>
    %95 = vector.extract_strided_slice %84 {offsets = [0, 0], sizes = [8, 8], strides = [1, 1]} : vector<8x16xf32> to vector<8x8xf32>
    %96 = vector.extract_strided_slice %89 {offsets = [0, 0], sizes = [8, 8], strides = [1, 1]} : vector<8x16xf32> to vector<8x8xf32>
    %cst_65 = arith.constant dense<0.000000e+00> : vector<8x8xf32>
    %97 = tpu.matmul %95, %96, %cst_65 {dimension_numbers = #tpu.dot_dimension_numbers<[1], [1], [0], [0], [0, 0, 1, 0], [], []>} : vector<8x8xf32>, vector<8x8xf32>, vector<8x8xf32> -> vector<8x8xf32>
    %98 = vector.extract_strided_slice %84 {offsets = [0, 8], sizes = [8, 8], strides = [1, 1]} : vector<8x16xf32> to vector<8x8xf32>
    %99 = vector.extract_strided_slice %89 {offsets = [0, 8], sizes = [8, 8], strides = [1, 1]} : vector<8x16xf32> to vector<8x8xf32>
    %cst_66 = arith.constant dense<0.000000e+00> : vector<8x8xf32>
    %100 = tpu.matmul %98, %99, %cst_66 {dimension_numbers = #tpu.dot_dimension_numbers<[1], [1], [0], [0], [0, 0, 1, 0], [], []>} : vector<8x8xf32>, vector<8x8xf32>, vector<8x8xf32> -> vector<8x8xf32>
    %101 = vector.shape_cast %97 : vector<8x8xf32> to vector<1x8x8xf32>
    %102 = vector.shape_cast %100 : vector<8x8xf32> to vector<1x8x8xf32>
    %103 = tpu.concatenate %101, %102 in 0 : vector<1x8x8xf32>, vector<1x8x8xf32> -> vector<2x8x8xf32>
    %104 = vector.shape_cast %79 : vector<8x8xf32> to vector<1x8x8xf32>
    %105 = vector.broadcast %104 : vector<1x8x8xf32> to vector<2x8x8xf32>
    %106 = arith.addf %103, %105 : vector<2x8x8xf32>
    %cst_67 = arith.constant dense<0xFF800000> : vector<2x8xf32>
    %107 = vector.multi_reduction <maximumf>, %106, %cst_67 [2] : vector<2x8x8xf32> to vector<2x8xf32>
    %108 = vector.shape_cast %107 : vector<2x8xf32> to vector<2x8x1xf32>
    %109 = vector.broadcast %108 : vector<2x8x1xf32> to vector<2x8x8xf32>
    %110 = arith.subf %106, %109 : vector<2x8x8xf32>
    %111 = math.exp %110 : vector<2x8x8xf32>
    %cst_68 = arith.constant dense<0.000000e+00> : vector<2x8xf32>
    %112 = vector.multi_reduction <add>, %111, %cst_68 [2] : vector<2x8x8xf32> to vector<2x8xf32>
    %113 = vector.shape_cast %112 : vector<2x8xf32> to vector<2x8x1xf32>
    %114 = tpu.reciprocal %113 : vector<2x8x1xf32> -> vector<2x8x1xf32>
    %115 = vector.broadcast %114 : vector<2x8x1xf32> to vector<2x8x8xf32>
    %116 = arith.mulf %111, %115 : vector<2x8x8xf32>
    %117 = vector.extract_strided_slice %116 {offsets = [0, 0, 0], sizes = [1, 8, 8], strides = [1, 1, 1]} : vector<2x8x8xf32> to vector<1x8x8xf32>
    %118 = vector.shape_cast %117 : vector<1x8x8xf32> to vector<8x8xf32>
    %119 = vector.extract_strided_slice %94 {offsets = [0, 0], sizes = [8, 8], strides = [1, 1]} : vector<8x16xf32> to vector<8x8xf32>
    %cst_69 = arith.constant dense<0.000000e+00> : vector<8x8xf32>
    %120 = tpu.matmul %118, %119, %cst_69 {dimension_numbers = #tpu.dot_dimension_numbers<[1], [0], [0], [1], [0, 0, 1, 1], [], []>} : vector<8x8xf32>, vector<8x8xf32>, vector<8x8xf32> -> vector<8x8xf32>
    %121 = vector.extract_strided_slice %116 {offsets = [1, 0, 0], sizes = [1, 8, 8], strides = [1, 1, 1]} : vector<2x8x8xf32> to vector<1x8x8xf32>
    %122 = vector.shape_cast %121 : vector<1x8x8xf32> to vector<8x8xf32>
    %123 = vector.extract_strided_slice %94 {offsets = [0, 8], sizes = [8, 8], strides = [1, 1]} : vector<8x16xf32> to vector<8x8xf32>
    %cst_70 = arith.constant dense<0.000000e+00> : vector<8x8xf32>
    %124 = tpu.matmul %122, %123, %cst_70 {dimension_numbers = #tpu.dot_dimension_numbers<[1], [0], [0], [1], [0, 0, 1, 1], [], []>} : vector<8x8xf32>, vector<8x8xf32>, vector<8x8xf32> -> vector<8x8xf32>
    %125 = tpu.concatenate %120, %124 in 1 : vector<8x8xf32>, vector<8x8xf32> -> vector<8x16xf32>
    %c0_71 = arith.constant 0 : index
    %c0_72 = arith.constant 0 : index
    %126 = vector.load %arg23[%c0_71, %c0_72] : memref<16x32xf32, #tpu.memory_space<vmem>>, vector<16x32xf32>
    %cst_73 = arith.constant dense<0.000000e+00> : vector<8x32xf32>
    %127 = tpu.matmul %125, %126, %cst_73 {dimension_numbers = #tpu.dot_dimension_numbers<[1], [0], [0], [1], [0, 0, 1, 1], [], []>} : vector<8x16xf32>, vector<16x32xf32>, vector<8x32xf32> -> vector<8x32xf32>
    %c0_74 = arith.constant 0 : index
    %c0_75 = arith.constant 0 : index
    %c0_76 = arith.constant 0 : index
    %c0_77 = arith.constant 0 : index
    %128 = vector.load %arg28[%c0_74, %c0_75, %c0_76, %c0_77] : memref<1x4x8x8xf32, #tpu.memory_space<vmem>>, vector<1x4x8x8xf32>
    %129 = vector.shape_cast %128 : vector<1x4x8x8xf32> to vector<4x8x8xf32>
    %130 = vector.shape_cast %52 : vector<4x8x8xf32> to vector<1x4x8x8xf32>
    tpu.vector_store %arg28[%c0_74, %c0_75, %c0_76, %c0_77], %130 {strides = array<i32>} : memref<1x4x8x8xf32, #tpu.memory_space<vmem>>, vector<1x4x8x8xf32>,
    %c0_78 = arith.constant 0 : index
    %c0_79 = arith.constant 0 : index
    %c0_80 = arith.constant 0 : index
    %c0_81 = arith.constant 0 : index
    %131 = vector.load %arg29[%c0_78, %c0_79, %c0_80, %c0_81] : memref<1x2x8x8xf32, #tpu.memory_space<vmem>>, vector<1x2x8x8xf32>
    %132 = vector.shape_cast %131 : vector<1x2x8x8xf32> to vector<2x8x8xf32>
    %133 = vector.shape_cast %116 : vector<2x8x8xf32> to vector<1x2x8x8xf32>
    tpu.vector_store %arg29[%c0_78, %c0_79, %c0_80, %c0_81], %133 {strides = array<i32>} : memref<1x2x8x8xf32, #tpu.memory_space<vmem>>, vector<1x2x8x8xf32>,
    %134 = arith.addf %71, %127 : vector<8x32xf32>
    %c0_82 = arith.constant 0 : index
    %c0_83 = arith.constant 0 : index
    %135 = vector.load %arg24[%c0_82, %c0_83] : memref<1x32xf32, #tpu.memory_space<vmem>>, vector<1x32xf32>
    %136 = vector.broadcast %135 : vector<1x32xf32> to vector<8x32xf32>
    %137 = arith.addf %134, %136 : vector<8x32xf32>
    %138 = arith.addf %137, %1 : vector<8x32xf32>
    %c0_84 = arith.constant 0 : index
    %c0_85 = arith.constant 0 : index
    %139 = vector.load %arg25[%c0_84, %c0_85] : memref<1x32xf32, #tpu.memory_space<vmem>>, vector<1x32xf32>
    %c0_86 = arith.constant 0 : index
    %c0_87 = arith.constant 0 : index
    %140 = vector.load %arg26[%c0_86, %c0_87] : memref<1x32xf32, #tpu.memory_space<vmem>>, vector<1x32xf32>
    %cst_88 = arith.constant dense<0.000000e+00> : vector<8xf32>
    %141 = vector.multi_reduction <add>, %138, %cst_88 [1] : vector<8x32xf32> to vector<8xf32>
    %142 = vector.shape_cast %141 : vector<8xf32> to vector<8x1xf32>
    %cst_89 = arith.constant 3.200000e+01 : f32
    %143 = vector.broadcast %cst_89 : f32 to vector<8x1xf32>
    %144 = arith.divf %142, %143 : vector<8x1xf32>
    %145 = vector.broadcast %144 : vector<8x1xf32> to vector<8x32xf32>
    %146 = arith.subf %138, %145 : vector<8x32xf32>
    %147 = arith.mulf %146, %146 : vector<8x32xf32>
    %cst_90 = arith.constant dense<0.000000e+00> : vector<8xf32>
    %148 = vector.multi_reduction <add>, %147, %cst_90 [1] : vector<8x32xf32> to vector<8xf32>
    %149 = vector.shape_cast %148 : vector<8xf32> to vector<8x1xf32>
    %cst_91 = arith.constant 3.200000e+01 : f32
    %150 = vector.broadcast %cst_91 : f32 to vector<8x1xf32>
    %151 = arith.divf %149, %150 : vector<8x1xf32>
    %152 = vector.broadcast %144 : vector<8x1xf32> to vector<8x32xf32>
    %153 = arith.subf %138, %152 : vector<8x32xf32>
    %cst_92 = arith.constant 9.99999974E-6 : f32
    %154 = vector.broadcast %cst_92 : f32 to vector<8x1xf32>
    %155 = arith.addf %151, %154 : vector<8x1xf32>
    %156 = math.rsqrt %155 : vector<8x1xf32>
    %157 = vector.broadcast %156 : vector<8x1xf32> to vector<8x32xf32>
    %158 = arith.mulf %153, %157 : vector<8x32xf32>
    %159 = vector.broadcast %139 : vector<1x32xf32> to vector<8x32xf32>
    %160 = arith.mulf %158, %159 : vector<8x32xf32>
    %161 = vector.broadcast %140 : vector<1x32xf32> to vector<8x32xf32>
    %162 = arith.addf %160, %161 : vector<8x32xf32>
    %c0_93 = arith.constant 0 : index
    %c0_94 = arith.constant 0 : index
    %c0_95 = arith.constant 0 : index
    %163 = vector.load %arg27[%c0_93, %c0_94, %c0_95] : memref<1x8x32xf32, #tpu.memory_space<vmem>>, vector<1x8x32xf32>
    %164 = vector.shape_cast %163 : vector<1x8x32xf32> to vector<8x32xf32>
    %165 = vector.shape_cast %162 : vector<8x32xf32> to vector<1x8x32xf32>
    tpu.vector_store %arg27[%c0_93, %c0_94, %c0_95], %165 {strides = array<i32>} : memref<1x8x32xf32, #tpu.memory_space<vmem>>, vector<1x8x32xf32>,
    return
  }
  func.func @transform_0(%arg0: i32, %arg1: i32) -> (i32, i32, i32) {
    %c0_i32 = arith.constant 0 : i32
    %c0_i32_0 = arith.constant 0 : i32
    return %arg0, %arg1, %c0_i32 : i32, i32, i32
  }
  func.func @transform_1(%arg0: i32, %arg1: i32) -> (i32, i32, i32) {
    %c0_i32 = arith.constant 0 : i32
    %c0_i32_0 = arith.constant 0 : i32
    %c0_i32_1 = arith.constant 0 : i32
    return %arg0, %c0_i32, %c0_i32_0 : i32, i32, i32
  }
  func.func @transform_2(%arg0: i32, %arg1: i32) -> (i32, i32, i32) {
    %c0_i32 = arith.constant 0 : i32
    %c0_i32_0 = arith.constant 0 : i32
    %c0_i32_1 = arith.constant 0 : i32
    return %arg0, %c0_i32, %c0_i32_0 : i32, i32, i32
  }
  func.func @transform_3(%arg0: i32, %arg1: i32) -> (i32, i32, i32) {
    %c0_i32 = arith.constant 0 : i32
    %c0_i32_0 = arith.constant 0 : i32
    return %arg0, %arg1, %c0_i32 : i32, i32, i32
  }
  func.func @transform_4(%arg0: i32, %arg1: i32) -> (i32, i32, i32) {
    %c0_i32 = arith.constant 0 : i32
    %c0_i32_0 = arith.constant 0 : i32
    return %arg0, %arg1, %c0_i32 : i32, i32, i32
  }
  func.func @transform_5(%arg0: i32, %arg1: i32) -> (i32, i32, i32) {
    %c0_i32 = arith.constant 0 : i32
    %c0_i32_0 = arith.constant 0 : i32
    %c0_i32_1 = arith.constant 0 : i32
    return %arg0, %c0_i32, %c0_i32_0 : i32, i32, i32
  }
  func.func @transform_6(%arg0: i32, %arg1: i32) -> (i32, i32, i32) {
    %c0_i32 = arith.constant 0 : i32
    %c0_i32_0 = arith.constant 0 : i32
    %c0_i32_1 = arith.constant 0 : i32
    return %arg0, %c0_i32, %c0_i32_0 : i32, i32, i32
  }
  func.func @transform_7(%arg0: i32, %arg1: i32) -> (i32, i32, i32) {
    %c0_i32 = arith.constant 0 : i32
    %c0_i32_0 = arith.constant 0 : i32
    return %arg0, %arg1, %c0_i32 : i32, i32, i32
  }
  func.func @transform_8(%arg0: i32, %arg1: i32) -> (i32, i32) {
    %c0_i32 = arith.constant 0 : i32
    %c0_i32_0 = arith.constant 0 : i32
    %c0_i32_1 = arith.constant 0 : i32
    return %c0_i32, %c0_i32_0 : i32, i32
  }
  func.func @transform_9(%arg0: i32, %arg1: i32) -> (i32, i32) {
    %c0_i32 = arith.constant 0 : i32
    %c0_i32_0 = arith.constant 0 : i32
    %c0_i32_1 = arith.constant 0 : i32
    return %c0_i32, %c0_i32_0 : i32, i32
  }
  func.func @transform_10(%arg0: i32, %arg1: i32) -> (i32, i32) {
    %c0_i32 = arith.constant 0 : i32
    %c0_i32_0 = arith.constant 0 : i32
    %c0_i32_1 = arith.constant 0 : i32
    return %c0_i32, %c0_i32_0 : i32, i32
  }
  func.func @transform_11(%arg0: i32, %arg1: i32) -> (i32, i32) {
    %c0_i32 = arith.constant 0 : i32
    %c0_i32_0 = arith.constant 0 : i32
    %c0_i32_1 = arith.constant 0 : i32
    return %c0_i32, %c0_i32_0 : i32, i32
  }
  func.func @transform_12(%arg0: i32, %arg1: i32) -> (i32, i32) {
    %c0_i32 = arith.constant 0 : i32
    %c0_i32_0 = arith.constant 0 : i32
    %c0_i32_1 = arith.constant 0 : i32
    return %c0_i32, %c0_i32_0 : i32, i32
  }
  func.func @transform_13(%arg0: i32, %arg1: i32) -> (i32, i32) {
    %c0_i32 = arith.constant 0 : i32
    %c0_i32_0 = arith.constant 0 : i32
    %c0_i32_1 = arith.constant 0 : i32
    return %c0_i32, %c0_i32_0 : i32, i32
  }
  func.func @transform_14(%arg0: i32, %arg1: i32) -> (i32, i32) {
    %c0_i32 = arith.constant 0 : i32
    %c0_i32_0 = arith.constant 0 : i32
    %c0_i32_1 = arith.constant 0 : i32
    return %c0_i32, %c0_i32_0 : i32, i32
  }
  func.func @transform_15(%arg0: i32, %arg1: i32) -> (i32, i32) {
    %c0_i32 = arith.constant 0 : i32
    %c0_i32_0 = arith.constant 0 : i32
    %c0_i32_1 = arith.constant 0 : i32
    return %c0_i32, %c0_i32_0 : i32, i32
  }
  func.func @transform_16(%arg0: i32, %arg1: i32) -> (i32, i32) {
    %c0_i32 = arith.constant 0 : i32
    %c0_i32_0 = arith.constant 0 : i32
    %c0_i32_1 = arith.constant 0 : i32
    return %c0_i32, %c0_i32_0 : i32, i32
  }
  func.func @transform_17(%arg0: i32, %arg1: i32) -> (i32, i32) {
    %c0_i32 = arith.constant 0 : i32
    %c0_i32_0 = arith.constant 0 : i32
    %c0_i32_1 = arith.constant 0 : i32
    return %c0_i32, %c0_i32_0 : i32, i32
  }
  func.func @transform_18(%arg0: i32, %arg1: i32) -> (i32, i32) {
    %c0_i32 = arith.constant 0 : i32
    %c0_i32_0 = arith.constant 0 : i32
    %c0_i32_1 = arith.constant 0 : i32
    return %c0_i32, %c0_i32_0 : i32, i32
  }
  func.func @transform_19(%arg0: i32, %arg1: i32) -> (i32, i32) {
    %c0_i32 = arith.constant 0 : i32
    %c0_i32_0 = arith.constant 0 : i32
    %c0_i32_1 = arith.constant 0 : i32
    return %c0_i32, %c0_i32_0 : i32, i32
  }
  func.func @transform_20(%arg0: i32, %arg1: i32) -> (i32, i32) {
    %c0_i32 = arith.constant 0 : i32
    %c0_i32_0 = arith.constant 0 : i32
    %c0_i32_1 = arith.constant 0 : i32
    return %c0_i32, %c0_i32_0 : i32, i32
  }
  func.func @transform_21(%arg0: i32, %arg1: i32) -> (i32, i32) {
    %c0_i32 = arith.constant 0 : i32
    %c0_i32_0 = arith.constant 0 : i32
    %c0_i32_1 = arith.constant 0 : i32
    return %c0_i32, %c0_i32_0 : i32, i32
  }
  func.func @transform_22(%arg0: i32, %arg1: i32) -> (i32, i32) {
    %c0_i32 = arith.constant 0 : i32
    %c0_i32_0 = arith.constant 0 : i32
    %c0_i32_1 = arith.constant 0 : i32
    return %c0_i32, %c0_i32_0 : i32, i32
  }
  func.func @transform_23(%arg0: i32, %arg1: i32) -> (i32, i32) {
    %c0_i32 = arith.constant 0 : i32
    %c0_i32_0 = arith.constant 0 : i32
    %c0_i32_1 = arith.constant 0 : i32
    return %c0_i32, %c0_i32_0 : i32, i32
  }
  func.func @transform_24(%arg0: i32, %arg1: i32) -> (i32, i32) {
    %c0_i32 = arith.constant 0 : i32
    %c0_i32_0 = arith.constant 0 : i32
    %c0_i32_1 = arith.constant 0 : i32
    return %c0_i32, %c0_i32_0 : i32, i32
  }
  func.func @transform_25(%arg0: i32, %arg1: i32) -> (i32, i32, i32) {
    %c0_i32 = arith.constant 0 : i32
    %c0_i32_0 = arith.constant 0 : i32
    return %arg0, %arg1, %c0_i32 : i32, i32, i32
  }
  func.func @transform_26(%arg0: i32, %arg1: i32) -> (i32, i32, i32, i32) {
    %c0_i32 = arith.constant 0 : i32
    %c0_i32_0 = arith.constant 0 : i32
    %c0_i32_1 = arith.constant 0 : i32
    return %arg0, %c0_i32, %arg1, %c0_i32_0 : i32, i32, i32, i32
  }
  func.func @transform_27(%arg0: i32, %arg1: i32) -> (i32, i32, i32, i32) {
    %c0_i32 = arith.constant 0 : i32
    %c0_i32_0 = arith.constant 0 : i32
    %c0_i32_1 = arith.constant 0 : i32
    return %arg0, %c0_i32, %arg1, %c0_i32_0 : i32, i32, i32, i32
  }
}

</mosaic_0001>

<llo_original>
// kernel: tpu_custom_call.1
$region0: #{tpu_custom_call.1}
  #allocation0 [shape = 'u32[]', space=smem, size = 0x4, offset = 0x4, fixed_abs, tag = 'smem constant byte address 0x4 - core index']
  #allocation1 [shape = 'u32[144,128]{1,0:T(1,128)}', space=vmem, size = 0x12000, scoped, tag = 'internal scratch']
  %s0 = inlined_call_operand.hbm [shape: f32[2,8,32], index: 0, kind: input, shape index: {}]
  %s1 = inlined_call_operand.hbm [shape: f32[2,8,32], index: 1, kind: input, shape index: {}]
  %s2 = inlined_call_operand.hbm [shape: f32[2,8,32], index: 2, kind: input, shape index: {}]
  %s3 = inlined_call_operand.hbm [shape: f32[2,8,8], index: 3, kind: input, shape index: {}]
  %s4 = inlined_call_operand.hbm [shape: f32[2,8,32], index: 4, kind: input, shape index: {}]
  %s5 = inlined_call_operand.hbm [shape: f32[2,8,32], index: 5, kind: input, shape index: {}]
  %s6 = inlined_call_operand.hbm [shape: f32[2,8,32], index: 6, kind: input, shape index: {}]
  %s7 = inlined_call_operand.hbm [shape: f32[2,8,8], index: 7, kind: input, shape index: {}]
  %s8 = inlined_call_operand.vmem [shape: f32[32,32], index: 8, kind: input, shape index: {}]
  %s9 = inlined_call_operand.vmem [shape: f32[1,32], index: 9, kind: input, shape index: {}]
  %s10 = inlined_call_operand.vmem [shape: f32[32,32], index: 10, kind: input, shape index: {}]
  %s11 = inlined_call_operand.hbm [shape: f32[1,32], index: 11, kind: input, shape index: {}]
  %s12 = inlined_call_operand.vmem [shape: f32[32,32], index: 12, kind: input, shape index: {}]
  %s13 = inlined_call_operand.hbm [shape: f32[1,32], index: 13, kind: input, shape index: {}]
  %s14 = inlined_call_operand.vmem [shape: f32[32,16], index: 14, kind: input, shape index: {}]
  %s15 = inlined_call_operand.vmem [shape: f32[1,16], index: 15, kind: input, shape index: {}]
  %s16 = inlined_call_operand.vmem [shape: f32[32,16], index: 16, kind: input, shape index: {}]
  %s17 = inlined_call_operand.vmem [shape: f32[1,16], index: 17, kind: input, shape index: {}]
  %s18 = inlined_call_operand.vmem [shape: f32[32,16], index: 18, kind: input, shape index: {}]
  %s19 = inlined_call_operand.vmem [shape: f32[1,16], index: 19, kind: input, shape index: {}]
  %s20 = inlined_call_operand.vmem [shape: f32[32,32], index: 20, kind: input, shape index: {}]
  %s21 = inlined_call_operand.vmem [shape: f32[16,32], index: 21, kind: input, shape index: {}]
  %s22 = inlined_call_operand.vmem [shape: f32[1,32], index: 22, kind: input, shape index: {}]
  %s23 = inlined_call_operand.vmem [shape: f32[1,32], index: 23, kind: input, shape index: {}]
  %s24 = inlined_call_operand.vmem [shape: f32[1,32], index: 24, kind: input, shape index: {}]
  %s25 = inlined_call_operand.hbm [shape: f32[2,8,32], index: 25, kind: output, shape index: {0}]
  %s26 = inlined_call_operand.hbm [shape: f32[2,4,8,8], index: 26, kind: output, shape index: {1}]
  %s27 = inlined_call_operand.hbm [shape: f32[2,2,8,8], index: 27, kind: output, shape index: {2}]
  %28 = xla_tuple %s25, %s26, %s27
  %s29 = sld [smem:[#allocation0]]
  $region189: #{tpu_custom_call.1} parent=0
    _
  %s31 = ssub.s32 1, %s29
  %s32 = scalar_select 0, %s31, %s29
  $region1: #{tpu_custom_call.1} parent=0
    #allocation2 [shape = 'u8[8192]{0}', space=vmem, size = 0x2000, scoped, tag = 'input window, operand 0']
    #allocation3 [shape = 's32[2]{0}', space=sflag, size = 0x8, scoped, tag = 'scoped memory for tpu_custom_call.1']
    #allocation4 [shape = 's32[2]{0}', space=sflag, size = 0x8, scoped, tag = 'scoped memory for tpu_custom_call.1']
    #allocation5 [shape = 'u8[8192]{0}', space=vmem, size = 0x2000, scoped, tag = 'input window, operand 1']
    #allocation6 [shape = 's32[2]{0}', space=sflag, size = 0x8, scoped, tag = 'scoped memory for tpu_custom_call.1']
    #allocation7 [shape = 'u8[8192]{0}', space=vmem, size = 0x2000, scoped, tag = 'input window, operand 2']
    #allocation8 [shape = 'u8[8192]{0}', space=vmem, size = 0x2000, scoped, tag = 'input window, operand 3']
    #allocation9 [shape = 's32[2]{0}', space=sflag, size = 0x8, scoped, tag = 'scoped memory for tpu_custom_call.1']
    #allocation10 [shape = 'u8[8192]{0}', space=vmem, size = 0x2000, scoped, tag = 'input window, operand 4']
    #allocation11 [shape = 'u8[8192]{0}', space=vmem, size = 0x2000, scoped, tag = 'input window, operand 5']
    #allocation12 [shape = 's32[2]{0}', space=sflag, size = 0x8, scoped, tag = 'scoped memory for tpu_custom_call.1']
    #allocation13 [shape = 'u8[8192]{0}', space=vmem, size = 0x2000, scoped, tag = 'input window, operand 6']
    #allocation14 [shape = 'u8[8192]{0}', space=vmem, size = 0x2000, scoped, tag = 'input window, operand 7']
    #allocation15 [shape = 's32[2]{0}', space=sflag, size = 0x8, scoped, tag = 'scoped memory for tpu_custom_call.1']
    #allocation16 [shape = 'u8[512]{0}', space=vmem, size = 0x400, scoped, tag = 'input window, operand 11, single buffered']
    #allocation17 [shape = 'u8[512]{0}', space=vmem, size = 0x400, scoped, tag = 'input window, operand 13, single buffered']
    #allocation18 [shape = 's32[1]{0}', space=sflag, size = 0x4, scoped, tag = 'scoped memory for tpu_custom_call.1']
    #allocation19 [shape = 'u8[8192]{0}', space=vmem, size = 0x2000, scoped, tag = 'output window, operand 0']
    #allocation20 [shape = 'u8[32768]{0}', space=vmem, size = 0x8000, scoped, tag = 'output window, operand 1']
    #allocation21 [shape = 's32[2]{0}', space=sflag, size = 0x8, scoped, tag = 'scoped memory for tpu_custom_call.1']
    #allocation22 [shape = 'u8[16384]{0}', space=vmem, size = 0x4000, scoped, tag = 'output window, operand 2']
    %33 = vsyncpa [#allocation3], 0
    %s34 = scalar_lea.sflag [#allocation3], 1
    %35 = vsyncpa %s34, 0
    %36 = vsyncpa [#allocation6], 0
    %s37 = scalar_lea.sflag [#allocation6], 1
    %38 = vsyncpa %s37, 0
    %39 = vsyncpa [#allocation9], 0
    %s40 = scalar_lea.sflag [#allocation9], 1
    %41 = vsyncpa %s40, 0
    %42 = vsyncpa [#allocation12], 0
    %s43 = scalar_lea.sflag [#allocation12], 1
    %44 = vsyncpa %s43, 0
    %45 = vsyncpa [#allocation15], 0
    %s46 = scalar_lea.sflag [#allocation15], 1
    %47 = vsyncpa %s46, 0
    %48 = vsyncpa [#allocation18], 0
    %49 = vsyncpa [#allocation4], 0
    %s50 = scalar_lea.sflag [#allocation4], 1
    %51 = vsyncpa %s50, 0
    %52 = vsyncpa [#allocation21], 0
    %s53 = scalar_lea.sflag [#allocation21], 1
    %54 = vsyncpa %s53, 0
    loop: start=0, step=1, limit=4
    $region2: #{tpu_custom_call.1} parent=1 // loop_pre_header
      _
    $region3: #{tpu_custom_call.1} parent=1 // loop_header
      %s56 = sphi 0, %s60
      %p57 = scmp.ge.s32.totalorder %s56, 4
      %s63 = sphi 0, %s75
      %s64 = sphi 0, %s71
      %s65 = sphi 0, %s63
      %s66 = sphi 0, %s64
      %s67 = sphi 0, %s65
      %s68 = sphi 0, %s66
      %s80 = sphi 0, %s82
      %s83 = sphi 0, %s80
      %s84 = sphi 0, %s83
      %s100 = sphi 0, %s84
      %s106 = sphi 0, %s108
      %s109 = sphi 0, %s106
      %s110 = sphi 0, %s109
      %s126 = sphi 0, %s110
      %s132 = sphi 0, %s134
      %s135 = sphi 0, %s132
      %s136 = sphi 0, %s135
      %s152 = sphi 0, %s136
      %s160 = sphi 0, %s162
      %s163 = sphi 0, %s160
      %s164 = sphi 0, %s163
      %s180 = sphi 0, %s164
      %s188 = sphi 0, %s190
      %s191 = sphi 0, %s188
      %s192 = sphi 0, %s191
      %s208 = sphi 0, %s192
      %s214 = sphi 0, %s216
      %s217 = sphi 0, %s214
      %s218 = sphi 0, %s217
      %s234 = sphi 0, %s218
      %s240 = sphi 0, %s242
      %s243 = sphi 0, %s240
      %s244 = sphi 0, %s243
      %s260 = sphi 0, %s244
      %s268 = sphi 0, %s270
      %s271 = sphi 0, %s268
      %s272 = sphi 0, %s271
      %s288 = sphi 0, %s272
      %s292 = sphi 0, %s292
      %s294 = sphi 0, %s292
      %s295 = sphi 0, %s294
      %s309 = sphi 0, %s295
      %s313 = sphi 0, %s313
      %s315 = sphi 0, %s313
      %s316 = sphi 0, %s315
      %s330 = sphi 0, %s316
      %s334 = sphi 0, %s334
      %s336 = sphi 0, %s334
      %s337 = sphi 0, %s336
      %s351 = sphi 0, %s337
      %s355 = sphi 0, %s355
      %s357 = sphi 0, %s355
      %s358 = sphi 0, %s357
      %s372 = sphi 0, %s358
      %s376 = sphi 0, %s376
      %s378 = sphi 0, %s376
      %s379 = sphi 0, %s378
      %s393 = sphi 0, %s379
      %s397 = sphi 0, %s397
      %s399 = sphi 0, %s397
      %s400 = sphi 0, %s399
      %s414 = sphi 0, %s400
      %s418 = sphi 0, %s418
      %s420 = sphi 0, %s418
      %s421 = sphi 0, %s420
      %s435 = sphi 0, %s421
      %s439 = sphi 0, %s439
      %s441 = sphi 0, %s439
      %s442 = sphi 0, %s441
      %s456 = sphi 0, %s442
      %s460 = sphi 0, %s460
      %s462 = sphi 0, %s460
      %s463 = sphi 0, %s462
      %s477 = sphi 0, %s463
      %s481 = sphi 0, %s481
      %s483 = sphi 0, %s481
      %s484 = sphi 0, %s483
      %s498 = sphi 0, %s484
      %s502 = sphi 0, %s502
      %s504 = sphi 0, %s502
      %s505 = sphi 0, %s504
      %s519 = sphi 0, %s505
      %s523 = sphi 0, %s523
      %s525 = sphi 0, %s523
      %s526 = sphi 0, %s525
      %s540 = sphi 0, %s526
      %s544 = sphi 0, %s544
      %s546 = sphi 0, %s544
      %s547 = sphi 0, %s546
      %s561 = sphi 0, %s547
      %s565 = sphi 0, %s565
      %s567 = sphi 0, %s565
      %s568 = sphi 0, %s567
      %s582 = sphi 0, %s568
      %s586 = sphi 0, %s586
      %s588 = sphi 0, %s586
      %s589 = sphi 0, %s588
      %s603 = sphi 0, %s589
      %s607 = sphi 0, %s607
      %s609 = sphi 0, %s607
      %s610 = sphi 0, %s609
      %s624 = sphi 0, %s610
      %s628 = sphi 0, %s628
      %s630 = sphi 0, %s628
      %s631 = sphi 0, %s630
      %s645 = sphi 0, %s631
      %s653 = sphi 0, %s655
      %s656 = sphi 0, %s653
      %s657 = sphi 0, %s656
      %s673 = sphi 0, %s657
      %s681 = sphi 0, %s683
      %s684 = sphi 0, %s681
      %s685 = sphi 0, %s684
      %s701 = sphi 0, %s685
      %s709 = sphi 0, %s711
      %s712 = sphi 0, %s709
      %s713 = sphi 0, %s712
      %s729 = sphi 0, %s713
    $region4: #{tpu_custom_call.1} parent=1 // loop_header_branch
      %59 = sbr.rel (%p57) target = $region8
    $region5: #{tpu_custom_call.1} parent=1 // loop_body
      %s61 = ssub.s32 %s56, 1
      %s62 = ssub.s32 %s56, 2
      %s69 = sadd.s32 1, %s64
      %p70 = scmp.ge.s32.totalorder %s69, 1
      %s71 = scalar_select %p70, 0, %s69
      %s72 = sadd.s32 1, %s63
      %s73 = scalar_select %p70, %s72, %s63
      %p74 = scmp.ge.s32.totalorder %s73, 2
      %s75 = scalar_select %p74, 0, %s73
      %s76 = ssub.s32 %s63, %s75
      %s77 = ssub.s32 %s64, %s71
      %s78 = sor.u32 %s76, %s77
      %p79 = scmp.eq.s32.totalorder %s78, 0
      %s81 = sadd.s32 %s80, 1
      %s82 = scalar_select %p79, %s80, %s81
      %p85 = pneg %p79
      %p86 = scmp.eq.s32.totalorder %s56, 1
      %p87 = por %p85, %p86
      %p88 = scmp.ne.s32.totalorder %s80, %s83
      %p89 = scmp.eq.s32.totalorder %s56, 0
      %p90 = por %p88, %p89
      %p91 = scmp.ne.s32.totalorder %s80, %s83
      %p92 = scmp.eq.s32.totalorder %s61, 1
      %p93 = por %p91, %p92
      %p94 = scmp.ne.s32.totalorder %s83, %s84
      %p95 = scmp.eq.s32.totalorder %s61, 0
      %p96 = por %p94, %p95
      %p97 = scmp.ne.s32.totalorder %s83, %s84
      %p98 = scmp.eq.s32.totalorder %s62, 1
      %p99 = por %p97, %p98
      %p101 = scmp.ne.s32.totalorder %s84, %s100
      %p102 = scmp.eq.s32.totalorder %s62, 0
      %p103 = por %p101, %p102
      %s104 = ssub.s32 %s63, %s75
      %p105 = scmp.eq.s32.totalorder %s104, 0
      %s107 = sadd.s32 %s106, 1
      %s108 = scalar_select %p105, %s106, %s107
      %p111 = pneg %p105
      %p112 = scmp.eq.s32.totalorder %s56, 1
      %p113 = por %p111, %p112
      %p114 = scmp.ne.s32.totalorder %s106, %s109
      %p115 = scmp.eq.s32.totalorder %s56, 0
      %p116 = por %p114, %p115
      %p117 = scmp.ne.s32.totalorder %s106, %s109
      %p118 = scmp.eq.s32.totalorder %s61, 1
      %p119 = por %p117, %p118
      %p120 = scmp.ne.s32.totalorder %s109, %s110
      %p121 = scmp.eq.s32.totalorder %s61, 0
      %p122 = por %p120, %p121
      %p123 = scmp.ne.s32.totalorder %s109, %s110
      %p124 = scmp.eq.s32.totalorder %s62, 1
      %p125 = por %p123, %p124
      %p127 = scmp.ne.s32.totalorder %s110, %s126
      %p128 = scmp.eq.s32.totalorder %s62, 0
      %p129 = por %p127, %p128
      %s130 = ssub.s32 %s63, %s75
      %p131 = scmp.eq.s32.totalorder %s130, 0
      %s133 = sadd.s32 %s132, 1
      %s134 = scalar_select %p131, %s132, %s133
      %p137 = pneg %p131
      %p138 = scmp.eq.s32.totalorder %s56, 1
      %p139 = por %p137, %p138
      %p140 = scmp.ne.s32.totalorder %s132, %s135
      %p141 = scmp.eq.s32.totalorder %s56, 0
      %p142 = por %p140, %p141
      %p143 = scmp.ne.s32.totalorder %s132, %s135
      %p144 = scmp.eq.s32.totalorder %s61, 1
      %p145 = por %p143, %p144
      %p146 = scmp.ne.s32.totalorder %s135, %s136
      %p147 = scmp.eq.s32.totalorder %s61, 0
      %p148 = por %p146, %p147
      %p149 = scmp.ne.s32.totalorder %s135, %s136
      %p150 = scmp.eq.s32.totalorder %s62, 1
      %p151 = por %p149, %p150
      %p153 = scmp.ne.s32.totalorder %s136, %s152
      %p154 = scmp.eq.s32.totalorder %s62, 0
      %p155 = por %p153, %p154
      %s156 = ssub.s32 %s63, %s75
      %s157 = ssub.s32 %s64, %s71
      %s158 = sor.u32 %s156, %s157
      %p159 = scmp.eq.s32.totalorder %s158, 0
      %s161 = sadd.s32 %s160, 1
      %s162 = scalar_select %p159, %s160, %s161
      %p165 = pneg %p159
      %p166 = scmp.eq.s32.totalorder %s56, 1
      %p167 = por %p165, %p166
      %p168 = scmp.ne.s32.totalorder %s160, %s163
      %p169 = scmp.eq.s32.totalorder %s56, 0
      %p170 = por %p168, %p169
      %p171 = scmp.ne.s32.totalorder %s160, %s163
      %p172 = scmp.eq.s32.totalorder %s61, 1
      %p173 = por %p171, %p172
      %p174 = scmp.ne.s32.totalorder %s163, %s164
      %p175 = scmp.eq.s32.totalorder %s61, 0
      %p176 = por %p174, %p175
      %p177 = scmp.ne.s32.totalorder %s163, %s164
      %p178 = scmp.eq.s32.totalorder %s62, 1
      %p179 = por %p177, %p178
      %p181 = scmp.ne.s32.totalorder %s164, %s180
      %p182 = scmp.eq.s32.totalorder %s62, 0
      %p183 = por %p181, %p182
      %s184 = ssub.s32 %s63, %s75
      %s185 = ssub.s32 %s64, %s71
      %s186 = sor.u32 %s184, %s185
      %p187 = scmp.eq.s32.totalorder %s186, 0
      %s189 = sadd.s32 %s188, 1
      %s190 = scalar_select %p187, %s188, %s189
      %p193 = pneg %p187
      %p194 = scmp.eq.s32.totalorder %s56, 1
      %p195 = por %p193, %p194
      %p196 = scmp.ne.s32.totalorder %s188, %s191
      %p197 = scmp.eq.s32.totalorder %s56, 0
      %p198 = por %p196, %p197
      %p199 = scmp.ne.s32.totalorder %s188, %s191
      %p200 = scmp.eq.s32.totalorder %s61, 1
      %p201 = por %p199, %p200
      %p202 = scmp.ne.s32.totalorder %s191, %s192
      %p203 = scmp.eq.s32.totalorder %s61, 0
      %p204 = por %p202, %p203
      %p205 = scmp.ne.s32.totalorder %s191, %s192
      %p206 = scmp.eq.s32.totalorder %s62, 1
      %p207 = por %p205, %p206
      %p209 = scmp.ne.s32.totalorder %s192, %s208
      %p210 = scmp.eq.s32.totalorder %s62, 0
      %p211 = por %p209, %p210
      %s212 = ssub.s32 %s63, %s75
      %p213 = scmp.eq.s32.totalorder %s212, 0
      %s215 = sadd.s32 %s214, 1
      %s216 = scalar_select %p213, %s214, %s215
      %p219 = pneg %p213
      %p220 = scmp.eq.s32.totalorder %s56, 1
      %p221 = por %p219, %p220
      %p222 = scmp.ne.s32.totalorder %s214, %s217
      %p223 = scmp.eq.s32.totalorder %s56, 0
      %p224 = por %p222, %p223
      %p225 = scmp.ne.s32.totalorder %s214, %s217
      %p226 = scmp.eq.s32.totalorder %s61, 1
      %p227 = por %p225, %p226
      %p228 = scmp.ne.s32.totalorder %s217, %s218
      %p229 = scmp.eq.s32.totalorder %s61, 0
      %p230 = por %p228, %p229
      %p231 = scmp.ne.s32.totalorder %s217, %s218
      %p232 = scmp.eq.s32.totalorder %s62, 1
      %p233 = por %p231, %p232
      %p235 = scmp.ne.s32.totalorder %s218, %s234
      %p236 = scmp.eq.s32.totalorder %s62, 0
      %p237 = por %p235, %p236
      %s238 = ssub.s32 %s63, %s75
      %p239 = scmp.eq.s32.totalorder %s238, 0
      %s241 = sadd.s32 %s240, 1
      %s242 = scalar_select %p239, %s240, %s241
      %p245 = pneg %p239
      %p246 = scmp.eq.s32.totalorder %s56, 1
      %p247 = por %p245, %p246
      %p248 = scmp.ne.s32.totalorder %s240, %s243
      %p249 = scmp.eq.s32.totalorder %s56, 0
      %p250 = por %p248, %p249
      %p251 = scmp.ne.s32.totalorder %s240, %s243
      %p252 = scmp.eq.s32.totalorder %s61, 1
      %p253 = por %p251, %p252
      %p254 = scmp.ne.s32.totalorder %s243, %s244
      %p255 = scmp.eq.s32.totalorder %s61, 0
      %p256 = por %p254, %p255
      %p257 = scmp.ne.s32.totalorder %s243, %s244
      %p258 = scmp.eq.s32.totalorder %s62, 1
      %p259 = por %p257, %p258
      %p261 = scmp.ne.s32.totalorder %s244, %s260
      %p262 = scmp.eq.s32.totalorder %s62, 0
      %p263 = por %p261, %p262
      %s264 = ssub.s32 %s63, %s75
      %s265 = ssub.s32 %s64, %s71
      %s266 = sor.u32 %s264, %s265
      %p267 = scmp.eq.s32.totalorder %s266, 0
      %s269 = sadd.s32 %s268, 1
      %s270 = scalar_select %p267, %s268, %s269
      %p273 = pneg %p267
      %p274 = scmp.eq.s32.totalorder %s56, 1
      %p275 = por %p273, %p274
      %p276 = scmp.ne.s32.totalorder %s268, %s271
      %p277 = scmp.eq.s32.totalorder %s56, 0
      %p278 = por %p276, %p277
      %p279 = scmp.ne.s32.totalorder %s268, %s271
      %p280 = scmp.eq.s32.totalorder %s61, 1
      %p281 = por %p279, %p280
      %p282 = scmp.ne.s32.totalorder %s271, %s272
      %p283 = scmp.eq.s32.totalorder %s61, 0
      %p284 = por %p282, %p283
      %p285 = scmp.ne.s32.totalorder %s271, %s272
      %p286 = scmp.eq.s32.totalorder %s62, 1
      %p287 = por %p285, %p286
      %p289 = scmp.ne.s32.totalorder %s272, %s288
      %p290 = scmp.eq.s32.totalorder %s62, 0
      %p291 = por %p289, %p290
      %s293 = sadd.s32 %s292, 1
      %p296 = scmp.eq.s32.totalorder %s56, 1
      %p297 = scmp.ne.s32.totalorder %s292, %s294
      %p298 = scmp.eq.s32.totalorder %s56, 0
      %p299 = por %p297, %p298
      %p300 = scmp.ne.s32.totalorder %s292, %s294
      %p301 = scmp.eq.s32.totalorder %s61, 1
      %p302 = por %p300, %p301
      %p303 = scmp.ne.s32.totalorder %s294, %s295
      %p304 = scmp.eq.s32.totalorder %s61, 0
      %p305 = por %p303, %p304
      %p306 = scmp.ne.s32.totalorder %s294, %s295
      %p307 = scmp.eq.s32.totalorder %s62, 1
      %p308 = por %p306, %p307
      %p310 = scmp.ne.s32.totalorder %s295, %s309
      %p311 = scmp.eq.s32.totalorder %s62, 0
      %p312 = por %p310, %p311
      %s314 = sadd.s32 %s313, 1
      %p317 = scmp.eq.s32.totalorder %s56, 1
      %p318 = scmp.ne.s32.totalorder %s313, %s315
      %p319 = scmp.eq.s32.totalorder %s56, 0
      %p320 = por %p318, %p319
      %p321 = scmp.ne.s32.totalorder %s313, %s315
      %p322 = scmp.eq.s32.totalorder %s61, 1
      %p323 = por %p321, %p322
      %p324 = scmp.ne.s32.totalorder %s315, %s316
      %p325 = scmp.eq.s32.totalorder %s61, 0
      %p326 = por %p324, %p325
      %p327 = scmp.ne.s32.totalorder %s315, %s316
      %p328 = scmp.eq.s32.totalorder %s62, 1
      %p329 = por %p327, %p328
      %p331 = scmp.ne.s32.totalorder %s316, %s330
      %p332 = scmp.eq.s32.totalorder %s62, 0
      %p333 = por %p331, %p332
      %s335 = sadd.s32 %s334, 1
      %p338 = scmp.eq.s32.totalorder %s56, 1
      %p339 = scmp.ne.s32.totalorder %s334, %s336
      %p340 = scmp.eq.s32.totalorder %s56, 0
      %p341 = por %p339, %p340
      %p342 = scmp.ne.s32.totalorder %s334, %s336
      %p343 = scmp.eq.s32.totalorder %s61, 1
      %p344 = por %p342, %p343
      %p345 = scmp.ne.s32.totalorder %s336, %s337
      %p346 = scmp.eq.s32.totalorder %s61, 0
      %p347 = por %p345, %p346
      %p348 = scmp.ne.s32.totalorder %s336, %s337
      %p349 = scmp.eq.s32.totalorder %s62, 1
      %p350 = por %p348, %p349
      %p352 = scmp.ne.s32.totalorder %s337, %s351
      %p353 = scmp.eq.s32.totalorder %s62, 0
      %p354 = por %p352, %p353
      %s356 = sadd.s32 %s355, 1
      %p359 = scmp.eq.s32.totalorder %s56, 1
      %p360 = scmp.ne.s32.totalorder %s355, %s357
      %p361 = scmp.eq.s32.totalorder %s56, 0
      %p362 = por %p360, %p361
      %p363 = scmp.ne.s32.totalorder %s355, %s357
      %p364 = scmp.eq.s32.totalorder %s61, 1
      %p365 = por %p363, %p364
      %p366 = scmp.ne.s32.totalorder %s357, %s358
      %p367 = scmp.eq.s32.totalorder %s61, 0
      %p368 = por %p366, %p367
      %p369 = scmp.ne.s32.totalorder %s357, %s358
      %p370 = scmp.eq.s32.totalorder %s62, 1
      %p371 = por %p369, %p370
      %p373 = scmp.ne.s32.totalorder %s358, %s372
      %p374 = scmp.eq.s32.totalorder %s62, 0
      %p375 = por %p373, %p374
      %s377 = sadd.s32 %s376, 1
      %p380 = scmp.eq.s32.totalorder %s56, 1
      %p381 = scmp.ne.s32.totalorder %s376, %s378
      %p382 = scmp.eq.s32.totalorder %s56, 0
      %p383 = por %p381, %p382
      %p384 = scmp.ne.s32.totalorder %s376, %s378
      %p385 = scmp.eq.s32.totalorder %s61, 1
      %p386 = por %p384, %p385
      %p387 = scmp.ne.s32.totalorder %s378, %s379
      %p388 = scmp.eq.s32.totalorder %s61, 0
      %p389 = por %p387, %p388
      %p390 = scmp.ne.s32.totalorder %s378, %s379
      %p391 = scmp.eq.s32.totalorder %s62, 1
      %p392 = por %p390, %p391
      %p394 = scmp.ne.s32.totalorder %s379, %s393
      %p395 = scmp.eq.s32.totalorder %s62, 0
      %p396 = por %p394, %p395
      %s398 = sadd.s32 %s397, 1
      %p401 = scmp.eq.s32.totalorder %s56, 1
      %p402 = scmp.ne.s32.totalorder %s397, %s399
      %p403 = scmp.eq.s32.totalorder %s56, 0
      %p404 = por %p402, %p403
      %p405 = scmp.ne.s32.totalorder %s397, %s399
      %p406 = scmp.eq.s32.totalorder %s61, 1
      %p407 = por %p405, %p406
      %p408 = scmp.ne.s32.totalorder %s399, %s400
      %p409 = scmp.eq.s32.totalorder %s61, 0
      %p410 = por %p408, %p409
      %p411 = scmp.ne.s32.totalorder %s399, %s400
      %p412 = scmp.eq.s32.totalorder %s62, 1
      %p413 = por %p411, %p412
      %p415 = scmp.ne.s32.totalorder %s400, %s414
      %p416 = scmp.eq.s32.totalorder %s62, 0
      %p417 = por %p415, %p416
      %s419 = sadd.s32 %s418, 1
      %p422 = scmp.eq.s32.totalorder %s56, 1
      %p423 = scmp.ne.s32.totalorder %s418, %s420
      %p424 = scmp.eq.s32.totalorder %s56, 0
      %p425 = por %p423, %p424
      %p426 = scmp.ne.s32.totalorder %s418, %s420
      %p427 = scmp.eq.s32.totalorder %s61, 1
      %p428 = por %p426, %p427
      %p429 = scmp.ne.s32.totalorder %s420, %s421
      %p430 = scmp.eq.s32.totalorder %s61, 0
      %p431 = por %p429, %p430
      %p432 = scmp.ne.s32.totalorder %s420, %s421
      %p433 = scmp.eq.s32.totalorder %s62, 1
      %p434 = por %p432, %p433
      %p436 = scmp.ne.s32.totalorder %s421, %s435
      %p437 = scmp.eq.s32.totalorder %s62, 0
      %p438 = por %p436, %p437
      %s440 = sadd.s32 %s439, 1
      %p443 = scmp.eq.s32.totalorder %s56, 1
      %p444 = scmp.ne.s32.totalorder %s439, %s441
      %p445 = scmp.eq.s32.totalorder %s56, 0
      %p446 = por %p444, %p445
      %p447 = scmp.ne.s32.totalorder %s439, %s441
      %p448 = scmp.eq.s32.totalorder %s61, 1
      %p449 = por %p447, %p448
      %p450 = scmp.ne.s32.totalorder %s441, %s442
      %p451 = scmp.eq.s32.totalorder %s61, 0
      %p452 = por %p450, %p451
      %p453 = scmp.ne.s32.totalorder %s441, %s442
      %p454 = scmp.eq.s32.totalorder %s62, 1
      %p455 = por %p453, %p454
      %p457 = scmp.ne.s32.totalorder %s442, %s456
      %p458 = scmp.eq.s32.totalorder %s62, 0
      %p459 = por %p457, %p458
      %s461 = sadd.s32 %s460, 1
      %p464 = scmp.eq.s32.totalorder %s56, 1
      %p465 = scmp.ne.s32.totalorder %s460, %s462
      %p466 = scmp.eq.s32.totalorder %s56, 0
      %p467 = por %p465, %p466
      %p468 = scmp.ne.s32.totalorder %s460, %s462
      %p469 = scmp.eq.s32.totalorder %s61, 1
      %p470 = por %p468, %p469
      %p471 = scmp.ne.s32.totalorder %s462, %s463
      %p472 = scmp.eq.s32.totalorder %s61, 0
      %p473 = por %p471, %p472
      %p474 = scmp.ne.s32.totalorder %s462, %s463
      %p475 = scmp.eq.s32.totalorder %s62, 1
      %p476 = por %p474, %p475
      %p478 = scmp.ne.s32.totalorder %s463, %s477
      %p479 = scmp.eq.s32.totalorder %s62, 0
      %p480 = por %p478, %p479
      %s482 = sadd.s32 %s481, 1
      %p485 = scmp.eq.s32.totalorder %s56, 1
      %p486 = scmp.ne.s32.totalorder %s481, %s483
      %p487 = scmp.eq.s32.totalorder %s56, 0
      %p488 = por %p486, %p487
      %p489 = scmp.ne.s32.totalorder %s481, %s483
      %p490 = scmp.eq.s32.totalorder %s61, 1
      %p491 = por %p489, %p490
      %p492 = scmp.ne.s32.totalorder %s483, %s484
      %p493 = scmp.eq.s32.totalorder %s61, 0
      %p494 = por %p492, %p493
      %p495 = scmp.ne.s32.totalorder %s483, %s484
      %p496 = scmp.eq.s32.totalorder %s62, 1
      %p497 = por %p495, %p496
      %p499 = scmp.ne.s32.totalorder %s484, %s498
      %p500 = scmp.eq.s32.totalorder %s62, 0
      %p501 = por %p499, %p500
      %s503 = sadd.s32 %s502, 1
      %p506 = scmp.eq.s32.totalorder %s56, 1
      %p507 = scmp.ne.s32.totalorder %s502, %s504
      %p508 = scmp.eq.s32.totalorder %s56, 0
      %p509 = por %p507, %p508
      %p510 = scmp.ne.s32.totalorder %s502, %s504
      %p511 = scmp.eq.s32.totalorder %s61, 1
      %p512 = por %p510, %p511
      %p513 = scmp.ne.s32.totalorder %s504, %s505
      %p514 = scmp.eq.s32.totalorder %s61, 0
      %p515 = por %p513, %p514
      %p516 = scmp.ne.s32.totalorder %s504, %s505
      %p517 = scmp.eq.s32.totalorder %s62, 1
      %p518 = por %p516, %p517
      %p520 = scmp.ne.s32.totalorder %s505, %s519
      %p521 = scmp.eq.s32.totalorder %s62, 0
      %p522 = por %p520, %p521
      %s524 = sadd.s32 %s523, 1
      %p527 = scmp.eq.s32.totalorder %s56, 1
      %p528 = scmp.ne.s32.totalorder %s523, %s525
      %p529 = scmp.eq.s32.totalorder %s56, 0
      %p530 = por %p528, %p529
      %p531 = scmp.ne.s32.totalorder %s523, %s525
      %p532 = scmp.eq.s32.totalorder %s61, 1
      %p533 = por %p531, %p532
      %p534 = scmp.ne.s32.totalorder %s525, %s526
      %p535 = scmp.eq.s32.totalorder %s61, 0
      %p536 = por %p534, %p535
      %p537 = scmp.ne.s32.totalorder %s525, %s526
      %p538 = scmp.eq.s32.totalorder %s62, 1
      %p539 = por %p537, %p538
      %p541 = scmp.ne.s32.totalorder %s526, %s540
      %p542 = scmp.eq.s32.totalorder %s62, 0
      %p543 = por %p541, %p542
      %s545 = sadd.s32 %s544, 1
      %p548 = scmp.eq.s32.totalorder %s56, 1
      %p549 = scmp.ne.s32.totalorder %s544, %s546
      %p550 = scmp.eq.s32.totalorder %s56, 0
      %p551 = por %p549, %p550
      %p552 = scmp.ne.s32.totalorder %s544, %s546
      %p553 = scmp.eq.s32.totalorder %s61, 1
      %p554 = por %p552, %p553
      %p555 = scmp.ne.s32.totalorder %s546, %s547
      %p556 = scmp.eq.s32.totalorder %s61, 0
      %p557 = por %p555, %p556
      %p558 = scmp.ne.s32.totalorder %s546, %s547
      %p559 = scmp.eq.s32.totalorder %s62, 1
      %p560 = por %p558, %p559
      %p562 = scmp.ne.s32.totalorder %s547, %s561
      %p563 = scmp.eq.s32.totalorder %s62, 0
      %p564 = por %p562, %p563
      %s566 = sadd.s32 %s565, 1
      %p569 = scmp.eq.s32.totalorder %s56, 1
      %p570 = scmp.ne.s32.totalorder %s565, %s567
      %p571 = scmp.eq.s32.totalorder %s56, 0
      %p572 = por %p570, %p571
      %p573 = scmp.ne.s32.totalorder %s565, %s567
      %p574 = scmp.eq.s32.totalorder %s61, 1
      %p575 = por %p573, %p574
      %p576 = scmp.ne.s32.totalorder %s567, %s568
      %p577 = scmp.eq.s32.totalorder %s61, 0
      %p578 = por %p576, %p577
      %p579 = scmp.ne.s32.totalorder %s567, %s568
      %p580 = scmp.eq.s32.totalorder %s62, 1
      %p581 = por %p579, %p580
      %p583 = scmp.ne.s32.totalorder %s568, %s582
      %p584 = scmp.eq.s32.totalorder %s62, 0
      %p585 = por %p583, %p584
      %s587 = sadd.s32 %s586, 1
      %p590 = scmp.eq.s32.totalorder %s56, 1
      %p591 = scmp.ne.s32.totalorder %s586, %s588
      %p592 = scmp.eq.s32.totalorder %s56, 0
      %p593 = por %p591, %p592
      %p594 = scmp.ne.s32.totalorder %s586, %s588
      %p595 = scmp.eq.s32.totalorder %s61, 1
      %p596 = por %p594, %p595
      %p597 = scmp.ne.s32.totalorder %s588, %s589
      %p598 = scmp.eq.s32.totalorder %s61, 0
      %p599 = por %p597, %p598
      %p600 = scmp.ne.s32.totalorder %s588, %s589
      %p601 = scmp.eq.s32.totalorder %s62, 1
      %p602 = por %p600, %p601
      %p604 = scmp.ne.s32.totalorder %s589, %s603
      %p605 = scmp.eq.s32.totalorder %s62, 0
      %p606 = por %p604, %p605
      %s608 = sadd.s32 %s607, 1
      %p611 = scmp.eq.s32.totalorder %s56, 1
      %p612 = scmp.ne.s32.totalorder %s607, %s609
      %p613 = scmp.eq.s32.totalorder %s56, 0
      %p614 = por %p612, %p613
      %p615 = scmp.ne.s32.totalorder %s607, %s609
      %p616 = scmp.eq.s32.totalorder %s61, 1
      %p617 = por %p615, %p616
      %p618 = scmp.ne.s32.totalorder %s609, %s610
      %p619 = scmp.eq.s32.totalorder %s61, 0
      %p620 = por %p618, %p619
      %p621 = scmp.ne.s32.totalorder %s609, %s610
      %p622 = scmp.eq.s32.totalorder %s62, 1
      %p623 = por %p621, %p622
      %p625 = scmp.ne.s32.totalorder %s610, %s624
      %p626 = scmp.eq.s32.totalorder %s62, 0
      %p627 = por %p625, %p626
      %s629 = sadd.s32 %s628, 1
      %p632 = scmp.eq.s32.totalorder %s56, 1
      %p633 = scmp.ne.s32.totalorder %s628, %s630
      %p634 = scmp.eq.s32.totalorder %s56, 0
      %p635 = por %p633, %p634
      %p636 = scmp.ne.s32.totalorder %s628, %s630
      %p637 = scmp.eq.s32.totalorder %s61, 1
      %p638 = por %p636, %p637
      %p639 = scmp.ne.s32.totalorder %s630, %s631
      %p640 = scmp.eq.s32.totalorder %s61, 0
      %p641 = por %p639, %p640
      %p642 = scmp.ne.s32.totalorder %s630, %s631
      %p643 = scmp.eq.s32.totalorder %s62, 1
      %p644 = por %p642, %p643
      %p646 = scmp.ne.s32.totalorder %s631, %s645
      %p647 = scmp.eq.s32.totalorder %s62, 0
      %p648 = por %p646, %p647
      %s649 = ssub.s32 %s63, %s75
      %s650 = ssub.s32 %s64, %s71
      %s651 = sor.u32 %s649, %s650
      %p652 = scmp.eq.s32.totalorder %s651, 0
      %s654 = sadd.s32 %s653, 1
      %s655 = scalar_select %p652, %s653, %s654
      %p658 = pneg %p652
      %p659 = scmp.eq.s32.totalorder %s56, 1
      %p660 = por %p658, %p659
      %p661 = scmp.ne.s32.totalorder %s653, %s656
      %p662 = scmp.eq.s32.totalorder %s56, 0
      %p663 = por %p661, %p662
      %p664 = scmp.ne.s32.totalorder %s653, %s656
      %p665 = scmp.eq.s32.totalorder %s61, 1
      %p666 = por %p664, %p665
      %p667 = scmp.ne.s32.totalorder %s656, %s657
      %p668 = scmp.eq.s32.totalorder %s61, 0
      %p669 = por %p667, %p668
      %p670 = scmp.ne.s32.totalorder %s656, %s657
      %p671 = scmp.eq.s32.totalorder %s62, 1
      %p672 = por %p670, %p671
      %p674 = scmp.ne.s32.totalorder %s657, %s673
      %p675 = scmp.eq.s32.totalorder %s62, 0
      %p676 = por %p674, %p675
      %s677 = ssub.s32 %s63, %s75
      %s678 = ssub.s32 %s64, %s71
      %s679 = sor.u32 %s677, %s678
      %p680 = scmp.eq.s32.totalorder %s679, 0
      %s682 = sadd.s32 %s681, 1
      %s683 = scalar_select %p680, %s681, %s682
      %p686 = pneg %p680
      %p687 = scmp.eq.s32.totalorder %s56, 1
      %p688 = por %p686, %p687
      %p689 = scmp.ne.s32.totalorder %s681, %s684
      %p690 = scmp.eq.s32.totalorder %s56, 0
      %p691 = por %p689, %p690
      %p692 = scmp.ne.s32.totalorder %s681, %s684
      %p693 = scmp.eq.s32.totalorder %s61, 1
      %p694 = por %p692, %p693
      %p695 = scmp.ne.s32.totalorder %s684, %s685
      %p696 = scmp.eq.s32.totalorder %s61, 0
      %p697 = por %p695, %p696
      %p698 = scmp.ne.s32.totalorder %s684, %s685
      %p699 = scmp.eq.s32.totalorder %s62, 1
      %p700 = por %p698, %p699
      %p702 = scmp.ne.s32.totalorder %s685, %s701
      %p703 = scmp.eq.s32.totalorder %s62, 0
      %p704 = por %p702, %p703
      %s705 = ssub.s32 %s63, %s75
      %s706 = ssub.s32 %s64, %s71
      %s707 = sor.u32 %s705, %s706
      %p708 = scmp.eq.s32.totalorder %s707, 0
      %s710 = sadd.s32 %s709, 1
      %s711 = scalar_select %p708, %s709, %s710
      %p714 = pneg %p708
      %p715 = scmp.eq.s32.totalorder %s56, 1
      %p716 = por %p714, %p715
      %p717 = scmp.ne.s32.totalorder %s709, %s712
      %p718 = scmp.eq.s32.totalorder %s56, 0
      %p719 = por %p717, %p718
      %p720 = scmp.ne.s32.totalorder %s709, %s712
      %p721 = scmp.eq.s32.totalorder %s61, 1
      %p722 = por %p720, %p721
      %p723 = scmp.ne.s32.totalorder %s712, %s713
      %p724 = scmp.eq.s32.totalorder %s61, 0
      %p725 = por %p723, %p724
      %p726 = scmp.ne.s32.totalorder %s712, %s713
      %p727 = scmp.eq.s32.totalorder %s62, 1
      %p728 = por %p726, %p727
      %p730 = scmp.ne.s32.totalorder %s713, %s729
      %p731 = scmp.eq.s32.totalorder %s62, 0
      %p732 = por %p730, %p731
      %p733 = scmp.le.s32.totalorder 1, %s56
      %p734 = scmp.lt.s32.totalorder %s56, 3
      %p735 = pnand %p733, %p734
      %p736 = pneg %p735
      // Predicated region
      $region9: #{tpu_custom_call.1} parent=5 // pred_check
        _
      $region10: #{tpu_custom_call.1} parent=5 // pred_check_branch
        %738 = sbr.rel (%p735) target = $region12
      $region11: #{tpu_custom_call.1} parent=5 // pred_region
        %s739 = ssub.s32 %s56, 1
        // Predicated region
        $region13: #{tpu_custom_call.1} parent=11 // pred_check
          %p740 = pneg %p305
        $region14: #{tpu_custom_call.1} parent=11 // pred_check_branch
          %742 = sbr.rel (%p740) target = $region16
        $region15: #{tpu_custom_call.1} parent=11 // pred_region
          _
        $region16: #{tpu_custom_call.1} parent=11 // pred_fallthru
          _
        // Predicated region
        $region17: #{tpu_custom_call.1} parent=11 // pred_check
          %p743 = pneg %p326
        $region18: #{tpu_custom_call.1} parent=11 // pred_check_branch
          %745 = sbr.rel (%p743) target = $region20
        $region19: #{tpu_custom_call.1} parent=11 // pred_region
          _
        $region20: #{tpu_custom_call.1} parent=11 // pred_fallthru
          _
        // Predicated region
        $region21: #{tpu_custom_call.1} parent=11 // pred_check
          %p746 = pneg %p347
        $region22: #{tpu_custom_call.1} parent=11 // pred_check_branch
          %748 = sbr.rel (%p746) target = $region24
        $region23: #{tpu_custom_call.1} parent=11 // pred_region
          _
        $region24: #{tpu_custom_call.1} parent=11 // pred_fallthru
          _
        // Predicated region
        $region25: #{tpu_custom_call.1} parent=11 // pred_check
          %p749 = pneg %p368
        $region26: #{tpu_custom_call.1} parent=11 // pred_check_branch
          %751 = sbr.rel (%p749) target = $region28
        $region27: #{tpu_custom_call.1} parent=11 // pred_region
          %s753 = ssub.s32 16, 16
          %754 = vsyncadd [#allocation15], %s753
          %s756 = sshll.u32 [#allocation16], 4
          %s757 = int_to_ptr.vmem [resolvable:$true] %s756
          %759 = dma.hbm_to_vmem [thread:$0]  %s11, 16, %s757, [#allocation15]
        $region28: #{tpu_custom_call.1} parent=11 // pred_fallthru
          _
        // Predicated region
        $region29: #{tpu_custom_call.1} parent=11 // pred_check
          %p760 = pneg %p389
        $region30: #{tpu_custom_call.1} parent=11 // pred_check_branch
          %762 = sbr.rel (%p760) target = $region32
        $region31: #{tpu_custom_call.1} parent=11 // pred_region
          _
        $region32: #{tpu_custom_call.1} parent=11 // pred_fallthru
          _
        // Predicated region
        $region33: #{tpu_custom_call.1} parent=11 // pred_check
          %p763 = pneg %p410
        $region34: #{tpu_custom_call.1} parent=11 // pred_check_branch
          %765 = sbr.rel (%p763) target = $region36
        $region35: #{tpu_custom_call.1} parent=11 // pred_region
          %s767 = ssub.s32 16, 16
          %768 = vsyncadd [#allocation18], %s767
          %s770 = sshll.u32 [#allocation17], 4
          %s771 = int_to_ptr.vmem [resolvable:$true] %s770
          %773 = dma.hbm_to_vmem [thread:$0]  %s13, 16, %s771, [#allocation18]
        $region36: #{tpu_custom_call.1} parent=11 // pred_fallthru
          _
        // Predicated region
        $region37: #{tpu_custom_call.1} parent=11 // pred_check
          %p774 = pneg %p431
        $region38: #{tpu_custom_call.1} parent=11 // pred_check_branch
          %776 = sbr.rel (%p774) target = $region40
        $region39: #{tpu_custom_call.1} parent=11 // pred_region
          _
        $region40: #{tpu_custom_call.1} parent=11 // pred_fallthru
          _
        // Predicated region
        $region41: #{tpu_custom_call.1} parent=11 // pred_check
          %p777 = pneg %p452
        $region42: #{tpu_custom_call.1} parent=11 // pred_check_branch
          %779 = sbr.rel (%p777) target = $region44
        $region43: #{tpu_custom_call.1} parent=11 // pred_region
          _
        $region44: #{tpu_custom_call.1} parent=11 // pred_fallthru
          _
        // Predicated region
        $region45: #{tpu_custom_call.1} parent=11 // pred_check
          %p780 = pneg %p473
        $region46: #{tpu_custom_call.1} parent=11 // pred_check_branch
          %782 = sbr.rel (%p780) target = $region48
        $region47: #{tpu_custom_call.1} parent=11 // pred_region
          _
        $region48: #{tpu_custom_call.1} parent=11 // pred_fallthru
          _
        // Predicated region
        $region49: #{tpu_custom_call.1} parent=11 // pred_check
          %p783 = pneg %p494
        $region50: #{tpu_custom_call.1} parent=11 // pred_check_branch
          %785 = sbr.rel (%p783) target = $region52
        $region51: #{tpu_custom_call.1} parent=11 // pred_region
          _
        $region52: #{tpu_custom_call.1} parent=11 // pred_fallthru
          _
        // Predicated region
        $region53: #{tpu_custom_call.1} parent=11 // pred_check
          %p786 = pneg %p515
        $region54: #{tpu_custom_call.1} parent=11 // pred_check_branch
          %788 = sbr.rel (%p786) target = $region56
        $region55: #{tpu_custom_call.1} parent=11 // pred_region
          _
        $region56: #{tpu_custom_call.1} parent=11 // pred_fallthru
          _
        // Predicated region
        $region57: #{tpu_custom_call.1} parent=11 // pred_check
          %p789 = pneg %p536
        $region58: #{tpu_custom_call.1} parent=11 // pred_check_branch
          %791 = sbr.rel (%p789) target = $region60
        $region59: #{tpu_custom_call.1} parent=11 // pred_region
          _
        $region60: #{tpu_custom_call.1} parent=11 // pred_fallthru
          _
        // Predicated region
        $region61: #{tpu_custom_call.1} parent=11 // pred_check
          %p792 = pneg %p557
        $region62: #{tpu_custom_call.1} parent=11 // pred_check_branch
          %794 = sbr.rel (%p792) target = $region64
        $region63: #{tpu_custom_call.1} parent=11 // pred_region
          _
        $region64: #{tpu_custom_call.1} parent=11 // pred_fallthru
          _
        // Predicated region
        $region65: #{tpu_custom_call.1} parent=11 // pred_check
          %p795 = pneg %p578
        $region66: #{tpu_custom_call.1} parent=11 // pred_check_branch
          %797 = sbr.rel (%p795) target = $region68
        $region67: #{tpu_custom_call.1} parent=11 // pred_region
          _
        $region68: #{tpu_custom_call.1} parent=11 // pred_fallthru
          _
        // Predicated region
        $region69: #{tpu_custom_call.1} parent=11 // pred_check
          %p798 = pneg %p599
        $region70: #{tpu_custom_call.1} parent=11 // pred_check_branch
          %800 = sbr.rel (%p798) target = $region72
        $region71: #{tpu_custom_call.1} parent=11 // pred_region
          _
        $region72: #{tpu_custom_call.1} parent=11 // pred_fallthru
          _
        // Predicated region
        $region73: #{tpu_custom_call.1} parent=11 // pred_check
          %p801 = pneg %p620
        $region74: #{tpu_custom_call.1} parent=11 // pred_check_branch
          %803 = sbr.rel (%p801) target = $region76
        $region75: #{tpu_custom_call.1} parent=11 // pred_region
          _
        $region76: #{tpu_custom_call.1} parent=11 // pred_fallthru
          _
        // Predicated region
        $region77: #{tpu_custom_call.1} parent=11 // pred_check
          %p804 = pneg %p641
        $region78: #{tpu_custom_call.1} parent=11 // pred_check_branch
          %806 = sbr.rel (%p804) target = $region80
        $region79: #{tpu_custom_call.1} parent=11 // pred_region
          _
        $region80: #{tpu_custom_call.1} parent=11 // pred_fallthru
          _
      $region12: #{tpu_custom_call.1} parent=5 // pred_fallthru
        _
      %p807 = scmp.lt.s32.totalorder %s56, 2
      // Predicated region
      $region81: #{tpu_custom_call.1} parent=5 // pred_check
        %p808 = pneg %p807
      $region82: #{tpu_custom_call.1} parent=5 // pred_check_branch
        %810 = sbr.rel (%p808) target = $region84
      $region83: #{tpu_custom_call.1} parent=5 // pred_region
        // Predicated region
        $region85: #{tpu_custom_call.1} parent=83 // pred_check
          %p811 = pneg %p90
        $region86: #{tpu_custom_call.1} parent=83 // pred_check_branch
          %813 = sbr.rel (%p811) target = $region88
        $region87: #{tpu_custom_call.1} parent=83 // pred_region
          %s814 = sand.u32 %s80, 1
          %s815 = scalar_lea.sflag [#allocation3], %s814
          %s816 = sand.u32 %s80, 1
          %s817 = smul.addr %s816, 8
          %s818 = scalar_lea.vmem [#allocation2], %s817
          %s820 = ssub.s32 128, 128
          %821 = vsyncadd %s815, %s820
          %s822 = sadd.s32 %s64, %s63
          %s823 = smul.addr %s822, 128
          %s824 = scalar_lea.hbm %s0, %s823
          %s826 = sshll.u32 %s818, 4
          %s827 = int_to_ptr.vmem [resolvable:$true] %s826
          %829 = dma.hbm_to_vmem [thread:$0]  %s824, 128, %s827, %s815
        $region88: #{tpu_custom_call.1} parent=83 // pred_fallthru
          _
        // Predicated region
        $region89: #{tpu_custom_call.1} parent=83 // pred_check
          %p830 = pneg %p116
        $region90: #{tpu_custom_call.1} parent=83 // pred_check_branch
          %832 = sbr.rel (%p830) target = $region92
        $region91: #{tpu_custom_call.1} parent=83 // pred_region
          %s833 = sand.u32 %s56, 1
          %s834 = scalar_lea.sflag [#allocation6], %s833
          %s835 = sand.u32 %s106, 1
          %s836 = smul.addr %s835, 8
          %s837 = scalar_lea.vmem [#allocation5], %s836
          %s839 = ssub.s32 128, 128
          %840 = vsyncadd %s834, %s839
          %s841 = smul.addr %s63, 128
          %s842 = scalar_lea.hbm %s1, %s841
          %s844 = sshll.u32 %s837, 4
          %s845 = int_to_ptr.vmem [resolvable:$true] %s844
          %847 = dma.hbm_to_vmem [thread:$0]  %s842, 128, %s845, %s834
        $region92: #{tpu_custom_call.1} parent=83 // pred_fallthru
          _
        // Predicated region
        $region93: #{tpu_custom_call.1} parent=83 // pred_check
          %p848 = pneg %p142
        $region94: #{tpu_custom_call.1} parent=83 // pred_check_branch
          %850 = sbr.rel (%p848) target = $region96
        $region95: #{tpu_custom_call.1} parent=83 // pred_region
          %s851 = sand.u32 %s56, 1
          %s852 = scalar_lea.sflag [#allocation6], %s851
          %s853 = sand.u32 %s132, 1
          %s854 = smul.addr %s853, 8
          %s855 = scalar_lea.vmem [#allocation7], %s854
          %s857 = ssub.s32 128, 128
          %858 = vsyncadd %s852, %s857
          %s859 = smul.addr %s63, 128
          %s860 = scalar_lea.hbm %s2, %s859
          %s862 = sshll.u32 %s855, 4
          %s863 = int_to_ptr.vmem [resolvable:$true] %s862
          %865 = dma.hbm_to_vmem [thread:$0]  %s860, 128, %s863, %s852
        $region96: #{tpu_custom_call.1} parent=83 // pred_fallthru
          _
        // Predicated region
        $region97: #{tpu_custom_call.1} parent=83 // pred_check
          %p866 = pneg %p170
        $region98: #{tpu_custom_call.1} parent=83 // pred_check_branch
          %868 = sbr.rel (%p866) target = $region100
        $region99: #{tpu_custom_call.1} parent=83 // pred_region
          %s869 = sand.u32 %s56, 1
          %s870 = scalar_lea.sflag [#allocation9], %s869
          %s871 = sand.u32 %s160, 1
          %s872 = smul.addr %s871, 8
          %s873 = scalar_lea.vmem [#allocation8], %s872
          %s875 = ssub.s32 128, 128
          %876 = vsyncadd %s870, %s875
          %s877 = sadd.s32 %s64, %s63
          %s878 = smul.addr %s877, 128
          %s879 = scalar_lea.hbm %s3, %s878
          %s881 = sshll.u32 %s873, 4
          %s882 = int_to_ptr.vmem [resolvable:$true] %s881
          %884 = dma.hbm_to_vmem [thread:$0]  %s879, 128, %s882, %s870
        $region100: #{tpu_custom_call.1} parent=83 // pred_fallthru
          _
        // Predicated region
        $region101: #{tpu_custom_call.1} parent=83 // pred_check
          %p885 = pneg %p198
        $region102: #{tpu_custom_call.1} parent=83 // pred_check_branch
          %887 = sbr.rel (%p885) target = $region104
        $region103: #{tpu_custom_call.1} parent=83 // pred_region
          %s888 = sand.u32 %s56, 1
          %s889 = scalar_lea.sflag [#allocation9], %s888
          %s890 = sand.u32 %s188, 1
          %s891 = smul.addr %s890, 8
          %s892 = scalar_lea.vmem [#allocation10], %s891
          %s894 = ssub.s32 128, 128
          %895 = vsyncadd %s889, %s894
          %s896 = sadd.s32 %s64, %s63
          %s897 = smul.addr %s896, 128
          %s898 = scalar_lea.hbm %s4, %s897
          %s900 = sshll.u32 %s892, 4
          %s901 = int_to_ptr.vmem [resolvable:$true] %s900
          %903 = dma.hbm_to_vmem [thread:$0]  %s898, 128, %s901, %s889
        $region104: #{tpu_custom_call.1} parent=83 // pred_fallthru
          _
        // Predicated region
        $region105: #{tpu_custom_call.1} parent=83 // pred_check
          %p904 = pneg %p224
        $region106: #{tpu_custom_call.1} parent=83 // pred_check_branch
          %906 = sbr.rel (%p904) target = $region108
        $region107: #{tpu_custom_call.1} parent=83 // pred_region
          %s907 = sand.u32 %s56, 1
          %s908 = scalar_lea.sflag [#allocation12], %s907
          %s909 = sand.u32 %s214, 1
          %s910 = smul.addr %s909, 8
          %s911 = scalar_lea.vmem [#allocation11], %s910
          %s913 = ssub.s32 128, 128
          %914 = vsyncadd %s908, %s913
          %s915 = smul.addr %s63, 128
          %s916 = scalar_lea.hbm %s5, %s915
          %s918 = sshll.u32 %s911, 4
          %s919 = int_to_ptr.vmem [resolvable:$true] %s918
          %921 = dma.hbm_to_vmem [thread:$0]  %s916, 128, %s919, %s908
        $region108: #{tpu_custom_call.1} parent=83 // pred_fallthru
          _
        // Predicated region
        $region109: #{tpu_custom_call.1} parent=83 // pred_check
          %p922 = pneg %p250
        $region110: #{tpu_custom_call.1} parent=83 // pred_check_branch
          %924 = sbr.rel (%p922) target = $region112
        $region111: #{tpu_custom_call.1} parent=83 // pred_region
          %s925 = sand.u32 %s56, 1
          %s926 = scalar_lea.sflag [#allocation12], %s925
          %s927 = sand.u32 %s240, 1
          %s928 = smul.addr %s927, 8
          %s929 = scalar_lea.vmem [#allocation13], %s928
          %s931 = ssub.s32 128, 128
          %932 = vsyncadd %s926, %s931
          %s933 = smul.addr %s63, 128
          %s934 = scalar_lea.hbm %s6, %s933
          %s936 = sshll.u32 %s929, 4
          %s937 = int_to_ptr.vmem [resolvable:$true] %s936
          %939 = dma.hbm_to_vmem [thread:$0]  %s934, 128, %s937, %s926
        $region112: #{tpu_custom_call.1} parent=83 // pred_fallthru
          _
        // Predicated region
        $region113: #{tpu_custom_call.1} parent=83 // pred_check
          %p940 = pneg %p278
        $region114: #{tpu_custom_call.1} parent=83 // pred_check_branch
          %942 = sbr.rel (%p940) target = $region116
        $region115: #{tpu_custom_call.1} parent=83 // pred_region
          %s943 = sand.u32 %s56, 1
          %s944 = scalar_lea.sflag [#allocation15], %s943
          %s945 = sand.u32 %s268, 1
          %s946 = smul.addr %s945, 8
          %s947 = scalar_lea.vmem [#allocation14], %s946
          %s949 = ssub.s32 128, 128
          %950 = vsyncadd %s944, %s949
          %s951 = sadd.s32 %s64, %s63
          %s952 = smul.addr %s951, 128
          %s953 = scalar_lea.hbm %s7, %s952
          %s955 = sshll.u32 %s947, 4
          %s956 = int_to_ptr.vmem [resolvable:$true] %s955
          %958 = dma.hbm_to_vmem [thread:$0]  %s953, 128, %s956, %s944
        $region116: #{tpu_custom_call.1} parent=83 // pred_fallthru
          _
      $region84: #{tpu_custom_call.1} parent=5 // pred_fallthru
        _
      %p959 = scmp.le.s32.totalorder 1, %s56
      %p960 = scmp.lt.s32.totalorder %s56, 3
      %p961 = pnand %p959, %p960
      %p962 = pneg %p961
      // Predicated region
      $region117: #{tpu_custom_call.1} parent=5 // pred_check
        _
      $region118: #{tpu_custom_call.1} parent=5 // pred_check_branch
        %964 = sbr.rel (%p961) target = $region120
      $region119: #{tpu_custom_call.1} parent=5 // pred_region
        %s965 = ssub.s32 %s56, 1
        %s966 = sand.u32 %s83, 1
        %s967 = scalar_lea.sflag [#allocation3], %s966
        %s968 = sand.u32 %s83, 1
        %s969 = smul.addr %s968, 8
        %s970 = scalar_lea.vmem [#allocation2], %s969
        // Predicated region
        $region121: #{tpu_custom_call.1} parent=119 // pred_check
          %p971 = pneg %p96
        $region122: #{tpu_custom_call.1} parent=119 // pred_check_branch
          %973 = sbr.rel (%p971) target = $region124
        $region123: #{tpu_custom_call.1} parent=119 // pred_region
          %974 = dma.done %s967, 128
        $region124: #{tpu_custom_call.1} parent=119 // pred_fallthru
          _
        %s975 = sand.u32 %s61, 1
        %s976 = scalar_lea.sflag [#allocation6], %s975
        %s977 = sand.u32 %s109, 1
        %s978 = smul.addr %s977, 8
        %s979 = scalar_lea.vmem [#allocation5], %s978
        // Predicated region
        $region125: #{tpu_custom_call.1} parent=119 // pred_check
          %p980 = pneg %p122
        $region126: #{tpu_custom_call.1} parent=119 // pred_check_branch
          %982 = sbr.rel (%p980) target = $region128
        $region127: #{tpu_custom_call.1} parent=119 // pred_region
          %983 = dma.done %s976, 128
        $region128: #{tpu_custom_call.1} parent=119 // pred_fallthru
          _
        %s984 = sand.u32 %s61, 1
        %s985 = scalar_lea.sflag [#allocation6], %s984
        %s986 = sand.u32 %s135, 1
        %s987 = smul.addr %s986, 8
        %s988 = scalar_lea.vmem [#allocation7], %s987
        // Predicated region
        $region129: #{tpu_custom_call.1} parent=119 // pred_check
          %p989 = pneg %p148
        $region130: #{tpu_custom_call.1} parent=119 // pred_check_branch
          %991 = sbr.rel (%p989) target = $region132
        $region131: #{tpu_custom_call.1} parent=119 // pred_region
          %992 = dma.done %s985, 128
        $region132: #{tpu_custom_call.1} parent=119 // pred_fallthru
          _
        %s993 = sand.u32 %s61, 1
        %s994 = scalar_lea.sflag [#allocation9], %s993
        %s995 = sand.u32 %s163, 1
        %s996 = smul.addr %s995, 8
        %s997 = scalar_lea.vmem [#allocation8], %s996
        // Predicated region
        $region133: #{tpu_custom_call.1} parent=119 // pred_check
          %p998 = pneg %p176
        $region134: #{tpu_custom_call.1} parent=119 // pred_check_branch
          %1000 = sbr.rel (%p998) target = $region136
        $region135: #{tpu_custom_call.1} parent=119 // pred_region
          %1001 = dma.done %s994, 128
        $region136: #{tpu_custom_call.1} parent=119 // pred_fallthru
          _
        %s1002 = sand.u32 %s61, 1
        %s1003 = scalar_lea.sflag [#allocation9], %s1002
        %s1004 = sand.u32 %s191, 1
        %s1005 = smul.addr %s1004, 8
        %s1006 = scalar_lea.vmem [#allocation10], %s1005
        // Predicated region
        $region137: #{tpu_custom_call.1} parent=119 // pred_check
          %p1007 = pneg %p204
        $region138: #{tpu_custom_call.1} parent=119 // pred_check_branch
          %1009 = sbr.rel (%p1007) target = $region140
        $region139: #{tpu_custom_call.1} parent=119 // pred_region
          %1010 = dma.done %s1003, 128
        $region140: #{tpu_custom_call.1} parent=119 // pred_fallthru
          _
        %s1011 = sand.u32 %s61, 1
        %s1012 = scalar_lea.sflag [#allocation12], %s1011
        %s1013 = sand.u32 %s217, 1
        %s1014 = smul.addr %s1013, 8
        %s1015 = scalar_lea.vmem [#allocation11], %s1014
        // Predicated region
        $region141: #{tpu_custom_call.1} parent=119 // pred_check
          %p1016 = pneg %p230
        $region142: #{tpu_custom_call.1} parent=119 // pred_check_branch
          %1018 = sbr.rel (%p1016) target = $region144
        $region143: #{tpu_custom_call.1} parent=119 // pred_region
          %1019 = dma.done %s1012, 128
        $region144: #{tpu_custom_call.1} parent=119 // pred_fallthru
          _
        %s1020 = sand.u32 %s61, 1
        %s1021 = scalar_lea.sflag [#allocation12], %s1020
        %s1022 = sand.u32 %s243, 1
        %s1023 = smul.addr %s1022, 8
        %s1024 = scalar_lea.vmem [#allocation13], %s1023
        // Predicated region
        $region145: #{tpu_custom_call.1} parent=119 // pred_check
          %p1025 = pneg %p256
        $region146: #{tpu_custom_call.1} parent=119 // pred_check_branch
          %1027 = sbr.rel (%p1025) target = $region148
        $region147: #{tpu_custom_call.1} parent=119 // pred_region
          %1028 = dma.done %s1021, 128
        $region148: #{tpu_custom_call.1} parent=119 // pred_fallthru
          _
        %s1029 = sand.u32 %s61, 1
        %s1030 = scalar_lea.sflag [#allocation15], %s1029
        %s1031 = sand.u32 %s271, 1
        %s1032 = smul.addr %s1031, 8
        %s1033 = scalar_lea.vmem [#allocation14], %s1032
        // Predicated region
        $region149: #{tpu_custom_call.1} parent=119 // pred_check
          %p1034 = pneg %p284
        $region150: #{tpu_custom_call.1} parent=119 // pred_check_branch
          %1036 = sbr.rel (%p1034) target = $region152
        $region151: #{tpu_custom_call.1} parent=119 // pred_region
          %1037 = dma.done %s1030, 128
        $region152: #{tpu_custom_call.1} parent=119 // pred_fallthru
          _
        // Predicated region
        $region153: #{tpu_custom_call.1} parent=119 // pred_check
          %p1038 = pneg %p368
        $region154: #{tpu_custom_call.1} parent=119 // pred_check_branch
          %1040 = sbr.rel (%p1038) target = $region156
        $region155: #{tpu_custom_call.1} parent=119 // pred_region
          %1041 = dma.done [#allocation15], 16
        $region156: #{tpu_custom_call.1} parent=119 // pred_fallthru
          _
        // Predicated region
        $region157: #{tpu_custom_call.1} parent=119 // pred_check
          %p1042 = pneg %p410
        $region158: #{tpu_custom_call.1} parent=119 // pred_check_branch
          %1044 = sbr.rel (%p1042) target = $region160
        $region159: #{tpu_custom_call.1} parent=119 // pred_region
          %1045 = dma.done [#allocation18], 16
        $region160: #{tpu_custom_call.1} parent=119 // pred_fallthru
          _
        %s1046 = sand.u32 %s83, 1
        %s1047 = scalar_lea.sflag [#allocation3], %s1046
        %s1048 = sand.u32 %s83, 1
        %s1049 = smul.addr %s1048, 8
        %s1050 = scalar_lea.vmem [#allocation2], %s1049
        %p1051 = pneg %p96
        %p1052 = pneg %p93
        %s1053 = sand.u32 %s61, 1
        %s1054 = scalar_lea.sflag [#allocation6], %s1053
        %s1055 = sand.u32 %s109, 1
        %s1056 = smul.addr %s1055, 8
        %s1057 = scalar_lea.vmem [#allocation5], %s1056
        %p1058 = pneg %p122
        %p1059 = pneg %p119
        %s1060 = sand.u32 %s61, 1
        %s1061 = scalar_lea.sflag [#allocation6], %s1060
        %s1062 = sand.u32 %s135, 1
        %s1063 = smul.addr %s1062, 8
        %s1064 = scalar_lea.vmem [#allocation7], %s1063
        %p1065 = pneg %p148
        %p1066 = pneg %p145
        %s1067 = sand.u32 %s61, 1
        %s1068 = scalar_lea.sflag [#allocation9], %s1067
        %s1069 = sand.u32 %s163, 1
        %s1070 = smul.addr %s1069, 8
        %s1071 = scalar_lea.vmem [#allocation8], %s1070
        %p1072 = pneg %p176
        %p1073 = pneg %p173
        %s1074 = sand.u32 %s61, 1
        %s1075 = scalar_lea.sflag [#allocation9], %s1074
        %s1076 = sand.u32 %s191, 1
        %s1077 = smul.addr %s1076, 8
        %s1078 = scalar_lea.vmem [#allocation10], %s1077
        %p1079 = pneg %p204
        %p1080 = pneg %p201
        %s1081 = sand.u32 %s61, 1
        %s1082 = scalar_lea.sflag [#allocation12], %s1081
        %s1083 = sand.u32 %s217, 1
        %s1084 = smul.addr %s1083, 8
        %s1085 = scalar_lea.vmem [#allocation11], %s1084
        %p1086 = pneg %p230
        %p1087 = pneg %p227
        %s1088 = sand.u32 %s61, 1
        %s1089 = scalar_lea.sflag [#allocation12], %s1088
        %s1090 = sand.u32 %s243, 1
        %s1091 = smul.addr %s1090, 8
        %s1092 = scalar_lea.vmem [#allocation13], %s1091
        %p1093 = pneg %p256
        %p1094 = pneg %p253
        %s1095 = sand.u32 %s61, 1
        %s1096 = scalar_lea.sflag [#allocation15], %s1095
        %s1097 = sand.u32 %s271, 1
        %s1098 = smul.addr %s1097, 8
        %s1099 = scalar_lea.vmem [#allocation14], %s1098
        %p1100 = pneg %p284
        %p1101 = pneg %p281
        %p1102 = pneg %p305
        %p1103 = pneg %p302
        %p1104 = pneg %p326
        %p1105 = pneg %p323
        %p1106 = pneg %p347
        %p1107 = pneg %p344
        %p1108 = pneg %p368
        %p1109 = pneg %p365
        %p1110 = pneg %p389
        %p1111 = pneg %p386
        %p1112 = pneg %p410
        %p1113 = pneg %p407
        %p1114 = pneg %p431
        %p1115 = pneg %p428
        %p1116 = pneg %p452
        %p1117 = pneg %p449
        %p1118 = pneg %p473
        %p1119 = pneg %p470
        %p1120 = pneg %p494
        %p1121 = pneg %p491
        %p1122 = pneg %p515
        %p1123 = pneg %p512
        %p1124 = pneg %p536
        %p1125 = pneg %p533
        %p1126 = pneg %p557
        %p1127 = pneg %p554
        %p1128 = pneg %p578
        %p1129 = pneg %p575
        %p1130 = pneg %p599
        %p1131 = pneg %p596
        %p1132 = pneg %p620
        %p1133 = pneg %p617
        %p1134 = pneg %p641
        %p1135 = pneg %p638
        %p1136 = pneg %p669
        %p1137 = pneg %p666
        %s1138 = sand.u32 %s656, 1
        %s1139 = scalar_lea.sflag [#allocation4], %s1138
        %s1140 = sand.u32 %s656, 1
        %s1141 = smul.addr %s1140, 8
        %s1142 = scalar_lea.vmem [#allocation19], %s1141
        %p1143 = pneg %p697
        %p1144 = pneg %p694
        %s1145 = sand.u32 %s61, 1
        %s1146 = scalar_lea.sflag [#allocation21], %s1145
        %s1147 = sand.u32 %s684, 1
        %s1148 = smul.addr %s1147, 32
        %s1149 = scalar_lea.vmem [#allocation20], %s1148
        %p1150 = pneg %p725
        %p1151 = pneg %p722
        %s1152 = sand.u32 %s61, 1
        %s1153 = scalar_lea.sflag [#allocation21], %s1152
        %s1154 = sand.u32 %s712, 1
        %s1155 = smul.addr %s1154, 16
        %s1156 = scalar_lea.vmem [#allocation22], %s1155
        %v1157 = vld [vmem:[%s970] sm:$0xff]
        %v1158 = vld [vmem:[%s979] sm:$0xff]
        %v1159 = vld [vmem:[%s988] sm:$0xff]
        %v1160 = vld [vmem:[%s997] sm:$0xff]
        %v1161 = vld [vmem:[%s8] sm:$0xff]
        %v1162 = vld [vmem:[%s8 + $0x8] sm:$0xff]
        %v1163 = vld [vmem:[%s8 + $0x10] sm:$0xff]
        %v1164 = vld [vmem:[%s8 + $0x18] sm:$0xff]
        %v1165 = vld [vmem:[%s9] sm:$0x1]
        %v1167 = vlaneseq
        %v1168 = vshrl.u32 %v1167, 7
        %v1169 = vsub.s32 0, %v1168
        %v1170 = vrot.slane %v1165, %v1169
        %vm1172 = vcmask 261120
        %v1174 = vsel %vm1172, %v1157, 0
        %1176 = vmatprep.subr.mxu0 0.0
        %1177 = vmatpush1.msra.mxu0 %v1161
        %1178 = vmatprep.subr.mxu0 0.0
        %1179 = vmatpush1.msra.mxu0 %v1162
        %1180 = vmatprep.subr.mxu0 0.0
        %1181 = vmatpush1.msra.mxu0 %v1163
        %1182 = vmatprep.subr.mxu0 0.0
        %1183 = vmatpush1.msra.mxu0 %v1164
        %1184 = vmatprep.subr.mxu0 0.0
        %1185 = vmatpush1.msra.mxu0 0.0
        %1186 = vmatprep.subr.mxu0 0.0
        %1187 = vmatpush1.msra.mxu0 0.0
        %1188 = vmatprep.subr.mxu0 0.0
        %1189 = vmatpush1.msra.mxu0 0.0
        %1190 = vmatprep.subr.mxu0 0.0
        %1191 = vmatpush1.msra.mxu0 0.0
        %1192 = vmatprep.subr.mxu0 0.0
        %1193 = vmatpush1.msra.mxu0 0.0
        %1194 = vmatprep.subr.mxu0 0.0
        %1195 = vmatpush1.msra.mxu0 0.0
        %1196 = vmatprep.subr.mxu0 0.0
        %1197 = vmatpush1.msra.mxu0 0.0
        %1198 = vmatprep.subr.mxu0 0.0
        %1199 = vmatpush1.msra.mxu0 0.0
        %1200 = vmatprep.subr.mxu0 0.0
        %1201 = vmatpush1.msra.mxu0 0.0
        %1202 = vmatprep.subr.mxu0 0.0
        %1203 = vmatpush1.msra.mxu0 0.0
        %1204 = vmatprep.subr.mxu0 0.0
        %1205 = vmatpush1.msra.mxu0 0.0
        %1206 = vmatprep.subr.mxu0 0.0
        %1207 = vmatpush1.msra.mxu0 0.0
        %1208 = vmatprep.subr.mxu0 0.0
        %1209 = vmatpush1.msra.mxu0 0.0
        %1210 = vmatprep.subr.mxu0 0.0
        %1211 = vmatpush1.msra.mxu0 0.0
        %1212 = vmatprep.subr.mxu0 0.0
        %1213 = vmatpush1.msra.mxu0 0.0
        %1214 = vmatprep.subr.mxu0 0.0
        %1215 = vmatpush1.msra.mxu0 0.0
        %1216 = vmatprep.subr.mxu0 0.0
        %1217 = vmatpush1.msra.mxu0 0.0
        %1218 = vmatprep.subr.mxu0 0.0
        %1219 = vmatpush1.msra.mxu0 0.0
        %1220 = vmatprep.subr.mxu0 0.0
        %1221 = vmatpush1.msra.mxu0 0.0
        %1222 = vmatprep.subr.mxu0 0.0
        %1223 = vmatpush1.msra.mxu0 0.0
        %1224 = vmatprep.subr.mxu0 0.0
        %1225 = vmatpush1.msra.mxu0 0.0
        %1226 = vmatprep.subr.mxu0 0.0
        %1227 = vmatpush1.msra.mxu0 0.0
        %1228 = vmatprep.subr.mxu0 0.0
        %1229 = vmatpush1.msra.mxu0 0.0
        %1230 = vmatprep.subr.mxu0 0.0
        %1231 = vmatpush1.msra.mxu0 0.0
        %1232 = vmatprep.subr.mxu0 0.0
        %1233 = vmatpush1.msra.mxu0 0.0
        %1234 = vmatprep.subr.mxu0 0.0
        %1235 = vmatpush1.msra.mxu0 0.0
        %1236 = vmatprep.subr.mxu0 0.0
        %1237 = vmatpush1.msra.mxu0 0.0
        %1238 = vmatprep.subr.mxu0 0.0
        %1239 = vmatpush1.msra.mxu0 0.0
        %1240 = vmatprep.mubr.f32.mxu0 0.0
        %1241 = vmatmul.mubr.f32.gmra.mrb[0].mxu0 %v1174
        %v1242 = vpop.f32.mrb[0].mxu0
        %v1243 = vadd.f32 %v1170, %v1242
        %v1244 = vpop.f32.mrb[0].mxu0
        %1245 = vdwg.mxu0
        %v1246 = vld [vmem:[%s10] sm:$0xff]
        %v1247 = vld [vmem:[%s10 + $0x8] sm:$0xff]
        %v1248 = vld [vmem:[%s10 + $0x10] sm:$0xff]
        %v1249 = vld [vmem:[%s10 + $0x18] sm:$0xff]
        %v1250 = vld [vmem:[#allocation16] sm:$0x1]
        %v1252 = vlaneseq
        %v1253 = vshrl.u32 %v1252, 7
        %v1254 = vsub.s32 0, %v1253
        %v1255 = vrot.slane %v1250, %v1254
        %v1258 = vsel %vm1172, %v1158, 0
        %1260 = vmatprep.subr.mxu0 0.0
        %1261 = vmatpush1.msra.mxu0 %v1246
        %1262 = vmatprep.subr.mxu0 0.0
        %1263 = vmatpush1.msra.mxu0 %v1247
        %1264 = vmatprep.subr.mxu0 0.0
        %1265 = vmatpush1.msra.mxu0 %v1248
        %1266 = vmatprep.subr.mxu0 0.0
        %1267 = vmatpush1.msra.mxu0 %v1249
        %1268 = vmatprep.subr.mxu0 0.0
        %1269 = vmatpush1.msra.mxu0 0.0
        %1270 = vmatprep.subr.mxu0 0.0
        %1271 = vmatpush1.msra.mxu0 0.0
        %1272 = vmatprep.subr.mxu0 0.0
        %1273 = vmatpush1.msra.mxu0 0.0
        %1274 = vmatprep.subr.mxu0 0.0
        %1275 = vmatpush1.msra.mxu0 0.0
        %1276 = vmatprep.subr.mxu0 0.0
        %1277 = vmatpush1.msra.mxu0 0.0
        %1278 = vmatprep.subr.mxu0 0.0
        %1279 = vmatpush1.msra.mxu0 0.0
        %1280 = vmatprep.subr.mxu0 0.0
        %1281 = vmatpush1.msra.mxu0 0.0
        %1282 = vmatprep.subr.mxu0 0.0
        %1283 = vmatpush1.msra.mxu0 0.0
        %1284 = vmatprep.subr.mxu0 0.0
        %1285 = vmatpush1.msra.mxu0 0.0
        %1286 = vmatprep.subr.mxu0 0.0
        %1287 = vmatpush1.msra.mxu0 0.0
        %1288 = vmatprep.subr.mxu0 0.0
        %1289 = vmatpush1.msra.mxu0 0.0
        %1290 = vmatprep.subr.mxu0 0.0
        %1291 = vmatpush1.msra.mxu0 0.0
        %1292 = vmatprep.subr.mxu0 0.0
        %1293 = vmatpush1.msra.mxu0 0.0
        %1294 = vmatprep.subr.mxu0 0.0
        %1295 = vmatpush1.msra.mxu0 0.0
        %1296 = vmatprep.subr.mxu0 0.0
        %1297 = vmatpush1.msra.mxu0 0.0
        %1298 = vmatprep.subr.mxu0 0.0
        %1299 = vmatpush1.msra.mxu0 0.0
        %1300 = vmatprep.subr.mxu0 0.0
        %1301 = vmatpush1.msra.mxu0 0.0
        %1302 = vmatprep.subr.mxu0 0.0
        %1303 = vmatpush1.msra.mxu0 0.0
        %1304 = vmatprep.subr.mxu0 0.0
        %1305 = vmatpush1.msra.mxu0 0.0
        %1306 = vmatprep.subr.mxu0 0.0
        %1307 = vmatpush1.msra.mxu0 0.0
        %1308 = vmatprep.subr.mxu0 0.0
        %1309 = vmatpush1.msra.mxu0 0.0
        %1310 = vmatprep.subr.mxu0 0.0
        %1311 = vmatpush1.msra.mxu0 0.0
        %1312 = vmatprep.subr.mxu0 0.0
        %1313 = vmatpush1.msra.mxu0 0.0
        %1314 = vmatprep.subr.mxu0 0.0
        %1315 = vmatpush1.msra.mxu0 0.0
        %1316 = vmatprep.subr.mxu0 0.0
        %1317 = vmatpush1.msra.mxu0 0.0
        %1318 = vmatprep.subr.mxu0 0.0
        %1319 = vmatpush1.msra.mxu0 0.0
        %1320 = vmatprep.subr.mxu0 0.0
        %1321 = vmatpush1.msra.mxu0 0.0
        %1322 = vmatprep.subr.mxu0 0.0
        %1323 = vmatpush1.msra.mxu0 0.0
        %1324 = vmatprep.mubr.f32.mxu0 0.0
        %1325 = vmatmul.mubr.f32.gmra.mrb[0].mxu0 %v1258
        %v1326 = vpop.f32.mrb[0].mxu0
        %v1327 = vadd.f32 %v1255, %v1326
        %v1328 = vpop.f32.mrb[0].mxu0
        %1329 = vdwg.mxu0
        %v1330 = vld [vmem:[%s12] sm:$0xff]
        %v1331 = vld [vmem:[%s12 + $0x8] sm:$0xff]
        %v1332 = vld [vmem:[%s12 + $0x10] sm:$0xff]
        %v1333 = vld [vmem:[%s12 + $0x18] sm:$0xff]
        %v1334 = vld [vmem:[#allocation17] sm:$0x1]
        %v1336 = vlaneseq
        %v1337 = vshrl.u32 %v1336, 7
        %v1338 = vsub.s32 0, %v1337
        %v1339 = vrot.slane %v1334, %v1338
        %v1342 = vsel %vm1172, %v1159, 0
        %1344 = vmatprep.subr.mxu0 0.0
        %1345 = vmatpush1.msra.mxu0 %v1330
        %1346 = vmatprep.subr.mxu0 0.0
        %1347 = vmatpush1.msra.mxu0 %v1331
        %1348 = vmatprep.subr.mxu0 0.0
        %1349 = vmatpush1.msra.mxu0 %v1332
        %1350 = vmatprep.subr.mxu0 0.0
        %1351 = vmatpush1.msra.mxu0 %v1333
        %1352 = vmatprep.subr.mxu0 0.0
        %1353 = vmatpush1.msra.mxu0 0.0
        %1354 = vmatprep.subr.mxu0 0.0
        %1355 = vmatpush1.msra.mxu0 0.0
        %1356 = vmatprep.subr.mxu0 0.0
        %1357 = vmatpush1.msra.mxu0 0.0
        %1358 = vmatprep.subr.mxu0 0.0
        %1359 = vmatpush1.msra.mxu0 0.0
        %1360 = vmatprep.subr.mxu0 0.0
        %1361 = vmatpush1.msra.mxu0 0.0
        %1362 = vmatprep.subr.mxu0 0.0
        %1363 = vmatpush1.msra.mxu0 0.0
        %1364 = vmatprep.subr.mxu0 0.0
        %1365 = vmatpush1.msra.mxu0 0.0
        %1366 = vmatprep.subr.mxu0 0.0
        %1367 = vmatpush1.msra.mxu0 0.0
        %1368 = vmatprep.subr.mxu0 0.0
        %1369 = vmatpush1.msra.mxu0 0.0
        %1370 = vmatprep.subr.mxu0 0.0
        %1371 = vmatpush1.msra.mxu0 0.0
        %1372 = vmatprep.subr.mxu0 0.0
        %1373 = vmatpush1.msra.mxu0 0.0
        %1374 = vmatprep.subr.mxu0 0.0
        %1375 = vmatpush1.msra.mxu0 0.0
        %1376 = vmatprep.subr.mxu0 0.0
        %1377 = vmatpush1.msra.mxu0 0.0
        %1378 = vmatprep.subr.mxu0 0.0
        %1379 = vmatpush1.msra.mxu0 0.0
        %1380 = vmatprep.subr.mxu0 0.0
        %1381 = vmatpush1.msra.mxu0 0.0
        %1382 = vmatprep.subr.mxu0 0.0
        %1383 = vmatpush1.msra.mxu0 0.0
        %1384 = vmatprep.subr.mxu0 0.0
        %1385 = vmatpush1.msra.mxu0 0.0
        %1386 = vmatprep.subr.mxu0 0.0
        %1387 = vmatpush1.msra.mxu0 0.0
        %1388 = vmatprep.subr.mxu0 0.0
        %1389 = vmatpush1.msra.mxu0 0.0
        %1390 = vmatprep.subr.mxu0 0.0
        %1391 = vmatpush1.msra.mxu0 0.0
        %1392 = vmatprep.subr.mxu0 0.0
        %1393 = vmatpush1.msra.mxu0 0.0
        %1394 = vmatprep.subr.mxu0 0.0
        %1395 = vmatpush1.msra.mxu0 0.0
        %1396 = vmatprep.subr.mxu0 0.0
        %1397 = vmatpush1.msra.mxu0 0.0
        %1398 = vmatprep.subr.mxu0 0.0
        %1399 = vmatpush1.msra.mxu0 0.0
        %1400 = vmatprep.subr.mxu0 0.0
        %1401 = vmatpush1.msra.mxu0 0.0
        %1402 = vmatprep.subr.mxu0 0.0
        %1403 = vmatpush1.msra.mxu0 0.0
        %1404 = vmatprep.subr.mxu0 0.0
        %1405 = vmatpush1.msra.mxu0 0.0
        %1406 = vmatprep.subr.mxu0 0.0
        %1407 = vmatpush1.msra.mxu0 0.0
        %1408 = vmatprep.mubr.f32.mxu0 0.0
        %1409 = vmatmul.mubr.f32.gmra.mrb[0].mxu0 %v1342
        %v1410 = vpop.f32.mrb[0].mxu0
        %v1411 = vadd.f32 %v1339, %v1410
        %v1412 = vpop.f32.mrb[0].mxu0
        %1413 = vdwg.mxu0
        %vm1414 = vcmask 64512
        %v1416 = vsel %vm1414, %v1243, 0
        %v1419 = vsel %vm1414, %v1327, 0
        %1421 = vmatprep.subr.mxu0 0.0
        %1422 = vmatpush1.xpose.msra.mxu0 %v1419
        %1423 = vmatprep.subr.mxu0 0.0
        %1424 = vmatpush1.xpose.msra.mxu0 0.0
        %1425 = vmatprep.subr.mxu0 0.0
        %1426 = vmatpush1.xpose.msra.mxu0 0.0
        %1427 = vmatprep.subr.mxu0 0.0
        %1428 = vmatpush1.xpose.msra.mxu0 0.0
        %1429 = vmatprep.subr.mxu0 0.0
        %1430 = vmatpush1.xpose.msra.mxu0 0.0
        %1431 = vmatprep.subr.mxu0 0.0
        %1432 = vmatpush1.xpose.msra.mxu0 0.0
        %1433 = vmatprep.subr.mxu0 0.0
        %1434 = vmatpush1.xpose.msra.mxu0 0.0
        %1435 = vmatprep.subr.mxu0 0.0
        %1436 = vmatpush1.xpose.msra.mxu0 0.0
        %1437 = vmatprep.subr.mxu0 0.0
        %1438 = vmatpush1.xpose.msra.mxu0 0.0
        %1439 = vmatprep.subr.mxu0 0.0
        %1440 = vmatpush1.xpose.msra.mxu0 0.0
        %1441 = vmatprep.subr.mxu0 0.0
        %1442 = vmatpush1.xpose.msra.mxu0 0.0
        %1443 = vmatprep.subr.mxu0 0.0
        %1444 = vmatpush1.xpose.msra.mxu0 0.0
        %1445 = vmatprep.subr.mxu0 0.0
        %1446 = vmatpush1.xpose.msra.mxu0 0.0
        %1447 = vmatprep.subr.mxu0 0.0
        %1448 = vmatpush1.xpose.msra.mxu0 0.0
        %1449 = vmatprep.subr.mxu0 0.0
        %1450 = vmatpush1.xpose.msra.mxu0 0.0
        %1451 = vmatprep.subr.mxu0 0.0
        %1452 = vmatpush1.xpose.msra.mxu0 0.0
        %1453 = vmatprep.subr.mxu0 0.0
        %1454 = vmatpush1.xpose.msra.mxu0 0.0
        %1455 = vmatprep.subr.mxu0 0.0
        %1456 = vmatpush1.xpose.msra.mxu0 0.0
        %1457 = vmatprep.subr.mxu0 0.0
        %1458 = vmatpush1.xpose.msra.mxu0 0.0
        %1459 = vmatprep.subr.mxu0 0.0
        %1460 = vmatpush1.xpose.msra.mxu0 0.0
        %1461 = vmatprep.subr.mxu0 0.0
        %1462 = vmatpush1.xpose.msra.mxu0 0.0
        %1463 = vmatprep.subr.mxu0 0.0
        %1464 = vmatpush1.xpose.msra.mxu0 0.0
        %1465 = vmatprep.subr.mxu0 0.0
        %1466 = vmatpush1.xpose.msra.mxu0 0.0
        %1467 = vmatprep.subr.mxu0 0.0
        %1468 = vmatpush1.xpose.msra.mxu0 0.0
        %1469 = vmatprep.subr.mxu0 0.0
        %1470 = vmatpush1.xpose.msra.mxu0 0.0
        %1471 = vmatprep.subr.mxu0 0.0
        %1472 = vmatpush1.xpose.msra.mxu0 0.0
        %1473 = vmatprep.subr.mxu0 0.0
        %1474 = vmatpush1.xpose.msra.mxu0 0.0
        %1475 = vmatprep.subr.mxu0 0.0
        %1476 = vmatpush1.xpose.msra.mxu0 0.0
        %1477 = vmatprep.subr.mxu0 0.0
        %1478 = vmatpush1.xpose.msra.mxu0 0.0
        %1479 = vmatprep.subr.mxu0 0.0
        %1480 = vmatpush1.xpose.msra.mxu0 0.0
        %1481 = vmatprep.subr.mxu0 0.0
        %1482 = vmatpush1.xpose.msra.mxu0 0.0
        %1483 = vmatprep.subr.mxu0 0.0
        %1484 = vmatpush1.xpose.msra.mxu0 0.0
        %1485 = vmatprep.mubr.f32.mxu0 0.0
        %1486 = vmatmul.mubr.f32.gmra.mrb[0].mxu0 %v1416
        %v1487 = vpop.f32.mrb[0].mxu0
        %v1488 = vadd.f32 0.0, %v1487
        %v1489 = vpop.f32.mrb[0].mxu0
        %1490 = vdwg.mxu0
        %1491 = vrot.lane.b32.xlu0 %v1243, 120
        %v1492 = vpop.permute.xlu0 %1491
        %1493 = vrot.lane.b32.xlu0 %v1327, 120
        %v1494 = vpop.permute.xlu0 %1493
        %v1495 = vsel %vm1414, %v1492, 0
        %v1497 = vsel %vm1414, %v1494, 0
        %1499 = vmatprep.subr.mxu0 0.0
        %1500 = vmatpush1.xpose.msra.mxu0 %v1497
        %1501 = vmatprep.subr.mxu0 0.0
        %1502 = vmatpush1.xpose.msra.mxu0 0.0
        %1503 = vmatprep.subr.mxu0 0.0
        %1504 = vmatpush1.xpose.msra.mxu0 0.0
        %1505 = vmatprep.subr.mxu0 0.0
        %1506 = vmatpush1.xpose.msra.mxu0 0.0
        %1507 = vmatprep.subr.mxu0 0.0
        %1508 = vmatpush1.xpose.msra.mxu0 0.0
        %1509 = vmatprep.subr.mxu0 0.0
        %1510 = vmatpush1.xpose.msra.mxu0 0.0
        %1511 = vmatprep.subr.mxu0 0.0
        %1512 = vmatpush1.xpose.msra.mxu0 0.0
        %1513 = vmatprep.subr.mxu0 0.0
        %1514 = vmatpush1.xpose.msra.mxu0 0.0
        %1515 = vmatprep.subr.mxu0 0.0
        %1516 = vmatpush1.xpose.msra.mxu0 0.0
        %1517 = vmatprep.subr.mxu0 0.0
        %1518 = vmatpush1.xpose.msra.mxu0 0.0
        %1519 = vmatprep.subr.mxu0 0.0
        %1520 = vmatpush1.xpose.msra.mxu0 0.0
        %1521 = vmatprep.subr.mxu0 0.0
        %1522 = vmatpush1.xpose.msra.mxu0 0.0
        %1523 = vmatprep.subr.mxu0 0.0
        %1524 = vmatpush1.xpose.msra.mxu0 0.0
        %1525 = vmatprep.subr.mxu0 0.0
        %1526 = vmatpush1.xpose.msra.mxu0 0.0
        %1527 = vmatprep.subr.mxu0 0.0
        %1528 = vmatpush1.xpose.msra.mxu0 0.0
        %1529 = vmatprep.subr.mxu0 0.0
        %1530 = vmatpush1.xpose.msra.mxu0 0.0
        %1531 = vmatprep.subr.mxu0 0.0
        %1532 = vmatpush1.xpose.msra.mxu0 0.0
        %1533 = vmatprep.subr.mxu0 0.0
        %1534 = vmatpush1.xpose.msra.mxu0 0.0
        %1535 = vmatprep.subr.mxu0 0.0
        %1536 = vmatpush1.xpose.msra.mxu0 0.0
        %1537 = vmatprep.subr.mxu0 0.0
        %1538 = vmatpush1.xpose.msra.mxu0 0.0
        %1539 = vmatprep.subr.mxu0 0.0
        %1540 = vmatpush1.xpose.msra.mxu0 0.0
        %1541 = vmatprep.subr.mxu0 0.0
        %1542 = vmatpush1.xpose.msra.mxu0 0.0
        %1543 = vmatprep.subr.mxu0 0.0
        %1544 = vmatpush1.xpose.msra.mxu0 0.0
        %1545 = vmatprep.subr.mxu0 0.0
        %1546 = vmatpush1.xpose.msra.mxu0 0.0
        %1547 = vmatprep.subr.mxu0 0.0
        %1548 = vmatpush1.xpose.msra.mxu0 0.0
        %1549 = vmatprep.subr.mxu0 0.0
        %1550 = vmatpush1.xpose.msra.mxu0 0.0
        %1551 = vmatprep.subr.mxu0 0.0
        %1552 = vmatpush1.xpose.msra.mxu0 0.0
        %1553 = vmatprep.subr.mxu0 0.0
        %1554 = vmatpush1.xpose.msra.mxu0 0.0
        %1555 = vmatprep.subr.mxu0 0.0
        %1556 = vmatpush1.xpose.msra.mxu0 0.0
        %1557 = vmatprep.subr.mxu0 0.0
        %1558 = vmatpush1.xpose.msra.mxu0 0.0
        %1559 = vmatprep.subr.mxu0 0.0
        %1560 = vmatpush1.xpose.msra.mxu0 0.0
        %1561 = vmatprep.subr.mxu0 0.0
        %1562 = vmatpush1.xpose.msra.mxu0 0.0
        %1563 = vmatprep.mubr.f32.mxu0 0.0
        %1564 = vmatmul.mubr.f32.gmra.mrb[0].mxu0 %v1495
        %v1565 = vpop.f32.mrb[0].mxu0
        %v1566 = vadd.f32 0.0, %v1565
        %v1567 = vpop.f32.mrb[0].mxu0
        %1568 = vdwg.mxu0
        %1569 = vrot.lane.b32.xlu0 %v1243, 112
        %v1570 = vpop.permute.xlu0 %1569
        %1571 = vrot.lane.b32.xlu0 %v1327, 112
        %v1572 = vpop.permute.xlu0 %1571
        %v1573 = vsel %vm1414, %v1570, 0
        %v1575 = vsel %vm1414, %v1572, 0
        %1577 = vmatprep.subr.mxu0 0.0
        %1578 = vmatpush1.xpose.msra.mxu0 %v1575
        %1579 = vmatprep.subr.mxu0 0.0
        %1580 = vmatpush1.xpose.msra.mxu0 0.0
        %1581 = vmatprep.subr.mxu0 0.0
        %1582 = vmatpush1.xpose.msra.mxu0 0.0
        %1583 = vmatprep.subr.mxu0 0.0
        %1584 = vmatpush1.xpose.msra.mxu0 0.0
        %1585 = vmatprep.subr.mxu0 0.0
        %1586 = vmatpush1.xpose.msra.mxu0 0.0
        %1587 = vmatprep.subr.mxu0 0.0
        %1588 = vmatpush1.xpose.msra.mxu0 0.0
        %1589 = vmatprep.subr.mxu0 0.0
        %1590 = vmatpush1.xpose.msra.mxu0 0.0
        %1591 = vmatprep.subr.mxu0 0.0
        %1592 = vmatpush1.xpose.msra.mxu0 0.0
        %1593 = vmatprep.subr.mxu0 0.0
        %1594 = vmatpush1.xpose.msra.mxu0 0.0
        %1595 = vmatprep.subr.mxu0 0.0
        %1596 = vmatpush1.xpose.msra.mxu0 0.0
        %1597 = vmatprep.subr.mxu0 0.0
        %1598 = vmatpush1.xpose.msra.mxu0 0.0
        %1599 = vmatprep.subr.mxu0 0.0
        %1600 = vmatpush1.xpose.msra.mxu0 0.0
        %1601 = vmatprep.subr.mxu0 0.0
        %1602 = vmatpush1.xpose.msra.mxu0 0.0
        %1603 = vmatprep.subr.mxu0 0.0
        %1604 = vmatpush1.xpose.msra.mxu0 0.0
        %1605 = vmatprep.subr.mxu0 0.0
        %1606 = vmatpush1.xpose.msra.mxu0 0.0
        %1607 = vmatprep.subr.mxu0 0.0
        %1608 = vmatpush1.xpose.msra.mxu0 0.0
        %1609 = vmatprep.subr.mxu0 0.0
        %1610 = vmatpush1.xpose.msra.mxu0 0.0
        %1611 = vmatprep.subr.mxu0 0.0
        %1612 = vmatpush1.xpose.msra.mxu0 0.0
        %1613 = vmatprep.subr.mxu0 0.0
        %1614 = vmatpush1.xpose.msra.mxu0 0.0
        %1615 = vmatprep.subr.mxu0 0.0
        %1616 = vmatpush1.xpose.msra.mxu0 0.0
        %1617 = vmatprep.subr.mxu0 0.0
        %1618 = vmatpush1.xpose.msra.mxu0 0.0
        %1619 = vmatprep.subr.mxu0 0.0
        %1620 = vmatpush1.xpose.msra.mxu0 0.0
        %1621 = vmatprep.subr.mxu0 0.0
        %1622 = vmatpush1.xpose.msra.mxu0 0.0
        %1623 = vmatprep.subr.mxu0 0.0
        %1624 = vmatpush1.xpose.msra.mxu0 0.0
        %1625 = vmatprep.subr.mxu0 0.0
        %1626 = vmatpush1.xpose.msra.mxu0 0.0
        %1627 = vmatprep.subr.mxu0 0.0
        %1628 = vmatpush1.xpose.msra.mxu0 0.0
        %1629 = vmatprep.subr.mxu0 0.0
        %1630 = vmatpush1.xpose.msra.mxu0 0.0
        %1631 = vmatprep.subr.mxu0 0.0
        %1632 = vmatpush1.xpose.msra.mxu0 0.0
        %1633 = vmatprep.subr.mxu0 0.0
        %1634 = vmatpush1.xpose.msra.mxu0 0.0
        %1635 = vmatprep.subr.mxu0 0.0
        %1636 = vmatpush1.xpose.msra.mxu0 0.0
        %1637 = vmatprep.subr.mxu0 0.0
        %1638 = vmatpush1.xpose.msra.mxu0 0.0
        %1639 = vmatprep.subr.mxu0 0.0
        %1640 = vmatpush1.xpose.msra.mxu0 0.0
        %1641 = vmatprep.mubr.f32.mxu0 0.0
        %1642 = vmatmul.mubr.f32.gmra.mrb[0].mxu0 %v1573
        %v1643 = vpop.f32.mrb[0].mxu0
        %v1644 = vadd.f32 0.0, %v1643
        %v1645 = vpop.f32.mrb[0].mxu0
        %1646 = vdwg.mxu0
        %1647 = vrot.lane.b32.xlu0 %v1243, 104
        %v1648 = vpop.permute.xlu0 %1647
        %1649 = vrot.lane.b32.xlu0 %v1327, 104
        %v1650 = vpop.permute.xlu0 %1649
        %v1651 = vsel %vm1414, %v1648, 0
        %v1653 = vsel %vm1414, %v1650, 0
        %1655 = vmatprep.subr.mxu0 0.0
        %1656 = vmatpush1.xpose.msra.mxu0 %v1653
        %1657 = vmatprep.subr.mxu0 0.0
        %1658 = vmatpush1.xpose.msra.mxu0 0.0
        %1659 = vmatprep.subr.mxu0 0.0
        %1660 = vmatpush1.xpose.msra.mxu0 0.0
        %1661 = vmatprep.subr.mxu0 0.0
        %1662 = vmatpush1.xpose.msra.mxu0 0.0
        %1663 = vmatprep.subr.mxu0 0.0
        %1664 = vmatpush1.xpose.msra.mxu0 0.0
        %1665 = vmatprep.subr.mxu0 0.0
        %1666 = vmatpush1.xpose.msra.mxu0 0.0
        %1667 = vmatprep.subr.mxu0 0.0
        %1668 = vmatpush1.xpose.msra.mxu0 0.0
        %1669 = vmatprep.subr.mxu0 0.0
        %1670 = vmatpush1.xpose.msra.mxu0 0.0
        %1671 = vmatprep.subr.mxu0 0.0
        %1672 = vmatpush1.xpose.msra.mxu0 0.0
        %1673 = vmatprep.subr.mxu0 0.0
        %1674 = vmatpush1.xpose.msra.mxu0 0.0
        %1675 = vmatprep.subr.mxu0 0.0
        %1676 = vmatpush1.xpose.msra.mxu0 0.0
        %1677 = vmatprep.subr.mxu0 0.0
        %1678 = vmatpush1.xpose.msra.mxu0 0.0
        %1679 = vmatprep.subr.mxu0 0.0
        %1680 = vmatpush1.xpose.msra.mxu0 0.0
        %1681 = vmatprep.subr.mxu0 0.0
        %1682 = vmatpush1.xpose.msra.mxu0 0.0
        %1683 = vmatprep.subr.mxu0 0.0
        %1684 = vmatpush1.xpose.msra.mxu0 0.0
        %1685 = vmatprep.subr.mxu0 0.0
        %1686 = vmatpush1.xpose.msra.mxu0 0.0
        %1687 = vmatprep.subr.mxu0 0.0
        %1688 = vmatpush1.xpose.msra.mxu0 0.0
        %1689 = vmatprep.subr.mxu0 0.0
        %1690 = vmatpush1.xpose.msra.mxu0 0.0
        %1691 = vmatprep.subr.mxu0 0.0
        %1692 = vmatpush1.xpose.msra.mxu0 0.0
        %1693 = vmatprep.subr.mxu0 0.0
        %1694 = vmatpush1.xpose.msra.mxu0 0.0
        %1695 = vmatprep.subr.mxu0 0.0
        %1696 = vmatpush1.xpose.msra.mxu0 0.0
        %1697 = vmatprep.subr.mxu0 0.0
        %1698 = vmatpush1.xpose.msra.mxu0 0.0
        %1699 = vmatprep.subr.mxu0 0.0
        %1700 = vmatpush1.xpose.msra.mxu0 0.0
        %1701 = vmatprep.subr.mxu0 0.0
        %1702 = vmatpush1.xpose.msra.mxu0 0.0
        %1703 = vmatprep.subr.mxu0 0.0
        %1704 = vmatpush1.xpose.msra.mxu0 0.0
        %1705 = vmatprep.subr.mxu0 0.0
        %1706 = vmatpush1.xpose.msra.mxu0 0.0
        %1707 = vmatprep.subr.mxu0 0.0
        %1708 = vmatpush1.xpose.msra.mxu0 0.0
        %1709 = vmatprep.subr.mxu0 0.0
        %1710 = vmatpush1.xpose.msra.mxu0 0.0
        %1711 = vmatprep.subr.mxu0 0.0
        %1712 = vmatpush1.xpose.msra.mxu0 0.0
        %1713 = vmatprep.subr.mxu0 0.0
        %1714 = vmatpush1.xpose.msra.mxu0 0.0
        %1715 = vmatprep.subr.mxu0 0.0
        %1716 = vmatpush1.xpose.msra.mxu0 0.0
        %1717 = vmatprep.subr.mxu0 0.0
        %1718 = vmatpush1.xpose.msra.mxu0 0.0
        %1719 = vmatprep.mubr.f32.mxu0 0.0
        %1720 = vmatmul.mubr.f32.gmra.mrb[0].mxu0 %v1651
        %v1721 = vpop.f32.mrb[0].mxu0
        %v1722 = vadd.f32 0.0, %v1721
        %v1723 = vpop.f32.mrb[0].mxu0
        %1724 = vdwg.mxu0
        %v1725 = vadd.f32 %v1488, %v1160
        %v1726 = vadd.f32 %v1566, %v1160
        %v1727 = vadd.f32 %v1644, %v1160
        %v1728 = vadd.f32 %v1722, %v1160
        %v1729 = vsel %vm1414, %v1725, -inf
        %1730 = vmax.xlane.f32.xlu0 %v1729
        %v1731 = vpop.xlane.xlu0 %1730
        %v1732 = vsel %vm1414, %v1726, -inf
        %1733 = vmax.xlane.f32.xlu0 %v1732
        %v1734 = vpop.xlane.xlu0 %1733
        %v1735 = vsel %vm1414, %v1727, -inf
        %1736 = vmax.xlane.f32.xlu0 %v1735
        %v1737 = vpop.xlane.xlu0 %1736
        %v1738 = vsel %vm1414, %v1728, -inf
        %1739 = vmax.xlane.f32.xlu0 %v1738
        %v1740 = vpop.xlane.xlu0 %1739
        %v1741 = vsub.f32 %v1725, %v1731
        %v1742 = vsub.f32 %v1726, %v1734
        %v1743 = vsub.f32 %v1727, %v1737
        %v1744 = vsub.f32 %v1728, %v1740
        %v1745 = vmul.f32 %v1741, 1.442695
        %v1746 = vpow.pop %v1745
        %v1747 = vmul.f32 %v1742, 1.442695
        %v1748 = vpow.pop %v1747
        %v1749 = vmul.f32 %v1743, 1.442695
        %v1750 = vpow.pop %v1749
        %v1751 = vmul.f32 %v1744, 1.442695
        %v1752 = vpow.pop %v1751
        %v1753 = vsel %vm1414, %v1746, 0.0
        %1754 = vadd.xlane.f32.xlu0 %v1753
        %v1755 = vpop.xlane.xlu0 %1754
        %v1756 = vsel %vm1414, %v1748, 0.0
        %1757 = vadd.xlane.f32.xlu0 %v1756
        %v1758 = vpop.xlane.xlu0 %1757
        %v1759 = vsel %vm1414, %v1750, 0.0
        %1760 = vadd.xlane.f32.xlu0 %v1759
        %v1761 = vpop.xlane.xlu0 %1760
        %v1762 = vsel %vm1414, %v1752, 0.0
        %1763 = vadd.xlane.f32.xlu0 %v1762
        %v1764 = vpop.xlane.xlu0 %1763
        %v1765 = vrcp.pop %v1755
        %v1766 = vrcp.pop %v1758
        %v1767 = vrcp.pop %v1761
        %v1768 = vrcp.pop %v1764
        %v1769 = vmul.f32 %v1746, %v1765
        %v1770 = vmul.f32 %v1748, %v1766
        %v1771 = vmul.f32 %v1750, %v1767
        %v1772 = vmul.f32 %v1752, %v1768
        %v1774 = vsel %vm1414, %v1769, 0
        %1776 = vmatprep.subr.mxu0 0.0
        %1777 = vmatpush1.msra.mxu0 %v1411
        %1778 = vmatprep.subr.mxu0 0.0
        %1779 = vmatpush1.msra.mxu0 0.0
        %1780 = vmatprep.subr.mxu0 0.0
        %1781 = vmatpush1.msra.mxu0 0.0
        %1782 = vmatprep.subr.mxu0 0.0
        %1783 = vmatpush1.msra.mxu0 0.0
        %1784 = vmatprep.subr.mxu0 0.0
        %1785 = vmatpush1.msra.mxu0 0.0
        %1786 = vmatprep.subr.mxu0 0.0
        %1787 = vmatpush1.msra.mxu0 0.0
        %1788 = vmatprep.subr.mxu0 0.0
        %1789 = vmatpush1.msra.mxu0 0.0
        %1790 = vmatprep.subr.mxu0 0.0
        %1791 = vmatpush1.msra.mxu0 0.0
        %1792 = vmatprep.subr.mxu0 0.0
        %1793 = vmatpush1.msra.mxu0 0.0
        %1794 = vmatprep.subr.mxu0 0.0
        %1795 = vmatpush1.msra.mxu0 0.0
        %1796 = vmatprep.subr.mxu0 0.0
        %1797 = vmatpush1.msra.mxu0 0.0
        %1798 = vmatprep.subr.mxu0 0.0
        %1799 = vmatpush1.msra.mxu0 0.0
        %1800 = vmatprep.subr.mxu0 0.0
        %1801 = vmatpush1.msra.mxu0 0.0
        %1802 = vmatprep.subr.mxu0 0.0
        %1803 = vmatpush1.msra.mxu0 0.0
        %1804 = vmatprep.subr.mxu0 0.0
        %1805 = vmatpush1.msra.mxu0 0.0
        %1806 = vmatprep.subr.mxu0 0.0
        %1807 = vmatpush1.msra.mxu0 0.0
        %1808 = vmatprep.subr.mxu0 0.0
        %1809 = vmatpush1.msra.mxu0 0.0
        %1810 = vmatprep.subr.mxu0 0.0
        %1811 = vmatpush1.msra.mxu0 0.0
        %1812 = vmatprep.subr.mxu0 0.0
        %1813 = vmatpush1.msra.mxu0 0.0
        %1814 = vmatprep.subr.mxu0 0.0
        %1815 = vmatpush1.msra.mxu0 0.0
        %1816 = vmatprep.subr.mxu0 0.0
        %1817 = vmatpush1.msra.mxu0 0.0
        %1818 = vmatprep.subr.mxu0 0.0
        %1819 = vmatpush1.msra.mxu0 0.0
        %1820 = vmatprep.subr.mxu0 0.0
        %1821 = vmatpush1.msra.mxu0 0.0
        %1822 = vmatprep.subr.mxu0 0.0
        %1823 = vmatpush1.msra.mxu0 0.0
        %1824 = vmatprep.subr.mxu0 0.0
        %1825 = vmatpush1.msra.mxu0 0.0
        %1826 = vmatprep.subr.mxu0 0.0
        %1827 = vmatpush1.msra.mxu0 0.0
        %1828 = vmatprep.subr.mxu0 0.0
        %1829 = vmatpush1.msra.mxu0 0.0
        %1830 = vmatprep.subr.mxu0 0.0
        %1831 = vmatpush1.msra.mxu0 0.0
        %1832 = vmatprep.subr.mxu0 0.0
        %1833 = vmatpush1.msra.mxu0 0.0
        %1834 = vmatprep.subr.mxu0 0.0
        %1835 = vmatpush1.msra.mxu0 0.0
        %1836 = vmatprep.subr.mxu0 0.0
        %1837 = vmatpush1.msra.mxu0 0.0
        %1838 = vmatprep.subr.mxu0 0.0
        %1839 = vmatpush1.msra.mxu0 0.0
        %1840 = vmatprep.mubr.f32.mxu0 0.0
        %1841 = vmatmul.mubr.f32.gmra.mrb[0].mxu0 %v1774
        %v1842 = vpop.f32.mrb[0].mxu0
        %v1843 = vadd.f32 0.0, %v1842
        %v1844 = vpop.f32.mrb[0].mxu0
        %1845 = vdwg.mxu0
        %1847 = vrot.lane.b32.xlu0 %v1411, 120
        %v1848 = vpop.permute.xlu0 %1847
        %v1851 = vsel %vm1414, %v1770, 0
        %1853 = vmatprep.subr.mxu0 0.0
        %1854 = vmatpush1.msra.mxu0 %v1848
        %1855 = vmatprep.subr.mxu0 0.0
        %1856 = vmatpush1.msra.mxu0 0.0
        %1857 = vmatprep.subr.mxu0 0.0
        %1858 = vmatpush1.msra.mxu0 0.0
        %1859 = vmatprep.subr.mxu0 0.0
        %1860 = vmatpush1.msra.mxu0 0.0
        %1861 = vmatprep.subr.mxu0 0.0
        %1862 = vmatpush1.msra.mxu0 0.0
        %1863 = vmatprep.subr.mxu0 0.0
        %1864 = vmatpush1.msra.mxu0 0.0
        %1865 = vmatprep.subr.mxu0 0.0
        %1866 = vmatpush1.msra.mxu0 0.0
        %1867 = vmatprep.subr.mxu0 0.0
        %1868 = vmatpush1.msra.mxu0 0.0
        %1869 = vmatprep.subr.mxu0 0.0
        %1870 = vmatpush1.msra.mxu0 0.0
        %1871 = vmatprep.subr.mxu0 0.0
        %1872 = vmatpush1.msra.mxu0 0.0
        %1873 = vmatprep.subr.mxu0 0.0
        %1874 = vmatpush1.msra.mxu0 0.0
        %1875 = vmatprep.subr.mxu0 0.0
        %1876 = vmatpush1.msra.mxu0 0.0
        %1877 = vmatprep.subr.mxu0 0.0
        %1878 = vmatpush1.msra.mxu0 0.0
        %1879 = vmatprep.subr.mxu0 0.0
        %1880 = vmatpush1.msra.mxu0 0.0
        %1881 = vmatprep.subr.mxu0 0.0
        %1882 = vmatpush1.msra.mxu0 0.0
        %1883 = vmatprep.subr.mxu0 0.0
        %1884 = vmatpush1.msra.mxu0 0.0
        %1885 = vmatprep.subr.mxu0 0.0
        %1886 = vmatpush1.msra.mxu0 0.0
        %1887 = vmatprep.subr.mxu0 0.0
        %1888 = vmatpush1.msra.mxu0 0.0
        %1889 = vmatprep.subr.mxu0 0.0
        %1890 = vmatpush1.msra.mxu0 0.0
        %1891 = vmatprep.subr.mxu0 0.0
        %1892 = vmatpush1.msra.mxu0 0.0
        %1893 = vmatprep.subr.mxu0 0.0
        %1894 = vmatpush1.msra.mxu0 0.0
        %1895 = vmatprep.subr.mxu0 0.0
        %1896 = vmatpush1.msra.mxu0 0.0
        %1897 = vmatprep.subr.mxu0 0.0
        %1898 = vmatpush1.msra.mxu0 0.0
        %1899 = vmatprep.subr.mxu0 0.0
        %1900 = vmatpush1.msra.mxu0 0.0
        %1901 = vmatprep.subr.mxu0 0.0
        %1902 = vmatpush1.msra.mxu0 0.0
        %1903 = vmatprep.subr.mxu0 0.0
        %1904 = vmatpush1.msra.mxu0 0.0
        %1905 = vmatprep.subr.mxu0 0.0
        %1906 = vmatpush1.msra.mxu0 0.0
        %1907 = vmatprep.subr.mxu0 0.0
        %1908 = vmatpush1.msra.mxu0 0.0
        %1909 = vmatprep.subr.mxu0 0.0
        %1910 = vmatpush1.msra.mxu0 0.0
        %1911 = vmatprep.subr.mxu0 0.0
        %1912 = vmatpush1.msra.mxu0 0.0
        %1913 = vmatprep.subr.mxu0 0.0
        %1914 = vmatpush1.msra.mxu0 0.0
        %1915 = vmatprep.subr.mxu0 0.0
        %1916 = vmatpush1.msra.mxu0 0.0
        %1917 = vmatprep.mubr.f32.mxu0 0.0
        %1918 = vmatmul.mubr.f32.gmra.mrb[0].mxu0 %v1851
        %v1919 = vpop.f32.mrb[0].mxu0
        %v1920 = vadd.f32 0.0, %v1919
        %v1921 = vpop.f32.mrb[0].mxu0
        %1922 = vdwg.mxu0
        %1923 = vrot.lane.b32.xlu0 %v1411, 112
        %v1924 = vpop.permute.xlu0 %1923
        %v1927 = vsel %vm1414, %v1771, 0
        %1929 = vmatprep.subr.mxu0 0.0
        %1930 = vmatpush1.msra.mxu0 %v1924
        %1931 = vmatprep.subr.mxu0 0.0
        %1932 = vmatpush1.msra.mxu0 0.0
        %1933 = vmatprep.subr.mxu0 0.0
        %1934 = vmatpush1.msra.mxu0 0.0
        %1935 = vmatprep.subr.mxu0 0.0
        %1936 = vmatpush1.msra.mxu0 0.0
        %1937 = vmatprep.subr.mxu0 0.0
        %1938 = vmatpush1.msra.mxu0 0.0
        %1939 = vmatprep.subr.mxu0 0.0
        %1940 = vmatpush1.msra.mxu0 0.0
        %1941 = vmatprep.subr.mxu0 0.0
        %1942 = vmatpush1.msra.mxu0 0.0
        %1943 = vmatprep.subr.mxu0 0.0
        %1944 = vmatpush1.msra.mxu0 0.0
        %1945 = vmatprep.subr.mxu0 0.0
        %1946 = vmatpush1.msra.mxu0 0.0
        %1947 = vmatprep.subr.mxu0 0.0
        %1948 = vmatpush1.msra.mxu0 0.0
        %1949 = vmatprep.subr.mxu0 0.0
        %1950 = vmatpush1.msra.mxu0 0.0
        %1951 = vmatprep.subr.mxu0 0.0
        %1952 = vmatpush1.msra.mxu0 0.0
        %1953 = vmatprep.subr.mxu0 0.0
        %1954 = vmatpush1.msra.mxu0 0.0
        %1955 = vmatprep.subr.mxu0 0.0
        %1956 = vmatpush1.msra.mxu0 0.0
        %1957 = vmatprep.subr.mxu0 0.0
        %1958 = vmatpush1.msra.mxu0 0.0
        %1959 = vmatprep.subr.mxu0 0.0
        %1960 = vmatpush1.msra.mxu0 0.0
        %1961 = vmatprep.subr.mxu0 0.0
        %1962 = vmatpush1.msra.mxu0 0.0
        %1963 = vmatprep.subr.mxu0 0.0
        %1964 = vmatpush1.msra.mxu0 0.0
        %1965 = vmatprep.subr.mxu0 0.0
        %1966 = vmatpush1.msra.mxu0 0.0
        %1967 = vmatprep.subr.mxu0 0.0
        %1968 = vmatpush1.msra.mxu0 0.0
        %1969 = vmatprep.subr.mxu0 0.0
        %1970 = vmatpush1.msra.mxu0 0.0
        %1971 = vmatprep.subr.mxu0 0.0
        %1972 = vmatpush1.msra.mxu0 0.0
        %1973 = vmatprep.subr.mxu0 0.0
        %1974 = vmatpush1.msra.mxu0 0.0
        %1975 = vmatprep.subr.mxu0 0.0
        %1976 = vmatpush1.msra.mxu0 0.0
        %1977 = vmatprep.subr.mxu0 0.0
        %1978 = vmatpush1.msra.mxu0 0.0
        %1979 = vmatprep.subr.mxu0 0.0
        %1980 = vmatpush1.msra.mxu0 0.0
        %1981 = vmatprep.subr.mxu0 0.0
        %1982 = vmatpush1.msra.mxu0 0.0
        %1983 = vmatprep.subr.mxu0 0.0
        %1984 = vmatpush1.msra.mxu0 0.0
        %1985 = vmatprep.subr.mxu0 0.0
        %1986 = vmatpush1.msra.mxu0 0.0
        %1987 = vmatprep.subr.mxu0 0.0
        %1988 = vmatpush1.msra.mxu0 0.0
        %1989 = vmatprep.subr.mxu0 0.0
        %1990 = vmatpush1.msra.mxu0 0.0
        %1991 = vmatprep.subr.mxu0 0.0
        %1992 = vmatpush1.msra.mxu0 0.0
        %1993 = vmatprep.mubr.f32.mxu0 0.0
        %1994 = vmatmul.mubr.f32.gmra.mrb[0].mxu0 %v1927
        %v1995 = vpop.f32.mrb[0].mxu0
        %v1996 = vadd.f32 0.0, %v1995
        %v1997 = vpop.f32.mrb[0].mxu0
        %1998 = vdwg.mxu0
        %1999 = vrot.lane.b32.xlu0 %v1411, 104
        %v2000 = vpop.permute.xlu0 %1999
        %v2003 = vsel %vm1414, %v1772, 0
        %2005 = vmatprep.subr.mxu0 0.0
        %2006 = vmatpush1.msra.mxu0 %v2000
        %2007 = vmatprep.subr.mxu0 0.0
        %2008 = vmatpush1.msra.mxu0 0.0
        %2009 = vmatprep.subr.mxu0 0.0
        %2010 = vmatpush1.msra.mxu0 0.0
        %2011 = vmatprep.subr.mxu0 0.0
        %2012 = vmatpush1.msra.mxu0 0.0
        %2013 = vmatprep.subr.mxu0 0.0
        %2014 = vmatpush1.msra.mxu0 0.0
        %2015 = vmatprep.subr.mxu0 0.0
        %2016 = vmatpush1.msra.mxu0 0.0
        %2017 = vmatprep.subr.mxu0 0.0
        %2018 = vmatpush1.msra.mxu0 0.0
        %2019 = vmatprep.subr.mxu0 0.0
        %2020 = vmatpush1.msra.mxu0 0.0
        %2021 = vmatprep.subr.mxu0 0.0
        %2022 = vmatpush1.msra.mxu0 0.0
        %2023 = vmatprep.subr.mxu0 0.0
        %2024 = vmatpush1.msra.mxu0 0.0
        %2025 = vmatprep.subr.mxu0 0.0
        %2026 = vmatpush1.msra.mxu0 0.0
        %2027 = vmatprep.subr.mxu0 0.0
        %2028 = vmatpush1.msra.mxu0 0.0
        %2029 = vmatprep.subr.mxu0 0.0
        %2030 = vmatpush1.msra.mxu0 0.0
        %2031 = vmatprep.subr.mxu0 0.0
        %2032 = vmatpush1.msra.mxu0 0.0
        %2033 = vmatprep.subr.mxu0 0.0
        %2034 = vmatpush1.msra.mxu0 0.0
        %2035 = vmatprep.subr.mxu0 0.0
        %2036 = vmatpush1.msra.mxu0 0.0
        %2037 = vmatprep.subr.mxu0 0.0
        %2038 = vmatpush1.msra.mxu0 0.0
        %2039 = vmatprep.subr.mxu0 0.0
        %2040 = vmatpush1.msra.mxu0 0.0
        %2041 = vmatprep.subr.mxu0 0.0
        %2042 = vmatpush1.msra.mxu0 0.0
        %2043 = vmatprep.subr.mxu0 0.0
        %2044 = vmatpush1.msra.mxu0 0.0
        %2045 = vmatprep.subr.mxu0 0.0
        %2046 = vmatpush1.msra.mxu0 0.0
        %2047 = vmatprep.subr.mxu0 0.0
        %2048 = vmatpush1.msra.mxu0 0.0
        %2049 = vmatprep.subr.mxu0 0.0
        %2050 = vmatpush1.msra.mxu0 0.0
        %2051 = vmatprep.subr.mxu0 0.0
        %2052 = vmatpush1.msra.mxu0 0.0
        %2053 = vmatprep.subr.mxu0 0.0
        %2054 = vmatpush1.msra.mxu0 0.0
        %2055 = vmatprep.subr.mxu0 0.0
        %2056 = vmatpush1.msra.mxu0 0.0
        %2057 = vmatprep.subr.mxu0 0.0
        %2058 = vmatpush1.msra.mxu0 0.0
        %2059 = vmatprep.subr.mxu0 0.0
        %2060 = vmatpush1.msra.mxu0 0.0
        %2061 = vmatprep.subr.mxu0 0.0
        %2062 = vmatpush1.msra.mxu0 0.0
        %2063 = vmatprep.subr.mxu0 0.0
        %2064 = vmatpush1.msra.mxu0 0.0
        %2065 = vmatprep.subr.mxu0 0.0
        %2066 = vmatpush1.msra.mxu0 0.0
        %2067 = vmatprep.subr.mxu0 0.0
        %2068 = vmatpush1.msra.mxu0 0.0
        %2069 = vmatprep.mubr.f32.mxu0 0.0
        %2070 = vmatmul.mubr.f32.gmra.mrb[0].mxu0 %v2003
        %v2071 = vpop.f32.mrb[0].mxu0
        %v2072 = vadd.f32 0.0, %v2071
        %v2073 = vpop.f32.mrb[0].mxu0
        %2074 = vdwg.mxu0
        %2076 = vrot.lane.b32.xlu0 %v1920, 8
        %v2077 = vpop.permute.xlu0 %2076
        %2080 = vrot.lane.b32.xlu0 %v1996, 16
        %v2081 = vpop.permute.xlu0 %2080
        %2084 = vrot.lane.b32.xlu0 %v2072, 24
        %v2085 = vpop.permute.xlu0 %2084
        %v2087 = vsel %vm1414, %v1843, %v2077
        %vm2088 = vcmask 130048
        %v2089 = vsel %vm2088, %v2087, %v2081
        %vm2090 = vcmask 195584
        %v2091 = vsel %vm2090, %v2089, %v2085
        %v2092 = vld [vmem:[%s20] sm:$0xff]
        %v2093 = vld [vmem:[%s20 + $0x8] sm:$0xff]
        %v2094 = vld [vmem:[%s20 + $0x10] sm:$0xff]
        %v2095 = vld [vmem:[%s20 + $0x18] sm:$0xff]
        %v2096 = vld [vmem:[%s1006] sm:$0xff]
        %v2097 = vld [vmem:[%s1015] sm:$0xff]
        %v2098 = vld [vmem:[%s1024] sm:$0xff]
        %v2099 = vld [vmem:[%s1033] sm:$0xff]
        %v2100 = vld [vmem:[%s14] sm:$0xff]
        %v2101 = vld [vmem:[%s14 + $0x8] sm:$0xff]
        %v2102 = vld [vmem:[%s14 + $0x10] sm:$0xff]
        %v2103 = vld [vmem:[%s14 + $0x18] sm:$0xff]
        %v2104 = vld [vmem:[%s15] sm:$0x1]
        %v2106 = vlaneseq
        %v2107 = vshrl.u32 %v2106, 7
        %v2108 = vsub.s32 0, %v2107
        %v2109 = vrot.slane %v2104, %v2108
        %v2112 = vsel %vm1172, %v2096, 0
        %2114 = vmatprep.subr.mxu0 0.0
        %2115 = vmatpush1.msra.mxu0 %v2100
        %2116 = vmatprep.subr.mxu0 0.0
        %2117 = vmatpush1.msra.mxu0 %v2101
        %2118 = vmatprep.subr.mxu0 0.0
        %2119 = vmatpush1.msra.mxu0 %v2102
        %2120 = vmatprep.subr.mxu0 0.0
        %2121 = vmatpush1.msra.mxu0 %v2103
        %2122 = vmatprep.subr.mxu0 0.0
        %2123 = vmatpush1.msra.mxu0 0.0
        %2124 = vmatprep.subr.mxu0 0.0
        %2125 = vmatpush1.msra.mxu0 0.0
        %2126 = vmatprep.subr.mxu0 0.0
        %2127 = vmatpush1.msra.mxu0 0.0
        %2128 = vmatprep.subr.mxu0 0.0
        %2129 = vmatpush1.msra.mxu0 0.0
        %2130 = vmatprep.subr.mxu0 0.0
        %2131 = vmatpush1.msra.mxu0 0.0
        %2132 = vmatprep.subr.mxu0 0.0
        %2133 = vmatpush1.msra.mxu0 0.0
        %2134 = vmatprep.subr.mxu0 0.0
        %2135 = vmatpush1.msra.mxu0 0.0
        %2136 = vmatprep.subr.mxu0 0.0
        %2137 = vmatpush1.msra.mxu0 0.0
        %2138 = vmatprep.subr.mxu0 0.0
        %2139 = vmatpush1.msra.mxu0 0.0
        %2140 = vmatprep.subr.mxu0 0.0
        %2141 = vmatpush1.msra.mxu0 0.0
        %2142 = vmatprep.subr.mxu0 0.0
        %2143 = vmatpush1.msra.mxu0 0.0
        %2144 = vmatprep.subr.mxu0 0.0
        %2145 = vmatpush1.msra.mxu0 0.0
        %2146 = vmatprep.subr.mxu0 0.0
        %2147 = vmatpush1.msra.mxu0 0.0
        %2148 = vmatprep.subr.mxu0 0.0
        %2149 = vmatpush1.msra.mxu0 0.0
        %2150 = vmatprep.subr.mxu0 0.0
        %2151 = vmatpush1.msra.mxu0 0.0
        %2152 = vmatprep.subr.mxu0 0.0
        %2153 = vmatpush1.msra.mxu0 0.0
        %2154 = vmatprep.subr.mxu0 0.0
        %2155 = vmatpush1.msra.mxu0 0.0
        %2156 = vmatprep.subr.mxu0 0.0
        %2157 = vmatpush1.msra.mxu0 0.0
        %2158 = vmatprep.subr.mxu0 0.0
        %2159 = vmatpush1.msra.mxu0 0.0
        %2160 = vmatprep.subr.mxu0 0.0
        %2161 = vmatpush1.msra.mxu0 0.0
        %2162 = vmatprep.subr.mxu0 0.0
        %2163 = vmatpush1.msra.mxu0 0.0
        %2164 = vmatprep.subr.mxu0 0.0
        %2165 = vmatpush1.msra.mxu0 0.0
        %2166 = vmatprep.subr.mxu0 0.0
        %2167 = vmatpush1.msra.mxu0 0.0
        %2168 = vmatprep.subr.mxu0 0.0
        %2169 = vmatpush1.msra.mxu0 0.0
        %2170 = vmatprep.subr.mxu0 0.0
        %2171 = vmatpush1.msra.mxu0 0.0
        %2172 = vmatprep.subr.mxu0 0.0
        %2173 = vmatpush1.msra.mxu0 0.0
        %2174 = vmatprep.subr.mxu0 0.0
        %2175 = vmatpush1.msra.mxu0 0.0
        %2176 = vmatprep.subr.mxu0 0.0
        %2177 = vmatpush1.msra.mxu0 0.0
        %2178 = vmatprep.mubr.f32.mxu0 0.0
        %2179 = vmatmul.mubr.f32.gmra.mrb[0].mxu0 %v2112
        %v2180 = vpop.f32.mrb[0].mxu0
        %v2181 = vadd.f32 %v2109, %v2180
        %v2182 = vpop.f32.mrb[0].mxu0
        %2183 = vdwg.mxu0
        %v2184 = vld [vmem:[%s16] sm:$0xff]
        %v2185 = vld [vmem:[%s16 + $0x8] sm:$0xff]
        %v2186 = vld [vmem:[%s16 + $0x10] sm:$0xff]
        %v2187 = vld [vmem:[%s16 + $0x18] sm:$0xff]
        %v2188 = vld [vmem:[%s17] sm:$0x1]
        %v2190 = vlaneseq
        %v2191 = vshrl.u32 %v2190, 7
        %v2192 = vsub.s32 0, %v2191
        %v2193 = vrot.slane %v2188, %v2192
        %v2196 = vsel %vm1172, %v2097, 0
        %2198 = vmatprep.subr.mxu0 0.0
        %2199 = vmatpush1.msra.mxu0 %v2184
        %2200 = vmatprep.subr.mxu0 0.0
        %2201 = vmatpush1.msra.mxu0 %v2185
        %2202 = vmatprep.subr.mxu0 0.0
        %2203 = vmatpush1.msra.mxu0 %v2186
        %2204 = vmatprep.subr.mxu0 0.0
        %2205 = vmatpush1.msra.mxu0 %v2187
        %2206 = vmatprep.subr.mxu0 0.0
        %2207 = vmatpush1.msra.mxu0 0.0
        %2208 = vmatprep.subr.mxu0 0.0
        %2209 = vmatpush1.msra.mxu0 0.0
        %2210 = vmatprep.subr.mxu0 0.0
        %2211 = vmatpush1.msra.mxu0 0.0
        %2212 = vmatprep.subr.mxu0 0.0
        %2213 = vmatpush1.msra.mxu0 0.0
        %2214 = vmatprep.subr.mxu0 0.0
        %2215 = vmatpush1.msra.mxu0 0.0
        %2216 = vmatprep.subr.mxu0 0.0
        %2217 = vmatpush1.msra.mxu0 0.0
        %2218 = vmatprep.subr.mxu0 0.0
        %2219 = vmatpush1.msra.mxu0 0.0
        %2220 = vmatprep.subr.mxu0 0.0
        %2221 = vmatpush1.msra.mxu0 0.0
        %2222 = vmatprep.subr.mxu0 0.0
        %2223 = vmatpush1.msra.mxu0 0.0
        %2224 = vmatprep.subr.mxu0 0.0
        %2225 = vmatpush1.msra.mxu0 0.0
        %2226 = vmatprep.subr.mxu0 0.0
        %2227 = vmatpush1.msra.mxu0 0.0
        %2228 = vmatprep.subr.mxu0 0.0
        %2229 = vmatpush1.msra.mxu0 0.0
        %2230 = vmatprep.subr.mxu0 0.0
        %2231 = vmatpush1.msra.mxu0 0.0
        %2232 = vmatprep.subr.mxu0 0.0
        %2233 = vmatpush1.msra.mxu0 0.0
        %2234 = vmatprep.subr.mxu0 0.0
        %2235 = vmatpush1.msra.mxu0 0.0
        %2236 = vmatprep.subr.mxu0 0.0
        %2237 = vmatpush1.msra.mxu0 0.0
        %2238 = vmatprep.subr.mxu0 0.0
        %2239 = vmatpush1.msra.mxu0 0.0
        %2240 = vmatprep.subr.mxu0 0.0
        %2241 = vmatpush1.msra.mxu0 0.0
        %2242 = vmatprep.subr.mxu0 0.0
        %2243 = vmatpush1.msra.mxu0 0.0
        %2244 = vmatprep.subr.mxu0 0.0
        %2245 = vmatpush1.msra.mxu0 0.0
        %2246 = vmatprep.subr.mxu0 0.0
        %2247 = vmatpush1.msra.mxu0 0.0
        %2248 = vmatprep.subr.mxu0 0.0
        %2249 = vmatpush1.msra.mxu0 0.0
        %2250 = vmatprep.subr.mxu0 0.0
        %2251 = vmatpush1.msra.mxu0 0.0
        %2252 = vmatprep.subr.mxu0 0.0
        %2253 = vmatpush1.msra.mxu0 0.0
        %2254 = vmatprep.subr.mxu0 0.0
        %2255 = vmatpush1.msra.mxu0 0.0
        %2256 = vmatprep.subr.mxu0 0.0
        %2257 = vmatpush1.msra.mxu0 0.0
        %2258 = vmatprep.subr.mxu0 0.0
        %2259 = vmatpush1.msra.mxu0 0.0
        %2260 = vmatprep.subr.mxu0 0.0
        %2261 = vmatpush1.msra.mxu0 0.0
        %2262 = vmatprep.mubr.f32.mxu0 0.0
        %2263 = vmatmul.mubr.f32.gmra.mrb[0].mxu0 %v2196
        %v2264 = vpop.f32.mrb[0].mxu0
        %v2265 = vadd.f32 %v2193, %v2264
        %v2266 = vpop.f32.mrb[0].mxu0
        %2267 = vdwg.mxu0
        %v2268 = vld [vmem:[%s18] sm:$0xff]
        %v2269 = vld [vmem:[%s18 + $0x8] sm:$0xff]
        %v2270 = vld [vmem:[%s18 + $0x10] sm:$0xff]
        %v2271 = vld [vmem:[%s18 + $0x18] sm:$0xff]
        %v2272 = vld [vmem:[%s19] sm:$0x1]
        %v2274 = vlaneseq
        %v2275 = vshrl.u32 %v2274, 7
        %v2276 = vsub.s32 0, %v2275
        %v2277 = vrot.slane %v2272, %v2276
        %v2280 = vsel %vm1172, %v2098, 0
        %2282 = vmatprep.subr.mxu0 0.0
        %2283 = vmatpush1.msra.mxu0 %v2268
        %2284 = vmatprep.subr.mxu0 0.0
        %2285 = vmatpush1.msra.mxu0 %v2269
        %2286 = vmatprep.subr.mxu0 0.0
        %2287 = vmatpush1.msra.mxu0 %v2270
        %2288 = vmatprep.subr.mxu0 0.0
        %2289 = vmatpush1.msra.mxu0 %v2271
        %2290 = vmatprep.subr.mxu0 0.0
        %2291 = vmatpush1.msra.mxu0 0.0
        %2292 = vmatprep.subr.mxu0 0.0
        %2293 = vmatpush1.msra.mxu0 0.0
        %2294 = vmatprep.subr.mxu0 0.0
        %2295 = vmatpush1.msra.mxu0 0.0
        %2296 = vmatprep.subr.mxu0 0.0
        %2297 = vmatpush1.msra.mxu0 0.0
        %2298 = vmatprep.subr.mxu0 0.0
        %2299 = vmatpush1.msra.mxu0 0.0
        %2300 = vmatprep.subr.mxu0 0.0
        %2301 = vmatpush1.msra.mxu0 0.0
        %2302 = vmatprep.subr.mxu0 0.0
        %2303 = vmatpush1.msra.mxu0 0.0
        %2304 = vmatprep.subr.mxu0 0.0
        %2305 = vmatpush1.msra.mxu0 0.0
        %2306 = vmatprep.subr.mxu0 0.0
        %2307 = vmatpush1.msra.mxu0 0.0
        %2308 = vmatprep.subr.mxu0 0.0
        %2309 = vmatpush1.msra.mxu0 0.0
        %2310 = vmatprep.subr.mxu0 0.0
        %2311 = vmatpush1.msra.mxu0 0.0
        %2312 = vmatprep.subr.mxu0 0.0
        %2313 = vmatpush1.msra.mxu0 0.0
        %2314 = vmatprep.subr.mxu0 0.0
        %2315 = vmatpush1.msra.mxu0 0.0
        %2316 = vmatprep.subr.mxu0 0.0
        %2317 = vmatpush1.msra.mxu0 0.0
        %2318 = vmatprep.subr.mxu0 0.0
        %2319 = vmatpush1.msra.mxu0 0.0
        %2320 = vmatprep.subr.mxu0 0.0
        %2321 = vmatpush1.msra.mxu0 0.0
        %2322 = vmatprep.subr.mxu0 0.0
        %2323 = vmatpush1.msra.mxu0 0.0
        %2324 = vmatprep.subr.mxu0 0.0
        %2325 = vmatpush1.msra.mxu0 0.0
        %2326 = vmatprep.subr.mxu0 0.0
        %2327 = vmatpush1.msra.mxu0 0.0
        %2328 = vmatprep.subr.mxu0 0.0
        %2329 = vmatpush1.msra.mxu0 0.0
        %2330 = vmatprep.subr.mxu0 0.0
        %2331 = vmatpush1.msra.mxu0 0.0
        %2332 = vmatprep.subr.mxu0 0.0
        %2333 = vmatpush1.msra.mxu0 0.0
        %2334 = vmatprep.subr.mxu0 0.0
        %2335 = vmatpush1.msra.mxu0 0.0
        %2336 = vmatprep.subr.mxu0 0.0
        %2337 = vmatpush1.msra.mxu0 0.0
        %2338 = vmatprep.subr.mxu0 0.0
        %2339 = vmatpush1.msra.mxu0 0.0
        %2340 = vmatprep.subr.mxu0 0.0
        %2341 = vmatpush1.msra.mxu0 0.0
        %2342 = vmatprep.subr.mxu0 0.0
        %2343 = vmatpush1.msra.mxu0 0.0
        %2344 = vmatprep.subr.mxu0 0.0
        %2345 = vmatpush1.msra.mxu0 0.0
        %2346 = vmatprep.mubr.f32.mxu0 0.0
        %2347 = vmatmul.mubr.f32.gmra.mrb[0].mxu0 %v2280
        %v2348 = vpop.f32.mrb[0].mxu0
        %v2349 = vadd.f32 %v2277, %v2348
        %v2350 = vpop.f32.mrb[0].mxu0
        %2351 = vdwg.mxu0
        %v2353 = vsel %vm1414, %v2181, 0
        %v2356 = vsel %vm1414, %v2265, 0
        %2358 = vmatprep.subr.mxu0 0.0
        %2359 = vmatpush1.xpose.msra.mxu0 %v2356
        %2360 = vmatprep.subr.mxu0 0.0
        %2361 = vmatpush1.xpose.msra.mxu0 0.0
        %2362 = vmatprep.subr.mxu0 0.0
        %2363 = vmatpush1.xpose.msra.mxu0 0.0
        %2364 = vmatprep.subr.mxu0 0.0
        %2365 = vmatpush1.xpose.msra.mxu0 0.0
        %2366 = vmatprep.subr.mxu0 0.0
        %2367 = vmatpush1.xpose.msra.mxu0 0.0
        %2368 = vmatprep.subr.mxu0 0.0
        %2369 = vmatpush1.xpose.msra.mxu0 0.0
        %2370 = vmatprep.subr.mxu0 0.0
        %2371 = vmatpush1.xpose.msra.mxu0 0.0
        %2372 = vmatprep.subr.mxu0 0.0
        %2373 = vmatpush1.xpose.msra.mxu0 0.0
        %2374 = vmatprep.subr.mxu0 0.0
        %2375 = vmatpush1.xpose.msra.mxu0 0.0
        %2376 = vmatprep.subr.mxu0 0.0
        %2377 = vmatpush1.xpose.msra.mxu0 0.0
        %2378 = vmatprep.subr.mxu0 0.0
        %2379 = vmatpush1.xpose.msra.mxu0 0.0
        %2380 = vmatprep.subr.mxu0 0.0
        %2381 = vmatpush1.xpose.msra.mxu0 0.0
        %2382 = vmatprep.subr.mxu0 0.0
        %2383 = vmatpush1.xpose.msra.mxu0 0.0
        %2384 = vmatprep.subr.mxu0 0.0
        %2385 = vmatpush1.xpose.msra.mxu0 0.0
        %2386 = vmatprep.subr.mxu0 0.0
        %2387 = vmatpush1.xpose.msra.mxu0 0.0
        %2388 = vmatprep.subr.mxu0 0.0
        %2389 = vmatpush1.xpose.msra.mxu0 0.0
        %2390 = vmatprep.subr.mxu0 0.0
        %2391 = vmatpush1.xpose.msra.mxu0 0.0
        %2392 = vmatprep.subr.mxu0 0.0
        %2393 = vmatpush1.xpose.msra.mxu0 0.0
        %2394 = vmatprep.subr.mxu0 0.0
        %2395 = vmatpush1.xpose.msra.mxu0 0.0
        %2396 = vmatprep.subr.mxu0 0.0
        %2397 = vmatpush1.xpose.msra.mxu0 0.0
        %2398 = vmatprep.subr.mxu0 0.0
        %2399 = vmatpush1.xpose.msra.mxu0 0.0
        %2400 = vmatprep.subr.mxu0 0.0
        %2401 = vmatpush1.xpose.msra.mxu0 0.0
        %2402 = vmatprep.subr.mxu0 0.0
        %2403 = vmatpush1.xpose.msra.mxu0 0.0
        %2404 = vmatprep.subr.mxu0 0.0
        %2405 = vmatpush1.xpose.msra.mxu0 0.0
        %2406 = vmatprep.subr.mxu0 0.0
        %2407 = vmatpush1.xpose.msra.mxu0 0.0
        %2408 = vmatprep.subr.mxu0 0.0
        %2409 = vmatpush1.xpose.msra.mxu0 0.0
        %2410 = vmatprep.subr.mxu0 0.0
        %2411 = vmatpush1.xpose.msra.mxu0 0.0
        %2412 = vmatprep.subr.mxu0 0.0
        %2413 = vmatpush1.xpose.msra.mxu0 0.0
        %2414 = vmatprep.subr.mxu0 0.0
        %2415 = vmatpush1.xpose.msra.mxu0 0.0
        %2416 = vmatprep.subr.mxu0 0.0
        %2417 = vmatpush1.xpose.msra.mxu0 0.0
        %2418 = vmatprep.subr.mxu0 0.0
        %2419 = vmatpush1.xpose.msra.mxu0 0.0
        %2420 = vmatprep.subr.mxu0 0.0
        %2421 = vmatpush1.xpose.msra.mxu0 0.0
        %2422 = vmatprep.mubr.f32.mxu0 0.0
        %2423 = vmatmul.mubr.f32.gmra.mrb[0].mxu0 %v2353
        %v2424 = vpop.f32.mrb[0].mxu0
        %v2425 = vadd.f32 0.0, %v2424
        %v2426 = vpop.f32.mrb[0].mxu0
        %2427 = vdwg.mxu0
        %2428 = vrot.lane.b32.xlu0 %v2181, 120
        %v2429 = vpop.permute.xlu0 %2428
        %2430 = vrot.lane.b32.xlu0 %v2265, 120
        %v2431 = vpop.permute.xlu0 %2430
        %v2432 = vsel %vm1414, %v2429, 0
        %v2434 = vsel %vm1414, %v2431, 0
        %2436 = vmatprep.subr.mxu0 0.0
        %2437 = vmatpush1.xpose.msra.mxu0 %v2434
        %2438 = vmatprep.subr.mxu0 0.0
        %2439 = vmatpush1.xpose.msra.mxu0 0.0
        %2440 = vmatprep.subr.mxu0 0.0
        %2441 = vmatpush1.xpose.msra.mxu0 0.0
        %2442 = vmatprep.subr.mxu0 0.0
        %2443 = vmatpush1.xpose.msra.mxu0 0.0
        %2444 = vmatprep.subr.mxu0 0.0
        %2445 = vmatpush1.xpose.msra.mxu0 0.0
        %2446 = vmatprep.subr.mxu0 0.0
        %2447 = vmatpush1.xpose.msra.mxu0 0.0
        %2448 = vmatprep.subr.mxu0 0.0
        %2449 = vmatpush1.xpose.msra.mxu0 0.0
        %2450 = vmatprep.subr.mxu0 0.0
        %2451 = vmatpush1.xpose.msra.mxu0 0.0
        %2452 = vmatprep.subr.mxu0 0.0
        %2453 = vmatpush1.xpose.msra.mxu0 0.0
        %2454 = vmatprep.subr.mxu0 0.0
        %2455 = vmatpush1.xpose.msra.mxu0 0.0
        %2456 = vmatprep.subr.mxu0 0.0
        %2457 = vmatpush1.xpose.msra.mxu0 0.0
        %2458 = vmatprep.subr.mxu0 0.0
        %2459 = vmatpush1.xpose.msra.mxu0 0.0
        %2460 = vmatprep.subr.mxu0 0.0
        %2461 = vmatpush1.xpose.msra.mxu0 0.0
        %2462 = vmatprep.subr.mxu0 0.0
        %2463 = vmatpush1.xpose.msra.mxu0 0.0
        %2464 = vmatprep.subr.mxu0 0.0
        %2465 = vmatpush1.xpose.msra.mxu0 0.0
        %2466 = vmatprep.subr.mxu0 0.0
        %2467 = vmatpush1.xpose.msra.mxu0 0.0
        %2468 = vmatprep.subr.mxu0 0.0
        %2469 = vmatpush1.xpose.msra.mxu0 0.0
        %2470 = vmatprep.subr.mxu0 0.0
        %2471 = vmatpush1.xpose.msra.mxu0 0.0
        %2472 = vmatprep.subr.mxu0 0.0
        %2473 = vmatpush1.xpose.msra.mxu0 0.0
        %2474 = vmatprep.subr.mxu0 0.0
        %2475 = vmatpush1.xpose.msra.mxu0 0.0
        %2476 = vmatprep.subr.mxu0 0.0
        %2477 = vmatpush1.xpose.msra.mxu0 0.0
        %2478 = vmatprep.subr.mxu0 0.0
        %2479 = vmatpush1.xpose.msra.mxu0 0.0
        %2480 = vmatprep.subr.mxu0 0.0
        %2481 = vmatpush1.xpose.msra.mxu0 0.0
        %2482 = vmatprep.subr.mxu0 0.0
        %2483 = vmatpush1.xpose.msra.mxu0 0.0
        %2484 = vmatprep.subr.mxu0 0.0
        %2485 = vmatpush1.xpose.msra.mxu0 0.0
        %2486 = vmatprep.subr.mxu0 0.0
        %2487 = vmatpush1.xpose.msra.mxu0 0.0
        %2488 = vmatprep.subr.mxu0 0.0
        %2489 = vmatpush1.xpose.msra.mxu0 0.0
        %2490 = vmatprep.subr.mxu0 0.0
        %2491 = vmatpush1.xpose.msra.mxu0 0.0
        %2492 = vmatprep.subr.mxu0 0.0
        %2493 = vmatpush1.xpose.msra.mxu0 0.0
        %2494 = vmatprep.subr.mxu0 0.0
        %2495 = vmatpush1.xpose.msra.mxu0 0.0
        %2496 = vmatprep.subr.mxu0 0.0
        %2497 = vmatpush1.xpose.msra.mxu0 0.0
        %2498 = vmatprep.subr.mxu0 0.0
        %2499 = vmatpush1.xpose.msra.mxu0 0.0
        %2500 = vmatprep.mubr.f32.mxu0 0.0
        %2501 = vmatmul.mubr.f32.gmra.mrb[0].mxu0 %v2432
        %v2502 = vpop.f32.mrb[0].mxu0
        %v2503 = vadd.f32 0.0, %v2502
        %v2504 = vpop.f32.mrb[0].mxu0
        %2505 = vdwg.mxu0
        %v2506 = vadd.f32 %v2425, %v2099
        %v2507 = vadd.f32 %v2503, %v2099
        %v2508 = vsel %vm1414, %v2506, -inf
        %2509 = vmax.xlane.f32.xlu0 %v2508
        %v2510 = vpop.xlane.xlu0 %2509
        %v2511 = vsel %vm1414, %v2507, -inf
        %2512 = vmax.xlane.f32.xlu0 %v2511
        %v2513 = vpop.xlane.xlu0 %2512
        %v2514 = vsub.f32 %v2506, %v2510
        %v2515 = vsub.f32 %v2507, %v2513
        %v2516 = vmul.f32 %v2514, 1.442695
        %v2517 = vpow.pop %v2516
        %v2518 = vmul.f32 %v2515, 1.442695
        %v2519 = vpow.pop %v2518
        %v2520 = vsel %vm1414, %v2517, 0.0
        %2521 = vadd.xlane.f32.xlu0 %v2520
        %v2522 = vpop.xlane.xlu0 %2521
        %v2523 = vsel %vm1414, %v2519, 0.0
        %2524 = vadd.xlane.f32.xlu0 %v2523
        %v2525 = vpop.xlane.xlu0 %2524
        %v2526 = vrcp.pop %v2522
        %v2527 = vrcp.pop %v2525
        %v2528 = vmul.f32 %v2517, %v2526
        %v2529 = vmul.f32 %v2519, %v2527
        %v2531 = vsel %vm1414, %v2528, 0
        %2533 = vmatprep.subr.mxu0 0.0
        %2534 = vmatpush1.msra.mxu0 %v2349
        %2535 = vmatprep.subr.mxu0 0.0
        %2536 = vmatpush1.msra.mxu0 0.0
        %2537 = vmatprep.subr.mxu0 0.0
        %2538 = vmatpush1.msra.mxu0 0.0
        %2539 = vmatprep.subr.mxu0 0.0
        %2540 = vmatpush1.msra.mxu0 0.0
        %2541 = vmatprep.subr.mxu0 0.0
        %2542 = vmatpush1.msra.mxu0 0.0
        %2543 = vmatprep.subr.mxu0 0.0
        %2544 = vmatpush1.msra.mxu0 0.0
        %2545 = vmatprep.subr.mxu0 0.0
        %2546 = vmatpush1.msra.mxu0 0.0
        %2547 = vmatprep.subr.mxu0 0.0
        %2548 = vmatpush1.msra.mxu0 0.0
        %2549 = vmatprep.subr.mxu0 0.0
        %2550 = vmatpush1.msra.mxu0 0.0
        %2551 = vmatprep.subr.mxu0 0.0
        %2552 = vmatpush1.msra.mxu0 0.0
        %2553 = vmatprep.subr.mxu0 0.0
        %2554 = vmatpush1.msra.mxu0 0.0
        %2555 = vmatprep.subr.mxu0 0.0
        %2556 = vmatpush1.msra.mxu0 0.0
        %2557 = vmatprep.subr.mxu0 0.0
        %2558 = vmatpush1.msra.mxu0 0.0
        %2559 = vmatprep.subr.mxu0 0.0
        %2560 = vmatpush1.msra.mxu0 0.0
        %2561 = vmatprep.subr.mxu0 0.0
        %2562 = vmatpush1.msra.mxu0 0.0
        %2563 = vmatprep.subr.mxu0 0.0
        %2564 = vmatpush1.msra.mxu0 0.0
        %2565 = vmatprep.subr.mxu0 0.0
        %2566 = vmatpush1.msra.mxu0 0.0
        %2567 = vmatprep.subr.mxu0 0.0
        %2568 = vmatpush1.msra.mxu0 0.0
        %2569 = vmatprep.subr.mxu0 0.0
        %2570 = vmatpush1.msra.mxu0 0.0
        %2571 = vmatprep.subr.mxu0 0.0
        %2572 = vmatpush1.msra.mxu0 0.0
        %2573 = vmatprep.subr.mxu0 0.0
        %2574 = vmatpush1.msra.mxu0 0.0
        %2575 = vmatprep.subr.mxu0 0.0
        %2576 = vmatpush1.msra.mxu0 0.0
        %2577 = vmatprep.subr.mxu0 0.0
        %2578 = vmatpush1.msra.mxu0 0.0
        %2579 = vmatprep.subr.mxu0 0.0
        %2580 = vmatpush1.msra.mxu0 0.0
        %2581 = vmatprep.subr.mxu0 0.0
        %2582 = vmatpush1.msra.mxu0 0.0
        %2583 = vmatprep.subr.mxu0 0.0
        %2584 = vmatpush1.msra.mxu0 0.0
        %2585 = vmatprep.subr.mxu0 0.0
        %2586 = vmatpush1.msra.mxu0 0.0
        %2587 = vmatprep.subr.mxu0 0.0
        %2588 = vmatpush1.msra.mxu0 0.0
        %2589 = vmatprep.subr.mxu0 0.0
        %2590 = vmatpush1.msra.mxu0 0.0
        %2591 = vmatprep.subr.mxu0 0.0
        %2592 = vmatpush1.msra.mxu0 0.0
        %2593 = vmatprep.subr.mxu0 0.0
        %2594 = vmatpush1.msra.mxu0 0.0
        %2595 = vmatprep.subr.mxu0 0.0
        %2596 = vmatpush1.msra.mxu0 0.0
        %2597 = vmatprep.mubr.f32.mxu0 0.0
        %2598 = vmatmul.mubr.f32.gmra.mrb[0].mxu0 %v2531
        %v2599 = vpop.f32.mrb[0].mxu0
        %v2600 = vadd.f32 0.0, %v2599
        %v2601 = vpop.f32.mrb[0].mxu0
        %2602 = vdwg.mxu0
        %2604 = vrot.lane.b32.xlu0 %v2349, 120
        %v2605 = vpop.permute.xlu0 %2604
        %v2608 = vsel %vm1414, %v2529, 0
        %2610 = vmatprep.subr.mxu0 0.0
        %2611 = vmatpush1.msra.mxu0 %v2605
        %2612 = vmatprep.subr.mxu0 0.0
        %2613 = vmatpush1.msra.mxu0 0.0
        %2614 = vmatprep.subr.mxu0 0.0
        %2615 = vmatpush1.msra.mxu0 0.0
        %2616 = vmatprep.subr.mxu0 0.0
        %2617 = vmatpush1.msra.mxu0 0.0
        %2618 = vmatprep.subr.mxu0 0.0
        %2619 = vmatpush1.msra.mxu0 0.0
        %2620 = vmatprep.subr.mxu0 0.0
        %2621 = vmatpush1.msra.mxu0 0.0
        %2622 = vmatprep.subr.mxu0 0.0
        %2623 = vmatpush1.msra.mxu0 0.0
        %2624 = vmatprep.subr.mxu0 0.0
        %2625 = vmatpush1.msra.mxu0 0.0
        %2626 = vmatprep.subr.mxu0 0.0
        %2627 = vmatpush1.msra.mxu0 0.0
        %2628 = vmatprep.subr.mxu0 0.0
        %2629 = vmatpush1.msra.mxu0 0.0
        %2630 = vmatprep.subr.mxu0 0.0
        %2631 = vmatpush1.msra.mxu0 0.0
        %2632 = vmatprep.subr.mxu0 0.0
        %2633 = vmatpush1.msra.mxu0 0.0
        %2634 = vmatprep.subr.mxu0 0.0
        %2635 = vmatpush1.msra.mxu0 0.0
        %2636 = vmatprep.subr.mxu0 0.0
        %2637 = vmatpush1.msra.mxu0 0.0
        %2638 = vmatprep.subr.mxu0 0.0
        %2639 = vmatpush1.msra.mxu0 0.0
        %2640 = vmatprep.subr.mxu0 0.0
        %2641 = vmatpush1.msra.mxu0 0.0
        %2642 = vmatprep.subr.mxu0 0.0
        %2643 = vmatpush1.msra.mxu0 0.0
        %2644 = vmatprep.subr.mxu0 0.0
        %2645 = vmatpush1.msra.mxu0 0.0
        %2646 = vmatprep.subr.mxu0 0.0
        %2647 = vmatpush1.msra.mxu0 0.0
        %2648 = vmatprep.subr.mxu0 0.0
        %2649 = vmatpush1.msra.mxu0 0.0
        %2650 = vmatprep.subr.mxu0 0.0
        %2651 = vmatpush1.msra.mxu0 0.0
        %2652 = vmatprep.subr.mxu0 0.0
        %2653 = vmatpush1.msra.mxu0 0.0
        %2654 = vmatprep.subr.mxu0 0.0
        %2655 = vmatpush1.msra.mxu0 0.0
        %2656 = vmatprep.subr.mxu0 0.0
        %2657 = vmatpush1.msra.mxu0 0.0
        %2658 = vmatprep.subr.mxu0 0.0
        %2659 = vmatpush1.msra.mxu0 0.0
        %2660 = vmatprep.subr.mxu0 0.0
        %2661 = vmatpush1.msra.mxu0 0.0
        %2662 = vmatprep.subr.mxu0 0.0
        %2663 = vmatpush1.msra.mxu0 0.0
        %2664 = vmatprep.subr.mxu0 0.0
        %2665 = vmatpush1.msra.mxu0 0.0
        %2666 = vmatprep.subr.mxu0 0.0
        %2667 = vmatpush1.msra.mxu0 0.0
        %2668 = vmatprep.subr.mxu0 0.0
        %2669 = vmatpush1.msra.mxu0 0.0
        %2670 = vmatprep.subr.mxu0 0.0
        %2671 = vmatpush1.msra.mxu0 0.0
        %2672 = vmatprep.subr.mxu0 0.0
        %2673 = vmatpush1.msra.mxu0 0.0
        %2674 = vmatprep.mubr.f32.mxu0 0.0
        %2675 = vmatmul.mubr.f32.gmra.mrb[0].mxu0 %v2608
        %v2676 = vpop.f32.mrb[0].mxu0
        %v2677 = vadd.f32 0.0, %v2676
        %v2678 = vpop.f32.mrb[0].mxu0
        %2679 = vdwg.mxu0
        %2681 = vrot.lane.b32.xlu0 %v2677, 8
        %v2682 = vpop.permute.xlu0 %2681
        %v2684 = vsel %vm1414, %v2600, %v2682
        %v2685 = vld [vmem:[%s21] sm:$0xff]
        %v2686 = vld [vmem:[%s21 + $0x8] sm:$0xff]
        %v2688 = vsel %vm2088, %v2684, 0
        %2690 = vmatprep.subr.mxu0 0.0
        %2691 = vmatpush1.msra.mxu0 %v2685
        %2692 = vmatprep.subr.mxu0 0.0
        %2693 = vmatpush1.msra.mxu0 %v2686
        %2694 = vmatprep.subr.mxu0 0.0
        %2695 = vmatpush1.msra.mxu0 0.0
        %2696 = vmatprep.subr.mxu0 0.0
        %2697 = vmatpush1.msra.mxu0 0.0
        %2698 = vmatprep.subr.mxu0 0.0
        %2699 = vmatpush1.msra.mxu0 0.0
        %2700 = vmatprep.subr.mxu0 0.0
        %2701 = vmatpush1.msra.mxu0 0.0
        %2702 = vmatprep.subr.mxu0 0.0
        %2703 = vmatpush1.msra.mxu0 0.0
        %2704 = vmatprep.subr.mxu0 0.0
        %2705 = vmatpush1.msra.mxu0 0.0
        %2706 = vmatprep.subr.mxu0 0.0
        %2707 = vmatpush1.msra.mxu0 0.0
        %2708 = vmatprep.subr.mxu0 0.0
        %2709 = vmatpush1.msra.mxu0 0.0
        %2710 = vmatprep.subr.mxu0 0.0
        %2711 = vmatpush1.msra.mxu0 0.0
        %2712 = vmatprep.subr.mxu0 0.0
        %2713 = vmatpush1.msra.mxu0 0.0
        %2714 = vmatprep.subr.mxu0 0.0
        %2715 = vmatpush1.msra.mxu0 0.0
        %2716 = vmatprep.subr.mxu0 0.0
        %2717 = vmatpush1.msra.mxu0 0.0
        %2718 = vmatprep.subr.mxu0 0.0
        %2719 = vmatpush1.msra.mxu0 0.0
        %2720 = vmatprep.subr.mxu0 0.0
        %2721 = vmatpush1.msra.mxu0 0.0
        %2722 = vmatprep.subr.mxu0 0.0
        %2723 = vmatpush1.msra.mxu0 0.0
        %2724 = vmatprep.subr.mxu0 0.0
        %2725 = vmatpush1.msra.mxu0 0.0
        %2726 = vmatprep.subr.mxu0 0.0
        %2727 = vmatpush1.msra.mxu0 0.0
        %2728 = vmatprep.subr.mxu0 0.0
        %2729 = vmatpush1.msra.mxu0 0.0
        %2730 = vmatprep.subr.mxu0 0.0
        %2731 = vmatpush1.msra.mxu0 0.0
        %2732 = vmatprep.subr.mxu0 0.0
        %2733 = vmatpush1.msra.mxu0 0.0
        %2734 = vmatprep.subr.mxu0 0.0
        %2735 = vmatpush1.msra.mxu0 0.0
        %2736 = vmatprep.subr.mxu0 0.0
        %2737 = vmatpush1.msra.mxu0 0.0
        %2738 = vmatprep.subr.mxu0 0.0
        %2739 = vmatpush1.msra.mxu0 0.0
        %2740 = vmatprep.subr.mxu0 0.0
        %2741 = vmatpush1.msra.mxu0 0.0
        %2742 = vmatprep.subr.mxu0 0.0
        %2743 = vmatpush1.msra.mxu0 0.0
        %2744 = vmatprep.subr.mxu0 0.0
        %2745 = vmatpush1.msra.mxu0 0.0
        %2746 = vmatprep.subr.mxu0 0.0
        %2747 = vmatpush1.msra.mxu0 0.0
        %2748 = vmatprep.subr.mxu0 0.0
        %2749 = vmatpush1.msra.mxu0 0.0
        %2750 = vmatprep.subr.mxu0 0.0
        %2751 = vmatpush1.msra.mxu0 0.0
        %2752 = vmatprep.subr.mxu0 0.0
        %2753 = vmatpush1.msra.mxu0 0.0
        %2754 = vmatprep.mubr.f32.mxu0 0.0
        %2755 = vmatmul.mubr.f32.gmra.mrb[0].mxu0 %v2688
        %v2756 = vpop.f32.mrb[0].mxu0
        %v2757 = vadd.f32 0.0, %v2756
        %v2758 = vpop.f32.mrb[0].mxu0
        %2759 = vdwg.mxu0
        %2760 = vst.msk [vmem:[%s1149] sm:$0xff] %vm1414, %v1769
        %2761 = vst.msk [vmem:[%s1149 + $0x8] sm:$0xff] %vm1414, %v1770
        %2762 = vst.msk [vmem:[%s1149 + $0x10] sm:$0xff] %vm1414, %v1771
        %2763 = vst.msk [vmem:[%s1149 + $0x18] sm:$0xff] %vm1414, %v1772
        %2764 = vst.msk [vmem:[%s1156] sm:$0xff] %vm1414, %v2528
        %2765 = vst.msk [vmem:[%s1156 + $0x8] sm:$0xff] %vm1414, %v2529
        %v2767 = vsel %vm1172, %v2091, 0
        %2769 = vmatprep.subr.mxu0 0.0
        %2770 = vmatpush1.msra.mxu0 %v2092
        %2771 = vmatprep.subr.mxu0 0.0
        %2772 = vmatpush1.msra.mxu0 %v2093
        %2773 = vmatprep.subr.mxu0 0.0
        %2774 = vmatpush1.msra.mxu0 %v2094
        %2775 = vmatprep.subr.mxu0 0.0
        %2776 = vmatpush1.msra.mxu0 %v2095
        %2777 = vmatprep.subr.mxu0 0.0
        %2778 = vmatpush1.msra.mxu0 0.0
        %2779 = vmatprep.subr.mxu0 0.0
        %2780 = vmatpush1.msra.mxu0 0.0
        %2781 = vmatprep.subr.mxu0 0.0
        %2782 = vmatpush1.msra.mxu0 0.0
        %2783 = vmatprep.subr.mxu0 0.0
        %2784 = vmatpush1.msra.mxu0 0.0
        %2785 = vmatprep.subr.mxu0 0.0
        %2786 = vmatpush1.msra.mxu0 0.0
        %2787 = vmatprep.subr.mxu0 0.0
        %2788 = vmatpush1.msra.mxu0 0.0
        %2789 = vmatprep.subr.mxu0 0.0
        %2790 = vmatpush1.msra.mxu0 0.0
        %2791 = vmatprep.subr.mxu0 0.0
        %2792 = vmatpush1.msra.mxu0 0.0
        %2793 = vmatprep.subr.mxu0 0.0
        %2794 = vmatpush1.msra.mxu0 0.0
        %2795 = vmatprep.subr.mxu0 0.0
        %2796 = vmatpush1.msra.mxu0 0.0
        %2797 = vmatprep.subr.mxu0 0.0
        %2798 = vmatpush1.msra.mxu0 0.0
        %2799 = vmatprep.subr.mxu0 0.0
        %2800 = vmatpush1.msra.mxu0 0.0
        %2801 = vmatprep.subr.mxu0 0.0
        %2802 = vmatpush1.msra.mxu0 0.0
        %2803 = vmatprep.subr.mxu0 0.0
        %2804 = vmatpush1.msra.mxu0 0.0
        %2805 = vmatprep.subr.mxu0 0.0
        %2806 = vmatpush1.msra.mxu0 0.0
        %2807 = vmatprep.subr.mxu0 0.0
        %2808 = vmatpush1.msra.mxu0 0.0
        %2809 = vmatprep.subr.mxu0 0.0
        %2810 = vmatpush1.msra.mxu0 0.0
        %2811 = vmatprep.subr.mxu0 0.0
        %2812 = vmatpush1.msra.mxu0 0.0
        %2813 = vmatprep.subr.mxu0 0.0
        %2814 = vmatpush1.msra.mxu0 0.0
        %2815 = vmatprep.subr.mxu0 0.0
        %2816 = vmatpush1.msra.mxu0 0.0
        %2817 = vmatprep.subr.mxu0 0.0
        %2818 = vmatpush1.msra.mxu0 0.0
        %2819 = vmatprep.subr.mxu0 0.0
        %2820 = vmatpush1.msra.mxu0 0.0
        %2821 = vmatprep.subr.mxu0 0.0
        %2822 = vmatpush1.msra.mxu0 0.0
        %2823 = vmatprep.subr.mxu0 0.0
        %2824 = vmatpush1.msra.mxu0 0.0
        %2825 = vmatprep.subr.mxu0 0.0
        %2826 = vmatpush1.msra.mxu0 0.0
        %2827 = vmatprep.subr.mxu0 0.0
        %2828 = vmatpush1.msra.mxu0 0.0
        %2829 = vmatprep.subr.mxu0 0.0
        %2830 = vmatpush1.msra.mxu0 0.0
        %2831 = vmatprep.subr.mxu0 0.0
        %2832 = vmatpush1.msra.mxu0 0.0
        %2833 = vmatprep.mubr.f32.mxu0 0.0
        %2834 = vmatmul.mubr.f32.gmra.mrb[0].mxu0 %v2767
        %v2835 = vpop.f32.mrb[0].mxu0
        %v2836 = vadd.f32 %v2757, %v2835
        %v2837 = vpop.f32.mrb[0].mxu0
        %2838 = vdwg.mxu0
        %v2839 = vld [vmem:[%s22] sm:$0x1]
        %v2841 = vlaneseq
        %v2842 = vshrl.u32 %v2841, 7
        %v2843 = vsub.s32 0, %v2842
        %v2844 = vrot.slane %v2839, %v2843
        %v2846 = vadd.f32 %v2836, %v2844
        %v2847 = vadd.f32 %v2846, %v1157
        %v2848 = vld [vmem:[%s23] sm:$0x1]
        %v2849 = vld [vmem:[%s24] sm:$0x1]
        %v2850 = vsel %vm1172, %v2847, 0.0
        %2851 = vadd.xlane.f32.xlu0 %v2850
        %v2852 = vpop.xlane.xlu0 %2851
        %v2853 = vrcp.pop 32.0
        %v2854 = vmul.f32 %v2852, %v2853
        %v2855 = vsub.f32 %v2847, %v2854
        %v2856 = vmul.f32 %v2855, %v2855
        %v2857 = vsel %vm1172, %v2856, 0.0
        %2858 = vadd.xlane.f32.xlu0 %v2857
        %v2859 = vpop.xlane.xlu0 %2858
        %v2860 = vmul.f32 %v2859, %v2853
        %v2861 = vadd.f32 %v2860, 1e-05
        %v2862 = vrsqrt.pop %v2861
        %v2863 = vmul.f32 %v2855, %v2862
        %v2865 = vlaneseq
        %v2866 = vshrl.u32 %v2865, 7
        %v2867 = vsub.s32 0, %v2866
        %v2868 = vrot.slane %v2848, %v2867
        %v2870 = vmul.f32 %v2863, %v2868
        %v2872 = vlaneseq
        %v2873 = vshrl.u32 %v2872, 7
        %v2874 = vsub.s32 0, %v2873
        %v2875 = vrot.slane %v2849, %v2874
        %v2877 = vadd.f32 %v2870, %v2875
        %2878 = vst.msk [vmem:[%s1142] sm:$0xff] %vm1172, %v2877
        %s2879 = sand.u32 %s656, 1
        %s2880 = scalar_lea.sflag [#allocation4], %s2879
        %s2881 = sand.u32 %s656, 1
        %s2882 = smul.addr %s2881, 8
        %s2883 = scalar_lea.vmem [#allocation19], %s2882
        %s2884 = sand.u32 %s61, 1
        %s2885 = scalar_lea.sflag [#allocation21], %s2884
        %s2886 = sand.u32 %s684, 1
        %s2887 = smul.addr %s2886, 32
        %s2888 = scalar_lea.vmem [#allocation20], %s2887
        %s2889 = sand.u32 %s61, 1
        %s2890 = scalar_lea.sflag [#allocation21], %s2889
        %s2891 = sand.u32 %s712, 1
        %s2892 = smul.addr %s2891, 16
        %s2893 = scalar_lea.vmem [#allocation22], %s2892
        // Predicated region
        $region161: #{tpu_custom_call.1} parent=119 // pred_check
          %p2894 = pneg %p666
        $region162: #{tpu_custom_call.1} parent=119 // pred_check_branch
          %2896 = sbr.rel (%p2894) target = $region164
        $region163: #{tpu_custom_call.1} parent=119 // pred_region
          %s2898 = ssub.s32 128, 128
          %2899 = vsyncadd %s2880, %s2898
          %s2900 = sadd.s32 %s66, %s65
          %s2901 = smul.addr %s2900, 128
          %s2902 = scalar_lea.hbm %s25, %s2901
          %s2904 = sshll.u32 %s2883, 4
          %s2905 = int_to_ptr.vmem [resolvable:$true] %s2904
          %2907 = dma.vmem_to_hbm [thread:$0]  %s2905, 128, %s2902, %s2880
        $region164: #{tpu_custom_call.1} parent=119 // pred_fallthru
          _
        // Predicated region
        $region165: #{tpu_custom_call.1} parent=119 // pred_check
          %p2908 = pneg %p694
        $region166: #{tpu_custom_call.1} parent=119 // pred_check_branch
          %2910 = sbr.rel (%p2908) target = $region168
        $region167: #{tpu_custom_call.1} parent=119 // pred_region
          %s2912 = ssub.s32 512, 512
          %2913 = vsyncadd %s2885, %s2912
          %s2914 = smul.addr %s65, 4
          %s2915 = sadd.s32 %s66, %s2914
          %s2916 = smul.addr %s2915, 128
          %s2917 = scalar_lea.hbm %s26, %s2916
          %s2918 = sshll.u32 %s2888, 4
          %s2919 = int_to_ptr.vmem [resolvable:$true] %s2918
          %2924 = dma.vmem_to_hbm [thread:$0]  %s2919, 512, %s2917, %s2885, 128, 128, 8
        $region168: #{tpu_custom_call.1} parent=119 // pred_fallthru
          _
        // Predicated region
        $region169: #{tpu_custom_call.1} parent=119 // pred_check
          %p2925 = pneg %p722
        $region170: #{tpu_custom_call.1} parent=119 // pred_check_branch
          %2927 = sbr.rel (%p2925) target = $region172
        $region171: #{tpu_custom_call.1} parent=119 // pred_region
          %s2929 = ssub.s32 256, 256
          %2930 = vsyncadd %s2890, %s2929
          %s2931 = smul.addr %s65, 2
          %s2932 = sadd.s32 %s66, %s2931
          %s2933 = smul.addr %s2932, 128
          %s2934 = scalar_lea.hbm %s27, %s2933
          %s2935 = sshll.u32 %s2893, 4
          %s2936 = int_to_ptr.vmem [resolvable:$true] %s2935
          %2941 = dma.vmem_to_hbm [thread:$0]  %s2936, 256, %s2934, %s2890, 128, 128, 8
        $region172: #{tpu_custom_call.1} parent=119 // pred_fallthru
          _
      $region120: #{tpu_custom_call.1} parent=5 // pred_fallthru
        _
      %p2942 = scmp.le.s32.totalorder 2, %s56
      // Predicated region
      $region173: #{tpu_custom_call.1} parent=5 // pred_check
        %p2943 = pneg %p2942
      $region174: #{tpu_custom_call.1} parent=5 // pred_check_branch
        %2945 = sbr.rel (%p2943) target = $region176
      $region175: #{tpu_custom_call.1} parent=5 // pred_region
        %s2946 = ssub.s32 %s56, 2
        // Predicated region
        $region177: #{tpu_custom_call.1} parent=175 // pred_check
          %p2947 = pneg %p672
        $region178: #{tpu_custom_call.1} parent=175 // pred_check_branch
          %2949 = sbr.rel (%p2947) target = $region180
        $region179: #{tpu_custom_call.1} parent=175 // pred_region
          %s2950 = sand.u32 %s657, 1
          %s2951 = scalar_lea.sflag [#allocation4], %s2950
          %s2952 = sand.u32 %s657, 1
          %s2953 = smul.addr %s2952, 8
          %s2954 = scalar_lea.vmem [#allocation19], %s2953
          %2955 = dma.done %s2951, 128
        $region180: #{tpu_custom_call.1} parent=175 // pred_fallthru
          _
        // Predicated region
        $region181: #{tpu_custom_call.1} parent=175 // pred_check
          %p2956 = pneg %p700
        $region182: #{tpu_custom_call.1} parent=175 // pred_check_branch
          %2958 = sbr.rel (%p2956) target = $region184
        $region183: #{tpu_custom_call.1} parent=175 // pred_region
          %s2959 = sand.u32 %s62, 1
          %s2960 = scalar_lea.sflag [#allocation21], %s2959
          %s2961 = sand.u32 %s685, 1
          %s2962 = smul.addr %s2961, 32
          %s2963 = scalar_lea.vmem [#allocation20], %s2962
          %2964 = dma.done %s2960, 512
        $region184: #{tpu_custom_call.1} parent=175 // pred_fallthru
          _
        // Predicated region
        $region185: #{tpu_custom_call.1} parent=175 // pred_check
          %p2965 = pneg %p728
        $region186: #{tpu_custom_call.1} parent=175 // pred_check_branch
          %2967 = sbr.rel (%p2965) target = $region188
        $region187: #{tpu_custom_call.1} parent=175 // pred_region
          %s2968 = sand.u32 %s62, 1
          %s2969 = scalar_lea.sflag [#allocation21], %s2968
          %s2970 = sand.u32 %s713, 1
          %s2971 = smul.addr %s2970, 16
          %s2972 = scalar_lea.vmem [#allocation22], %s2971
          %2973 = dma.done %s2969, 256
        $region188: #{tpu_custom_call.1} parent=175 // pred_fallthru
          _
      $region176: #{tpu_custom_call.1} parent=5 // pred_fallthru
        _
    $region6: #{tpu_custom_call.1} parent=1 // loop_footer
      %s60 = sadd.s32 1, %s56
    $region7: #{tpu_custom_call.1} parent=1 // loop_footer_branch
      %55 = sbr.rel target = $region3
    $region8: #{tpu_custom_call.1} parent=1 // loop_exit
      _
    %2974 = vsyncpa [#allocation3], 1
    %s2975 = scalar_lea.sflag [#allocation3], 1
    %2976 = vsyncpa %s2975, 1
    %2977 = vsyncpa [#allocation6], 1
    %s2978 = scalar_lea.sflag [#allocation6], 1
    %2979 = vsyncpa %s2978, 1
    %2980 = vsyncpa [#allocation9], 1
    %s2981 = scalar_lea.sflag [#allocation9], 1
    %2982 = vsyncpa %s2981, 1
    %2983 = vsyncpa [#allocation12], 1
    %s2984 = scalar_lea.sflag [#allocation12], 1
    %2985 = vsyncpa %s2984, 1
    %2986 = vsyncpa [#allocation15], 1
    %s2987 = scalar_lea.sflag [#allocation15], 1
    %2988 = vsyncpa %s2987, 1
    %2989 = vsyncpa [#allocation18], 1
    %2990 = vsyncpa [#allocation4], 1
    %s2991 = scalar_lea.sflag [#allocation4], 1
    %2992 = vsyncpa %s2991, 1
    %2993 = vsyncpa [#allocation21], 1
    %s2994 = scalar_lea.sflag [#allocation21], 1
    %2995 = vsyncpa %s2994, 1

// kernel: tpu_custom_call.1
$region0: #{tpu_custom_call.1}
  #allocation0 [shape = 'u32[]', space=smem, size = 0x4, offset = 0x4, fixed_abs, tag = 'smem constant byte address 0x4 - core index']
  #allocation1 [shape = 'u32[144,128]{1,0:T(1,128)}', space=vmem, size = 0x12000, scoped, tag = 'internal scratch']
  %s0 = inlined_call_operand.hbm [shape: f32[2,8,32], index: 0, kind: input, shape index: {}]
  %s1 = inlined_call_operand.hbm [shape: f32[2,8,32], index: 1, kind: input, shape index: {}]
  %s2 = inlined_call_operand.hbm [shape: f32[2,8,32], index: 2, kind: input, shape index: {}]
  %s3 = inlined_call_operand.hbm [shape: f32[2,8,8], index: 3, kind: input, shape index: {}]
  %s4 = inlined_call_operand.hbm [shape: f32[2,8,32], index: 4, kind: input, shape index: {}]
  %s5 = inlined_call_operand.hbm [shape: f32[2,8,32], index: 5, kind: input, shape index: {}]
  %s6 = inlined_call_operand.hbm [shape: f32[2,8,32], index: 6, kind: input, shape index: {}]
  %s7 = inlined_call_operand.hbm [shape: f32[2,8,8], index: 7, kind: input, shape index: {}]
  %s8 = inlined_call_operand.vmem [shape: f32[32,32], index: 8, kind: input, shape index: {}]
  %s9 = inlined_call_operand.vmem [shape: f32[1,32], index: 9, kind: input, shape index: {}]
  %s10 = inlined_call_operand.vmem [shape: f32[32,32], index: 10, kind: input, shape index: {}]
  %s11 = inlined_call_operand.hbm [shape: f32[1,32], index: 11, kind: input, shape index: {}]
  %s12 = inlined_call_operand.vmem [shape: f32[32,32], index: 12, kind: input, shape index: {}]
  %s13 = inlined_call_operand.hbm [shape: f32[1,32], index: 13, kind: input, shape index: {}]
  %s14 = inlined_call_operand.vmem [shape: f32[32,16], index: 14, kind: input, shape index: {}]
  %s15 = inlined_call_operand.vmem [shape: f32[1,16], index: 15, kind: input, shape index: {}]
  %s16 = inlined_call_operand.vmem [shape: f32[32,16], index: 16, kind: input, shape index: {}]
  %s17 = inlined_call_operand.vmem [shape: f32[1,16], index: 17, kind: input, shape index: {}]
  %s18 = inlined_call_operand.vmem [shape: f32[32,16], index: 18, kind: input, shape index: {}]
  %s19 = inlined_call_operand.vmem [shape: f32[1,16], index: 19, kind: input, shape index: {}]
  %s20 = inlined_call_operand.vmem [shape: f32[32,32], index: 20, kind: input, shape index: {}]
  %s21 = inlined_call_operand.vmem [shape: f32[16,32], index: 21, kind: input, shape index: {}]
  %s22 = inlined_call_operand.vmem [shape: f32[1,32], index: 22, kind: input, shape index: {}]
  %s23 = inlined_call_operand.vmem [shape: f32[1,32], index: 23, kind: input, shape index: {}]
  %s24 = inlined_call_operand.vmem [shape: f32[1,32], index: 24, kind: input, shape index: {}]
  %s25 = inlined_call_operand.hbm [shape: f32[2,8,32], index: 25, kind: output, shape index: {0}]
  %s26 = inlined_call_operand.hbm [shape: f32[2,4,8,8], index: 26, kind: output, shape index: {1}]
  %s27 = inlined_call_operand.hbm [shape: f32[2,2,8,8], index: 27, kind: output, shape index: {2}]
  %28 = xla_tuple %s25, %s26, %s27
  %s29 = sld [smem:[#allocation0]]
  $region189: #{tpu_custom_call.1} parent=0
    _
  %s31 = ssub.s32 1, %s29
  %s32 = scalar_select 0, %s31, %s29
  $region1: #{tpu_custom_call.1} parent=0
    #allocation2 [shape = 'u8[8192]{0}', space=vmem, size = 0x2000, scoped, tag = 'input window, operand 0']
    #allocation3 [shape = 's32[2]{0}', space=sflag, size = 0x8, scoped, tag = 'scoped memory for tpu_custom_call.1']
    #allocation4 [shape = 's32[2]{0}', space=sflag, size = 0x8, scoped, tag = 'scoped memory for tpu_custom_call.1']
    #allocation5 [shape = 'u8[8192]{0}', space=vmem, size = 0x2000, scoped, tag = 'input window, operand 1']
    #allocation6 [shape = 's32[2]{0}', space=sflag, size = 0x8, scoped, tag = 'scoped memory for tpu_custom_call.1']
    #allocation7 [shape = 'u8[8192]{0}', space=vmem, size = 0x2000, scoped, tag = 'input window, operand 2']
    #allocation8 [shape = 'u8[8192]{0}', space=vmem, size = 0x2000, scoped, tag = 'input window, operand 3']
    #allocation9 [shape = 's32[2]{0}', space=sflag, size = 0x8, scoped, tag = 'scoped memory for tpu_custom_call.1']
    #allocation10 [shape = 'u8[8192]{0}', space=vmem, size = 0x2000, scoped, tag = 'input window, operand 4']
    #allocation11 [shape = 'u8[8192]{0}', space=vmem, size = 0x2000, scoped, tag = 'input window, operand 5']
    #allocation12 [shape = 's32[2]{0}', space=sflag, size = 0x8, scoped, tag = 'scoped memory for tpu_custom_call.1']
    #allocation13 [shape = 'u8[8192]{0}', space=vmem, size = 0x2000, scoped, tag = 'input window, operand 6']
    #allocation14 [shape = 'u8[8192]{0}', space=vmem, size = 0x2000, scoped, tag = 'input window, operand 7']
    #allocation15 [shape = 's32[2]{0}', space=sflag, size = 0x8, scoped, tag = 'scoped memory for tpu_custom_call.1']
    #allocation16 [shape = 'u8[512]{0}', space=vmem, size = 0x400, scoped, tag = 'input window, operand 11, single buffered']
    #allocation17 [shape = 'u8[512]{0}', space=vmem, size = 0x400, scoped, tag = 'input window, operand 13, single buffered']
    #allocation18 [shape = 's32[1]{0}', space=sflag, size = 0x4, scoped, tag = 'scoped memory for tpu_custom_call.1']
    #allocation19 [shape = 'u8[8192]{0}', space=vmem, size = 0x2000, scoped, tag = 'output window, operand 0']
    #allocation20 [shape = 'u8[32768]{0}', space=vmem, size = 0x8000, scoped, tag = 'output window, operand 1']
    #allocation21 [shape = 's32[2]{0}', space=sflag, size = 0x8, scoped, tag = 'scoped memory for tpu_custom_call.1']
    #allocation22 [shape = 'u8[16384]{0}', space=vmem, size = 0x4000, scoped, tag = 'output window, operand 2']
    %33 = vsyncpa [#allocation3], 0
    %s34 = scalar_lea.sflag [#allocation3], 1
    %35 = vsyncpa %s34, 0
    %36 = vsyncpa [#allocation6], 0
    %s37 = scalar_lea.sflag [#allocation6], 1
    %38 = vsyncpa %s37, 0
    %39 = vsyncpa [#allocation9], 0
    %s40 = scalar_lea.sflag [#allocation9], 1
    %41 = vsyncpa %s40, 0
    %42 = vsyncpa [#allocation12], 0
    %s43 = scalar_lea.sflag [#allocation12], 1
    %44 = vsyncpa %s43, 0
    %45 = vsyncpa [#allocation15], 0
    %s46 = scalar_lea.sflag [#allocation15], 1
    %47 = vsyncpa %s46, 0
    %48 = vsyncpa [#allocation18], 0
    %49 = vsyncpa [#allocation4], 0
    %s50 = scalar_lea.sflag [#allocation4], 1
    %51 = vsyncpa %s50, 0
    %52 = vsyncpa [#allocation21], 0
    %s53 = scalar_lea.sflag [#allocation21], 1
    %54 = vsyncpa %s53, 0
    loop: start=0, step=1, limit=4
    $region2: #{tpu_custom_call.1} parent=1 // loop_pre_header
      _
    $region3: #{tpu_custom_call.1} parent=1 // loop_header
      %s56 = sphi 0, %s60
      %p57 = scmp.ge.s32.totalorder %s56, 4
      %s63 = sphi 0, %s75
      %s64 = sphi 0, %s71
      %s65 = sphi 0, %s63
      %s66 = sphi 0, %s64
      %s67 = sphi 0, %s65
      %s68 = sphi 0, %s66
      %s80 = sphi 0, %s82
      %s83 = sphi 0, %s80
      %s84 = sphi 0, %s83
      %s100 = sphi 0, %s84
      %s106 = sphi 0, %s108
      %s109 = sphi 0, %s106
      %s110 = sphi 0, %s109
      %s126 = sphi 0, %s110
      %s132 = sphi 0, %s134
      %s135 = sphi 0, %s132
      %s136 = sphi 0, %s135
      %s152 = sphi 0, %s136
      %s160 = sphi 0, %s162
      %s163 = sphi 0, %s160
      %s164 = sphi 0, %s163
      %s180 = sphi 0, %s164
      %s188 = sphi 0, %s190
      %s191 = sphi 0, %s188
      %s192 = sphi 0, %s191
      %s208 = sphi 0, %s192
      %s214 = sphi 0, %s216
      %s217 = sphi 0, %s214
      %s218 = sphi 0, %s217
      %s234 = sphi 0, %s218
      %s240 = sphi 0, %s242
      %s243 = sphi 0, %s240
      %s244 = sphi 0, %s243
      %s260 = sphi 0, %s244
      %s268 = sphi 0, %s270
      %s271 = sphi 0, %s268
      %s272 = sphi 0, %s271
      %s288 = sphi 0, %s272
      %s292 = sphi 0, %s292
      %s294 = sphi 0, %s292
      %s295 = sphi 0, %s294
      %s309 = sphi 0, %s295
      %s313 = sphi 0, %s313
      %s315 = sphi 0, %s313
      %s316 = sphi 0, %s315
      %s330 = sphi 0, %s316
      %s334 = sphi 0, %s334
      %s336 = sphi 0, %s334
      %s337 = sphi 0, %s336
      %s351 = sphi 0, %s337
      %s355 = sphi 0, %s355
      %s357 = sphi 0, %s355
      %s358 = sphi 0, %s357
      %s372 = sphi 0, %s358
      %s376 = sphi 0, %s376
      %s378 = sphi 0, %s376
      %s379 = sphi 0, %s378
      %s393 = sphi 0, %s379
      %s397 = sphi 0, %s397
      %s399 = sphi 0, %s397
      %s400 = sphi 0, %s399
      %s414 = sphi 0, %s400
      %s418 = sphi 0, %s418
      %s420 = sphi 0, %s418
      %s421 = sphi 0, %s420
      %s435 = sphi 0, %s421
      %s439 = sphi 0, %s439
      %s441 = sphi 0, %s439
      %s442 = sphi 0, %s441
      %s456 = sphi 0, %s442
      %s460 = sphi 0, %s460
      %s462 = sphi 0, %s460
      %s463 = sphi 0, %s462
      %s477 = sphi 0, %s463
      %s481 = sphi 0, %s481
      %s483 = sphi 0, %s481
      %s484 = sphi 0, %s483
      %s498 = sphi 0, %s484
      %s502 = sphi 0, %s502
      %s504 = sphi 0, %s502
      %s505 = sphi 0, %s504
      %s519 = sphi 0, %s505
      %s523 = sphi 0, %s523
      %s525 = sphi 0, %s523
      %s526 = sphi 0, %s525
      %s540 = sphi 0, %s526
      %s544 = sphi 0, %s544
      %s546 = sphi 0, %s544
      %s547 = sphi 0, %s546
      %s561 = sphi 0, %s547
      %s565 = sphi 0, %s565
      %s567 = sphi 0, %s565
      %s568 = sphi 0, %s567
      %s582 = sphi 0, %s568
      %s586 = sphi 0, %s586
      %s588 = sphi 0, %s586
      %s589 = sphi 0, %s588
      %s603 = sphi 0, %s589
      %s607 = sphi 0, %s607
      %s609 = sphi 0, %s607
      %s610 = sphi 0, %s609
      %s624 = sphi 0, %s610
      %s628 = sphi 0, %s628
      %s630 = sphi 0, %s628
      %s631 = sphi 0, %s630
      %s645 = sphi 0, %s631
      %s653 = sphi 0, %s655
      %s656 = sphi 0, %s653
      %s657 = sphi 0, %s656
      %s673 = sphi 0, %s657
      %s681 = sphi 0, %s683
      %s684 = sphi 0, %s681
      %s685 = sphi 0, %s684
      %s701 = sphi 0, %s685
      %s709 = sphi 0, %s711
      %s712 = sphi 0, %s709
      %s713 = sphi 0, %s712
      %s729 = sphi 0, %s713
    $region4: #{tpu_custom_call.1} parent=1 // loop_header_branch
      %59 = sbr.rel (%p57) target = $region8
    $region5: #{tpu_custom_call.1} parent=1 // loop_body
      %s61 = ssub.s32 %s56, 1
      %s62 = ssub.s32 %s56, 2
      %s69 = sadd.s32 1, %s64
      %p70 = scmp.ge.s32.totalorder %s69, 1
      %s71 = scalar_select %p70, 0, %s69
      %s72 = sadd.s32 1, %s63
      %s73 = scalar_select %p70, %s72, %s63
      %p74 = scmp.ge.s32.totalorder %s73, 2
      %s75 = scalar_select %p74, 0, %s73
      %s76 = ssub.s32 %s63, %s75
      %s77 = ssub.s32 %s64, %s71
      %s78 = sor.u32 %s76, %s77
      %p79 = scmp.eq.s32.totalorder %s78, 0
      %s81 = sadd.s32 %s80, 1
      %s82 = scalar_select %p79, %s80, %s81
      %p85 = pneg %p79
      %p86 = scmp.eq.s32.totalorder %s56, 1
      %p87 = por %p85, %p86
      %p88 = scmp.ne.s32.totalorder %s80, %s83
      %p89 = scmp.eq.s32.totalorder %s56, 0
      %p90 = por %p88, %p89
      %p91 = scmp.ne.s32.totalorder %s80, %s83
      %p92 = scmp.eq.s32.totalorder %s61, 1
      %p93 = por %p91, %p92
      %p94 = scmp.ne.s32.totalorder %s83, %s84
      %p95 = scmp.eq.s32.totalorder %s61, 0
      %p96 = por %p94, %p95
      %p97 = scmp.ne.s32.totalorder %s83, %s84
      %p98 = scmp.eq.s32.totalorder %s62, 1
      %p99 = por %p97, %p98
      %p101 = scmp.ne.s32.totalorder %s84, %s100
      %p102 = scmp.eq.s32.totalorder %s62, 0
      %p103 = por %p101, %p102
      %s104 = ssub.s32 %s63, %s75
      %p105 = scmp.eq.s32.totalorder %s104, 0
      %s107 = sadd.s32 %s106, 1
      %s108 = scalar_select %p105, %s106, %s107
      %p111 = pneg %p105
      %p112 = scmp.eq.s32.totalorder %s56, 1
      %p113 = por %p111, %p112
      %p114 = scmp.ne.s32.totalorder %s106, %s109
      %p115 = scmp.eq.s32.totalorder %s56, 0
      %p116 = por %p114, %p115
      %p117 = scmp.ne.s32.totalorder %s106, %s109
      %p118 = scmp.eq.s32.totalorder %s61, 1
      %p119 = por %p117, %p118
      %p120 = scmp.ne.s32.totalorder %s109, %s110
      %p121 = scmp.eq.s32.totalorder %s61, 0
      %p122 = por %p120, %p121
      %p123 = scmp.ne.s32.totalorder %s109, %s110
      %p124 = scmp.eq.s32.totalorder %s62, 1
      %p125 = por %p123, %p124
      %p127 = scmp.ne.s32.totalorder %s110, %s126
      %p128 = scmp.eq.s32.totalorder %s62, 0
      %p129 = por %p127, %p128
      %s130 = ssub.s32 %s63, %s75
      %p131 = scmp.eq.s32.totalorder %s130, 0
      %s133 = sadd.s32 %s132, 1
      %s134 = scalar_select %p131, %s132, %s133
      %p137 = pneg %p131
      %p138 = scmp.eq.s32.totalorder %s56, 1
      %p139 = por %p137, %p138
      %p140 = scmp.ne.s32.totalorder %s132, %s135
      %p141 = scmp.eq.s32.totalorder %s56, 0
      %p142 = por %p140, %p141
      %p143 = scmp.ne.s32.totalorder %s132, %s135
      %p144 = scmp.eq.s32.totalorder %s61, 1
      %p145 = por %p143, %p144
      %p146 = scmp.ne.s32.totalorder %s135, %s136
      %p147 = scmp.eq.s32.totalorder %s61, 0
      %p148 = por %p146, %p147
      %p149 = scmp.ne.s32.totalorder %s135, %s136
      %p150 = scmp.eq.s32.totalorder %s62, 1
      %p151 = por %p149, %p150
      %p153 = scmp.ne.s32.totalorder %s136, %s152
      %p154 = scmp.eq.s32.totalorder %s62, 0
      %p155 = por %p153, %p154
      %s156 = ssub.s32 %s63, %s75
      %s157 = ssub.s32 %s64, %s71
      %s158 = sor.u32 %s156, %s157
      %p159 = scmp.eq.s32.totalorder %s158, 0
      %s161 = sadd.s32 %s160, 1
      %s162 = scalar_select %p159, %s160, %s161
      %p165 = pneg %p159
      %p166 = scmp.eq.s32.totalorder %s56, 1
      %p167 = por %p165, %p166
      %p168 = scmp.ne.s32.totalorder %s160, %s163
      %p169 = scmp.eq.s32.totalorder %s56, 0
      %p170 = por %p168, %p169
      %p171 = scmp.ne.s32.totalorder %s160, %s163
      %p172 = scmp.eq.s32.totalorder %s61, 1
      %p173 = por %p171, %p172
      %p174 = scmp.ne.s32.totalorder %s163, %s164
      %p175 = scmp.eq.s32.totalorder %s61, 0
      %p176 = por %p174, %p175
      %p177 = scmp.ne.s32.totalorder %s163, %s164
      %p178 = scmp.eq.s32.totalorder %s62, 1
      %p179 = por %p177, %p178
      %p181 = scmp.ne.s32.totalorder %s164, %s180
      %p182 = scmp.eq.s32.totalorder %s62, 0
      %p183 = por %p181, %p182
      %s184 = ssub.s32 %s63, %s75
      %s185 = ssub.s32 %s64, %s71
      %s186 = sor.u32 %s184, %s185
      %p187 = scmp.eq.s32.totalorder %s186, 0
      %s189 = sadd.s32 %s188, 1
      %s190 = scalar_select %p187, %s188, %s189
      %p193 = pneg %p187
      %p194 = scmp.eq.s32.totalorder %s56, 1
      %p195 = por %p193, %p194
      %p196 = scmp.ne.s32.totalorder %s188, %s191
      %p197 = scmp.eq.s32.totalorder %s56, 0
      %p198 = por %p196, %p197
      %p199 = scmp.ne.s32.totalorder %s188, %s191
      %p200 = scmp.eq.s32.totalorder %s61, 1
      %p201 = por %p199, %p200
      %p202 = scmp.ne.s32.totalorder %s191, %s192
      %p203 = scmp.eq.s32.totalorder %s61, 0
      %p204 = por %p202, %p203
      %p205 = scmp.ne.s32.totalorder %s191, %s192
      %p206 = scmp.eq.s32.totalorder %s62, 1
      %p207 = por %p205, %p206
      %p209 = scmp.ne.s32.totalorder %s192, %s208
      %p210 = scmp.eq.s32.totalorder %s62, 0
      %p211 = por %p209, %p210
      %s212 = ssub.s32 %s63, %s75
      %p213 = scmp.eq.s32.totalorder %s212, 0
      %s215 = sadd.s32 %s214, 1
      %s216 = scalar_select %p213, %s214, %s215
      %p219 = pneg %p213
      %p220 = scmp.eq.s32.totalorder %s56, 1
      %p221 = por %p219, %p220
      %p222 = scmp.ne.s32.totalorder %s214, %s217
      %p223 = scmp.eq.s32.totalorder %s56, 0
      %p224 = por %p222, %p223
      %p225 = scmp.ne.s32.totalorder %s214, %s217
      %p226 = scmp.eq.s32.totalorder %s61, 1
      %p227 = por %p225, %p226
      %p228 = scmp.ne.s32.totalorder %s217, %s218
      %p229 = scmp.eq.s32.totalorder %s61, 0
      %p230 = por %p228, %p229
      %p231 = scmp.ne.s32.totalorder %s217, %s218
      %p232 = scmp.eq.s32.totalorder %s62, 1
      %p233 = por %p231, %p232
      %p235 = scmp.ne.s32.totalorder %s218, %s234
      %p236 = scmp.eq.s32.totalorder %s62, 0
      %p237 = por %p235, %p236
      %s238 = ssub.s32 %s63, %s75
      %p239 = scmp.eq.s32.totalorder %s238, 0
      %s241 = sadd.s32 %s240, 1
      %s242 = scalar_select %p239, %s240, %s241
      %p245 = pneg %p239
      %p246 = scmp.eq.s32.totalorder %s56, 1
      %p247 = por %p245, %p246
      %p248 = scmp.ne.s32.totalorder %s240, %s243
      %p249 = scmp.eq.s32.totalorder %s56, 0
      %p250 = por %p248, %p249
      %p251 = scmp.ne.s32.totalorder %s240, %s243
      %p252 = scmp.eq.s32.totalorder %s61, 1
      %p253 = por %p251, %p252
      %p254 = scmp.ne.s32.totalorder %s243, %s244
      %p255 = scmp.eq.s32.totalorder %s61, 0
      %p256 = por %p254, %p255
      %p257 = scmp.ne.s32.totalorder %s243, %s244
      %p258 = scmp.eq.s32.totalorder %s62, 1
      %p259 = por %p257, %p258
      %p261 = scmp.ne.s32.totalorder %s244, %s260
      %p262 = scmp.eq.s32.totalorder %s62, 0
      %p263 = por %p261, %p262
      %s264 = ssub.s32 %s63, %s75
      %s265 = ssub.s32 %s64, %s71
      %s266 = sor.u32 %s264, %s265
      %p267 = scmp.eq.s32.totalorder %s266, 0
      %s269 = sadd.s32 %s268, 1
      %s270 = scalar_select %p267, %s268, %s269
      %p273 = pneg %p267
      %p274 = scmp.eq.s32.totalorder %s56, 1
      %p275 = por %p273, %p274
      %p276 = scmp.ne.s32.totalorder %s268, %s271
      %p277 = scmp.eq.s32.totalorder %s56, 0
      %p278 = por %p276, %p277
      %p279 = scmp.ne.s32.totalorder %s268, %s271
      %p280 = scmp.eq.s32.totalorder %s61, 1
      %p281 = por %p279, %p280
      %p282 = scmp.ne.s32.totalorder %s271, %s272
      %p283 = scmp.eq.s32.totalorder %s61, 0
      %p284 = por %p282, %p283
      %p285 = scmp.ne.s32.totalorder %s271, %s272
      %p286 = scmp.eq.s32.totalorder %s62, 1
      %p287 = por %p285, %p286
      %p289 = scmp.ne.s32.totalorder %s272, %s288
      %p290 = scmp.eq.s32.totalorder %s62, 0
      %p291 = por %p289, %p290
      %s293 = sadd.s32 %s292, 1
      %p296 = scmp.eq.s32.totalorder %s56, 1
      %p297 = scmp.ne.s32.totalorder %s292, %s294
      %p298 = scmp.eq.s32.totalorder %s56, 0
      %p299 = por %p297, %p298
      %p300 = scmp.ne.s32.totalorder %s292, %s294
      %p301 = scmp.eq.s32.totalorder %s61, 1
      %p302 = por %p300, %p301
      %p303 = scmp.ne.s32.totalorder %s294, %s295
      %p304 = scmp.eq.s32.totalorder %s61, 0
      %p305 = por %p303, %p304
      %p306 = scmp.ne.s32.totalorder %s294, %s295
      %p307 = scmp.eq.s32.totalorder %s62, 1
      %p308 = por %p306, %p307
      %p310 = scmp.ne.s32.totalorder %s295, %s309
      %p311 = scmp.eq.s32.totalorder %s62, 0
      %p312 = por %p310, %p311
      %s314 = sadd.s32 %s313, 1
      %p317 = scmp.eq.s32.totalorder %s56, 1
      %p318 = scmp.ne.s32.totalorder %s313, %s315
      %p319 = scmp.eq.s32.totalorder %s56, 0
      %p320 = por %p318, %p319
      %p321 = scmp.ne.s32.totalorder %s313, %s315
      %p322 = scmp.eq.s32.totalorder %s61, 1
      %p323 = por %p321, %p322
      %p324 = scmp.ne.s32.totalorder %s315, %s316
      %p325 = scmp.eq.s32.totalorder %s61, 0
      %p326 = por %p324, %p325
      %p327 = scmp.ne.s32.totalorder %s315, %s316
      %p328 = scmp.eq.s32.totalorder %s62, 1
      %p329 = por %p327, %p328
      %p331 = scmp.ne.s32.totalorder %s316, %s330
      %p332 = scmp.eq.s32.totalorder %s62, 0
      %p333 = por %p331, %p332
      %s335 = sadd.s32 %s334, 1
      %p338 = scmp.eq.s32.totalorder %s56, 1
      %p339 = scmp.ne.s32.totalorder %s334, %s336
      %p340 = scmp.eq.s32.totalorder %s56, 0
      %p341 = por %p339, %p340
      %p342 = scmp.ne.s32.totalorder %s334, %s336
      %p343 = scmp.eq.s32.totalorder %s61, 1
      %p344 = por %p342, %p343
      %p345 = scmp.ne.s32.totalorder %s336, %s337
      %p346 = scmp.eq.s32.totalorder %s61, 0
      %p347 = por %p345, %p346
      %p348 = scmp.ne.s32.totalorder %s336, %s337
      %p349 = scmp.eq.s32.totalorder %s62, 1
      %p350 = por %p348, %p349
      %p352 = scmp.ne.s32.totalorder %s337, %s351
      %p353 = scmp.eq.s32.totalorder %s62, 0
      %p354 = por %p352, %p353
      %s356 = sadd.s32 %s355, 1
      %p359 = scmp.eq.s32.totalorder %s56, 1
      %p360 = scmp.ne.s32.totalorder %s355, %s357
      %p361 = scmp.eq.s32.totalorder %s56, 0
      %p362 = por %p360, %p361
      %p363 = scmp.ne.s32.totalorder %s355, %s357
      %p364 = scmp.eq.s32.totalorder %s61, 1
      %p365 = por %p363, %p364
      %p366 = scmp.ne.s32.totalorder %s357, %s358
      %p367 = scmp.eq.s32.totalorder %s61, 0
      %p368 = por %p366, %p367
      %p369 = scmp.ne.s32.totalorder %s357, %s358
      %p370 = scmp.eq.s32.totalorder %s62, 1
      %p371 = por %p369, %p370
      %p373 = scmp.ne.s32.totalorder %s358, %s372
      %p374 = scmp.eq.s32.totalorder %s62, 0
      %p375 = por %p373, %p374
      %s377 = sadd.s32 %s376, 1
      %p380 = scmp.eq.s32.totalorder %s56, 1
      %p381 = scmp.ne.s32.totalorder %s376, %s378
      %p382 = scmp.eq.s32.totalorder %s56, 0
      %p383 = por %p381, %p382
      %p384 = scmp.ne.s32.totalorder %s376, %s378
      %p385 = scmp.eq.s32.totalorder %s61, 1
      %p386 = por %p384, %p385
      %p387 = scmp.ne.s32.totalorder %s378, %s379
      %p388 = scmp.eq.s32.totalorder %s61, 0
      %p389 = por %p387, %p388
      %p390 = scmp.ne.s32.totalorder %s378, %s379
      %p391 = scmp.eq.s32.totalorder %s62, 1
      %p392 = por %p390, %p391
      %p394 = scmp.ne.s32.totalorder %s379, %s393
      %p395 = scmp.eq.s32.totalorder %s62, 0
      %p396 = por %p394, %p395
      %s398 = sadd.s32 %s397, 1
      %p401 = scmp.eq.s32.totalorder %s56, 1
      %p402 = scmp.ne.s32.totalorder %s397, %s399
      %p403 = scmp.eq.s32.totalorder %s56, 0
      %p404 = por %p402, %p403
      %p405 = scmp.ne.s32.totalorder %s397, %s399
      %p406 = scmp.eq.s32.totalorder %s61, 1
      %p407 = por %p405, %p406
      %p408 = scmp.ne.s32.totalorder %s399, %s400
      %p409 = scmp.eq.s32.totalorder %s61, 0
      %p410 = por %p408, %p409
      %p411 = scmp.ne.s32.totalorder %s399, %s400
      %p412 = scmp.eq.s32.totalorder %s62, 1
      %p413 = por %p411, %p412
      %p415 = scmp.ne.s32.totalorder %s400, %s414
      %p416 = scmp.eq.s32.totalorder %s62, 0
      %p417 = por %p415, %p416
      %s419 = sadd.s32 %s418, 1
      %p422 = scmp.eq.s32.totalorder %s56, 1
      %p423 = scmp.ne.s32.totalorder %s418, %s420
      %p424 = scmp.eq.s32.totalorder %s56, 0
      %p425 = por %p423, %p424
      %p426 = scmp.ne.s32.totalorder %s418, %s420
      %p427 = scmp.eq.s32.totalorder %s61, 1
      %p428 = por %p426, %p427
      %p429 = scmp.ne.s32.totalorder %s420, %s421
      %p430 = scmp.eq.s32.totalorder %s61, 0
      %p431 = por %p429, %p430
      %p432 = scmp.ne.s32.totalorder %s420, %s421
      %p433 = scmp.eq.s32.totalorder %s62, 1
      %p434 = por %p432, %p433
      %p436 = scmp.ne.s32.totalorder %s421, %s435
      %p437 = scmp.eq.s32.totalorder %s62, 0
      %p438 = por %p436, %p437
      %s440 = sadd.s32 %s439, 1
      %p443 = scmp.eq.s32.totalorder %s56, 1
      %p444 = scmp.ne.s32.totalorder %s439, %s441
      %p445 = scmp.eq.s32.totalorder %s56, 0
      %p446 = por %p444, %p445
      %p447 = scmp.ne.s32.totalorder %s439, %s441
      %p448 = scmp.eq.s32.totalorder %s61, 1
      %p449 = por %p447, %p448
      %p450 = scmp.ne.s32.totalorder %s441, %s442
      %p451 = scmp.eq.s32.totalorder %s61, 0
      %p452 = por %p450, %p451
      %p453 = scmp.ne.s32.totalorder %s441, %s442
      %p454 = scmp.eq.s32.totalorder %s62, 1
      %p455 = por %p453, %p454
      %p457 = scmp.ne.s32.totalorder %s442, %s456
      %p458 = scmp.eq.s32.totalorder %s62, 0
      %p459 = por %p457, %p458
      %s461 = sadd.s32 %s460, 1
      %p464 = scmp.eq.s32.totalorder %s56, 1
      %p465 = scmp.ne.s32.totalorder %s460, %s462
      %p466 = scmp.eq.s32.totalorder %s56, 0
      %p467 = por %p465, %p466
      %p468 = scmp.ne.s32.totalorder %s460, %s462
      %p469 = scmp.eq.s32.totalorder %s61, 1
      %p470 = por %p468, %p469
      %p471 = scmp.ne.s32.totalorder %s462, %s463
      %p472 = scmp.eq.s32.totalorder %s61, 0
      %p473 = por %p471, %p472
      %p474 = scmp.ne.s32.totalorder %s462, %s463
      %p475 = scmp.eq.s32.totalorder %s62, 1
      %p476 = por %p474, %p475
      %p478 = scmp.ne.s32.totalorder %s463, %s477
      %p479 = scmp.eq.s32.totalorder %s62, 0
      %p480 = por %p478, %p479
      %s482 = sadd.s32 %s481, 1
      %p485 = scmp.eq.s32.totalorder %s56, 1
      %p486 = scmp.ne.s32.totalorder %s481, %s483
      %p487 = scmp.eq.s32.totalorder %s56, 0
      %p488 = por %p486, %p487
      %p489 = scmp.ne.s32.totalorder %s481, %s483
      %p490 = scmp.eq.s32.totalorder %s61, 1
      %p491 = por %p489, %p490
      %p492 = scmp.ne.s32.totalorder %s483, %s484
      %p493 = scmp.eq.s32.totalorder %s61, 0
      %p494 = por %p492, %p493
      %p495 = scmp.ne.s32.totalorder %s483, %s484
      %p496 = scmp.eq.s32.totalorder %s62, 1
      %p497 = por %p495, %p496
      %p499 = scmp.ne.s32.totalorder %s484, %s498
      %p500 = scmp.eq.s32.totalorder %s62, 0
      %p501 = por %p499, %p500
      %s503 = sadd.s32 %s502, 1
      %p506 = scmp.eq.s32.totalorder %s56, 1
      %p507 = scmp.ne.s32.totalorder %s502, %s504
      %p508 = scmp.eq.s32.totalorder %s56, 0
      %p509 = por %p507, %p508
      %p510 = scmp.ne.s32.totalorder %s502, %s504
      %p511 = scmp.eq.s32.totalorder %s61, 1
      %p512 = por %p510, %p511
      %p513 = scmp.ne.s32.totalorder %s504, %s505
      %p514 = scmp.eq.s32.totalorder %s61, 0
      %p515 = por %p513, %p514
      %p516 = scmp.ne.s32.totalorder %s504, %s505
      %p517 = scmp.eq.s32.totalorder %s62, 1
      %p518 = por %p516, %p517
      %p520 = scmp.ne.s32.totalorder %s505, %s519
      %p521 = scmp.eq.s32.totalorder %s62, 0
      %p522 = por %p520, %p521
      %s524 = sadd.s32 %s523, 1
      %p527 = scmp.eq.s32.totalorder %s56, 1
      %p528 = scmp.ne.s32.totalorder %s523, %s525
      %p529 = scmp.eq.s32.totalorder %s56, 0
      %p530 = por %p528, %p529
      %p531 = scmp.ne.s32.totalorder %s523, %s525
      %p532 = scmp.eq.s32.totalorder %s61, 1
      %p533 = por %p531, %p532
      %p534 = scmp.ne.s32.totalorder %s525, %s526
      %p535 = scmp.eq.s32.totalorder %s61, 0
      %p536 = por %p534, %p535
      %p537 = scmp.ne.s32.totalorder %s525, %s526
      %p538 = scmp.eq.s32.totalorder %s62, 1
      %p539 = por %p537, %p538
      %p541 = scmp.ne.s32.totalorder %s526, %s540
      %p542 = scmp.eq.s32.totalorder %s62, 0
      %p543 = por %p541, %p542
      %s545 = sadd.s32 %s544, 1
      %p548 = scmp.eq.s32.totalorder %s56, 1
      %p549 = scmp.ne.s32.totalorder %s544, %s546
      %p550 = scmp.eq.s32.totalorder %s56, 0
      %p551 = por %p549, %p550
      %p552 = scmp.ne.s32.totalorder %s544, %s546
      %p553 = scmp.eq.s32.totalorder %s61, 1
      %p554 = por %p552, %p553
      %p555 = scmp.ne.s32.totalorder %s546, %s547
      %p556 = scmp.eq.s32.totalorder %s61, 0
      %p557 = por %p555, %p556
      %p558 = scmp.ne.s32.totalorder %s546, %s547
      %p559 = scmp.eq.s32.totalorder %s62, 1
      %p560 = por %p558, %p559
      %p562 = scmp.ne.s32.totalorder %s547, %s561
      %p563 = scmp.eq.s32.totalorder %s62, 0
      %p564 = por %p562, %p563
      %s566 = sadd.s32 %s565, 1
      %p569 = scmp.eq.s32.totalorder %s56, 1
      %p570 = scmp.ne.s32.totalorder %s565, %s567
      %p571 = scmp.eq.s32.totalorder %s56, 0
      %p572 = por %p570, %p571
      %p573 = scmp.ne.s32.totalorder %s565, %s567
      %p574 = scmp.eq.s32.totalorder %s61, 1
      %p575 = por %p573, %p574
      %p576 = scmp.ne.s32.totalorder %s567, %s568
      %p577 = scmp.eq.s32.totalorder %s61, 0
      %p578 = por %p576, %p577
      %p579 = scmp.ne.s32.totalorder %s567, %s568
      %p580 = scmp.eq.s32.totalorder %s62, 1
      %p581 = por %p579, %p580
      %p583 = scmp.ne.s32.totalorder %s568, %s582
      %p584 = scmp.eq.s32.totalorder %s62, 0
      %p585 = por %p583, %p584
      %s587 = sadd.s32 %s586, 1
      %p590 = scmp.eq.s32.totalorder %s56, 1
      %p591 = scmp.ne.s32.totalorder %s586, %s588
      %p592 = scmp.eq.s32.totalorder %s56, 0
      %p593 = por %p591, %p592
      %p594 = scmp.ne.s32.totalorder %s586, %s588
      %p595 = scmp.eq.s32.totalorder %s61, 1
      %p596 = por %p594, %p595
      %p597 = scmp.ne.s32.totalorder %s588, %s589
      %p598 = scmp.eq.s32.totalorder %s61, 0
      %p599 = por %p597, %p598
      %p600 = scmp.ne.s32.totalorder %s588, %s589
      %p601 = scmp.eq.s32.totalorder %s62, 1
      %p602 = por %p600, %p601
      %p604 = scmp.ne.s32.totalorder %s589, %s603
      %p605 = scmp.eq.s32.totalorder %s62, 0
      %p606 = por %p604, %p605
      %s608 = sadd.s32 %s607, 1
      %p611 = scmp.eq.s32.totalorder %s56, 1
      %p612 = scmp.ne.s32.totalorder %s607, %s609
      %p613 = scmp.eq.s32.totalorder %s56, 0
      %p614 = por %p612, %p613
      %p615 = scmp.ne.s32.totalorder %s607, %s609
      %p616 = scmp.eq.s32.totalorder %s61, 1
      %p617 = por %p615, %p616
      %p618 = scmp.ne.s32.totalorder %s609, %s610
      %p619 = scmp.eq.s32.totalorder %s61, 0
      %p620 = por %p618, %p619
      %p621 = scmp.ne.s32.totalorder %s609, %s610
      %p622 = scmp.eq.s32.totalorder %s62, 1
      %p623 = por %p621, %p622
      %p625 = scmp.ne.s32.totalorder %s610, %s624
      %p626 = scmp.eq.s32.totalorder %s62, 0
      %p627 = por %p625, %p626
      %s629 = sadd.s32 %s628, 1
      %p632 = scmp.eq.s32.totalorder %s56, 1
      %p633 = scmp.ne.s32.totalorder %s628, %s630
      %p634 = scmp.eq.s32.totalorder %s56, 0
      %p635 = por %p633, %p634
      %p636 = scmp.ne.s32.totalorder %s628, %s630
      %p637 = scmp.eq.s32.totalorder %s61, 1
      %p638 = por %p636, %p637
      %p639 = scmp.ne.s32.totalorder %s630, %s631
      %p640 = scmp.eq.s32.totalorder %s61, 0
      %p641 = por %p639, %p640
      %p642 = scmp.ne.s32.totalorder %s630, %s631
      %p643 = scmp.eq.s32.totalorder %s62, 1
      %p644 = por %p642, %p643
      %p646 = scmp.ne.s32.totalorder %s631, %s645
      %p647 = scmp.eq.s32.totalorder %s62, 0
      %p648 = por %p646, %p647
      %s649 = ssub.s32 %s63, %s75
      %s650 = ssub.s32 %s64, %s71
      %s651 = sor.u32 %s649, %s650
      %p652 = scmp.eq.s32.totalorder %s651, 0
      %s654 = sadd.s32 %s653, 1
      %s655 = scalar_select %p652, %s653, %s654
      %p658 = pneg %p652
      %p659 = scmp.eq.s32.totalorder %s56, 1
      %p660 = por %p658, %p659
      %p661 = scmp.ne.s32.totalorder %s653, %s656
      %p662 = scmp.eq.s32.totalorder %s56, 0
      %p663 = por %p661, %p662
      %p664 = scmp.ne.s32.totalorder %s653, %s656
      %p665 = scmp.eq.s32.totalorder %s61, 1
      %p666 = por %p664, %p665
      %p667 = scmp.ne.s32.totalorder %s656, %s657
      %p668 = scmp.eq.s32.totalorder %s61, 0
      %p669 = por %p667, %p668
      %p670 = scmp.ne.s32.totalorder %s656, %s657
      %p671 = scmp.eq.s32.totalorder %s62, 1
      %p672 = por %p670, %p671
      %p674 = scmp.ne.s32.totalorder %s657, %s673
      %p675 = scmp.eq.s32.totalorder %s62, 0
      %p676 = por %p674, %p675
      %s677 = ssub.s32 %s63, %s75
      %s678 = ssub.s32 %s64, %s71
      %s679 = sor.u32 %s677, %s678
      %p680 = scmp.eq.s32.totalorder %s679, 0
      %s682 = sadd.s32 %s681, 1
      %s683 = scalar_select %p680, %s681, %s682
      %p686 = pneg %p680
      %p687 = scmp.eq.s32.totalorder %s56, 1
      %p688 = por %p686, %p687
      %p689 = scmp.ne.s32.totalorder %s681, %s684
      %p690 = scmp.eq.s32.totalorder %s56, 0
      %p691 = por %p689, %p690
      %p692 = scmp.ne.s32.totalorder %s681, %s684
      %p693 = scmp.eq.s32.totalorder %s61, 1
      %p694 = por %p692, %p693
      %p695 = scmp.ne.s32.totalorder %s684, %s685
      %p696 = scmp.eq.s32.totalorder %s61, 0
      %p697 = por %p695, %p696
      %p698 = scmp.ne.s32.totalorder %s684, %s685
      %p699 = scmp.eq.s32.totalorder %s62, 1
      %p700 = por %p698, %p699
      %p702 = scmp.ne.s32.totalorder %s685, %s701
      %p703 = scmp.eq.s32.totalorder %s62, 0
      %p704 = por %p702, %p703
      %s705 = ssub.s32 %s63, %s75
      %s706 = ssub.s32 %s64, %s71
      %s707 = sor.u32 %s705, %s706
      %p708 = scmp.eq.s32.totalorder %s707, 0
      %s710 = sadd.s32 %s709, 1
      %s711 = scalar_select %p708, %s709, %s710
      %p714 = pneg %p708
      %p715 = scmp.eq.s32.totalorder %s56, 1
      %p716 = por %p714, %p715
      %p717 = scmp.ne.s32.totalorder %s709, %s712
      %p718 = scmp.eq.s32.totalorder %s56, 0
      %p719 = por %p717, %p718
      %p720 = scmp.ne.s32.totalorder %s709, %s712
      %p721 = scmp.eq.s32.totalorder %s61, 1
      %p722 = por %p720, %p721
      %p723 = scmp.ne.s32.totalorder %s712, %s713
      %p724 = scmp.eq.s32.totalorder %s61, 0
      %p725 = por %p723, %p724
      %p726 = scmp.ne.s32.totalorder %s712, %s713
      %p727 = scmp.eq.s32.totalorder %s62, 1
      %p728 = por %p726, %p727
      %p730 = scmp.ne.s32.totalorder %s713, %s729
      %p731 = scmp.eq.s32.totalorder %s62, 0
      %p732 = por %p730, %p731
      %p733 = scmp.le.s32.totalorder 1, %s56
      %p734 = scmp.lt.s32.totalorder %s56, 3
      %p735 = pnand %p733, %p734
      %p736 = pneg %p735
      // Predicated region
      $region9: #{tpu_custom_call.1} parent=5 // pred_check
        _
      $region10: #{tpu_custom_call.1} parent=5 // pred_check_branch
        %738 = sbr.rel (%p735) target = $region12
      $region11: #{tpu_custom_call.1} parent=5 // pred_region
        %s739 = ssub.s32 %s56, 1
        // Predicated region
        $region13: #{tpu_custom_call.1} parent=11 // pred_check
          %p740 = pneg %p305
        $region14: #{tpu_custom_call.1} parent=11 // pred_check_branch
          %742 = sbr.rel (%p740) target = $region16
        $region15: #{tpu_custom_call.1} parent=11 // pred_region
          _
        $region16: #{tpu_custom_call.1} parent=11 // pred_fallthru
          _
        // Predicated region
        $region17: #{tpu_custom_call.1} parent=11 // pred_check
          %p743 = pneg %p326
        $region18: #{tpu_custom_call.1} parent=11 // pred_check_branch
          %745 = sbr.rel (%p743) target = $region20
        $region19: #{tpu_custom_call.1} parent=11 // pred_region
          _
        $region20: #{tpu_custom_call.1} parent=11 // pred_fallthru
          _
        // Predicated region
        $region21: #{tpu_custom_call.1} parent=11 // pred_check
          %p746 = pneg %p347
        $region22: #{tpu_custom_call.1} parent=11 // pred_check_branch
          %748 = sbr.rel (%p746) target = $region24
        $region23: #{tpu_custom_call.1} parent=11 // pred_region
          _
        $region24: #{tpu_custom_call.1} parent=11 // pred_fallthru
          _
        // Predicated region
        $region25: #{tpu_custom_call.1} parent=11 // pred_check
          %p749 = pneg %p368
        $region26: #{tpu_custom_call.1} parent=11 // pred_check_branch
          %751 = sbr.rel (%p749) target = $region28
        $region27: #{tpu_custom_call.1} parent=11 // pred_region
          %s753 = ssub.s32 16, 16
          %754 = vsyncadd [#allocation15], %s753
          %s756 = sshll.u32 [#allocation16], 4
          %s757 = int_to_ptr.vmem [resolvable:$true] %s756
          %759 = dma.hbm_to_vmem [thread:$0]  %s11, 16, %s757, [#allocation15]
        $region28: #{tpu_custom_call.1} parent=11 // pred_fallthru
          _
        // Predicated region
        $region29: #{tpu_custom_call.1} parent=11 // pred_check
          %p760 = pneg %p389
        $region30: #{tpu_custom_call.1} parent=11 // pred_check_branch
          %762 = sbr.rel (%p760) target = $region32
        $region31: #{tpu_custom_call.1} parent=11 // pred_region
          _
        $region32: #{tpu_custom_call.1} parent=11 // pred_fallthru
          _
        // Predicated region
        $region33: #{tpu_custom_call.1} parent=11 // pred_check
          %p763 = pneg %p410
        $region34: #{tpu_custom_call.1} parent=11 // pred_check_branch
          %765 = sbr.rel (%p763) target = $region36
        $region35: #{tpu_custom_call.1} parent=11 // pred_region
          %s767 = ssub.s32 16, 16
          %768 = vsyncadd [#allocation18], %s767
          %s770 = sshll.u32 [#allocation17], 4
          %s771 = int_to_ptr.vmem [resolvable:$true] %s770
          %773 = dma.hbm_to_vmem [thread:$0]  %s13, 16, %s771, [#allocation18]
        $region36: #{tpu_custom_call.1} parent=11 // pred_fallthru
          _
        // Predicated region
        $region37: #{tpu_custom_call.1} parent=11 // pred_check
          %p774 = pneg %p431
        $region38: #{tpu_custom_call.1} parent=11 // pred_check_branch
          %776 = sbr.rel (%p774) target = $region40
        $region39: #{tpu_custom_call.1} parent=11 // pred_region
          _
        $region40: #{tpu_custom_call.1} parent=11 // pred_fallthru
          _
        // Predicated region
        $region41: #{tpu_custom_call.1} parent=11 // pred_check
          %p777 = pneg %p452
        $region42: #{tpu_custom_call.1} parent=11 // pred_check_branch
          %779 = sbr.rel (%p777) target = $region44
        $region43: #{tpu_custom_call.1} parent=11 // pred_region
          _
        $region44: #{tpu_custom_call.1} parent=11 // pred_fallthru
          _
        // Predicated region
        $region45: #{tpu_custom_call.1} parent=11 // pred_check
          %p780 = pneg %p473
        $region46: #{tpu_custom_call.1} parent=11 // pred_check_branch
          %782 = sbr.rel (%p780) target = $region48
        $region47: #{tpu_custom_call.1} parent=11 // pred_region
          _
        $region48: #{tpu_custom_call.1} parent=11 // pred_fallthru
          _
        // Predicated region
        $region49: #{tpu_custom_call.1} parent=11 // pred_check
          %p783 = pneg %p494
        $region50: #{tpu_custom_call.1} parent=11 // pred_check_branch
          %785 = sbr.rel (%p783) target = $region52
        $region51: #{tpu_custom_call.1} parent=11 // pred_region
          _
        $region52: #{tpu_custom_call.1} parent=11 // pred_fallthru
          _
        // Predicated region
        $region53: #{tpu_custom_call.1} parent=11 // pred_check
          %p786 = pneg %p515
        $region54: #{tpu_custom_call.1} parent=11 // pred_check_branch
          %788 = sbr.rel (%p786) target = $region56
        $region55: #{tpu_custom_call.1} parent=11 // pred_region
          _
        $region56: #{tpu_custom_call.1} parent=11 // pred_fallthru
          _
        // Predicated region
        $region57: #{tpu_custom_call.1} parent=11 // pred_check
          %p789 = pneg %p536
        $region58: #{tpu_custom_call.1} parent=11 // pred_check_branch
          %791 = sbr.rel (%p789) target = $region60
        $region59: #{tpu_custom_call.1} parent=11 // pred_region
          _
        $region60: #{tpu_custom_call.1} parent=11 // pred_fallthru
          _
        // Predicated region
        $region61: #{tpu_custom_call.1} parent=11 // pred_check
          %p792 = pneg %p557
        $region62: #{tpu_custom_call.1} parent=11 // pred_check_branch
          %794 = sbr.rel (%p792) target = $region64
        $region63: #{tpu_custom_call.1} parent=11 // pred_region
          _
        $region64: #{tpu_custom_call.1} parent=11 // pred_fallthru
          _
        // Predicated region
        $region65: #{tpu_custom_call.1} parent=11 // pred_check
          %p795 = pneg %p578
        $region66: #{tpu_custom_call.1} parent=11 // pred_check_branch
          %797 = sbr.rel (%p795) target = $region68
        $region67: #{tpu_custom_call.1} parent=11 // pred_region
          _
        $region68: #{tpu_custom_call.1} parent=11 // pred_fallthru
          _
        // Predicated region
        $region69: #{tpu_custom_call.1} parent=11 // pred_check
          %p798 = pneg %p599
        $region70: #{tpu_custom_call.1} parent=11 // pred_check_branch
          %800 = sbr.rel (%p798) target = $region72
        $region71: #{tpu_custom_call.1} parent=11 // pred_region
          _
        $region72: #{tpu_custom_call.1} parent=11 // pred_fallthru
          _
        // Predicated region
        $region73: #{tpu_custom_call.1} parent=11 // pred_check
          %p801 = pneg %p620
        $region74: #{tpu_custom_call.1} parent=11 // pred_check_branch
          %803 = sbr.rel (%p801) target = $region76
        $region75: #{tpu_custom_call.1} parent=11 // pred_region
          _
        $region76: #{tpu_custom_call.1} parent=11 // pred_fallthru
          _
        // Predicated region
        $region77: #{tpu_custom_call.1} parent=11 // pred_check
          %p804 = pneg %p641
        $region78: #{tpu_custom_call.1} parent=11 // pred_check_branch
          %806 = sbr.rel (%p804) target = $region80
        $region79: #{tpu_custom_call.1} parent=11 // pred_region
          _
        $region80: #{tpu_custom_call.1} parent=11 // pred_fallthru
          _
      $region12: #{tpu_custom_call.1} parent=5 // pred_fallthru
        _
      %p807 = scmp.lt.s32.totalorder %s56, 2
      // Predicated region
      $region81: #{tpu_custom_call.1} parent=5 // pred_check
        %p808 = pneg %p807
      $region82: #{tpu_custom_call.1} parent=5 // pred_check_branch
        %810 = sbr.rel (%p808) target = $region84
      $region83: #{tpu_custom_call.1} parent=5 // pred_region
        // Predicated region
        $region85: #{tpu_custom_call.1} parent=83 // pred_check
          %p811 = pneg %p90
        $region86: #{tpu_custom_call.1} parent=83 // pred_check_branch
          %813 = sbr.rel (%p811) target = $region88
        $region87: #{tpu_custom_call.1} parent=83 // pred_region
          %s814 = sand.u32 %s80, 1
          %s815 = scalar_lea.sflag [#allocation3], %s814
          %s816 = sand.u32 %s80, 1
          %s817 = smul.addr %s816, 8
          %s818 = scalar_lea.vmem [#allocation2], %s817
          %s820 = ssub.s32 128, 128
          %821 = vsyncadd %s815, %s820
          %s822 = sadd.s32 %s64, %s63
          %s823 = smul.addr %s822, 128
          %s824 = scalar_lea.hbm %s0, %s823
          %s826 = sshll.u32 %s818, 4
          %s827 = int_to_ptr.vmem [resolvable:$true] %s826
          %829 = dma.hbm_to_vmem [thread:$0]  %s824, 128, %s827, %s815
        $region88: #{tpu_custom_call.1} parent=83 // pred_fallthru
          _
        // Predicated region
        $region89: #{tpu_custom_call.1} parent=83 // pred_check
          %p830 = pneg %p116
        $region90: #{tpu_custom_call.1} parent=83 // pred_check_branch
          %832 = sbr.rel (%p830) target = $region92
        $region91: #{tpu_custom_call.1} parent=83 // pred_region
          %s833 = sand.u32 %s56, 1
          %s834 = scalar_lea.sflag [#allocation6], %s833
          %s835 = sand.u32 %s106, 1
          %s836 = smul.addr %s835, 8
          %s837 = scalar_lea.vmem [#allocation5], %s836
          %s839 = ssub.s32 128, 128
          %840 = vsyncadd %s834, %s839
          %s841 = smul.addr %s63, 128
          %s842 = scalar_lea.hbm %s1, %s841
          %s844 = sshll.u32 %s837, 4
          %s845 = int_to_ptr.vmem [resolvable:$true] %s844
          %847 = dma.hbm_to_vmem [thread:$0]  %s842, 128, %s845, %s834
        $region92: #{tpu_custom_call.1} parent=83 // pred_fallthru
          _
        // Predicated region
        $region93: #{tpu_custom_call.1} parent=83 // pred_check
          %p848 = pneg %p142
        $region94: #{tpu_custom_call.1} parent=83 // pred_check_branch
          %850 = sbr.rel (%p848) target = $region96
        $region95: #{tpu_custom_call.1} parent=83 // pred_region
          %s851 = sand.u32 %s56, 1
          %s852 = scalar_lea.sflag [#allocation6], %s851
          %s853 = sand.u32 %s132, 1
          %s854 = smul.addr %s853, 8
          %s855 = scalar_lea.vmem [#allocation7], %s854
          %s857 = ssub.s32 128, 128
          %858 = vsyncadd %s852, %s857
          %s859 = smul.addr %s63, 128
          %s860 = scalar_lea.hbm %s2, %s859
          %s862 = sshll.u32 %s855, 4
          %s863 = int_to_ptr.vmem [resolvable:$true] %s862
          %865 = dma.hbm_to_vmem [thread:$0]  %s860, 128, %s863, %s852
        $region96: #{tpu_custom_call.1} parent=83 // pred_fallthru
          _
        // Predicated region
        $region97: #{tpu_custom_call.1} parent=83 // pred_check
          %p866 = pneg %p170
        $region98: #{tpu_custom_call.1} parent=83 // pred_check_branch
          %868 = sbr.rel (%p866) target = $region100
        $region99: #{tpu_custom_call.1} parent=83 // pred_region
          %s869 = sand.u32 %s56, 1
          %s870 = scalar_lea.sflag [#allocation9], %s869
          %s871 = sand.u32 %s160, 1
          %s872 = smul.addr %s871, 8
          %s873 = scalar_lea.vmem [#allocation8], %s872
          %s875 = ssub.s32 128, 128
          %876 = vsyncadd %s870, %s875
          %s877 = sadd.s32 %s64, %s63
          %s878 = smul.addr %s877, 128
          %s879 = scalar_lea.hbm %s3, %s878
          %s881 = sshll.u32 %s873, 4
          %s882 = int_to_ptr.vmem [resolvable:$true] %s881
          %884 = dma.hbm_to_vmem [thread:$0]  %s879, 128, %s882, %s870
        $region100: #{tpu_custom_call.1} parent=83 // pred_fallthru
          _
        // Predicated region
        $region101: #{tpu_custom_call.1} parent=83 // pred_check
          %p885 = pneg %p198
        $region102: #{tpu_custom_call.1} parent=83 // pred_check_branch
          %887 = sbr.rel (%p885) target = $region104
        $region103: #{tpu_custom_call.1} parent=83 // pred_region
          %s888 = sand.u32 %s56, 1
          %s889 = scalar_lea.sflag [#allocation9], %s888
          %s890 = sand.u32 %s188, 1
          %s891 = smul.addr %s890, 8
          %s892 = scalar_lea.vmem [#allocation10], %s891
          %s894 = ssub.s32 128, 128
          %895 = vsyncadd %s889, %s894
          %s896 = sadd.s32 %s64, %s63
          %s897 = smul.addr %s896, 128
          %s898 = scalar_lea.hbm %s4, %s897
          %s900 = sshll.u32 %s892, 4
          %s901 = int_to_ptr.vmem [resolvable:$true] %s900
          %903 = dma.hbm_to_vmem [thread:$0]  %s898, 128, %s901, %s889
        $region104: #{tpu_custom_call.1} parent=83 // pred_fallthru
          _
        // Predicated region
        $region105: #{tpu_custom_call.1} parent=83 // pred_check
          %p904 = pneg %p224
        $region106: #{tpu_custom_call.1} parent=83 // pred_check_branch
          %906 = sbr.rel (%p904) target = $region108
        $region107: #{tpu_custom_call.1} parent=83 // pred_region
          %s907 = sand.u32 %s56, 1
          %s908 = scalar_lea.sflag [#allocation12], %s907
          %s909 = sand.u32 %s214, 1
          %s910 = smul.addr %s909, 8
          %s911 = scalar_lea.vmem [#allocation11], %s910
          %s913 = ssub.s32 128, 128
          %914 = vsyncadd %s908, %s913
          %s915 = smul.addr %s63, 128
          %s916 = scalar_lea.hbm %s5, %s915
          %s918 = sshll.u32 %s911, 4
          %s919 = int_to_ptr.vmem [resolvable:$true] %s918
          %921 = dma.hbm_to_vmem [thread:$0]  %s916, 128, %s919, %s908
        $region108: #{tpu_custom_call.1} parent=83 // pred_fallthru
          _
        // Predicated region
        $region109: #{tpu_custom_call.1} parent=83 // pred_check
          %p922 = pneg %p250
        $region110: #{tpu_custom_call.1} parent=83 // pred_check_branch
          %924 = sbr.rel (%p922) target = $region112
        $region111: #{tpu_custom_call.1} parent=83 // pred_region
          %s925 = sand.u32 %s56, 1
          %s926 = scalar_lea.sflag [#allocation12], %s925
          %s927 = sand.u32 %s240, 1
          %s928 = smul.addr %s927, 8
          %s929 = scalar_lea.vmem [#allocation13], %s928
          %s931 = ssub.s32 128, 128
          %932 = vsyncadd %s926, %s931
          %s933 = smul.addr %s63, 128
          %s934 = scalar_lea.hbm %s6, %s933
          %s936 = sshll.u32 %s929, 4
          %s937 = int_to_ptr.vmem [resolvable:$true] %s936
          %939 = dma.hbm_to_vmem [thread:$0]  %s934, 128, %s937, %s926
        $region112: #{tpu_custom_call.1} parent=83 // pred_fallthru
          _
        // Predicated region
        $region113: #{tpu_custom_call.1} parent=83 // pred_check
          %p940 = pneg %p278
        $region114: #{tpu_custom_call.1} parent=83 // pred_check_branch
          %942 = sbr.rel (%p940) target = $region116
        $region115: #{tpu_custom_call.1} parent=83 // pred_region
          %s943 = sand.u32 %s56, 1
          %s944 = scalar_lea.sflag [#allocation15], %s943
          %s945 = sand.u32 %s268, 1
          %s946 = smul.addr %s945, 8
          %s947 = scalar_lea.vmem [#allocation14], %s946
          %s949 = ssub.s32 128, 128
          %950 = vsyncadd %s944, %s949
          %s951 = sadd.s32 %s64, %s63
          %s952 = smul.addr %s951, 128
          %s953 = scalar_lea.hbm %s7, %s952
          %s955 = sshll.u32 %s947, 4
          %s956 = int_to_ptr.vmem [resolvable:$true] %s955
          %958 = dma.hbm_to_vmem [thread:$0]  %s953, 128, %s956, %s944
        $region116: #{tpu_custom_call.1} parent=83 // pred_fallthru
          _
      $region84: #{tpu_custom_call.1} parent=5 // pred_fallthru
        _
      %p959 = scmp.le.s32.totalorder 1, %s56
      %p960 = scmp.lt.s32.totalorder %s56, 3
      %p961 = pnand %p959, %p960
      %p962 = pneg %p961
      // Predicated region
      $region117: #{tpu_custom_call.1} parent=5 // pred_check
        _
      $region118: #{tpu_custom_call.1} parent=5 // pred_check_branch
        %964 = sbr.rel (%p961) target = $region120
      $region119: #{tpu_custom_call.1} parent=5 // pred_region
        %s965 = ssub.s32 %s56, 1
        %s966 = sand.u32 %s83, 1
        %s967 = scalar_lea.sflag [#allocation3], %s966
        %s968 = sand.u32 %s83, 1
        %s969 = smul.addr %s968, 8
        %s970 = scalar_lea.vmem [#allocation2], %s969
        // Predicated region
        $region121: #{tpu_custom_call.1} parent=119 // pred_check
          %p971 = pneg %p96
        $region122: #{tpu_custom_call.1} parent=119 // pred_check_branch
          %973 = sbr.rel (%p971) target = $region124
        $region123: #{tpu_custom_call.1} parent=119 // pred_region
          %974 = dma.done %s967, 128
        $region124: #{tpu_custom_call.1} parent=119 // pred_fallthru
          _
        %s975 = sand.u32 %s61, 1
        %s976 = scalar_lea.sflag [#allocation6], %s975
        %s977 = sand.u32 %s109, 1
        %s978 = smul.addr %s977, 8
        %s979 = scalar_lea.vmem [#allocation5], %s978
        // Predicated region
        $region125: #{tpu_custom_call.1} parent=119 // pred_check
          %p980 = pneg %p122
        $region126: #{tpu_custom_call.1} parent=119 // pred_check_branch
          %982 = sbr.rel (%p980) target = $region128
        $region127: #{tpu_custom_call.1} parent=119 // pred_region
          %983 = dma.done %s976, 128
        $region128: #{tpu_custom_call.1} parent=119 // pred_fallthru
          _
        %s984 = sand.u32 %s61, 1
        %s985 = scalar_lea.sflag [#allocation6], %s984
        %s986 = sand.u32 %s135, 1
        %s987 = smul.addr %s986, 8
        %s988 = scalar_lea.vmem [#allocation7], %s987
        // Predicated region
        $region129: #{tpu_custom_call.1} parent=119 // pred_check
          %p989 = pneg %p148
        $region130: #{tpu_custom_call.1} parent=119 // pred_check_branch
          %991 = sbr.rel (%p989) target = $region132
        $region131: #{tpu_custom_call.1} parent=119 // pred_region
          %992 = dma.done %s985, 128
        $region132: #{tpu_custom_call.1} parent=119 // pred_fallthru
          _
        %s993 = sand.u32 %s61, 1
        %s994 = scalar_lea.sflag [#allocation9], %s993
        %s995 = sand.u32 %s163, 1
        %s996 = smul.addr %s995, 8
        %s997 = scalar_lea.vmem [#allocation8], %s996
        // Predicated region
        $region133: #{tpu_custom_call.1} parent=119 // pred_check
          %p998 = pneg %p176
        $region134: #{tpu_custom_call.1} parent=119 // pred_check_branch
          %1000 = sbr.rel (%p998) target = $region136
        $region135: #{tpu_custom_call.1} parent=119 // pred_region
          %1001 = dma.done %s994, 128
        $region136: #{tpu_custom_call.1} parent=119 // pred_fallthru
          _
        %s1002 = sand.u32 %s61, 1
        %s1003 = scalar_lea.sflag [#allocation9], %s1002
        %s1004 = sand.u32 %s191, 1
        %s1005 = smul.addr %s1004, 8
        %s1006 = scalar_lea.vmem [#allocation10], %s1005
        // Predicated region
        $region137: #{tpu_custom_call.1} parent=119 // pred_check
          %p1007 = pneg %p204
        $region138: #{tpu_custom_call.1} parent=119 // pred_check_branch
          %1009 = sbr.rel (%p1007) target = $region140
        $region139: #{tpu_custom_call.1} parent=119 // pred_region
          %1010 = dma.done %s1003, 128
        $region140: #{tpu_custom_call.1} parent=119 // pred_fallthru
          _
        %s1011 = sand.u32 %s61, 1
        %s1012 = scalar_lea.sflag [#allocation12], %s1011
        %s1013 = sand.u32 %s217, 1
        %s1014 = smul.addr %s1013, 8
        %s1015 = scalar_lea.vmem [#allocation11], %s1014
        // Predicated region
        $region141: #{tpu_custom_call.1} parent=119 // pred_check
          %p1016 = pneg %p230
        $region142: #{tpu_custom_call.1} parent=119 // pred_check_branch
          %1018 = sbr.rel (%p1016) target = $region144
        $region143: #{tpu_custom_call.1} parent=119 // pred_region
          %1019 = dma.done %s1012, 128
        $region144: #{tpu_custom_call.1} parent=119 // pred_fallthru
          _
        %s1020 = sand.u32 %s61, 1
        %s1021 = scalar_lea.sflag [#allocation12], %s1020
        %s1022 = sand.u32 %s243, 1
        %s1023 = smul.addr %s1022, 8
        %s1024 = scalar_lea.vmem [#allocation13], %s1023
        // Predicated region
        $region145: #{tpu_custom_call.1} parent=119 // pred_check
          %p1025 = pneg %p256
        $region146: #{tpu_custom_call.1} parent=119 // pred_check_branch
          %1027 = sbr.rel (%p1025) target = $region148
        $region147: #{tpu_custom_call.1} parent=119 // pred_region
          %1028 = dma.done %s1021, 128
        $region148: #{tpu_custom_call.1} parent=119 // pred_fallthru
          _
        %s1029 = sand.u32 %s61, 1
        %s1030 = scalar_lea.sflag [#allocation15], %s1029
        %s1031 = sand.u32 %s271, 1
        %s1032 = smul.addr %s1031, 8
        %s1033 = scalar_lea.vmem [#allocation14], %s1032
        // Predicated region
        $region149: #{tpu_custom_call.1} parent=119 // pred_check
          %p1034 = pneg %p284
        $region150: #{tpu_custom_call.1} parent=119 // pred_check_branch
          %1036 = sbr.rel (%p1034) target = $region152
        $region151: #{tpu_custom_call.1} parent=119 // pred_region
          %1037 = dma.done %s1030, 128
        $region152: #{tpu_custom_call.1} parent=119 // pred_fallthru
          _
        // Predicated region
        $region153: #{tpu_custom_call.1} parent=119 // pred_check
          %p1038 = pneg %p368
        $region154: #{tpu_custom_call.1} parent=119 // pred_check_branch
          %1040 = sbr.rel (%p1038) target = $region156
        $region155: #{tpu_custom_call.1} parent=119 // pred_region
          %1041 = dma.done [#allocation15], 16
        $region156: #{tpu_custom_call.1} parent=119 // pred_fallthru
          _
        // Predicated region
        $region157: #{tpu_custom_call.1} parent=119 // pred_check
          %p1042 = pneg %p410
        $region158: #{tpu_custom_call.1} parent=119 // pred_check_branch
          %1044 = sbr.rel (%p1042) target = $region160
        $region159: #{tpu_custom_call.1} parent=119 // pred_region
          %1045 = dma.done [#allocation18], 16
        $region160: #{tpu_custom_call.1} parent=119 // pred_fallthru
          _
        %s1046 = sand.u32 %s83, 1
        %s1047 = scalar_lea.sflag [#allocation3], %s1046
        %s1048 = sand.u32 %s83, 1
        %s1049 = smul.addr %s1048, 8
        %s1050 = scalar_lea.vmem [#allocation2], %s1049
        %p1051 = pneg %p96
        %p1052 = pneg %p93
        %s1053 = sand.u32 %s61, 1
        %s1054 = scalar_lea.sflag [#allocation6], %s1053
        %s1055 = sand.u32 %s109, 1
        %s1056 = smul.addr %s1055, 8
        %s1057 = scalar_lea.vmem [#allocation5], %s1056
        %p1058 = pneg %p122
        %p1059 = pneg %p119
        %s1060 = sand.u32 %s61, 1
        %s1061 = scalar_lea.sflag [#allocation6], %s1060
        %s1062 = sand.u32 %s135, 1
        %s1063 = smul.addr %s1062, 8
        %s1064 = scalar_lea.vmem [#allocation7], %s1063
        %p1065 = pneg %p148
        %p1066 = pneg %p145
        %s1067 = sand.u32 %s61, 1
        %s1068 = scalar_lea.sflag [#allocation9], %s1067
        %s1069 = sand.u32 %s163, 1
        %s1070 = smul.addr %s1069, 8
        %s1071 = scalar_lea.vmem [#allocation8], %s1070
        %p1072 = pneg %p176
        %p1073 = pneg %p173
        %s1074 = sand.u32 %s61, 1
        %s1075 = scalar_lea.sflag [#allocation9], %s1074
        %s1076 = sand.u32 %s191, 1
        %s1077 = smul.addr %s1076, 8
        %s1078 = scalar_lea.vmem [#allocation10], %s1077
        %p1079 = pneg %p204
        %p1080 = pneg %p201
        %s1081 = sand.u32 %s61, 1
        %s1082 = scalar_lea.sflag [#allocation12], %s1081
        %s1083 = sand.u32 %s217, 1
        %s1084 = smul.addr %s1083, 8
        %s1085 = scalar_lea.vmem [#allocation11], %s1084
        %p1086 = pneg %p230
        %p1087 = pneg %p227
        %s1088 = sand.u32 %s61, 1
        %s1089 = scalar_lea.sflag [#allocation12], %s1088
        %s1090 = sand.u32 %s243, 1
        %s1091 = smul.addr %s1090, 8
        %s1092 = scalar_lea.vmem [#allocation13], %s1091
        %p1093 = pneg %p256
        %p1094 = pneg %p253
        %s1095 = sand.u32 %s61, 1
        %s1096 = scalar_lea.sflag [#allocation15], %s1095
        %s1097 = sand.u32 %s271, 1
        %s1098 = smul.addr %s1097, 8
        %s1099 = scalar_lea.vmem [#allocation14], %s1098
        %p1100 = pneg %p284
        %p1101 = pneg %p281
        %p1102 = pneg %p305
        %p1103 = pneg %p302
        %p1104 = pneg %p326
        %p1105 = pneg %p323
        %p1106 = pneg %p347
        %p1107 = pneg %p344
        %p1108 = pneg %p368
        %p1109 = pneg %p365
        %p1110 = pneg %p389
        %p1111 = pneg %p386
        %p1112 = pneg %p410
        %p1113 = pneg %p407
        %p1114 = pneg %p431
        %p1115 = pneg %p428
        %p1116 = pneg %p452
        %p1117 = pneg %p449
        %p1118 = pneg %p473
        %p1119 = pneg %p470
        %p1120 = pneg %p494
        %p1121 = pneg %p491
        %p1122 = pneg %p515
        %p1123 = pneg %p512
        %p1124 = pneg %p536
        %p1125 = pneg %p533
        %p1126 = pneg %p557
        %p1127 = pneg %p554
        %p1128 = pneg %p578
        %p1129 = pneg %p575
        %p1130 = pneg %p599
        %p1131 = pneg %p596
        %p1132 = pneg %p620
        %p1133 = pneg %p617
        %p1134 = pneg %p641
        %p1135 = pneg %p638
        %p1136 = pneg %p669
        %p1137 = pneg %p666
        %s1138 = sand.u32 %s656, 1
        %s1139 = scalar_lea.sflag [#allocation4], %s1138
        %s1140 = sand.u32 %s656, 1
        %s1141 = smul.addr %s1140, 8
        %s1142 = scalar_lea.vmem [#allocation19], %s1141
        %p1143 = pneg %p697
        %p1144 = pneg %p694
        %s1145 = sand.u32 %s61, 1
        %s1146 = scalar_lea.sflag [#allocation21], %s1145
        %s1147 = sand.u32 %s684, 1
        %s1148 = smul.addr %s1147, 32
        %s1149 = scalar_lea.vmem [#allocation20], %s1148
        %p1150 = pneg %p725
        %p1151 = pneg %p722
        %s1152 = sand.u32 %s61, 1
        %s1153 = scalar_lea.sflag [#allocation21], %s1152
        %s1154 = sand.u32 %s712, 1
        %s1155 = smul.addr %s1154, 16
        %s1156 = scalar_lea.vmem [#allocation22], %s1155
        %v1157 = vld [vmem:[%s970] sm:$0xff]
        %v1158 = vld [vmem:[%s979] sm:$0xff]
        %v1159 = vld [vmem:[%s988] sm:$0xff]
        %v1160 = vld [vmem:[%s997] sm:$0xff]
        %v1161 = vld [vmem:[%s8] sm:$0xff]
        %v1162 = vld [vmem:[%s8 + $0x8] sm:$0xff]
        %v1163 = vld [vmem:[%s8 + $0x10] sm:$0xff]
        %v1164 = vld [vmem:[%s8 + $0x18] sm:$0xff]
        %v1165 = vld [vmem:[%s9] sm:$0x1]
        %v1167 = vlaneseq
        %v1168 = vshrl.u32 %v1167, 7
        %v1169 = vsub.s32 0, %v1168
        %v1170 = vrot.slane %v1165, %v1169
        %vm1172 = vcmask 261120
        %v1174 = vsel %vm1172, %v1157, 0
        %1176 = vmatprep.subr.mxu0 0.0
        %1177 = vmatpush1.msra.mxu0 %v1161
        %1178 = vmatprep.subr.mxu0 0.0
        %1179 = vmatpush1.msra.mxu0 %v1162
        %1180 = vmatprep.subr.mxu0 0.0
        %1181 = vmatpush1.msra.mxu0 %v1163
        %1182 = vmatprep.subr.mxu0 0.0
        %1183 = vmatpush1.msra.mxu0 %v1164
        %1184 = vmatprep.subr.mxu0 0.0
        %1185 = vmatpush1.msra.mxu0 0.0
        %1186 = vmatprep.subr.mxu0 0.0
        %1187 = vmatpush1.msra.mxu0 0.0
        %1188 = vmatprep.subr.mxu0 0.0
        %1189 = vmatpush1.msra.mxu0 0.0
        %1190 = vmatprep.subr.mxu0 0.0
        %1191 = vmatpush1.msra.mxu0 0.0
        %1192 = vmatprep.subr.mxu0 0.0
        %1193 = vmatpush1.msra.mxu0 0.0
        %1194 = vmatprep.subr.mxu0 0.0
        %1195 = vmatpush1.msra.mxu0 0.0
        %1196 = vmatprep.subr.mxu0 0.0
        %1197 = vmatpush1.msra.mxu0 0.0
        %1198 = vmatprep.subr.mxu0 0.0
        %1199 = vmatpush1.msra.mxu0 0.0
        %1200 = vmatprep.subr.mxu0 0.0
        %1201 = vmatpush1.msra.mxu0 0.0
        %1202 = vmatprep.subr.mxu0 0.0
        %1203 = vmatpush1.msra.mxu0 0.0
        %1204 = vmatprep.subr.mxu0 0.0
        %1205 = vmatpush1.msra.mxu0 0.0
        %1206 = vmatprep.subr.mxu0 0.0
        %1207 = vmatpush1.msra.mxu0 0.0
        %1208 = vmatprep.subr.mxu0 0.0
        %1209 = vmatpush1.msra.mxu0 0.0
        %1210 = vmatprep.subr.mxu0 0.0
        %1211 = vmatpush1.msra.mxu0 0.0
        %1212 = vmatprep.subr.mxu0 0.0
        %1213 = vmatpush1.msra.mxu0 0.0
        %1214 = vmatprep.subr.mxu0 0.0
        %1215 = vmatpush1.msra.mxu0 0.0
        %1216 = vmatprep.subr.mxu0 0.0
        %1217 = vmatpush1.msra.mxu0 0.0
        %1218 = vmatprep.subr.mxu0 0.0
        %1219 = vmatpush1.msra.mxu0 0.0
        %1220 = vmatprep.subr.mxu0 0.0
        %1221 = vmatpush1.msra.mxu0 0.0
        %1222 = vmatprep.subr.mxu0 0.0
        %1223 = vmatpush1.msra.mxu0 0.0
        %1224 = vmatprep.subr.mxu0 0.0
        %1225 = vmatpush1.msra.mxu0 0.0
        %1226 = vmatprep.subr.mxu0 0.0
        %1227 = vmatpush1.msra.mxu0 0.0
        %1228 = vmatprep.subr.mxu0 0.0
        %1229 = vmatpush1.msra.mxu0 0.0
        %1230 = vmatprep.subr.mxu0 0.0
        %1231 = vmatpush1.msra.mxu0 0.0
        %1232 = vmatprep.subr.mxu0 0.0
        %1233 = vmatpush1.msra.mxu0 0.0
        %1234 = vmatprep.subr.mxu0 0.0
        %1235 = vmatpush1.msra.mxu0 0.0
        %1236 = vmatprep.subr.mxu0 0.0
        %1237 = vmatpush1.msra.mxu0 0.0
        %1238 = vmatprep.subr.mxu0 0.0
        %1239 = vmatpush1.msra.mxu0 0.0
        %1240 = vmatprep.mubr.f32.mxu0 0.0
        %1241 = vmatmul.mubr.f32.gmra.mrb[0].mxu0 %v1174
        %v1242 = vpop.f32.mrb[0].mxu0
        %v1243 = vadd.f32 %v1170, %v1242
        %v1244 = vpop.f32.mrb[0].mxu0
        %1245 = vdwg.mxu0
        %v1246 = vld [vmem:[%s10] sm:$0xff]
        %v1247 = vld [vmem:[%s10 + $0x8] sm:$0xff]
        %v1248 = vld [vmem:[%s10 + $0x10] sm:$0xff]
        %v1249 = vld [vmem:[%s10 + $0x18] sm:$0xff]
        %v1250 = vld [vmem:[#allocation16] sm:$0x1]
        %v1252 = vlaneseq
        %v1253 = vshrl.u32 %v1252, 7
        %v1254 = vsub.s32 0, %v1253
        %v1255 = vrot.slane %v1250, %v1254
        %v1258 = vsel %vm1172, %v1158, 0
        %1260 = vmatprep.subr.mxu0 0.0
        %1261 = vmatpush1.msra.mxu0 %v1246
        %1262 = vmatprep.subr.mxu0 0.0
        %1263 = vmatpush1.msra.mxu0 %v1247
        %1264 = vmatprep.subr.mxu0 0.0
        %1265 = vmatpush1.msra.mxu0 %v1248
        %1266 = vmatprep.subr.mxu0 0.0
        %1267 = vmatpush1.msra.mxu0 %v1249
        %1268 = vmatprep.subr.mxu0 0.0
        %1269 = vmatpush1.msra.mxu0 0.0
        %1270 = vmatprep.subr.mxu0 0.0
        %1271 = vmatpush1.msra.mxu0 0.0
        %1272 = vmatprep.subr.mxu0 0.0
        %1273 = vmatpush1.msra.mxu0 0.0
        %1274 = vmatprep.subr.mxu0 0.0
        %1275 = vmatpush1.msra.mxu0 0.0
        %1276 = vmatprep.subr.mxu0 0.0
        %1277 = vmatpush1.msra.mxu0 0.0
        %1278 = vmatprep.subr.mxu0 0.0
        %1279 = vmatpush1.msra.mxu0 0.0
        %1280 = vmatprep.subr.mxu0 0.0
        %1281 = vmatpush1.msra.mxu0 0.0
        %1282 = vmatprep.subr.mxu0 0.0
        %1283 = vmatpush1.msra.mxu0 0.0
        %1284 = vmatprep.subr.mxu0 0.0
        %1285 = vmatpush1.msra.mxu0 0.0
        %1286 = vmatprep.subr.mxu0 0.0
        %1287 = vmatpush1.msra.mxu0 0.0
        %1288 = vmatprep.subr.mxu0 0.0
        %1289 = vmatpush1.msra.mxu0 0.0
        %1290 = vmatprep.subr.mxu0 0.0
        %1291 = vmatpush1.msra.mxu0 0.0
        %1292 = vmatprep.subr.mxu0 0.0
        %1293 = vmatpush1.msra.mxu0 0.0
        %1294 = vmatprep.subr.mxu0 0.0
        %1295 = vmatpush1.msra.mxu0 0.0
        %1296 = vmatprep.subr.mxu0 0.0
        %1297 = vmatpush1.msra.mxu0 0.0
        %1298 = vmatprep.subr.mxu0 0.0
        %1299 = vmatpush1.msra.mxu0 0.0
        %1300 = vmatprep.subr.mxu0 0.0
        %1301 = vmatpush1.msra.mxu0 0.0
        %1302 = vmatprep.subr.mxu0 0.0
        %1303 = vmatpush1.msra.mxu0 0.0
        %1304 = vmatprep.subr.mxu0 0.0
        %1305 = vmatpush1.msra.mxu0 0.0
        %1306 = vmatprep.subr.mxu0 0.0
        %1307 = vmatpush1.msra.mxu0 0.0
        %1308 = vmatprep.subr.mxu0 0.0
        %1309 = vmatpush1.msra.mxu0 0.0
        %1310 = vmatprep.subr.mxu0 0.0
        %1311 = vmatpush1.msra.mxu0 0.0
        %1312 = vmatprep.subr.mxu0 0.0
        %1313 = vmatpush1.msra.mxu0 0.0
        %1314 = vmatprep.subr.mxu0 0.0
        %1315 = vmatpush1.msra.mxu0 0.0
        %1316 = vmatprep.subr.mxu0 0.0
        %1317 = vmatpush1.msra.mxu0 0.0
        %1318 = vmatprep.subr.mxu0 0.0
        %1319 = vmatpush1.msra.mxu0 0.0
        %1320 = vmatprep.subr.mxu0 0.0
        %1321 = vmatpush1.msra.mxu0 0.0
        %1322 = vmatprep.subr.mxu0 0.0
        %1323 = vmatpush1.msra.mxu0 0.0
        %1324 = vmatprep.mubr.f32.mxu0 0.0
        %1325 = vmatmul.mubr.f32.gmra.mrb[0].mxu0 %v1258
        %v1326 = vpop.f32.mrb[0].mxu0
        %v1327 = vadd.f32 %v1255, %v1326
        %v1328 = vpop.f32.mrb[0].mxu0
        %1329 = vdwg.mxu0
        %v1330 = vld [vmem:[%s12] sm:$0xff]
        %v1331 = vld [vmem:[%s12 + $0x8] sm:$0xff]
        %v1332 = vld [vmem:[%s12 + $0x10] sm:$0xff]
        %v1333 = vld [vmem:[%s12 + $0x18] sm:$0xff]
        %v1334 = vld [vmem:[#allocation17] sm:$0x1]
        %v1336 = vlaneseq
        %v1337 = vshrl.u32 %v1336, 7
        %v1338 = vsub.s32 0, %v1337
        %v1339 = vrot.slane %v1334, %v1338
        %v1342 = vsel %vm1172, %v1159, 0
        %1344 = vmatprep.subr.mxu0 0.0
        %1345 = vmatpush1.msra.mxu0 %v1330
        %1346 = vmatprep.subr.mxu0 0.0
        %1347 = vmatpush1.msra.mxu0 %v1331
        %1348 = vmatprep.subr.mxu0 0.0
        %1349 = vmatpush1.msra.mxu0 %v1332
        %1350 = vmatprep.subr.mxu0 0.0
        %1351 = vmatpush1.msra.mxu0 %v1333
        %1352 = vmatprep.subr.mxu0 0.0
        %1353 = vmatpush1.msra.mxu0 0.0
        %1354 = vmatprep.subr.mxu0 0.0
        %1355 = vmatpush1.msra.mxu0 0.0
        %1356 = vmatprep.subr.mxu0 0.0
        %1357 = vmatpush1.msra.mxu0 0.0
        %1358 = vmatprep.subr.mxu0 0.0
        %1359 = vmatpush1.msra.mxu0 0.0
        %1360 = vmatprep.subr.mxu0 0.0
        %1361 = vmatpush1.msra.mxu0 0.0
        %1362 = vmatprep.subr.mxu0 0.0
        %1363 = vmatpush1.msra.mxu0 0.0
        %1364 = vmatprep.subr.mxu0 0.0
        %1365 = vmatpush1.msra.mxu0 0.0
        %1366 = vmatprep.subr.mxu0 0.0
        %1367 = vmatpush1.msra.mxu0 0.0
        %1368 = vmatprep.subr.mxu0 0.0
        %1369 = vmatpush1.msra.mxu0 0.0
        %1370 = vmatprep.subr.mxu0 0.0
        %1371 = vmatpush1.msra.mxu0 0.0
        %1372 = vmatprep.subr.mxu0 0.0
        %1373 = vmatpush1.msra.mxu0 0.0
        %1374 = vmatprep.subr.mxu0 0.0
        %1375 = vmatpush1.msra.mxu0 0.0
        %1376 = vmatprep.subr.mxu0 0.0
        %1377 = vmatpush1.msra.mxu0 0.0
        %1378 = vmatprep.subr.mxu0 0.0
        %1379 = vmatpush1.msra.mxu0 0.0
        %1380 = vmatprep.subr.mxu0 0.0
        %1381 = vmatpush1.msra.mxu0 0.0
        %1382 = vmatprep.subr.mxu0 0.0
        %1383 = vmatpush1.msra.mxu0 0.0
        %1384 = vmatprep.subr.mxu0 0.0
        %1385 = vmatpush1.msra.mxu0 0.0
        %1386 = vmatprep.subr.mxu0 0.0
        %1387 = vmatpush1.msra.mxu0 0.0
        %1388 = vmatprep.subr.mxu0 0.0
        %1389 = vmatpush1.msra.mxu0 0.0
        %1390 = vmatprep.subr.mxu0 0.0
        %1391 = vmatpush1.msra.mxu0 0.0
        %1392 = vmatprep.subr.mxu0 0.0
        %1393 = vmatpush1.msra.mxu0 0.0
        %1394 = vmatprep.subr.mxu0 0.0
        %1395 = vmatpush1.msra.mxu0 0.0
        %1396 = vmatprep.subr.mxu0 0.0
        %1397 = vmatpush1.msra.mxu0 0.0
        %1398 = vmatprep.subr.mxu0 0.0
        %1399 = vmatpush1.msra.mxu0 0.0
        %1400 = vmatprep.subr.mxu0 0.0
        %1401 = vmatpush1.msra.mxu0 0.0
        %1402 = vmatprep.subr.mxu0 0.0
        %1403 = vmatpush1.msra.mxu0 0.0
        %1404 = vmatprep.subr.mxu0 0.0
        %1405 = vmatpush1.msra.mxu0 0.0
        %1406 = vmatprep.subr.mxu0 0.0
        %1407 = vmatpush1.msra.mxu0 0.0
        %1408 = vmatprep.mubr.f32.mxu0 0.0
        %1409 = vmatmul.mubr.f32.gmra.mrb[0].mxu0 %v1342
        %v1410 = vpop.f32.mrb[0].mxu0
        %v1411 = vadd.f32 %v1339, %v1410
        %v1412 = vpop.f32.mrb[0].mxu0
        %1413 = vdwg.mxu0
        %vm1414 = vcmask 64512
        %v1416 = vsel %vm1414, %v1243, 0
        %v1419 = vsel %vm1414, %v1327, 0
        %1421 = vmatprep.subr.mxu0 0.0
        %1422 = vmatpush1.xpose.msra.mxu0 %v1419
        %1423 = vmatprep.subr.mxu0 0.0
        %1424 = vmatpush1.xpose.msra.mxu0 0.0
        %1425 = vmatprep.subr.mxu0 0.0
        %1426 = vmatpush1.xpose.msra.mxu0 0.0
        %1427 = vmatprep.subr.mxu0 0.0
        %1428 = vmatpush1.xpose.msra.mxu0 0.0
        %1429 = vmatprep.subr.mxu0 0.0
        %1430 = vmatpush1.xpose.msra.mxu0 0.0
        %1431 = vmatprep.subr.mxu0 0.0
        %1432 = vmatpush1.xpose.msra.mxu0 0.0
        %1433 = vmatprep.subr.mxu0 0.0
        %1434 = vmatpush1.xpose.msra.mxu0 0.0
        %1435 = vmatprep.subr.mxu0 0.0
        %1436 = vmatpush1.xpose.msra.mxu0 0.0
        %1437 = vmatprep.subr.mxu0 0.0
        %1438 = vmatpush1.xpose.msra.mxu0 0.0
        %1439 = vmatprep.subr.mxu0 0.0
        %1440 = vmatpush1.xpose.msra.mxu0 0.0
        %1441 = vmatprep.subr.mxu0 0.0
        %1442 = vmatpush1.xpose.msra.mxu0 0.0
        %1443 = vmatprep.subr.mxu0 0.0
        %1444 = vmatpush1.xpose.msra.mxu0 0.0
        %1445 = vmatprep.subr.mxu0 0.0
        %1446 = vmatpush1.xpose.msra.mxu0 0.0
        %1447 = vmatprep.subr.mxu0 0.0
        %1448 = vmatpush1.xpose.msra.mxu0 0.0
        %1449 = vmatprep.subr.mxu0 0.0
        %1450 = vmatpush1.xpose.msra.mxu0 0.0
        %1451 = vmatprep.subr.mxu0 0.0
        %1452 = vmatpush1.xpose.msra.mxu0 0.0
        %1453 = vmatprep.subr.mxu0 0.0
        %1454 = vmatpush1.xpose.msra.mxu0 0.0
        %1455 = vmatprep.subr.mxu0 0.0
        %1456 = vmatpush1.xpose.msra.mxu0 0.0
        %1457 = vmatprep.subr.mxu0 0.0
        %1458 = vmatpush1.xpose.msra.mxu0 0.0
        %1459 = vmatprep.subr.mxu0 0.0
        %1460 = vmatpush1.xpose.msra.mxu0 0.0
        %1461 = vmatprep.subr.mxu0 0.0
        %1462 = vmatpush1.xpose.msra.mxu0 0.0
        %1463 = vmatprep.subr.mxu0 0.0
        %1464 = vmatpush1.xpose.msra.mxu0 0.0
        %1465 = vmatprep.subr.mxu0 0.0
        %1466 = vmatpush1.xpose.msra.mxu0 0.0
        %1467 = vmatprep.subr.mxu0 0.0
        %1468 = vmatpush1.xpose.msra.mxu0 0.0
        %1469 = vmatprep.subr.mxu0 0.0
        %1470 = vmatpush1.xpose.msra.mxu0 0.0
        %1471 = vmatprep.subr.mxu0 0.0
        %1472 = vmatpush1.xpose.msra.mxu0 0.0
        %1473 = vmatprep.subr.mxu0 0.0
        %1474 = vmatpush1.xpose.msra.mxu0 0.0
        %1475 = vmatprep.subr.mxu0 0.0
        %1476 = vmatpush1.xpose.msra.mxu0 0.0
        %1477 = vmatprep.subr.mxu0 0.0
        %1478 = vmatpush1.xpose.msra.mxu0 0.0
        %1479 = vmatprep.subr.mxu0 0.0
        %1480 = vmatpush1.xpose.msra.mxu0 0.0
        %1481 = vmatprep.subr.mxu0 0.0
        %1482 = vmatpush1.xpose.msra.mxu0 0.0
        %1483 = vmatprep.subr.mxu0 0.0
        %1484 = vmatpush1.xpose.msra.mxu0 0.0
        %1485 = vmatprep.mubr.f32.mxu0 0.0
        %1486 = vmatmul.mubr.f32.gmra.mrb[0].mxu0 %v1416
        %v1487 = vpop.f32.mrb[0].mxu0
        %v1488 = vadd.f32 0.0, %v1487
        %v1489 = vpop.f32.mrb[0].mxu0
        %1490 = vdwg.mxu0
        %1491 = vrot.lane.b32.xlu0 %v1243, 120
        %v1492 = vpop.permute.xlu0 %1491
        %1493 = vrot.lane.b32.xlu0 %v1327, 120
        %v1494 = vpop.permute.xlu0 %1493
        %v1495 = vsel %vm1414, %v1492, 0
        %v1497 = vsel %vm1414, %v1494, 0
        %1499 = vmatprep.subr.mxu0 0.0
        %1500 = vmatpush1.xpose.msra.mxu0 %v1497
        %1501 = vmatprep.subr.mxu0 0.0
        %1502 = vmatpush1.xpose.msra.mxu0 0.0
        %1503 = vmatprep.subr.mxu0 0.0
        %1504 = vmatpush1.xpose.msra.mxu0 0.0
        %1505 = vmatprep.subr.mxu0 0.0
        %1506 = vmatpush1.xpose.msra.mxu0 0.0
        %1507 = vmatprep.subr.mxu0 0.0
        %1508 = vmatpush1.xpose.msra.mxu0 0.0
        %1509 = vmatprep.subr.mxu0 0.0
        %1510 = vmatpush1.xpose.msra.mxu0 0.0
        %1511 = vmatprep.subr.mxu0 0.0
        %1512 = vmatpush1.xpose.msra.mxu0 0.0
        %1513 = vmatprep.subr.mxu0 0.0
        %1514 = vmatpush1.xpose.msra.mxu0 0.0
        %1515 = vmatprep.subr.mxu0 0.0
        %1516 = vmatpush1.xpose.msra.mxu0 0.0
        %1517 = vmatprep.subr.mxu0 0.0
        %1518 = vmatpush1.xpose.msra.mxu0 0.0
        %1519 = vmatprep.subr.mxu0 0.0
        %1520 = vmatpush1.xpose.msra.mxu0 0.0
        %1521 = vmatprep.subr.mxu0 0.0
        %1522 = vmatpush1.xpose.msra.mxu0 0.0
        %1523 = vmatprep.subr.mxu0 0.0
        %1524 = vmatpush1.xpose.msra.mxu0 0.0
        %1525 = vmatprep.subr.mxu0 0.0
        %1526 = vmatpush1.xpose.msra.mxu0 0.0
        %1527 = vmatprep.subr.mxu0 0.0
        %1528 = vmatpush1.xpose.msra.mxu0 0.0
        %1529 = vmatprep.subr.mxu0 0.0
        %1530 = vmatpush1.xpose.msra.mxu0 0.0
        %1531 = vmatprep.subr.mxu0 0.0
        %1532 = vmatpush1.xpose.msra.mxu0 0.0
        %1533 = vmatprep.subr.mxu0 0.0
        %1534 = vmatpush1.xpose.msra.mxu0 0.0
        %1535 = vmatprep.subr.mxu0 0.0
        %1536 = vmatpush1.xpose.msra.mxu0 0.0
        %1537 = vmatprep.subr.mxu0 0.0
        %1538 = vmatpush1.xpose.msra.mxu0 0.0
        %1539 = vmatprep.subr.mxu0 0.0
        %1540 = vmatpush1.xpose.msra.mxu0 0.0
        %1541 = vmatprep.subr.mxu0 0.0
        %1542 = vmatpush1.xpose.msra.mxu0 0.0
        %1543 = vmatprep.subr.mxu0 0.0
        %1544 = vmatpush1.xpose.msra.mxu0 0.0
        %1545 = vmatprep.subr.mxu0 0.0
        %1546 = vmatpush1.xpose.msra.mxu0 0.0
        %1547 = vmatprep.subr.mxu0 0.0
        %1548 = vmatpush1.xpose.msra.mxu0 0.0
        %1549 = vmatprep.subr.mxu0 0.0
        %1550 = vmatpush1.xpose.msra.mxu0 0.0
        %1551 = vmatprep.subr.mxu0 0.0
        %1552 = vmatpush1.xpose.msra.mxu0 0.0
        %1553 = vmatprep.subr.mxu0 0.0
        %1554 = vmatpush1.xpose.msra.mxu0 0.0
        %1555 = vmatprep.subr.mxu0 0.0
        %1556 = vmatpush1.xpose.msra.mxu0 0.0
        %1557 = vmatprep.subr.mxu0 0.0
        %1558 = vmatpush1.xpose.msra.mxu0 0.0
        %1559 = vmatprep.subr.mxu0 0.0
        %1560 = vmatpush1.xpose.msra.mxu0 0.0
        %1561 = vmatprep.subr.mxu0 0.0
        %1562 = vmatpush1.xpose.msra.mxu0 0.0
        %1563 = vmatprep.mubr.f32.mxu0 0.0
        %1564 = vmatmul.mubr.f32.gmra.mrb[0].mxu0 %v1495
        %v1565 = vpop.f32.mrb[0].mxu0
        %v1566 = vadd.f32 0.0, %v1565
        %v1567 = vpop.f32.mrb[0].mxu0
        %1568 = vdwg.mxu0
        %1569 = vrot.lane.b32.xlu0 %v1243, 112
        %v1570 = vpop.permute.xlu0 %1569
        %1571 = vrot.lane.b32.xlu0 %v1327, 112
        %v1572 = vpop.permute.xlu0 %1571
        %v1573 = vsel %vm1414, %v1570, 0
        %v1575 = vsel %vm1414, %v1572, 0
        %1577 = vmatprep.subr.mxu0 0.0
        %1578 = vmatpush1.xpose.msra.mxu0 %v1575
        %1579 = vmatprep.subr.mxu0 0.0
        %1580 = vmatpush1.xpose.msra.mxu0 0.0
        %1581 = vmatprep.subr.mxu0 0.0
        %1582 = vmatpush1.xpose.msra.mxu0 0.0
        %1583 = vmatprep.subr.mxu0 0.0
        %1584 = vmatpush1.xpose.msra.mxu0 0.0
        %1585 = vmatprep.subr.mxu0 0.0
        %1586 = vmatpush1.xpose.msra.mxu0 0.0
        %1587 = vmatprep.subr.mxu0 0.0
        %1588 = vmatpush1.xpose.msra.mxu0 0.0
        %1589 = vmatprep.subr.mxu0 0.0
        %1590 = vmatpush1.xpose.msra.mxu0 0.0
        %1591 = vmatprep.subr.mxu0 0.0
        %1592 = vmatpush1.xpose.msra.mxu0 0.0
        %1593 = vmatprep.subr.mxu0 0.0
        %1594 = vmatpush1.xpose.msra.mxu0 0.0
        %1595 = vmatprep.subr.mxu0 0.0
        %1596 = vmatpush1.xpose.msra.mxu0 0.0
        %1597 = vmatprep.subr.mxu0 0.0
        %1598 = vmatpush1.xpose.msra.mxu0 0.0
        %1599 = vmatprep.subr.mxu0 0.0
        %1600 = vmatpush1.xpose.msra.mxu0 0.0
        %1601 = vmatprep.subr.mxu0 0.0
        %1602 = vmatpush1.xpose.msra.mxu0 0.0
        %1603 = vmatprep.subr.mxu0 0.0
        %1604 = vmatpush1.xpose.msra.mxu0 0.0
        %1605 = vmatprep.subr.mxu0 0.0
        %1606 = vmatpush1.xpose.msra.mxu0 0.0
        %1607 = vmatprep.subr.mxu0 0.0
        %1608 = vmatpush1.xpose.msra.mxu0 0.0
        %1609 = vmatprep.subr.mxu0 0.0
        %1610 = vmatpush1.xpose.msra.mxu0 0.0
        %1611 = vmatprep.subr.mxu0 0.0
        %1612 = vmatpush1.xpose.msra.mxu0 0.0
        %1613 = vmatprep.subr.mxu0 0.0
        %1614 = vmatpush1.xpose.msra.mxu0 0.0
        %1615 = vmatprep.subr.mxu0 0.0
        %1616 = vmatpush1.xpose.msra.mxu0 0.0
        %1617 = vmatprep.subr.mxu0 0.0
        %1618 = vmatpush1.xpose.msra.mxu0 0.0
        %1619 = vmatprep.subr.mxu0 0.0
        %1620 = vmatpush1.xpose.msra.mxu0 0.0
        %1621 = vmatprep.subr.mxu0 0.0
        %1622 = vmatpush1.xpose.msra.mxu0 0.0
        %1623 = vmatprep.subr.mxu0 0.0
        %1624 = vmatpush1.xpose.msra.mxu0 0.0
        %1625 = vmatprep.subr.mxu0 0.0
        %1626 = vmatpush1.xpose.msra.mxu0 0.0
        %1627 = vmatprep.subr.mxu0 0.0
        %1628 = vmatpush1.xpose.msra.mxu0 0.0
        %1629 = vmatprep.subr.mxu0 0.0
        %1630 = vmatpush1.xpose.msra.mxu0 0.0
        %1631 = vmatprep.subr.mxu0 0.0
        %1632 = vmatpush1.xpose.msra.mxu0 0.0
        %1633 = vmatprep.subr.mxu0 0.0
        %1634 = vmatpush1.xpose.msra.mxu0 0.0
        %1635 = vmatprep.subr.mxu0 0.0
        %1636 = vmatpush1.xpose.msra.mxu0 0.0
        %1637 = vmatprep.subr.mxu0 0.0
        %1638 = vmatpush1.xpose.msra.mxu0 0.0
        %1639 = vmatprep.subr.mxu0 0.0
        %1640 = vmatpush1.xpose.msra.mxu0 0.0
        %1641 = vmatprep.mubr.f32.mxu0 0.0
        %1642 = vmatmul.mubr.f32.gmra.mrb[0].mxu0 %v1573
        %v1643 = vpop.f32.mrb[0].mxu0
        %v1644 = vadd.f32 0.0, %v1643
        %v1645 = vpop.f32.mrb[0].mxu0
        %1646 = vdwg.mxu0
        %1647 = vrot.lane.b32.xlu0 %v1243, 104
        %v1648 = vpop.permute.xlu0 %1647
        %1649 = vrot.lane.b32.xlu0 %v1327, 104
        %v1650 = vpop.permute.xlu0 %1649
        %v1651 = vsel %vm1414, %v1648, 0
        %v1653 = vsel %vm1414, %v1650, 0
        %1655 = vmatprep.subr.mxu0 0.0
        %1656 = vmatpush1.xpose.msra.mxu0 %v1653
        %1657 = vmatprep.subr.mxu0 0.0
        %1658 = vmatpush1.xpose.msra.mxu0 0.0
        %1659 = vmatprep.subr.mxu0 0.0
        %1660 = vmatpush1.xpose.msra.mxu0 0.0
        %1661 = vmatprep.subr.mxu0 0.0
        %1662 = vmatpush1.xpose.msra.mxu0 0.0
        %1663 = vmatprep.subr.mxu0 0.0
        %1664 = vmatpush1.xpose.msra.mxu0 0.0
        %1665 = vmatprep.subr.mxu0 0.0
        %1666 = vmatpush1.xpose.msra.mxu0 0.0
        %1667 = vmatprep.subr.mxu0 0.0
        %1668 = vmatpush1.xpose.msra.mxu0 0.0
        %1669 = vmatprep.subr.mxu0 0.0
        %1670 = vmatpush1.xpose.msra.mxu0 0.0
        %1671 = vmatprep.subr.mxu0 0.0
        %1672 = vmatpush1.xpose.msra.mxu0 0.0
        %1673 = vmatprep.subr.mxu0 0.0
        %1674 = vmatpush1.xpose.msra.mxu0 0.0
        %1675 = vmatprep.subr.mxu0 0.0
        %1676 = vmatpush1.xpose.msra.mxu0 0.0
        %1677 = vmatprep.subr.mxu0 0.0
        %1678 = vmatpush1.xpose.msra.mxu0 0.0
        %1679 = vmatprep.subr.mxu0 0.0
        %1680 = vmatpush1.xpose.msra.mxu0 0.0
        %1681 = vmatprep.subr.mxu0 0.0
        %1682 = vmatpush1.xpose.msra.mxu0 0.0
        %1683 = vmatprep.subr.mxu0 0.0
        %1684 = vmatpush1.xpose.msra.mxu0 0.0
        %1685 = vmatprep.subr.mxu0 0.0
        %1686 = vmatpush1.xpose.msra.mxu0 0.0
        %1687 = vmatprep.subr.mxu0 0.0
        %1688 = vmatpush1.xpose.msra.mxu0 0.0
        %1689 = vmatprep.subr.mxu0 0.0
        %1690 = vmatpush1.xpose.msra.mxu0 0.0
        %1691 = vmatprep.subr.mxu0 0.0
        %1692 = vmatpush1.xpose.msra.mxu0 0.0
        %1693 = vmatprep.subr.mxu0 0.0
        %1694 = vmatpush1.xpose.msra.mxu0 0.0
        %1695 = vmatprep.subr.mxu0 0.0
        %1696 = vmatpush1.xpose.msra.mxu0 0.0
        %1697 = vmatprep.subr.mxu0 0.0
        %1698 = vmatpush1.xpose.msra.mxu0 0.0
        %1699 = vmatprep.subr.mxu0 0.0
        %1700 = vmatpush1.xpose.msra.mxu0 0.0
        %1701 = vmatprep.subr.mxu0 0.0
        %1702 = vmatpush1.xpose.msra.mxu0 0.0
        %1703 = vmatprep.subr.mxu0 0.0
        %1704 = vmatpush1.xpose.msra.mxu0 0.0
        %1705 = vmatprep.subr.mxu0 0.0
        %1706 = vmatpush1.xpose.msra.mxu0 0.0
        %1707 = vmatprep.subr.mxu0 0.0
        %1708 = vmatpush1.xpose.msra.mxu0 0.0
        %1709 = vmatprep.subr.mxu0 0.0
        %1710 = vmatpush1.xpose.msra.mxu0 0.0
        %1711 = vmatprep.subr.mxu0 0.0
        %1712 = vmatpush1.xpose.msra.mxu0 0.0
        %1713 = vmatprep.subr.mxu0 0.0
        %1714 = vmatpush1.xpose.msra.mxu0 0.0
        %1715 = vmatprep.subr.mxu0 0.0
        %1716 = vmatpush1.xpose.msra.mxu0 0.0
        %1717 = vmatprep.subr.mxu0 0.0
        %1718 = vmatpush1.xpose.msra.mxu0 0.0
        %1719 = vmatprep.mubr.f32.mxu0 0.0
        %1720 = vmatmul.mubr.f32.gmra.mrb[0].mxu0 %v1651
        %v1721 = vpop.f32.mrb[0].mxu0
        %v1722 = vadd.f32 0.0, %v1721
        %v1723 = vpop.f32.mrb[0].mxu0
        %1724 = vdwg.mxu0
        %v1725 = vadd.f32 %v1488, %v1160
        %v1726 = vadd.f32 %v1566, %v1160
        %v1727 = vadd.f32 %v1644, %v1160
        %v1728 = vadd.f32 %v1722, %v1160
        %v1729 = vsel %vm1414, %v1725, -inf
        %1730 = vmax.xlane.f32.xlu0 %v1729
        %v1731 = vpop.xlane.xlu0 %1730
        %v1732 = vsel %vm1414, %v1726, -inf
        %1733 = vmax.xlane.f32.xlu0 %v1732
        %v1734 = vpop.xlane.xlu0 %1733
        %v1735 = vsel %vm1414, %v1727, -inf
        %1736 = vmax.xlane.f32.xlu0 %v1735
        %v1737 = vpop.xlane.xlu0 %1736
        %v1738 = vsel %vm1414, %v1728, -inf
        %1739 = vmax.xlane.f32.xlu0 %v1738
        %v1740 = vpop.xlane.xlu0 %1739
        %v1741 = vsub.f32 %v1725, %v1731
        %v1742 = vsub.f32 %v1726, %v1734
        %v1743 = vsub.f32 %v1727, %v1737
        %v1744 = vsub.f32 %v1728, %v1740
        %v1745 = vmul.f32 %v1741, 1.442695
        %v1746 = vpow.pop %v1745
        %v1747 = vmul.f32 %v1742, 1.442695
        %v1748 = vpow.pop %v1747
        %v1749 = vmul.f32 %v1743, 1.442695
        %v1750 = vpow.pop %v1749
        %v1751 = vmul.f32 %v1744, 1.442695
        %v1752 = vpow.pop %v1751
        %v1753 = vsel %vm1414, %v1746, 0.0
        %1754 = vadd.xlane.f32.xlu0 %v1753
        %v1755 = vpop.xlane.xlu0 %1754
        %v1756 = vsel %vm1414, %v1748, 0.0
        %1757 = vadd.xlane.f32.xlu0 %v1756
        %v1758 = vpop.xlane.xlu0 %1757
        %v1759 = vsel %vm1414, %v1750, 0.0
        %1760 = vadd.xlane.f32.xlu0 %v1759
        %v1761 = vpop.xlane.xlu0 %1760
        %v1762 = vsel %vm1414, %v1752, 0.0
        %1763 = vadd.xlane.f32.xlu0 %v1762
        %v1764 = vpop.xlane.xlu0 %1763
        %v1765 = vrcp.pop %v1755
        %v1766 = vrcp.pop %v1758
        %v1767 = vrcp.pop %v1761
        %v1768 = vrcp.pop %v1764
        %v1769 = vmul.f32 %v1746, %v1765
        %v1770 = vmul.f32 %v1748, %v1766
        %v1771 = vmul.f32 %v1750, %v1767
        %v1772 = vmul.f32 %v1752, %v1768
        %v1774 = vsel %vm1414, %v1769, 0
        %1776 = vmatprep.subr.mxu0 0.0
        %1777 = vmatpush1.msra.mxu0 %v1411
        %1778 = vmatprep.subr.mxu0 0.0
        %1779 = vmatpush1.msra.mxu0 0.0
        %1780 = vmatprep.subr.mxu0 0.0
        %1781 = vmatpush1.msra.mxu0 0.0
        %1782 = vmatprep.subr.mxu0 0.0
        %1783 = vmatpush1.msra.mxu0 0.0
        %1784 = vmatprep.subr.mxu0 0.0
        %1785 = vmatpush1.msra.mxu0 0.0
        %1786 = vmatprep.subr.mxu0 0.0
        %1787 = vmatpush1.msra.mxu0 0.0
        %1788 = vmatprep.subr.mxu0 0.0
        %1789 = vmatpush1.msra.mxu0 0.0
        %1790 = vmatprep.subr.mxu0 0.0
        %1791 = vmatpush1.msra.mxu0 0.0
        %1792 = vmatprep.subr.mxu0 0.0
        %1793 = vmatpush1.msra.mxu0 0.0
        %1794 = vmatprep.subr.mxu0 0.0
        %1795 = vmatpush1.msra.mxu0 0.0
        %1796 = vmatprep.subr.mxu0 0.0
        %1797 = vmatpush1.msra.mxu0 0.0
        %1798 = vmatprep.subr.mxu0 0.0
        %1799 = vmatpush1.msra.mxu0 0.0
        %1800 = vmatprep.subr.mxu0 0.0
        %1801 = vmatpush1.msra.mxu0 0.0
        %1802 = vmatprep.subr.mxu0 0.0
        %1803 = vmatpush1.msra.mxu0 0.0
        %1804 = vmatprep.subr.mxu0 0.0
        %1805 = vmatpush1.msra.mxu0 0.0
        %1806 = vmatprep.subr.mxu0 0.0
        %1807 = vmatpush1.msra.mxu0 0.0
        %1808 = vmatprep.subr.mxu0 0.0
        %1809 = vmatpush1.msra.mxu0 0.0
        %1810 = vmatprep.subr.mxu0 0.0
        %1811 = vmatpush1.msra.mxu0 0.0
        %1812 = vmatprep.subr.mxu0 0.0
        %1813 = vmatpush1.msra.mxu0 0.0
        %1814 = vmatprep.subr.mxu0 0.0
        %1815 = vmatpush1.msra.mxu0 0.0
        %1816 = vmatprep.subr.mxu0 0.0
        %1817 = vmatpush1.msra.mxu0 0.0
        %1818 = vmatprep.subr.mxu0 0.0
        %1819 = vmatpush1.msra.mxu0 0.0
        %1820 = vmatprep.subr.mxu0 0.0
        %1821 = vmatpush1.msra.mxu0 0.0
        %1822 = vmatprep.subr.mxu0 0.0
        %1823 = vmatpush1.msra.mxu0 0.0
        %1824 = vmatprep.subr.mxu0 0.0
        %1825 = vmatpush1.msra.mxu0 0.0
        %1826 = vmatprep.subr.mxu0 0.0
        %1827 = vmatpush1.msra.mxu0 0.0
        %1828 = vmatprep.subr.mxu0 0.0
        %1829 = vmatpush1.msra.mxu0 0.0
        %1830 = vmatprep.subr.mxu0 0.0
        %1831 = vmatpush1.msra.mxu0 0.0
        %1832 = vmatprep.subr.mxu0 0.0
        %1833 = vmatpush1.msra.mxu0 0.0
        %1834 = vmatprep.subr.mxu0 0.0
        %1835 = vmatpush1.msra.mxu0 0.0
        %1836 = vmatprep.subr.mxu0 0.0
        %1837 = vmatpush1.msra.mxu0 0.0
        %1838 = vmatprep.subr.mxu0 0.0
        %1839 = vmatpush1.msra.mxu0 0.0
        %1840 = vmatprep.mubr.f32.mxu0 0.0
        %1841 = vmatmul.mubr.f32.gmra.mrb[0].mxu0 %v1774
        %v1842 = vpop.f32.mrb[0].mxu0
        %v1843 = vadd.f32 0.0, %v1842
        %v1844 = vpop.f32.mrb[0].mxu0
        %1845 = vdwg.mxu0
        %1847 = vrot.lane.b32.xlu0 %v1411, 120
        %v1848 = vpop.permute.xlu0 %1847
        %v1851 = vsel %vm1414, %v1770, 0
        %1853 = vmatprep.subr.mxu0 0.0
        %1854 = vmatpush1.msra.mxu0 %v1848
        %1855 = vmatprep.subr.mxu0 0.0
        %1856 = vmatpush1.msra.mxu0 0.0
        %1857 = vmatprep.subr.mxu0 0.0
        %1858 = vmatpush1.msra.mxu0 0.0
        %1859 = vmatprep.subr.mxu0 0.0
        %1860 = vmatpush1.msra.mxu0 0.0
        %1861 = vmatprep.subr.mxu0 0.0
        %1862 = vmatpush1.msra.mxu0 0.0
        %1863 = vmatprep.subr.mxu0 0.0
        %1864 = vmatpush1.msra.mxu0 0.0
        %1865 = vmatprep.subr.mxu0 0.0
        %1866 = vmatpush1.msra.mxu0 0.0
        %1867 = vmatprep.subr.mxu0 0.0
        %1868 = vmatpush1.msra.mxu0 0.0
        %1869 = vmatprep.subr.mxu0 0.0
        %1870 = vmatpush1.msra.mxu0 0.0
        %1871 = vmatprep.subr.mxu0 0.0
        %1872 = vmatpush1.msra.mxu0 0.0
        %1873 = vmatprep.subr.mxu0 0.0
        %1874 = vmatpush1.msra.mxu0 0.0
        %1875 = vmatprep.subr.mxu0 0.0
        %1876 = vmatpush1.msra.mxu0 0.0
        %1877 = vmatprep.subr.mxu0 0.0
        %1878 = vmatpush1.msra.mxu0 0.0
        %1879 = vmatprep.subr.mxu0 0.0
        %1880 = vmatpush1.msra.mxu0 0.0
        %1881 = vmatprep.subr.mxu0 0.0
        %1882 = vmatpush1.msra.mxu0 0.0
        %1883 = vmatprep.subr.mxu0 0.0
        %1884 = vmatpush1.msra.mxu0 0.0
        %1885 = vmatprep.subr.mxu0 0.0
        %1886 = vmatpush1.msra.mxu0 0.0
        %1887 = vmatprep.subr.mxu0 0.0
        %1888 = vmatpush1.msra.mxu0 0.0
        %1889 = vmatprep.subr.mxu0 0.0
        %1890 = vmatpush1.msra.mxu0 0.0
        %1891 = vmatprep.subr.mxu0 0.0
        %1892 = vmatpush1.msra.mxu0 0.0
        %1893 = vmatprep.subr.mxu0 0.0
        %1894 = vmatpush1.msra.mxu0 0.0
        %1895 = vmatprep.subr.mxu0 0.0
        %1896 = vmatpush1.msra.mxu0 0.0
        %1897 = vmatprep.subr.mxu0 0.0
        %1898 = vmatpush1.msra.mxu0 0.0
        %1899 = vmatprep.subr.mxu0 0.0
        %1900 = vmatpush1.msra.mxu0 0.0
        %1901 = vmatprep.subr.mxu0 0.0
        %1902 = vmatpush1.msra.mxu0 0.0
        %1903 = vmatprep.subr.mxu0 0.0
        %1904 = vmatpush1.msra.mxu0 0.0
        %1905 = vmatprep.subr.mxu0 0.0
        %1906 = vmatpush1.msra.mxu0 0.0
        %1907 = vmatprep.subr.mxu0 0.0
        %1908 = vmatpush1.msra.mxu0 0.0
        %1909 = vmatprep.subr.mxu0 0.0
        %1910 = vmatpush1.msra.mxu0 0.0
        %1911 = vmatprep.subr.mxu0 0.0
        %1912 = vmatpush1.msra.mxu0 0.0
        %1913 = vmatprep.subr.mxu0 0.0
        %1914 = vmatpush1.msra.mxu0 0.0
        %1915 = vmatprep.subr.mxu0 0.0
        %1916 = vmatpush1.msra.mxu0 0.0
        %1917 = vmatprep.mubr.f32.mxu0 0.0
        %1918 = vmatmul.mubr.f32.gmra.mrb[0].mxu0 %v1851
        %v1919 = vpop.f32.mrb[0].mxu0
        %v1920 = vadd.f32 0.0, %v1919
        %v1921 = vpop.f32.mrb[0].mxu0
        %1922 = vdwg.mxu0
        %1923 = vrot.lane.b32.xlu0 %v1411, 112
        %v1924 = vpop.permute.xlu0 %1923
        %v1927 = vsel %vm1414, %v1771, 0
        %1929 = vmatprep.subr.mxu0 0.0
        %1930 = vmatpush1.msra.mxu0 %v1924
        %1931 = vmatprep.subr.mxu0 0.0
        %1932 = vmatpush1.msra.mxu0 0.0
        %1933 = vmatprep.subr.mxu0 0.0
        %1934 = vmatpush1.msra.mxu0 0.0
        %1935 = vmatprep.subr.mxu0 0.0
        %1936 = vmatpush1.msra.mxu0 0.0
        %1937 = vmatprep.subr.mxu0 0.0
        %1938 = vmatpush1.msra.mxu0 0.0
        %1939 = vmatprep.subr.mxu0 0.0
        %1940 = vmatpush1.msra.mxu0 0.0
        %1941 = vmatprep.subr.mxu0 0.0
        %1942 = vmatpush1.msra.mxu0 0.0
        %1943 = vmatprep.subr.mxu0 0.0
        %1944 = vmatpush1.msra.mxu0 0.0
        %1945 = vmatprep.subr.mxu0 0.0
        %1946 = vmatpush1.msra.mxu0 0.0
        %1947 = vmatprep.subr.mxu0 0.0
        %1948 = vmatpush1.msra.mxu0 0.0
        %1949 = vmatprep.subr.mxu0 0.0
        %1950 = vmatpush1.msra.mxu0 0.0
        %1951 = vmatprep.subr.mxu0 0.0
        %1952 = vmatpush1.msra.mxu0 0.0
        %1953 = vmatprep.subr.mxu0 0.0
        %1954 = vmatpush1.msra.mxu0 0.0
        %1955 = vmatprep.subr.mxu0 0.0
        %1956 = vmatpush1.msra.mxu0 0.0
        %1957 = vmatprep.subr.mxu0 0.0
        %1958 = vmatpush1.msra.mxu0 0.0
        %1959 = vmatprep.subr.mxu0 0.0
        %1960 = vmatpush1.msra.mxu0 0.0
        %1961 = vmatprep.subr.mxu0 0.0
        %1962 = vmatpush1.msra.mxu0 0.0
        %1963 = vmatprep.subr.mxu0 0.0
        %1964 = vmatpush1.msra.mxu0 0.0
        %1965 = vmatprep.subr.mxu0 0.0
        %1966 = vmatpush1.msra.mxu0 0.0
        %1967 = vmatprep.subr.mxu0 0.0
        %1968 = vmatpush1.msra.mxu0 0.0
        %1969 = vmatprep.subr.mxu0 0.0
        %1970 = vmatpush1.msra.mxu0 0.0
        %1971 = vmatprep.subr.mxu0 0.0
        %1972 = vmatpush1.msra.mxu0 0.0
        %1973 = vmatprep.subr.mxu0 0.0
        %1974 = vmatpush1.msra.mxu0 0.0
        %1975 = vmatprep.subr.mxu0 0.0
        %1976 = vmatpush1.msra.mxu0 0.0
        %1977 = vmatprep.subr.mxu0 0.0
        %1978 = vmatpush1.msra.mxu0 0.0
        %1979 = vmatprep.subr.mxu0 0.0
        %1980 = vmatpush1.msra.mxu0 0.0
        %1981 = vmatprep.subr.mxu0 0.0
        %1982 = vmatpush1.msra.mxu0 0.0
        %1983 = vmatprep.subr.mxu0 0.0
        %1984 = vmatpush1.msra.mxu0 0.0
        %1985 = vmatprep.subr.mxu0 0.0
        %1986 = vmatpush1.msra.mxu0 0.0
        %1987 = vmatprep.subr.mxu0 0.0
        %1988 = vmatpush1.msra.mxu0 0.0
        %1989 = vmatprep.subr.mxu0 0.0
        %1990 = vmatpush1.msra.mxu0 0.0
        %1991 = vmatprep.subr.mxu0 0.0
        %1992 = vmatpush1.msra.mxu0 0.0
        %1993 = vmatprep.mubr.f32.mxu0 0.0
        %1994 = vmatmul.mubr.f32.gmra.mrb[0].mxu0 %v1927
        %v1995 = vpop.f32.mrb[0].mxu0
        %v1996 = vadd.f32 0.0, %v1995
        %v1997 = vpop.f32.mrb[0].mxu0
        %1998 = vdwg.mxu0
        %1999 = vrot.lane.b32.xlu0 %v1411, 104
        %v2000 = vpop.permute.xlu0 %1999
        %v2003 = vsel %vm1414, %v1772, 0
        %2005 = vmatprep.subr.mxu0 0.0
        %2006 = vmatpush1.msra.mxu0 %v2000
        %2007 = vmatprep.subr.mxu0 0.0
        %2008 = vmatpush1.msra.mxu0 0.0
        %2009 = vmatprep.subr.mxu0 0.0
        %2010 = vmatpush1.msra.mxu0 0.0
        %2011 = vmatprep.subr.mxu0 0.0
        %2012 = vmatpush1.msra.mxu0 0.0
        %2013 = vmatprep.subr.mxu0 0.0
        %2014 = vmatpush1.msra.mxu0 0.0
        %2015 = vmatprep.subr.mxu0 0.0
        %2016 = vmatpush1.msra.mxu0 0.0
        %2017 = vmatprep.subr.mxu0 0.0
        %2018 = vmatpush1.msra.mxu0 0.0
        %2019 = vmatprep.subr.mxu0 0.0
        %2020 = vmatpush1.msra.mxu0 0.0
        %2021 = vmatprep.subr.mxu0 0.0
        %2022 = vmatpush1.msra.mxu0 0.0
        %2023 = vmatprep.subr.mxu0 0.0
        %2024 = vmatpush1.msra.mxu0 0.0
        %2025 = vmatprep.subr.mxu0 0.0
        %2026 = vmatpush1.msra.mxu0 0.0
        %2027 = vmatprep.subr.mxu0 0.0
        %2028 = vmatpush1.msra.mxu0 0.0
        %2029 = vmatprep.subr.mxu0 0.0
        %2030 = vmatpush1.msra.mxu0 0.0
        %2031 = vmatprep.subr.mxu0 0.0
        %2032 = vmatpush1.msra.mxu0 0.0
        %2033 = vmatprep.subr.mxu0 0.0
        %2034 = vmatpush1.msra.mxu0 0.0
        %2035 = vmatprep.subr.mxu0 0.0
        %2036 = vmatpush1.msra.mxu0 0.0
        %2037 = vmatprep.subr.mxu0 0.0
        %2038 = vmatpush1.msra.mxu0 0.0
        %2039 = vmatprep.subr.mxu0 0.0
        %2040 = vmatpush1.msra.mxu0 0.0
        %2041 = vmatprep.subr.mxu0 0.0
        %2042 = vmatpush1.msra.mxu0 0.0
        %2043 = vmatprep.subr.mxu0 0.0
        %2044 = vmatpush1.msra.mxu0 0.0
        %2045 = vmatprep.subr.mxu0 0.0
        %2046 = vmatpush1.msra.mxu0 0.0
        %2047 = vmatprep.subr.mxu0 0.0
        %2048 = vmatpush1.msra.mxu0 0.0
        %2049 = vmatprep.subr.mxu0 0.0
        %2050 = vmatpush1.msra.mxu0 0.0
        %2051 = vmatprep.subr.mxu0 0.0
        %2052 = vmatpush1.msra.mxu0 0.0
        %2053 = vmatprep.subr.mxu0 0.0
        %2054 = vmatpush1.msra.mxu0 0.0
        %2055 = vmatprep.subr.mxu0 0.0
        %2056 = vmatpush1.msra.mxu0 0.0
        %2057 = vmatprep.subr.mxu0 0.0
        %2058 = vmatpush1.msra.mxu0 0.0
        %2059 = vmatprep.subr.mxu0 0.0
        %2060 = vmatpush1.msra.mxu0 0.0
        %2061 = vmatprep.subr.mxu0 0.0
        %2062 = vmatpush1.msra.mxu0 0.0
        %2063 = vmatprep.subr.mxu0 0.0
        %2064 = vmatpush1.msra.mxu0 0.0
        %2065 = vmatprep.subr.mxu0 0.0
        %2066 = vmatpush1.msra.mxu0 0.0
        %2067 = vmatprep.subr.mxu0 0.0
        %2068 = vmatpush1.msra.mxu0 0.0
        %2069 = vmatprep.mubr.f32.mxu0 0.0
        %2070 = vmatmul.mubr.f32.gmra.mrb[0].mxu0 %v2003
        %v2071 = vpop.f32.mrb[0].mxu0
        %v2072 = vadd.f32 0.0, %v2071
        %v2073 = vpop.f32.mrb[0].mxu0
        %2074 = vdwg.mxu0
        %2076 = vrot.lane.b32.xlu0 %v1920, 8
        %v2077 = vpop.permute.xlu0 %2076
        %2080 = vrot.lane.b32.xlu0 %v1996, 16
        %v2081 = vpop.permute.xlu0 %2080
        %2084 = vrot.lane.b32.xlu0 %v2072, 24
        %v2085 = vpop.permute.xlu0 %2084
        %v2087 = vsel %vm1414, %v1843, %v2077
        %vm2088 = vcmask 130048
        %v2089 = vsel %vm2088, %v2087, %v2081
        %vm2090 = vcmask 195584
        %v2091 = vsel %vm2090, %v2089, %v2085
        %v2092 = vld [vmem:[%s20] sm:$0xff]
        %v2093 = vld [vmem:[%s20 + $0x8] sm:$0xff]
        %v2094 = vld [vmem:[%s20 + $0x10] sm:$0xff]
        %v2095 = vld [vmem:[%s20 + $0x18] sm:$0xff]
        %v2096 = vld [vmem:[%s1006] sm:$0xff]
        %v2097 = vld [vmem:[%s1015] sm:$0xff]
        %v2098 = vld [vmem:[%s1024] sm:$0xff]
        %v2099 = vld [vmem:[%s1033] sm:$0xff]
        %v2100 = vld [vmem:[%s14] sm:$0xff]
        %v2101 = vld [vmem:[%s14 + $0x8] sm:$0xff]
        %v2102 = vld [vmem:[%s14 + $0x10] sm:$0xff]
        %v2103 = vld [vmem:[%s14 + $0x18] sm:$0xff]
        %v2104 = vld [vmem:[%s15] sm:$0x1]
        %v2106 = vlaneseq
        %v2107 = vshrl.u32 %v2106, 7
        %v2108 = vsub.s32 0, %v2107
        %v2109 = vrot.slane %v2104, %v2108
        %v2112 = vsel %vm1172, %v2096, 0
        %2114 = vmatprep.subr.mxu0 0.0
        %2115 = vmatpush1.msra.mxu0 %v2100
        %2116 = vmatprep.subr.mxu0 0.0
        %2117 = vmatpush1.msra.mxu0 %v2101
        %2118 = vmatprep.subr.mxu0 0.0
        %2119 = vmatpush1.msra.mxu0 %v2102
        %2120 = vmatprep.subr.mxu0 0.0
        %2121 = vmatpush1.msra.mxu0 %v2103
        %2122 = vmatprep.subr.mxu0 0.0
        %2123 = vmatpush1.msra.mxu0 0.0
        %2124 = vmatprep.subr.mxu0 0.0
        %2125 = vmatpush1.msra.mxu0 0.0
        %2126 = vmatprep.subr.mxu0 0.0
        %2127 = vmatpush1.msra.mxu0 0.0
        %2128 = vmatprep.subr.mxu0 0.0
        %2129 = vmatpush1.msra.mxu0 0.0
        %2130 = vmatprep.subr.mxu0 0.0
        %2131 = vmatpush1.msra.mxu0 0.0
        %2132 = vmatprep.subr.mxu0 0.0
        %2133 = vmatpush1.msra.mxu0 0.0
        %2134 = vmatprep.subr.mxu0 0.0
        %2135 = vmatpush1.msra.mxu0 0.0
        %2136 = vmatprep.subr.mxu0 0.0
        %2137 = vmatpush1.msra.mxu0 0.0
        %2138 = vmatprep.subr.mxu0 0.0
        %2139 = vmatpush1.msra.mxu0 0.0
        %2140 = vmatprep.subr.mxu0 0.0
        %2141 = vmatpush1.msra.mxu0 0.0
        %2142 = vmatprep.subr.mxu0 0.0
        %2143 = vmatpush1.msra.mxu0 0.0
        %2144 = vmatprep.subr.mxu0 0.0
        %2145 = vmatpush1.msra.mxu0 0.0
        %2146 = vmatprep.subr.mxu0 0.0
        %2147 = vmatpush1.msra.mxu0 0.0
        %2148 = vmatprep.subr.mxu0 0.0
        %2149 = vmatpush1.msra.mxu0 0.0
        %2150 = vmatprep.subr.mxu0 0.0
        %2151 = vmatpush1.msra.mxu0 0.0
        %2152 = vmatprep.subr.mxu0 0.0
        %2153 = vmatpush1.msra.mxu0 0.0
        %2154 = vmatprep.subr.mxu0 0.0
        %2155 = vmatpush1.msra.mxu0 0.0
        %2156 = vmatprep.subr.mxu0 0.0
        %2157 = vmatpush1.msra.mxu0 0.0
        %2158 = vmatprep.subr.mxu0 0.0
        %2159 = vmatpush1.msra.mxu0 0.0
        %2160 = vmatprep.subr.mxu0 0.0
        %2161 = vmatpush1.msra.mxu0 0.0
        %2162 = vmatprep.subr.mxu0 0.0
        %2163 = vmatpush1.msra.mxu0 0.0
        %2164 = vmatprep.subr.mxu0 0.0
        %2165 = vmatpush1.msra.mxu0 0.0
        %2166 = vmatprep.subr.mxu0 0.0
        %2167 = vmatpush1.msra.mxu0 0.0
        %2168 = vmatprep.subr.mxu0 0.0
        %2169 = vmatpush1.msra.mxu0 0.0
        %2170 = vmatprep.subr.mxu0 0.0
        %2171 = vmatpush1.msra.mxu0 0.0
        %2172 = vmatprep.subr.mxu0 0.0
        %2173 = vmatpush1.msra.mxu0 0.0
        %2174 = vmatprep.subr.mxu0 0.0
        %2175 = vmatpush1.msra.mxu0 0.0
        %2176 = vmatprep.subr.mxu0 0.0
        %2177 = vmatpush1.msra.mxu0 0.0
        %2178 = vmatprep.mubr.f32.mxu0 0.0
        %2179 = vmatmul.mubr.f32.gmra.mrb[0].mxu0 %v2112
        %v2180 = vpop.f32.mrb[0].mxu0
        %v2181 = vadd.f32 %v2109, %v2180
        %v2182 = vpop.f32.mrb[0].mxu0
        %2183 = vdwg.mxu0
        %v2184 = vld [vmem:[%s16] sm:$0xff]
        %v2185 = vld [vmem:[%s16 + $0x8] sm:$0xff]
        %v2186 = vld [vmem:[%s16 + $0x10] sm:$0xff]
        %v2187 = vld [vmem:[%s16 + $0x18] sm:$0xff]
        %v2188 = vld [vmem:[%s17] sm:$0x1]
        %v2190 = vlaneseq
        %v2191 = vshrl.u32 %v2190, 7
        %v2192 = vsub.s32 0, %v2191
        %v2193 = vrot.slane %v2188, %v2192
        %v2196 = vsel %vm1172, %v2097, 0
        %2198 = vmatprep.subr.mxu0 0.0
        %2199 = vmatpush1.msra.mxu0 %v2184
        %2200 = vmatprep.subr.mxu0 0.0
        %2201 = vmatpush1.msra.mxu0 %v2185
        %2202 = vmatprep.subr.mxu0 0.0
        %2203 = vmatpush1.msra.mxu0 %v2186
        %2204 = vmatprep.subr.mxu0 0.0
        %2205 = vmatpush1.msra.mxu0 %v2187
        %2206 = vmatprep.subr.mxu0 0.0
        %2207 = vmatpush1.msra.mxu0 0.0
        %2208 = vmatprep.subr.mxu0 0.0
        %2209 = vmatpush1.msra.mxu0 0.0
        %2210 = vmatprep.subr.mxu0 0.0
        %2211 = vmatpush1.msra.mxu0 0.0
        %2212 = vmatprep.subr.mxu0 0.0
        %2213 = vmatpush1.msra.mxu0 0.0
        %2214 = vmatprep.subr.mxu0 0.0
        %2215 = vmatpush1.msra.mxu0 0.0
        %2216 = vmatprep.subr.mxu0 0.0
        %2217 = vmatpush1.msra.mxu0 0.0
        %2218 = vmatprep.subr.mxu0 0.0
        %2219 = vmatpush1.msra.mxu0 0.0
        %2220 = vmatprep.subr.mxu0 0.0
        %2221 = vmatpush1.msra.mxu0 0.0
        %2222 = vmatprep.subr.mxu0 0.0
        %2223 = vmatpush1.msra.mxu0 0.0
        %2224 = vmatprep.subr.mxu0 0.0
        %2225 = vmatpush1.msra.mxu0 0.0
        %2226 = vmatprep.subr.mxu0 0.0
        %2227 = vmatpush1.msra.mxu0 0.0
        %2228 = vmatprep.subr.mxu0 0.0
        %2229 = vmatpush1.msra.mxu0 0.0
        %2230 = vmatprep.subr.mxu0 0.0
        %2231 = vmatpush1.msra.mxu0 0.0
        %2232 = vmatprep.subr.mxu0 0.0
        %2233 = vmatpush1.msra.mxu0 0.0
        %2234 = vmatprep.subr.mxu0 0.0
        %2235 = vmatpush1.msra.mxu0 0.0
        %2236 = vmatprep.subr.mxu0 0.0
        %2237 = vmatpush1.msra.mxu0 0.0
        %2238 = vmatprep.subr.mxu0 0.0
        %2239 = vmatpush1.msra.mxu0 0.0
        %2240 = vmatprep.subr.mxu0 0.0
        %2241 = vmatpush1.msra.mxu0 0.0
        %2242 = vmatprep.subr.mxu0 0.0
        %2243 = vmatpush1.msra.mxu0 0.0
        %2244 = vmatprep.subr.mxu0 0.0
        %2245 = vmatpush1.msra.mxu0 0.0
        %2246 = vmatprep.subr.mxu0 0.0
        %2247 = vmatpush1.msra.mxu0 0.0
        %2248 = vmatprep.subr.mxu0 0.0
        %2249 = vmatpush1.msra.mxu0 0.0
        %2250 = vmatprep.subr.mxu0 0.0
        %2251 = vmatpush1.msra.mxu0 0.0
        %2252 = vmatprep.subr.mxu0 0.0
        %2253 = vmatpush1.msra.mxu0 0.0
        %2254 = vmatprep.subr.mxu0 0.0
        %2255 = vmatpush1.msra.mxu0 0.0
        %2256 = vmatprep.subr.mxu0 0.0
        %2257 = vmatpush1.msra.mxu0 0.0
        %2258 = vmatprep.subr.mxu0 0.0
        %2259 = vmatpush1.msra.mxu0 0.0
        %2260 = vmatprep.subr.mxu0 0.0
        %2261 = vmatpush1.msra.mxu0 0.0
        %2262 = vmatprep.mubr.f32.mxu0 0.0
        %2263 = vmatmul.mubr.f32.gmra.mrb[0].mxu0 %v2196
        %v2264 = vpop.f32.mrb[0].mxu0
        %v2265 = vadd.f32 %v2193, %v2264
        %v2266 = vpop.f32.mrb[0].mxu0
        %2267 = vdwg.mxu0
        %v2268 = vld [vmem:[%s18] sm:$0xff]
        %v2269 = vld [vmem:[%s18 + $0x8] sm:$0xff]
        %v2270 = vld [vmem:[%s18 + $0x10] sm:$0xff]
        %v2271 = vld [vmem:[%s18 + $0x18] sm:$0xff]
        %v2272 = vld [vmem:[%s19] sm:$0x1]
        %v2274 = vlaneseq
        %v2275 = vshrl.u32 %v2274, 7
        %v2276 = vsub.s32 0, %v2275
        %v2277 = vrot.slane %v2272, %v2276
        %v2280 = vsel %vm1172, %v2098, 0
        %2282 = vmatprep.subr.mxu0 0.0
        %2283 = vmatpush1.msra.mxu0 %v2268
        %2284 = vmatprep.subr.mxu0 0.0
        %2285 = vmatpush1.msra.mxu0 %v2269
        %2286 = vmatprep.subr.mxu0 0.0
        %2287 = vmatpush1.msra.mxu0 %v2270
        %2288 = vmatprep.subr.mxu0 0.0
        %2289 = vmatpush1.msra.mxu0 %v2271
        %2290 = vmatprep.subr.mxu0 0.0
        %2291 = vmatpush1.msra.mxu0 0.0
        %2292 = vmatprep.subr.mxu0 0.0
        %2293 = vmatpush1.msra.mxu0 0.0
        %2294 = vmatprep.subr.mxu0 0.0
        %2295 = vmatpush1.msra.mxu0 0.0
        %2296 = vmatprep.subr.mxu0 0.0
        %2297 = vmatpush1.msra.mxu0 0.0
        %2298 = vmatprep.subr.mxu0 0.0
        %2299 = vmatpush1.msra.mxu0 0.0
        %2300 = vmatprep.subr.mxu0 0.0
        %2301 = vmatpush1.msra.mxu0 0.0
        %2302 = vmatprep.subr.mxu0 0.0
        %2303 = vmatpush1.msra.mxu0 0.0
        %2304 = vmatprep.subr.mxu0 0.0
        %2305 = vmatpush1.msra.mxu0 0.0
        %2306 = vmatprep.subr.mxu0 0.0
        %2307 = vmatpush1.msra.mxu0 0.0
        %2308 = vmatprep.subr.mxu0 0.0
        %2309 = vmatpush1.msra.mxu0 0.0
        %2310 = vmatprep.subr.mxu0 0.0
        %2311 = vmatpush1.msra.mxu0 0.0
        %2312 = vmatprep.subr.mxu0 0.0
        %2313 = vmatpush1.msra.mxu0 0.0
        %2314 = vmatprep.subr.mxu0 0.0
        %2315 = vmatpush1.msra.mxu0 0.0
        %2316 = vmatprep.subr.mxu0 0.0
        %2317 = vmatpush1.msra.mxu0 0.0
        %2318 = vmatprep.subr.mxu0 0.0
        %2319 = vmatpush1.msra.mxu0 0.0
        %2320 = vmatprep.subr.mxu0 0.0
        %2321 = vmatpush1.msra.mxu0 0.0
        %2322 = vmatprep.subr.mxu0 0.0
        %2323 = vmatpush1.msra.mxu0 0.0
        %2324 = vmatprep.subr.mxu0 0.0
        %2325 = vmatpush1.msra.mxu0 0.0
        %2326 = vmatprep.subr.mxu0 0.0
        %2327 = vmatpush1.msra.mxu0 0.0
        %2328 = vmatprep.subr.mxu0 0.0
        %2329 = vmatpush1.msra.mxu0 0.0
        %2330 = vmatprep.subr.mxu0 0.0
        %2331 = vmatpush1.msra.mxu0 0.0
        %2332 = vmatprep.subr.mxu0 0.0
        %2333 = vmatpush1.msra.mxu0 0.0
        %2334 = vmatprep.subr.mxu0 0.0
        %2335 = vmatpush1.msra.mxu0 0.0
        %2336 = vmatprep.subr.mxu0 0.0
        %2337 = vmatpush1.msra.mxu0 0.0
        %2338 = vmatprep.subr.mxu0 0.0
        %2339 = vmatpush1.msra.mxu0 0.0
        %2340 = vmatprep.subr.mxu0 0.0
        %2341 = vmatpush1.msra.mxu0 0.0
        %2342 = vmatprep.subr.mxu0 0.0
        %2343 = vmatpush1.msra.mxu0 0.0
        %2344 = vmatprep.subr.mxu0 0.0
        %2345 = vmatpush1.msra.mxu0 0.0
        %2346 = vmatprep.mubr.f32.mxu0 0.0
        %2347 = vmatmul.mubr.f32.gmra.mrb[0].mxu0 %v2280
        %v2348 = vpop.f32.mrb[0].mxu0
        %v2349 = vadd.f32 %v2277, %v2348
        %v2350 = vpop.f32.mrb[0].mxu0
        %2351 = vdwg.mxu0
        %v2353 = vsel %vm1414, %v2181, 0
        %v2356 = vsel %vm1414, %v2265, 0
        %2358 = vmatprep.subr.mxu0 0.0
        %2359 = vmatpush1.xpose.msra.mxu0 %v2356
        %2360 = vmatprep.subr.mxu0 0.0
        %2361 = vmatpush1.xpose.msra.mxu0 0.0
        %2362 = vmatprep.subr.mxu0 0.0
        %2363 = vmatpush1.xpose.msra.mxu0 0.0
        %2364 = vmatprep.subr.mxu0 0.0
        %2365 = vmatpush1.xpose.msra.mxu0 0.0
        %2366 = vmatprep.subr.mxu0 0.0
        %2367 = vmatpush1.xpose.msra.mxu0 0.0
        %2368 = vmatprep.subr.mxu0 0.0
        %2369 = vmatpush1.xpose.msra.mxu0 0.0
        %2370 = vmatprep.subr.mxu0 0.0
        %2371 = vmatpush1.xpose.msra.mxu0 0.0
        %2372 = vmatprep.subr.mxu0 0.0
        %2373 = vmatpush1.xpose.msra.mxu0 0.0
        %2374 = vmatprep.subr.mxu0 0.0
        %2375 = vmatpush1.xpose.msra.mxu0 0.0
        %2376 = vmatprep.subr.mxu0 0.0
        %2377 = vmatpush1.xpose.msra.mxu0 0.0
        %2378 = vmatprep.subr.mxu0 0.0
        %2379 = vmatpush1.xpose.msra.mxu0 0.0
        %2380 = vmatprep.subr.mxu0 0.0
        %2381 = vmatpush1.xpose.msra.mxu0 0.0
        %2382 = vmatprep.subr.mxu0 0.0
        %2383 = vmatpush1.xpose.msra.mxu0 0.0
        %2384 = vmatprep.subr.mxu0 0.0
        %2385 = vmatpush1.xpose.msra.mxu0 0.0
        %2386 = vmatprep.subr.mxu0 0.0
        %2387 = vmatpush1.xpose.msra.mxu0 0.0
        %2388 = vmatprep.subr.mxu0 0.0
        %2389 = vmatpush1.xpose.msra.mxu0 0.0
        %2390 = vmatprep.subr.mxu0 0.0
        %2391 = vmatpush1.xpose.msra.mxu0 0.0
        %2392 = vmatprep.subr.mxu0 0.0
        %2393 = vmatpush1.xpose.msra.mxu0 0.0
        %2394 = vmatprep.subr.mxu0 0.0
        %2395 = vmatpush1.xpose.msra.mxu0 0.0
        %2396 = vmatprep.subr.mxu0 0.0
        %2397 = vmatpush1.xpose.msra.mxu0 0.0
        %2398 = vmatprep.subr.mxu0 0.0
        %2399 = vmatpush1.xpose.msra.mxu0 0.0
        %2400 = vmatprep.subr.mxu0 0.0
        %2401 = vmatpush1.xpose.msra.mxu0 0.0
        %2402 = vmatprep.subr.mxu0 0.0
        %2403 = vmatpush1.xpose.msra.mxu0 0.0
        %2404 = vmatprep.subr.mxu0 0.0
        %2405 = vmatpush1.xpose.msra.mxu0 0.0
        %2406 = vmatprep.subr.mxu0 0.0
        %2407 = vmatpush1.xpose.msra.mxu0 0.0
        %2408 = vmatprep.subr.mxu0 0.0
        %2409 = vmatpush1.xpose.msra.mxu0 0.0
        %2410 = vmatprep.subr.mxu0 0.0
        %2411 = vmatpush1.xpose.msra.mxu0 0.0
        %2412 = vmatprep.subr.mxu0 0.0
        %2413 = vmatpush1.xpose.msra.mxu0 0.0
        %2414 = vmatprep.subr.mxu0 0.0
        %2415 = vmatpush1.xpose.msra.mxu0 0.0
        %2416 = vmatprep.subr.mxu0 0.0
        %2417 = vmatpush1.xpose.msra.mxu0 0.0
        %2418 = vmatprep.subr.mxu0 0.0
        %2419 = vmatpush1.xpose.msra.mxu0 0.0
        %2420 = vmatprep.subr.mxu0 0.0
        %2421 = vmatpush1.xpose.msra.mxu0 0.0
        %2422 = vmatprep.mubr.f32.mxu0 0.0
        %2423 = vmatmul.mubr.f32.gmra.mrb[0].mxu0 %v2353
        %v2424 = vpop.f32.mrb[0].mxu0
        %v2425 = vadd.f32 0.0, %v2424
        %v2426 = vpop.f32.mrb[0].mxu0
        %2427 = vdwg.mxu0
        %2428 = vrot.lane.b32.xlu0 %v2181, 120
        %v2429 = vpop.permute.xlu0 %2428
        %2430 = vrot.lane.b32.xlu0 %v2265, 120
        %v2431 = vpop.permute.xlu0 %2430
        %v2432 = vsel %vm1414, %v2429, 0
        %v2434 = vsel %vm1414, %v2431, 0
        %2436 = vmatprep.subr.mxu0 0.0
        %2437 = vmatpush1.xpose.msra.mxu0 %v2434
        %2438 = vmatprep.subr.mxu0 0.0
        %2439 = vmatpush1.xpose.msra.mxu0 0.0
        %2440 = vmatprep.subr.mxu0 0.0
        %2441 = vmatpush1.xpose.msra.mxu0 0.0
        %2442 = vmatprep.subr.mxu0 0.0
        %2443 = vmatpush1.xpose.msra.mxu0 0.0
        %2444 = vmatprep.subr.mxu0 0.0
        %2445 = vmatpush1.xpose.msra.mxu0 0.0
        %2446 = vmatprep.subr.mxu0 0.0
        %2447 = vmatpush1.xpose.msra.mxu0 0.0
        %2448 = vmatprep.subr.mxu0 0.0
        %2449 = vmatpush1.xpose.msra.mxu0 0.0
        %2450 = vmatprep.subr.mxu0 0.0
        %2451 = vmatpush1.xpose.msra.mxu0 0.0
        %2452 = vmatprep.subr.mxu0 0.0
        %2453 = vmatpush1.xpose.msra.mxu0 0.0
        %2454 = vmatprep.subr.mxu0 0.0
        %2455 = vmatpush1.xpose.msra.mxu0 0.0
        %2456 = vmatprep.subr.mxu0 0.0
        %2457 = vmatpush1.xpose.msra.mxu0 0.0
        %2458 = vmatprep.subr.mxu0 0.0
        %2459 = vmatpush1.xpose.msra.mxu0 0.0
        %2460 = vmatprep.subr.mxu0 0.0
        %2461 = vmatpush1.xpose.msra.mxu0 0.0
        %2462 = vmatprep.subr.mxu0 0.0
        %2463 = vmatpush1.xpose.msra.mxu0 0.0
        %2464 = vmatprep.subr.mxu0 0.0
        %2465 = vmatpush1.xpose.msra.mxu0 0.0
        %2466 = vmatprep.subr.mxu0 0.0
        %2467 = vmatpush1.xpose.msra.mxu0 0.0
        %2468 = vmatprep.subr.mxu0 0.0
        %2469 = vmatpush1.xpose.msra.mxu0 0.0
        %2470 = vmatprep.subr.mxu0 0.0
        %2471 = vmatpush1.xpose.msra.mxu0 0.0
        %2472 = vmatprep.subr.mxu0 0.0
        %2473 = vmatpush1.xpose.msra.mxu0 0.0
        %2474 = vmatprep.subr.mxu0 0.0
        %2475 = vmatpush1.xpose.msra.mxu0 0.0
        %2476 = vmatprep.subr.mxu0 0.0
        %2477 = vmatpush1.xpose.msra.mxu0 0.0
        %2478 = vmatprep.subr.mxu0 0.0
        %2479 = vmatpush1.xpose.msra.mxu0 0.0
        %2480 = vmatprep.subr.mxu0 0.0
        %2481 = vmatpush1.xpose.msra.mxu0 0.0
        %2482 = vmatprep.subr.mxu0 0.0
        %2483 = vmatpush1.xpose.msra.mxu0 0.0
        %2484 = vmatprep.subr.mxu0 0.0
        %2485 = vmatpush1.xpose.msra.mxu0 0.0
        %2486 = vmatprep.subr.mxu0 0.0
        %2487 = vmatpush1.xpose.msra.mxu0 0.0
        %2488 = vmatprep.subr.mxu0 0.0
        %2489 = vmatpush1.xpose.msra.mxu0 0.0
        %2490 = vmatprep.subr.mxu0 0.0
        %2491 = vmatpush1.xpose.msra.mxu0 0.0
        %2492 = vmatprep.subr.mxu0 0.0
        %2493 = vmatpush1.xpose.msra.mxu0 0.0
        %2494 = vmatprep.subr.mxu0 0.0
        %2495 = vmatpush1.xpose.msra.mxu0 0.0
        %2496 = vmatprep.subr.mxu0 0.0
        %2497 = vmatpush1.xpose.msra.mxu0 0.0
        %2498 = vmatprep.subr.mxu0 0.0
        %2499 = vmatpush1.xpose.msra.mxu0 0.0
        %2500 = vmatprep.mubr.f32.mxu0 0.0
        %2501 = vmatmul.mubr.f32.gmra.mrb[0].mxu0 %v2432
        %v2502 = vpop.f32.mrb[0].mxu0
        %v2503 = vadd.f32 0.0, %v2502
        %v2504 = vpop.f32.mrb[0].mxu0
        %2505 = vdwg.mxu0
        %v2506 = vadd.f32 %v2425, %v2099
        %v2507 = vadd.f32 %v2503, %v2099
        %v2508 = vsel %vm1414, %v2506, -inf
        %2509 = vmax.xlane.f32.xlu0 %v2508
        %v2510 = vpop.xlane.xlu0 %2509
        %v2511 = vsel %vm1414, %v2507, -inf
        %2512 = vmax.xlane.f32.xlu0 %v2511
        %v2513 = vpop.xlane.xlu0 %2512
        %v2514 = vsub.f32 %v2506, %v2510
        %v2515 = vsub.f32 %v2507, %v2513
        %v2516 = vmul.f32 %v2514, 1.442695
        %v2517 = vpow.pop %v2516
        %v2518 = vmul.f32 %v2515, 1.442695
        %v2519 = vpow.pop %v2518
        %v2520 = vsel %vm1414, %v2517, 0.0
        %2521 = vadd.xlane.f32.xlu0 %v2520
        %v2522 = vpop.xlane.xlu0 %2521
        %v2523 = vsel %vm1414, %v2519, 0.0
        %2524 = vadd.xlane.f32.xlu0 %v2523
        %v2525 = vpop.xlane.xlu0 %2524
        %v2526 = vrcp.pop %v2522
        %v2527 = vrcp.pop %v2525
        %v2528 = vmul.f32 %v2517, %v2526
        %v2529 = vmul.f32 %v2519, %v2527
        %v2531 = vsel %vm1414, %v2528, 0
        %2533 = vmatprep.subr.mxu0 0.0
        %2534 = vmatpush1.msra.mxu0 %v2349
        %2535 = vmatprep.subr.mxu0 0.0
        %2536 = vmatpush1.msra.mxu0 0.0
        %2537 = vmatprep.subr.mxu0 0.0
        %2538 = vmatpush1.msra.mxu0 0.0
        %2539 = vmatprep.subr.mxu0 0.0
        %2540 = vmatpush1.msra.mxu0 0.0
        %2541 = vmatprep.subr.mxu0 0.0
        %2542 = vmatpush1.msra.mxu0 0.0
        %2543 = vmatprep.subr.mxu0 0.0
        %2544 = vmatpush1.msra.mxu0 0.0
        %2545 = vmatprep.subr.mxu0 0.0
        %2546 = vmatpush1.msra.mxu0 0.0
        %2547 = vmatprep.subr.mxu0 0.0
        %2548 = vmatpush1.msra.mxu0 0.0
        %2549 = vmatprep.subr.mxu0 0.0
        %2550 = vmatpush1.msra.mxu0 0.0
        %2551 = vmatprep.subr.mxu0 0.0
        %2552 = vmatpush1.msra.mxu0 0.0
        %2553 = vmatprep.subr.mxu0 0.0
        %2554 = vmatpush1.msra.mxu0 0.0
        %2555 = vmatprep.subr.mxu0 0.0
        %2556 = vmatpush1.msra.mxu0 0.0
        %2557 = vmatprep.subr.mxu0 0.0
        %2558 = vmatpush1.msra.mxu0 0.0
        %2559 = vmatprep.subr.mxu0 0.0
        %2560 = vmatpush1.msra.mxu0 0.0
        %2561 = vmatprep.subr.mxu0 0.0
        %2562 = vmatpush1.msra.mxu0 0.0
        %2563 = vmatprep.subr.mxu0 0.0
        %2564 = vmatpush1.msra.mxu0 0.0
        %2565 = vmatprep.subr.mxu0 0.0
        %2566 = vmatpush1.msra.mxu0 0.0
        %2567 = vmatprep.subr.mxu0 0.0
        %2568 = vmatpush1.msra.mxu0 0.0
        %2569 = vmatprep.subr.mxu0 0.0
        %2570 = vmatpush1.msra.mxu0 0.0
        %2571 = vmatprep.subr.mxu0 0.0
        %2572 = vmatpush1.msra.mxu0 0.0
        %2573 = vmatprep.subr.mxu0 0.0
        %2574 = vmatpush1.msra.mxu0 0.0
        %2575 = vmatprep.subr.mxu0 0.0
        %2576 = vmatpush1.msra.mxu0 0.0
        %2577 = vmatprep.subr.mxu0 0.0
        %2578 = vmatpush1.msra.mxu0 0.0
        %2579 = vmatprep.subr.mxu0 0.0
        %2580 = vmatpush1.msra.mxu0 0.0
        %2581 = vmatprep.subr.mxu0 0.0
        %2582 = vmatpush1.msra.mxu0 0.0
        %2583 = vmatprep.subr.mxu0 0.0
        %2584 = vmatpush1.msra.mxu0 0.0
        %2585 = vmatprep.subr.mxu0 0.0
        %2586 = vmatpush1.msra.mxu0 0.0
        %2587 = vmatprep.subr.mxu0 0.0
        %2588 = vmatpush1.msra.mxu0 0.0
        %2589 = vmatprep.subr.mxu0 0.0
        %2590 = vmatpush1.msra.mxu0 0.0
        %2591 = vmatprep.subr.mxu0 0.0
        %2592 = vmatpush1.msra.mxu0 0.0
        %2593 = vmatprep.subr.mxu0 0.0
        %2594 = vmatpush1.msra.mxu0 0.0
        %2595 = vmatprep.subr.mxu0 0.0
        %2596 = vmatpush1.msra.mxu0 0.0
        %2597 = vmatprep.mubr.f32.mxu0 0.0
        %2598 = vmatmul.mubr.f32.gmra.mrb[0].mxu0 %v2531
        %v2599 = vpop.f32.mrb[0].mxu0
        %v2600 = vadd.f32 0.0, %v2599
        %v2601 = vpop.f32.mrb[0].mxu0
        %2602 = vdwg.mxu0
        %2604 = vrot.lane.b32.xlu0 %v2349, 120
        %v2605 = vpop.permute.xlu0 %2604
        %v2608 = vsel %vm1414, %v2529, 0
        %2610 = vmatprep.subr.mxu0 0.0
        %2611 = vmatpush1.msra.mxu0 %v2605
        %2612 = vmatprep.subr.mxu0 0.0
        %2613 = vmatpush1.msra.mxu0 0.0
        %2614 = vmatprep.subr.mxu0 0.0
        %2615 = vmatpush1.msra.mxu0 0.0
        %2616 = vmatprep.subr.mxu0 0.0
        %2617 = vmatpush1.msra.mxu0 0.0
        %2618 = vmatprep.subr.mxu0 0.0
        %2619 = vmatpush1.msra.mxu0 0.0
        %2620 = vmatprep.subr.mxu0 0.0
        %2621 = vmatpush1.msra.mxu0 0.0
        %2622 = vmatprep.subr.mxu0 0.0
        %2623 = vmatpush1.msra.mxu0 0.0
        %2624 = vmatprep.subr.mxu0 0.0
        %2625 = vmatpush1.msra.mxu0 0.0
        %2626 = vmatprep.subr.mxu0 0.0
        %2627 = vmatpush1.msra.mxu0 0.0
        %2628 = vmatprep.subr.mxu0 0.0
        %2629 = vmatpush1.msra.mxu0 0.0
        %2630 = vmatprep.subr.mxu0 0.0
        %2631 = vmatpush1.msra.mxu0 0.0
        %2632 = vmatprep.subr.mxu0 0.0
        %2633 = vmatpush1.msra.mxu0 0.0
        %2634 = vmatprep.subr.mxu0 0.0
        %2635 = vmatpush1.msra.mxu0 0.0
        %2636 = vmatprep.subr.mxu0 0.0
        %2637 = vmatpush1.msra.mxu0 0.0
        %2638 = vmatprep.subr.mxu0 0.0
        %2639 = vmatpush1.msra.mxu0 0.0
        %2640 = vmatprep.subr.mxu0 0.0
        %2641 = vmatpush1.msra.mxu0 0.0
        %2642 = vmatprep.subr.mxu0 0.0
        %2643 = vmatpush1.msra.mxu0 0.0
        %2644 = vmatprep.subr.mxu0 0.0
        %2645 = vmatpush1.msra.mxu0 0.0
        %2646 = vmatprep.subr.mxu0 0.0
        %2647 = vmatpush1.msra.mxu0 0.0
        %2648 = vmatprep.subr.mxu0 0.0
        %2649 = vmatpush1.msra.mxu0 0.0
        %2650 = vmatprep.subr.mxu0 0.0
        %2651 = vmatpush1.msra.mxu0 0.0
        %2652 = vmatprep.subr.mxu0 0.0
        %2653 = vmatpush1.msra.mxu0 0.0
        %2654 = vmatprep.subr.mxu0 0.0
        %2655 = vmatpush1.msra.mxu0 0.0
        %2656 = vmatprep.subr.mxu0 0.0
        %2657 = vmatpush1.msra.mxu0 0.0
        %2658 = vmatprep.subr.mxu0 0.0
        %2659 = vmatpush1.msra.mxu0 0.0
        %2660 = vmatprep.subr.mxu0 0.0
        %2661 = vmatpush1.msra.mxu0 0.0
        %2662 = vmatprep.subr.mxu0 0.0
        %2663 = vmatpush1.msra.mxu0 0.0
        %2664 = vmatprep.subr.mxu0 0.0
        %2665 = vmatpush1.msra.mxu0 0.0
        %2666 = vmatprep.subr.mxu0 0.0
        %2667 = vmatpush1.msra.mxu0 0.0
        %2668 = vmatprep.subr.mxu0 0.0
        %2669 = vmatpush1.msra.mxu0 0.0
        %2670 = vmatprep.subr.mxu0 0.0
        %2671 = vmatpush1.msra.mxu0 0.0
        %2672 = vmatprep.subr.mxu0 0.0
        %2673 = vmatpush1.msra.mxu0 0.0
        %2674 = vmatprep.mubr.f32.mxu0 0.0
        %2675 = vmatmul.mubr.f32.gmra.mrb[0].mxu0 %v2608
        %v2676 = vpop.f32.mrb[0].mxu0
        %v2677 = vadd.f32 0.0, %v2676
        %v2678 = vpop.f32.mrb[0].mxu0
        %2679 = vdwg.mxu0
        %2681 = vrot.lane.b32.xlu0 %v2677, 8
        %v2682 = vpop.permute.xlu0 %2681
        %v2684 = vsel %vm1414, %v2600, %v2682
        %v2685 = vld [vmem:[%s21] sm:$0xff]
        %v2686 = vld [vmem:[%s21 + $0x8] sm:$0xff]
        %v2688 = vsel %vm2088, %v2684, 0
        %2690 = vmatprep.subr.mxu0 0.0
        %2691 = vmatpush1.msra.mxu0 %v2685
        %2692 = vmatprep.subr.mxu0 0.0
        %2693 = vmatpush1.msra.mxu0 %v2686
        %2694 = vmatprep.subr.mxu0 0.0
        %2695 = vmatpush1.msra.mxu0 0.0
        %2696 = vmatprep.subr.mxu0 0.0
        %2697 = vmatpush1.msra.mxu0 0.0
        %2698 = vmatprep.subr.mxu0 0.0
        %2699 = vmatpush1.msra.mxu0 0.0
        %2700 = vmatprep.subr.mxu0 0.0
        %2701 = vmatpush1.msra.mxu0 0.0
        %2702 = vmatprep.subr.mxu0 0.0
        %2703 = vmatpush1.msra.mxu0 0.0
        %2704 = vmatprep.subr.mxu0 0.0
        %2705 = vmatpush1.msra.mxu0 0.0
        %2706 = vmatprep.subr.mxu0 0.0
        %2707 = vmatpush1.msra.mxu0 0.0
        %2708 = vmatprep.subr.mxu0 0.0
        %2709 = vmatpush1.msra.mxu0 0.0
        %2710 = vmatprep.subr.mxu0 0.0
        %2711 = vmatpush1.msra.mxu0 0.0
        %2712 = vmatprep.subr.mxu0 0.0
        %2713 = vmatpush1.msra.mxu0 0.0
        %2714 = vmatprep.subr.mxu0 0.0
        %2715 = vmatpush1.msra.mxu0 0.0
        %2716 = vmatprep.subr.mxu0 0.0
        %2717 = vmatpush1.msra.mxu0 0.0
        %2718 = vmatprep.subr.mxu0 0.0
        %2719 = vmatpush1.msra.mxu0 0.0
        %2720 = vmatprep.subr.mxu0 0.0
        %2721 = vmatpush1.msra.mxu0 0.0
        %2722 = vmatprep.subr.mxu0 0.0
        %2723 = vmatpush1.msra.mxu0 0.0
        %2724 = vmatprep.subr.mxu0 0.0
        %2725 = vmatpush1.msra.mxu0 0.0
        %2726 = vmatprep.subr.mxu0 0.0
        %2727 = vmatpush1.msra.mxu0 0.0
        %2728 = vmatprep.subr.mxu0 0.0
        %2729 = vmatpush1.msra.mxu0 0.0
        %2730 = vmatprep.subr.mxu0 0.0
        %2731 = vmatpush1.msra.mxu0 0.0
        %2732 = vmatprep.subr.mxu0 0.0
        %2733 = vmatpush1.msra.mxu0 0.0
        %2734 = vmatprep.subr.mxu0 0.0
        %2735 = vmatpush1.msra.mxu0 0.0
        %2736 = vmatprep.subr.mxu0 0.0
        %2737 = vmatpush1.msra.mxu0 0.0
        %2738 = vmatprep.subr.mxu0 0.0
        %2739 = vmatpush1.msra.mxu0 0.0
        %2740 = vmatprep.subr.mxu0 0.0
        %2741 = vmatpush1.msra.mxu0 0.0
        %2742 = vmatprep.subr.mxu0 0.0
        %2743 = vmatpush1.msra.mxu0 0.0
        %2744 = vmatprep.subr.mxu0 0.0
        %2745 = vmatpush1.msra.mxu0 0.0
        %2746 = vmatprep.subr.mxu0 0.0
        %2747 = vmatpush1.msra.mxu0 0.0
        %2748 = vmatprep.subr.mxu0 0.0
        %2749 = vmatpush1.msra.mxu0 0.0
        %2750 = vmatprep.subr.mxu0 0.0
        %2751 = vmatpush1.msra.mxu0 0.0
        %2752 = vmatprep.subr.mxu0 0.0
        %2753 = vmatpush1.msra.mxu0 0.0
        %2754 = vmatprep.mubr.f32.mxu0 0.0
        %2755 = vmatmul.mubr.f32.gmra.mrb[0].mxu0 %v2688
        %v2756 = vpop.f32.mrb[0].mxu0
        %v2757 = vadd.f32 0.0, %v2756
        %v2758 = vpop.f32.mrb[0].mxu0
        %2759 = vdwg.mxu0
        %2760 = vst.msk [vmem:[%s1149] sm:$0xff] %vm1414, %v1769
        %2761 = vst.msk [vmem:[%s1149 + $0x8] sm:$0xff] %vm1414, %v1770
        %2762 = vst.msk [vmem:[%s1149 + $0x10] sm:$0xff] %vm1414, %v1771
        %2763 = vst.msk [vmem:[%s1149 + $0x18] sm:$0xff] %vm1414, %v1772
        %2764 = vst.msk [vmem:[%s1156] sm:$0xff] %vm1414, %v2528
        %2765 = vst.msk [vmem:[%s1156 + $0x8] sm:$0xff] %vm1414, %v2529
        %v2767 = vsel %vm1172, %v2091, 0
        %2769 = vmatprep.subr.mxu0 0.0
        %2770 = vmatpush1.msra.mxu0 %v2092
        %2771 = vmatprep.subr.mxu0 0.0
        %2772 = vmatpush1.msra.mxu0 %v2093
        %2773 = vmatprep.subr.mxu0 0.0
        %2774 = vmatpush1.msra.mxu0 %v2094
        %2775 = vmatprep.subr.mxu0 0.0
        %2776 = vmatpush1.msra.mxu0 %v2095
        %2777 = vmatprep.subr.mxu0 0.0
        %2778 = vmatpush1.msra.mxu0 0.0
        %2779 = vmatprep.subr.mxu0 0.0
        %2780 = vmatpush1.msra.mxu0 0.0
        %2781 = vmatprep.subr.mxu0 0.0
        %2782 = vmatpush1.msra.mxu0 0.0
        %2783 = vmatprep.subr.mxu0 0.0
        %2784 = vmatpush1.msra.mxu0 0.0
        %2785 = vmatprep.subr.mxu0 0.0
        %2786 = vmatpush1.msra.mxu0 0.0
        %2787 = vmatprep.subr.mxu0 0.0
        %2788 = vmatpush1.msra.mxu0 0.0
        %2789 = vmatprep.subr.mxu0 0.0
        %2790 = vmatpush1.msra.mxu0 0.0
        %2791 = vmatprep.subr.mxu0 0.0
        %2792 = vmatpush1.msra.mxu0 0.0
        %2793 = vmatprep.subr.mxu0 0.0
        %2794 = vmatpush1.msra.mxu0 0.0
        %2795 = vmatprep.subr.mxu0 0.0
        %2796 = vmatpush1.msra.mxu0 0.0
        %2797 = vmatprep.subr.mxu0 0.0
        %2798 = vmatpush1.msra.mxu0 0.0
        %2799 = vmatprep.subr.mxu0 0.0
        %2800 = vmatpush1.msra.mxu0 0.0
        %2801 = vmatprep.subr.mxu0 0.0
        %2802 = vmatpush1.msra.mxu0 0.0
        %2803 = vmatprep.subr.mxu0 0.0
        %2804 = vmatpush1.msra.mxu0 0.0
        %2805 = vmatprep.subr.mxu0 0.0
        %2806 = vmatpush1.msra.mxu0 0.0
        %2807 = vmatprep.subr.mxu0 0.0
        %2808 = vmatpush1.msra.mxu0 0.0
        %2809 = vmatprep.subr.mxu0 0.0
        %2810 = vmatpush1.msra.mxu0 0.0
        %2811 = vmatprep.subr.mxu0 0.0
        %2812 = vmatpush1.msra.mxu0 0.0
        %2813 = vmatprep.subr.mxu0 0.0
        %2814 = vmatpush1.msra.mxu0 0.0
        %2815 = vmatprep.subr.mxu0 0.0
        %2816 = vmatpush1.msra.mxu0 0.0
        %2817 = vmatprep.subr.mxu0 0.0
        %2818 = vmatpush1.msra.mxu0 0.0
        %2819 = vmatprep.subr.mxu0 0.0
        %2820 = vmatpush1.msra.mxu0 0.0
        %2821 = vmatprep.subr.mxu0 0.0
        %2822 = vmatpush1.msra.mxu0 0.0
        %2823 = vmatprep.subr.mxu0 0.0
        %2824 = vmatpush1.msra.mxu0 0.0
        %2825 = vmatprep.subr.mxu0 0.0
        %2826 = vmatpush1.msra.mxu0 0.0
        %2827 = vmatprep.subr.mxu0 0.0
        %2828 = vmatpush1.msra.mxu0 0.0
        %2829 = vmatprep.subr.mxu0 0.0
        %2830 = vmatpush1.msra.mxu0 0.0
        %2831 = vmatprep.subr.mxu0 0.0
        %2832 = vmatpush1.msra.mxu0 0.0
        %2833 = vmatprep.mubr.f32.mxu0 0.0
        %2834 = vmatmul.mubr.f32.gmra.mrb[0].mxu0 %v2767
        %v2835 = vpop.f32.mrb[0].mxu0
        %v2836 = vadd.f32 %v2757, %v2835
        %v2837 = vpop.f32.mrb[0].mxu0
        %2838 = vdwg.mxu0
        %v2839 = vld [vmem:[%s22] sm:$0x1]
        %v2841 = vlaneseq
        %v2842 = vshrl.u32 %v2841, 7
        %v2843 = vsub.s32 0, %v2842
        %v2844 = vrot.slane %v2839, %v2843
        %v2846 = vadd.f32 %v2836, %v2844
        %v2847 = vadd.f32 %v2846, %v1157
        %v2848 = vld [vmem:[%s23] sm:$0x1]
        %v2849 = vld [vmem:[%s24] sm:$0x1]
        %v2850 = vsel %vm1172, %v2847, 0.0
        %2851 = vadd.xlane.f32.xlu0 %v2850
        %v2852 = vpop.xlane.xlu0 %2851
        %v2853 = vrcp.pop 32.0
        %v2854 = vmul.f32 %v2852, %v2853
        %v2855 = vsub.f32 %v2847, %v2854
        %v2856 = vmul.f32 %v2855, %v2855
        %v2857 = vsel %vm1172, %v2856, 0.0
        %2858 = vadd.xlane.f32.xlu0 %v2857
        %v2859 = vpop.xlane.xlu0 %2858
        %v2860 = vmul.f32 %v2859, %v2853
        %v2861 = vadd.f32 %v2860, 1e-05
        %v2862 = vrsqrt.pop %v2861
        %v2863 = vmul.f32 %v2855, %v2862
        %v2865 = vlaneseq
        %v2866 = vshrl.u32 %v2865, 7
        %v2867 = vsub.s32 0, %v2866
        %v2868 = vrot.slane %v2848, %v2867
        %v2870 = vmul.f32 %v2863, %v2868
        %v2872 = vlaneseq
        %v2873 = vshrl.u32 %v2872, 7
        %v2874 = vsub.s32 0, %v2873
        %v2875 = vrot.slane %v2849, %v2874
        %v2877 = vadd.f32 %v2870, %v2875
        %2878 = vst.msk [vmem:[%s1142] sm:$0xff] %vm1172, %v2877
        %s2879 = sand.u32 %s656, 1
        %s2880 = scalar_lea.sflag [#allocation4], %s2879
        %s2881 = sand.u32 %s656, 1
        %s2882 = smul.addr %s2881, 8
        %s2883 = scalar_lea.vmem [#allocation19], %s2882
        %s2884 = sand.u32 %s61, 1
        %s2885 = scalar_lea.sflag [#allocation21], %s2884
        %s2886 = sand.u32 %s684, 1
        %s2887 = smul.addr %s2886, 32
        %s2888 = scalar_lea.vmem [#allocation20], %s2887
        %s2889 = sand.u32 %s61, 1
        %s2890 = scalar_lea.sflag [#allocation21], %s2889
        %s2891 = sand.u32 %s712, 1
        %s2892 = smul.addr %s2891, 16
        %s2893 = scalar_lea.vmem [#allocation22], %s2892
        // Predicated region
        $region161: #{tpu_custom_call.1} parent=119 // pred_check
          %p2894 = pneg %p666
        $region162: #{tpu_custom_call.1} parent=119 // pred_check_branch
          %2896 = sbr.rel (%p2894) target = $region164
        $region163: #{tpu_custom_call.1} parent=119 // pred_region
          %s2898 = ssub.s32 128, 128
          %2899 = vsyncadd %s2880, %s2898
          %s2900 = sadd.s32 %s66, %s65
          %s2901 = smul.addr %s2900, 128
          %s2902 = scalar_lea.hbm %s25, %s2901
          %s2904 = sshll.u32 %s2883, 4
          %s2905 = int_to_ptr.vmem [resolvable:$true] %s2904
          %2907 = dma.vmem_to_hbm [thread:$0]  %s2905, 128, %s2902, %s2880
        $region164: #{tpu_custom_call.1} parent=119 // pred_fallthru
          _
        // Predicated region
        $region165: #{tpu_custom_call.1} parent=119 // pred_check
          %p2908 = pneg %p694
        $region166: #{tpu_custom_call.1} parent=119 // pred_check_branch
          %2910 = sbr.rel (%p2908) target = $region168
        $region167: #{tpu_custom_call.1} parent=119 // pred_region
          %s2912 = ssub.s32 512, 512
          %2913 = vsyncadd %s2885, %s2912
          %s2914 = smul.addr %s65, 4
          %s2915 = sadd.s32 %s66, %s2914
          %s2916 = smul.addr %s2915, 128
          %s2917 = scalar_lea.hbm %s26, %s2916
          %s2918 = sshll.u32 %s2888, 4
          %s2919 = int_to_ptr.vmem [resolvable:$true] %s2918
          %2924 = dma.vmem_to_hbm [thread:$0]  %s2919, 512, %s2917, %s2885, 128, 128, 8
        $region168: #{tpu_custom_call.1} parent=119 // pred_fallthru
          _
        // Predicated region
        $region169: #{tpu_custom_call.1} parent=119 // pred_check
          %p2925 = pneg %p722
        $region170: #{tpu_custom_call.1} parent=119 // pred_check_branch
          %2927 = sbr.rel (%p2925) target = $region172
        $region171: #{tpu_custom_call.1} parent=119 // pred_region
          %s2929 = ssub.s32 256, 256
          %2930 = vsyncadd %s2890, %s2929
          %s2931 = smul.addr %s65, 2
          %s2932 = sadd.s32 %s66, %s2931
          %s2933 = smul.addr %s2932, 128
          %s2934 = scalar_lea.hbm %s27, %s2933
          %s2935 = sshll.u32 %s2893, 4
          %s2936 = int_to_ptr.vmem [resolvable:$true] %s2935
          %2941 = dma.vmem_to_hbm [thread:$0]  %s2936, 256, %s2934, %s2890, 128, 128, 8
        $region172: #{tpu_custom_call.1} parent=119 // pred_fallthru
          _
      $region120: #{tpu_custom_call.1} parent=5 // pred_fallthru
        _
      %p2942 = scmp.le.s32.totalorder 2, %s56
      // Predicated region
      $region173: #{tpu_custom_call.1} parent=5 // pred_check
        %p2943 = pneg %p2942
      $region174: #{tpu_custom_call.1} parent=5 // pred_check_branch
        %2945 = sbr.rel (%p2943) target = $region176
      $region175: #{tpu_custom_call.1} parent=5 // pred_region
        %s2946 = ssub.s32 %s56, 2
        // Predicated region
        $region177: #{tpu_custom_call.1} parent=175 // pred_check
          %p2947 = pneg %p672
        $region178: #{tpu_custom_call.1} parent=175 // pred_check_branch
          %2949 = sbr.rel (%p2947) target = $region180
        $region179: #{tpu_custom_call.1} parent=175 // pred_region
          %s2950 = sand.u32 %s657, 1
          %s2951 = scalar_lea.sflag [#allocation4], %s2950
          %s2952 = sand.u32 %s657, 1
          %s2953 = smul.addr %s2952, 8
          %s2954 = scalar_lea.vmem [#allocation19], %s2953
          %2955 = dma.done %s2951, 128
        $region180: #{tpu_custom_call.1} parent=175 // pred_fallthru
          _
        // Predicated region
        $region181: #{tpu_custom_call.1} parent=175 // pred_check
          %p2956 = pneg %p700
        $region182: #{tpu_custom_call.1} parent=175 // pred_check_branch
          %2958 = sbr.rel (%p2956) target = $region184
        $region183: #{tpu_custom_call.1} parent=175 // pred_region
          %s2959 = sand.u32 %s62, 1
          %s2960 = scalar_lea.sflag [#allocation21], %s2959
          %s2961 = sand.u32 %s685, 1
          %s2962 = smul.addr %s2961, 32
          %s2963 = scalar_lea.vmem [#allocation20], %s2962
          %2964 = dma.done %s2960, 512
        $region184: #{tpu_custom_call.1} parent=175 // pred_fallthru
          _
        // Predicated region
        $region185: #{tpu_custom_call.1} parent=175 // pred_check
          %p2965 = pneg %p728
        $region186: #{tpu_custom_call.1} parent=175 // pred_check_branch
          %2967 = sbr.rel (%p2965) target = $region188
        $region187: #{tpu_custom_call.1} parent=175 // pred_region
          %s2968 = sand.u32 %s62, 1
          %s2969 = scalar_lea.sflag [#allocation21], %s2968
          %s2970 = sand.u32 %s713, 1
          %s2971 = smul.addr %s2970, 16
          %s2972 = scalar_lea.vmem [#allocation22], %s2971
          %2973 = dma.done %s2969, 256
        $region188: #{tpu_custom_call.1} parent=175 // pred_fallthru
          _
      $region176: #{tpu_custom_call.1} parent=5 // pred_fallthru
        _
    $region6: #{tpu_custom_call.1} parent=1 // loop_footer
      %s60 = sadd.s32 1, %s56
    $region7: #{tpu_custom_call.1} parent=1 // loop_footer_branch
      %55 = sbr.rel target = $region3
    $region8: #{tpu_custom_call.1} parent=1 // loop_exit
      _
    %2974 = vsyncpa [#allocation3], 1
    %s2975 = scalar_lea.sflag [#allocation3], 1
    %2976 = vsyncpa %s2975, 1
    %2977 = vsyncpa [#allocation6], 1
    %s2978 = scalar_lea.sflag [#allocation6], 1
    %2979 = vsyncpa %s2978, 1
    %2980 = vsyncpa [#allocation9], 1
    %s2981 = scalar_lea.sflag [#allocation9], 1
    %2982 = vsyncpa %s2981, 1
    %2983 = vsyncpa [#allocation12], 1
    %s2984 = scalar_lea.sflag [#allocation12], 1
    %2985 = vsyncpa %s2984, 1
    %2986 = vsyncpa [#allocation15], 1
    %s2987 = scalar_lea.sflag [#allocation15], 1
    %2988 = vsyncpa %s2987, 1
    %2989 = vsyncpa [#allocation18], 1
    %2990 = vsyncpa [#allocation4], 1
    %s2991 = scalar_lea.sflag [#allocation4], 1
    %2992 = vsyncpa %s2991, 1
    %2993 = vsyncpa [#allocation21], 1
    %s2994 = scalar_lea.sflag [#allocation21], 1
    %2995 = vsyncpa %s2994, 1

</llo_original>
